<compile_context>
chip_gen: v6e
topology: v6e:2x2x1
jax: 0.10.0
libtpu: 0.0.40
codegen_flags: <defaults>
</compile_context>

<pallas_src>
import functools
import math

import jax
import jax.numpy as jnp
from jax import lax
from jax.experimental import pallas as pl
from jax.experimental.pallas import tpu as pltpu


def _matmul_nt(a, b):
    """a @ b.T without materializing a transpose (contract last dims)."""
    return lax.dot_general(a, b, (((1,), (1,)), ((), ())),
                           preferred_element_type=jnp.float32)


# ----------------------------------------------------------------------------
# Fused HLSL forward kernel
# ----------------------------------------------------------------------------
def _hlsl_kernel(hidden_ref, coarse_ref, fine_ref,
                 wih0_ref, b0_ref, whh0_ref,
                 wih1_ref, b1_ref, whh1_ref,
                 wq_ref, bq_ref, wk_ref, bk_ref, wv_ref, bv_ref,
                 wfc_ref, bfc_ref, wcat_ref, bcat_ref,
                 out_ref, *, hidden_dim, num_heads, seq_len):
    H = hidden_dim
    S = seq_len
    depth = 2 * H // num_heads
    inv_sqrt_d = 1.0 / math.sqrt(depth)

    def softmax_last(x):
        m = jnp.max(x, axis=-1, keepdims=True)
        e = jnp.exp(x - m)
        return e * pl.reciprocal(jnp.sum(e, axis=-1, keepdims=True), approx=True)

    def lstm_cell(gates, c):
        # PyTorch gate order (i, f, g, o), each H wide.
        i = jax.nn.sigmoid(gates[:, 0 * H:1 * H])
        f = jax.nn.sigmoid(gates[:, 1 * H:2 * H])
        g = jnp.tanh(gates[:, 2 * H:3 * H])
        o = jax.nn.sigmoid(gates[:, 3 * H:4 * H])
        c_new = f * c + i * g
        return o * jnp.tanh(c_new), c_new

    def bilstm_layer(x, wih, bias, whh_f, whh_b):
        """x: [S, Din]; wih: [Din, 8H] (fwd 4H | bwd 4H gates); bias: [1, 8H]."""
        # Hoisted input projection for both directions + pre-folded biases.
        gi = jnp.dot(x, wih, preferred_element_type=jnp.float32) + bias  # [S,8H]
        h_f = jnp.zeros((1, H), jnp.float32)
        c_f = jnp.zeros((1, H), jnp.float32)
        h_b = jnp.zeros((1, H), jnp.float32)
        c_b = jnp.zeros((1, H), jnp.float32)
        outs_f = [None] * S
        outs_b = [None] * S
        for s in range(S):                       # fully unrolled (S is static)
            p = S - 1 - s                        # reverse-direction position
            gates_f = gi[s:s + 1, 0:4 * H] + jnp.dot(
                h_f, whh_f, preferred_element_type=jnp.float32)
            gates_b = gi[p:p + 1, 4 * H:8 * H] + jnp.dot(
                h_b, whh_b, preferred_element_type=jnp.float32)
            h_f, c_f = lstm_cell(gates_f, c_f)
            h_b, c_b = lstm_cell(gates_b, c_b)
            outs_f[s] = h_f
            outs_b[p] = h_b
        out_f = jnp.concatenate(outs_f, axis=0)            # [S, H]
        out_b = jnp.concatenate(outs_b, axis=0)            # [S, H]
        return jnp.concatenate([out_f, out_b], axis=-1)    # [S, 2H]

    wq = wq_ref[...]; bq = bq_ref[...]
    wk = wk_ref[...]; bk = bk_ref[...]
    wv = wv_ref[...]; bv = bv_ref[...]
    wfc = wfc_ref[...]; bfc = bfc_ref[...]

    def multi_attn(q_in, kv_in):
        """Shared-weight MultiHeadAttn (batch == 1, seq == S)."""
        q = jnp.dot(q_in, wq, preferred_element_type=jnp.float32) + bq
        k = jnp.dot(kv_in, wk, preferred_element_type=jnp.float32) + bk
        v = jnp.dot(kv_in, wv, preferred_element_type=jnp.float32) + bv
        head_outs = []
        for h in range(num_heads):               # unrolled over heads
            sl = slice(h * depth, (h + 1) * depth)
            scores = _matmul_nt(q[:, sl], k[:, sl]) * inv_sqrt_d     # [S, S]
            attn = softmax_last(scores)
            head_outs.append(jnp.dot(attn, v[:, sl],
                                     preferred_element_type=jnp.float32))
        concat = jnp.concatenate(head_outs, axis=-1)                 # [S, 2H]
        return jnp.dot(concat, wfc, preferred_element_type=jnp.float32) + bfc

    hidden = hidden_ref[...]                     # [S, 2H]
    coarse = coarse_ref[...]
    fine = fine_ref[...]

    # ctx_encoder: 2-layer bidirectional LSTM.
    # TODO(synk): nn.LSTM dropout=0.5 applies only in training mode; identity here.
    ctx1 = bilstm_layer(hidden, wih0_ref[...], b0_ref[...],
                        whh0_ref[0], whh0_ref[1])
    ctx = bilstm_layer(ctx1, wih1_ref[...], b1_ref[...],
                       whh1_ref[0], whh1_ref[1])

    attn1 = multi_attn(ctx, coarse)
    attn2 = multi_attn(attn1, fine)

    # alpha = softmax(attn2 @ hidden^T); re_weight = alpha @ hidden
    alpha = softmax_last(_matmul_nt(attn2, hidden))                  # [S, S]
    re_weight = jnp.dot(alpha, hidden, preferred_element_type=jnp.float32)

    feats = jnp.concatenate([re_weight, ctx, attn2], axis=-1)        # [S, 6H]
    out_ref[...] = jnp.dot(feats, wcat_ref[...],
                           preferred_element_type=jnp.float32) + bcat_ref[...]


# ----------------------------------------------------------------------------
# pallas_call wrapper
# ----------------------------------------------------------------------------
_VMEM = pl.BlockSpec(memory_space=pltpu.MemorySpace.VMEM)


def hlsl_forward(hidden, coarse, fine, params, *, hidden_dim, num_heads):
    """hidden/coarse/fine: [1, S, 2H] (batch_first LSTM sees seq_len = S)."""
    S = hidden.shape[1]
    H2 = 2 * hidden_dim
    kern = functools.partial(_hlsl_kernel, hidden_dim=hidden_dim,
                             num_heads=num_heads, seq_len=S)
    out = pl.pallas_call(
        kern,
        out_shape=jax.ShapeDtypeStruct((S, H2), jnp.float32),
        in_specs=[_VMEM] * 19,
        out_specs=_VMEM,
    )(hidden[0], coarse[0], fine[0],
      params['wih0'], params['b0'], params['whh0'],
      params['wih1'], params['b1'], params['whh1'],
      params['wq'], params['bq'], params['wk'], params['bk'],
      params['wv'], params['bv'], params['wfc'], params['bfc'],
      params['wcat'], params['bcat'])
    return out[None]                             # [1, S, 2H]


# ----------------------------------------------------------------------------
# Parameter construction (PyTorch-style init, pre-laid-out for the kernel)
# ----------------------------------------------------------------------------
def init_params(key, hidden_dim, num_heads):
    H = hidden_dim
    H2 = 2 * H
    keys = iter(jax.random.split(key, 32))

    def uni(shape, bound):
        return jax.random.uniform(next(keys), shape, jnp.float32, -bound, bound)

    def lstm_layer(in_dim):
        kb = 1.0 / math.sqrt(H)
        wih_f = uni((4 * H, in_dim), kb); whh_f = uni((4 * H, H), kb)
        bih_f = uni((4 * H,), kb);        bhh_f = uni((4 * H,), kb)
        wih_b = uni((4 * H, in_dim), kb); whh_b = uni((4 * H, H), kb)
        bih_b = uni((4 * H,), kb);        bhh_b = uni((4 * H,), kb)
        wih = jnp.concatenate([wih_f.T, wih_b.T], axis=1)            # [in, 8H]
        b = jnp.concatenate([bih_f + bhh_f, bih_b + bhh_b])[None]    # [1, 8H]
        whh = jnp.stack([whh_f.T, whh_b.T], axis=0)                  # [2, H, 4H]
        return wih, b, whh

    def linear(in_dim, out_dim):
        kb = 1.0 / math.sqrt(in_dim)
        w = uni((out_dim, in_dim), kb)
        b = uni((out_dim,), kb)
        return w.T, b[None]                                          # x @ W form

    params = {}
    params['wih0'], params['b0'], params['whh0'] = lstm_layer(H2)
    params['wih1'], params['b1'], params['whh1'] = lstm_layer(H2)
    params['wq'], params['bq'] = linear(H2, H2)
    params['wk'], params['bk'] = linear(H2, H2)
    params['wv'], params['bv'] = linear(H2, H2)
    params['wfc'], params['bfc'] = linear(H2, H2)
    params['wcat'], params['bcat'] = linear(6 * H, H2)
    return params


# ----------------------------------------------------------------------------
if __name__ == "__main__":
    hidden_dim, num_heads, batch_size = 32, 4, 8   # depth = 2H/heads = 16
    H2 = 2 * hidden_dim

    key = jax.random.PRNGKey(0)
    kp, kh, kc, kf = jax.random.split(key, 4)
    params = init_params(kp, hidden_dim, num_heads)

    hidden = jax.random.normal(kh, (1, batch_size, H2), jnp.float32)
    coarse = jax.random.normal(kc, (1, batch_size, H2), jnp.float32)
    fine = jax.random.normal(kf, (1, batch_size, H2), jnp.float32)

    out = hlsl_forward(hidden, coarse, fine, params,
                       hidden_dim=hidden_dim, num_heads=num_heads)
    out = jax.block_until_ready(out)
    assert out.shape == (1, batch_size, H2) and out.dtype == jnp.float32
    print("KERNEL_OK")
</pallas_src>

<mosaic_0001>
module attributes {stable_mosaic.version = 11 : i64} {
  func.func @_hlsl_kernel(%arg0: memref<8x64xf32, #tpu.memory_space<vmem>>, %arg1: memref<8x64xf32, #tpu.memory_space<vmem>>, %arg2: memref<8x64xf32, #tpu.memory_space<vmem>>, %arg3: memref<64x256xf32, #tpu.memory_space<vmem>>, %arg4: memref<1x256xf32, #tpu.memory_space<vmem>>, %arg5: memref<2x32x128xf32, #tpu.memory_space<vmem>>, %arg6: memref<64x256xf32, #tpu.memory_space<vmem>>, %arg7: memref<1x256xf32, #tpu.memory_space<vmem>>, %arg8: memref<2x32x128xf32, #tpu.memory_space<vmem>>, %arg9: memref<64x64xf32, #tpu.memory_space<vmem>>, %arg10: memref<1x64xf32, #tpu.memory_space<vmem>>, %arg11: memref<64x64xf32, #tpu.memory_space<vmem>>, %arg12: memref<1x64xf32, #tpu.memory_space<vmem>>, %arg13: memref<64x64xf32, #tpu.memory_space<vmem>>, %arg14: memref<1x64xf32, #tpu.memory_space<vmem>>, %arg15: memref<64x64xf32, #tpu.memory_space<vmem>>, %arg16: memref<1x64xf32, #tpu.memory_space<vmem>>, %arg17: memref<192x64xf32, #tpu.memory_space<vmem>>, %arg18: memref<1x64xf32, #tpu.memory_space<vmem>>, %arg19: memref<8x64xf32, #tpu.memory_space<vmem>>) attributes {dimension_semantics = [], scalar_prefetch = 0 : i64, scratch_operands = 0 : i64, tpu.core_type = #tpu.core_type<tc>} {
    %c0 = arith.constant 0 : index
    %c0_0 = arith.constant 0 : index
    %0 = vector.load %arg9[%c0, %c0_0] : memref<64x64xf32, #tpu.memory_space<vmem>>, vector<64x64xf32>
    %c0_1 = arith.constant 0 : index
    %c0_2 = arith.constant 0 : index
    %1 = vector.load %arg10[%c0_1, %c0_2] : memref<1x64xf32, #tpu.memory_space<vmem>>, vector<1x64xf32>
    %c0_3 = arith.constant 0 : index
    %c0_4 = arith.constant 0 : index
    %2 = vector.load %arg11[%c0_3, %c0_4] : memref<64x64xf32, #tpu.memory_space<vmem>>, vector<64x64xf32>
    %c0_5 = arith.constant 0 : index
    %c0_6 = arith.constant 0 : index
    %3 = vector.load %arg12[%c0_5, %c0_6] : memref<1x64xf32, #tpu.memory_space<vmem>>, vector<1x64xf32>
    %c0_7 = arith.constant 0 : index
    %c0_8 = arith.constant 0 : index
    %4 = vector.load %arg13[%c0_7, %c0_8] : memref<64x64xf32, #tpu.memory_space<vmem>>, vector<64x64xf32>
    %c0_9 = arith.constant 0 : index
    %c0_10 = arith.constant 0 : index
    %5 = vector.load %arg14[%c0_9, %c0_10] : memref<1x64xf32, #tpu.memory_space<vmem>>, vector<1x64xf32>
    %c0_11 = arith.constant 0 : index
    %c0_12 = arith.constant 0 : index
    %6 = vector.load %arg15[%c0_11, %c0_12] : memref<64x64xf32, #tpu.memory_space<vmem>>, vector<64x64xf32>
    %c0_13 = arith.constant 0 : index
    %c0_14 = arith.constant 0 : index
    %7 = vector.load %arg16[%c0_13, %c0_14] : memref<1x64xf32, #tpu.memory_space<vmem>>, vector<1x64xf32>
    %c0_15 = arith.constant 0 : index
    %c0_16 = arith.constant 0 : index
    %8 = vector.load %arg0[%c0_15, %c0_16] : memref<8x64xf32, #tpu.memory_space<vmem>>, vector<8x64xf32>
    %c0_17 = arith.constant 0 : index
    %c0_18 = arith.constant 0 : index
    %9 = vector.load %arg1[%c0_17, %c0_18] : memref<8x64xf32, #tpu.memory_space<vmem>>, vector<8x64xf32>
    %c0_19 = arith.constant 0 : index
    %c0_20 = arith.constant 0 : index
    %10 = vector.load %arg2[%c0_19, %c0_20] : memref<8x64xf32, #tpu.memory_space<vmem>>, vector<8x64xf32>
    %c0_21 = arith.constant 0 : index
    %c0_22 = arith.constant 0 : index
    %11 = vector.load %arg3[%c0_21, %c0_22] : memref<64x256xf32, #tpu.memory_space<vmem>>, vector<64x256xf32>
    %c0_23 = arith.constant 0 : index
    %c0_24 = arith.constant 0 : index
    %12 = vector.load %arg4[%c0_23, %c0_24] : memref<1x256xf32, #tpu.memory_space<vmem>>, vector<1x256xf32>
    %c0_25 = arith.constant 0 : index
    %c0_26 = arith.constant 0 : index
    %c0_27 = arith.constant 0 : index
    %13 = vector.load %arg5[%c0_25, %c0_26, %c0_27] : memref<2x32x128xf32, #tpu.memory_space<vmem>>, vector<1x32x128xf32>
    %14 = vector.shape_cast %13 : vector<1x32x128xf32> to vector<32x128xf32>
    %c1 = arith.constant 1 : index
    %c0_28 = arith.constant 0 : index
    %c0_29 = arith.constant 0 : index
    %15 = vector.load %arg5[%c1, %c0_28, %c0_29] : memref<2x32x128xf32, #tpu.memory_space<vmem>>, vector<1x32x128xf32>
    %16 = vector.shape_cast %15 : vector<1x32x128xf32> to vector<32x128xf32>
    %cst = arith.constant dense<0.000000e+00> : vector<8x256xf32>
    %17 = tpu.matmul %8, %11, %cst {dimension_numbers = #tpu.dot_dimension_numbers<[1], [0], [0], [1], [0, 0, 1, 1], [], []>} : vector<8x64xf32>, vector<64x256xf32>, vector<8x256xf32> -> vector<8x256xf32>
    %18 = vector.broadcast %12 : vector<1x256xf32> to vector<8x256xf32>
    %19 = arith.addf %17, %18 : vector<8x256xf32>
    %cst_30 = arith.constant 0.000000e+00 : f32
    %20 = vector.broadcast %cst_30 : f32 to vector<1x32xf32>
    %cst_31 = arith.constant 0.000000e+00 : f32
    %21 = vector.broadcast %cst_31 : f32 to vector<1x32xf32>
    %cst_32 = arith.constant 0.000000e+00 : f32
    %22 = vector.broadcast %cst_32 : f32 to vector<1x32xf32>
    %cst_33 = arith.constant 0.000000e+00 : f32
    %23 = vector.broadcast %cst_33 : f32 to vector<1x32xf32>
    %24 = vector.extract_strided_slice %19 {offsets = [0, 0], sizes = [1, 128], strides = [1, 1]} : vector<8x256xf32> to vector<1x128xf32>
    %cst_34 = arith.constant dense<0.000000e+00> : vector<1x128xf32>
    %25 = tpu.matmul %20, %14, %cst_34 {dimension_numbers = #tpu.dot_dimension_numbers<[1], [0], [0], [1], [0, 0, 1, 1], [], []>} : vector<1x32xf32>, vector<32x128xf32>, vector<1x128xf32> -> vector<1x128xf32>
    %26 = arith.addf %24, %25 : vector<1x128xf32>
    %27 = vector.extract_strided_slice %19 {offsets = [7, 128], sizes = [1, 128], strides = [1, 1]} : vector<8x256xf32> to vector<1x128xf32>
    %cst_35 = arith.constant dense<0.000000e+00> : vector<1x128xf32>
    %28 = tpu.matmul %22, %16, %cst_35 {dimension_numbers = #tpu.dot_dimension_numbers<[1], [0], [0], [1], [0, 0, 1, 1], [], []>} : vector<1x32xf32>, vector<32x128xf32>, vector<1x128xf32> -> vector<1x128xf32>
    %29 = arith.addf %27, %28 : vector<1x128xf32>
    %30 = vector.extract_strided_slice %26 {offsets = [0, 0], sizes = [1, 32], strides = [1, 1]} : vector<1x128xf32> to vector<1x32xf32>
    %31 = arith.negf %30 : vector<1x32xf32>
    %32 = math.exp %31 : vector<1x32xf32>
    %cst_36 = arith.constant 1.000000e+00 : f32
    %33 = vector.broadcast %cst_36 : f32 to vector<1x32xf32>
    %34 = arith.addf %33, %32 : vector<1x32xf32>
    %35 = arith.divf %33, %34 : vector<1x32xf32>
    %36 = vector.extract_strided_slice %26 {offsets = [0, 32], sizes = [1, 32], strides = [1, 1]} : vector<1x128xf32> to vector<1x32xf32>
    %37 = arith.negf %36 : vector<1x32xf32>
    %38 = math.exp %37 : vector<1x32xf32>
    %cst_37 = arith.constant 1.000000e+00 : f32
    %39 = vector.broadcast %cst_37 : f32 to vector<1x32xf32>
    %40 = arith.addf %39, %38 : vector<1x32xf32>
    %41 = arith.divf %39, %40 : vector<1x32xf32>
    %42 = vector.extract_strided_slice %26 {offsets = [0, 64], sizes = [1, 32], strides = [1, 1]} : vector<1x128xf32> to vector<1x32xf32>
    %43 = math.tanh %42 : vector<1x32xf32>
    %44 = vector.extract_strided_slice %26 {offsets = [0, 96], sizes = [1, 32], strides = [1, 1]} : vector<1x128xf32> to vector<1x32xf32>
    %45 = arith.negf %44 : vector<1x32xf32>
    %46 = math.exp %45 : vector<1x32xf32>
    %cst_38 = arith.constant 1.000000e+00 : f32
    %47 = vector.broadcast %cst_38 : f32 to vector<1x32xf32>
    %48 = arith.addf %47, %46 : vector<1x32xf32>
    %49 = arith.divf %47, %48 : vector<1x32xf32>
    %50 = arith.mulf %41, %21 : vector<1x32xf32>
    %51 = arith.mulf %35, %43 : vector<1x32xf32>
    %52 = arith.addf %50, %51 : vector<1x32xf32>
    %53 = math.tanh %52 : vector<1x32xf32>
    %54 = arith.mulf %49, %53 : vector<1x32xf32>
    %55 = vector.extract_strided_slice %29 {offsets = [0, 0], sizes = [1, 32], strides = [1, 1]} : vector<1x128xf32> to vector<1x32xf32>
    %56 = arith.negf %55 : vector<1x32xf32>
    %57 = math.exp %56 : vector<1x32xf32>
    %cst_39 = arith.constant 1.000000e+00 : f32
    %58 = vector.broadcast %cst_39 : f32 to vector<1x32xf32>
    %59 = arith.addf %58, %57 : vector<1x32xf32>
    %60 = arith.divf %58, %59 : vector<1x32xf32>
    %61 = vector.extract_strided_slice %29 {offsets = [0, 32], sizes = [1, 32], strides = [1, 1]} : vector<1x128xf32> to vector<1x32xf32>
    %62 = arith.negf %61 : vector<1x32xf32>
    %63 = math.exp %62 : vector<1x32xf32>
    %cst_40 = arith.constant 1.000000e+00 : f32
    %64 = vector.broadcast %cst_40 : f32 to vector<1x32xf32>
    %65 = arith.addf %64, %63 : vector<1x32xf32>
    %66 = arith.divf %64, %65 : vector<1x32xf32>
    %67 = vector.extract_strided_slice %29 {offsets = [0, 64], sizes = [1, 32], strides = [1, 1]} : vector<1x128xf32> to vector<1x32xf32>
    %68 = math.tanh %67 : vector<1x32xf32>
    %69 = vector.extract_strided_slice %29 {offsets = [0, 96], sizes = [1, 32], strides = [1, 1]} : vector<1x128xf32> to vector<1x32xf32>
    %70 = arith.negf %69 : vector<1x32xf32>
    %71 = math.exp %70 : vector<1x32xf32>
    %cst_41 = arith.constant 1.000000e+00 : f32
    %72 = vector.broadcast %cst_41 : f32 to vector<1x32xf32>
    %73 = arith.addf %72, %71 : vector<1x32xf32>
    %74 = arith.divf %72, %73 : vector<1x32xf32>
    %75 = arith.mulf %66, %23 : vector<1x32xf32>
    %76 = arith.mulf %60, %68 : vector<1x32xf32>
    %77 = arith.addf %75, %76 : vector<1x32xf32>
    %78 = math.tanh %77 : vector<1x32xf32>
    %79 = arith.mulf %74, %78 : vector<1x32xf32>
    %80 = vector.extract_strided_slice %19 {offsets = [1, 0], sizes = [1, 128], strides = [1, 1]} : vector<8x256xf32> to vector<1x128xf32>
    %cst_42 = arith.constant dense<0.000000e+00> : vector<1x128xf32>
    %81 = tpu.matmul %54, %14, %cst_42 {dimension_numbers = #tpu.dot_dimension_numbers<[1], [0], [0], [1], [0, 0, 1, 1], [], []>} : vector<1x32xf32>, vector<32x128xf32>, vector<1x128xf32> -> vector<1x128xf32>
    %82 = arith.addf %80, %81 : vector<1x128xf32>
    %83 = vector.extract_strided_slice %19 {offsets = [6, 128], sizes = [1, 128], strides = [1, 1]} : vector<8x256xf32> to vector<1x128xf32>
    %cst_43 = arith.constant dense<0.000000e+00> : vector<1x128xf32>
    %84 = tpu.matmul %79, %16, %cst_43 {dimension_numbers = #tpu.dot_dimension_numbers<[1], [0], [0], [1], [0, 0, 1, 1], [], []>} : vector<1x32xf32>, vector<32x128xf32>, vector<1x128xf32> -> vector<1x128xf32>
    %85 = arith.addf %83, %84 : vector<1x128xf32>
    %86 = vector.extract_strided_slice %82 {offsets = [0, 0], sizes = [1, 32], strides = [1, 1]} : vector<1x128xf32> to vector<1x32xf32>
    %87 = arith.negf %86 : vector<1x32xf32>
    %88 = math.exp %87 : vector<1x32xf32>
    %cst_44 = arith.constant 1.000000e+00 : f32
    %89 = vector.broadcast %cst_44 : f32 to vector<1x32xf32>
    %90 = arith.addf %89, %88 : vector<1x32xf32>
    %91 = arith.divf %89, %90 : vector<1x32xf32>
    %92 = vector.extract_strided_slice %82 {offsets = [0, 32], sizes = [1, 32], strides = [1, 1]} : vector<1x128xf32> to vector<1x32xf32>
    %93 = arith.negf %92 : vector<1x32xf32>
    %94 = math.exp %93 : vector<1x32xf32>
    %cst_45 = arith.constant 1.000000e+00 : f32
    %95 = vector.broadcast %cst_45 : f32 to vector<1x32xf32>
    %96 = arith.addf %95, %94 : vector<1x32xf32>
    %97 = arith.divf %95, %96 : vector<1x32xf32>
    %98 = vector.extract_strided_slice %82 {offsets = [0, 64], sizes = [1, 32], strides = [1, 1]} : vector<1x128xf32> to vector<1x32xf32>
    %99 = math.tanh %98 : vector<1x32xf32>
    %100 = vector.extract_strided_slice %82 {offsets = [0, 96], sizes = [1, 32], strides = [1, 1]} : vector<1x128xf32> to vector<1x32xf32>
    %101 = arith.negf %100 : vector<1x32xf32>
    %102 = math.exp %101 : vector<1x32xf32>
    %cst_46 = arith.constant 1.000000e+00 : f32
    %103 = vector.broadcast %cst_46 : f32 to vector<1x32xf32>
    %104 = arith.addf %103, %102 : vector<1x32xf32>
    %105 = arith.divf %103, %104 : vector<1x32xf32>
    %106 = arith.mulf %97, %52 : vector<1x32xf32>
    %107 = arith.mulf %91, %99 : vector<1x32xf32>
    %108 = arith.addf %106, %107 : vector<1x32xf32>
    %109 = math.tanh %108 : vector<1x32xf32>
    %110 = arith.mulf %105, %109 : vector<1x32xf32>
    %111 = vector.extract_strided_slice %85 {offsets = [0, 0], sizes = [1, 32], strides = [1, 1]} : vector<1x128xf32> to vector<1x32xf32>
    %112 = arith.negf %111 : vector<1x32xf32>
    %113 = math.exp %112 : vector<1x32xf32>
    %cst_47 = arith.constant 1.000000e+00 : f32
    %114 = vector.broadcast %cst_47 : f32 to vector<1x32xf32>
    %115 = arith.addf %114, %113 : vector<1x32xf32>
    %116 = arith.divf %114, %115 : vector<1x32xf32>
    %117 = vector.extract_strided_slice %85 {offsets = [0, 32], sizes = [1, 32], strides = [1, 1]} : vector<1x128xf32> to vector<1x32xf32>
    %118 = arith.negf %117 : vector<1x32xf32>
    %119 = math.exp %118 : vector<1x32xf32>
    %cst_48 = arith.constant 1.000000e+00 : f32
    %120 = vector.broadcast %cst_48 : f32 to vector<1x32xf32>
    %121 = arith.addf %120, %119 : vector<1x32xf32>
    %122 = arith.divf %120, %121 : vector<1x32xf32>
    %123 = vector.extract_strided_slice %85 {offsets = [0, 64], sizes = [1, 32], strides = [1, 1]} : vector<1x128xf32> to vector<1x32xf32>
    %124 = math.tanh %123 : vector<1x32xf32>
    %125 = vector.extract_strided_slice %85 {offsets = [0, 96], sizes = [1, 32], strides = [1, 1]} : vector<1x128xf32> to vector<1x32xf32>
    %126 = arith.negf %125 : vector<1x32xf32>
    %127 = math.exp %126 : vector<1x32xf32>
    %cst_49 = arith.constant 1.000000e+00 : f32
    %128 = vector.broadcast %cst_49 : f32 to vector<1x32xf32>
    %129 = arith.addf %128, %127 : vector<1x32xf32>
    %130 = arith.divf %128, %129 : vector<1x32xf32>
    %131 = arith.mulf %122, %77 : vector<1x32xf32>
    %132 = arith.mulf %116, %124 : vector<1x32xf32>
    %133 = arith.addf %131, %132 : vector<1x32xf32>
    %134 = math.tanh %133 : vector<1x32xf32>
    %135 = arith.mulf %130, %134 : vector<1x32xf32>
    %136 = vector.extract_strided_slice %19 {offsets = [2, 0], sizes = [1, 128], strides = [1, 1]} : vector<8x256xf32> to vector<1x128xf32>
    %cst_50 = arith.constant dense<0.000000e+00> : vector<1x128xf32>
    %137 = tpu.matmul %110, %14, %cst_50 {dimension_numbers = #tpu.dot_dimension_numbers<[1], [0], [0], [1], [0, 0, 1, 1], [], []>} : vector<1x32xf32>, vector<32x128xf32>, vector<1x128xf32> -> vector<1x128xf32>
    %138 = arith.addf %136, %137 : vector<1x128xf32>
    %139 = vector.extract_strided_slice %19 {offsets = [5, 128], sizes = [1, 128], strides = [1, 1]} : vector<8x256xf32> to vector<1x128xf32>
    %cst_51 = arith.constant dense<0.000000e+00> : vector<1x128xf32>
    %140 = tpu.matmul %135, %16, %cst_51 {dimension_numbers = #tpu.dot_dimension_numbers<[1], [0], [0], [1], [0, 0, 1, 1], [], []>} : vector<1x32xf32>, vector<32x128xf32>, vector<1x128xf32> -> vector<1x128xf32>
    %141 = arith.addf %139, %140 : vector<1x128xf32>
    %142 = vector.extract_strided_slice %138 {offsets = [0, 0], sizes = [1, 32], strides = [1, 1]} : vector<1x128xf32> to vector<1x32xf32>
    %143 = arith.negf %142 : vector<1x32xf32>
    %144 = math.exp %143 : vector<1x32xf32>
    %cst_52 = arith.constant 1.000000e+00 : f32
    %145 = vector.broadcast %cst_52 : f32 to vector<1x32xf32>
    %146 = arith.addf %145, %144 : vector<1x32xf32>
    %147 = arith.divf %145, %146 : vector<1x32xf32>
    %148 = vector.extract_strided_slice %138 {offsets = [0, 32], sizes = [1, 32], strides = [1, 1]} : vector<1x128xf32> to vector<1x32xf32>
    %149 = arith.negf %148 : vector<1x32xf32>
    %150 = math.exp %149 : vector<1x32xf32>
    %cst_53 = arith.constant 1.000000e+00 : f32
    %151 = vector.broadcast %cst_53 : f32 to vector<1x32xf32>
    %152 = arith.addf %151, %150 : vector<1x32xf32>
    %153 = arith.divf %151, %152 : vector<1x32xf32>
    %154 = vector.extract_strided_slice %138 {offsets = [0, 64], sizes = [1, 32], strides = [1, 1]} : vector<1x128xf32> to vector<1x32xf32>
    %155 = math.tanh %154 : vector<1x32xf32>
    %156 = vector.extract_strided_slice %138 {offsets = [0, 96], sizes = [1, 32], strides = [1, 1]} : vector<1x128xf32> to vector<1x32xf32>
    %157 = arith.negf %156 : vector<1x32xf32>
    %158 = math.exp %157 : vector<1x32xf32>
    %cst_54 = arith.constant 1.000000e+00 : f32
    %159 = vector.broadcast %cst_54 : f32 to vector<1x32xf32>
    %160 = arith.addf %159, %158 : vector<1x32xf32>
    %161 = arith.divf %159, %160 : vector<1x32xf32>
    %162 = arith.mulf %153, %108 : vector<1x32xf32>
    %163 = arith.mulf %147, %155 : vector<1x32xf32>
    %164 = arith.addf %162, %163 : vector<1x32xf32>
    %165 = math.tanh %164 : vector<1x32xf32>
    %166 = arith.mulf %161, %165 : vector<1x32xf32>
    %167 = vector.extract_strided_slice %141 {offsets = [0, 0], sizes = [1, 32], strides = [1, 1]} : vector<1x128xf32> to vector<1x32xf32>
    %168 = arith.negf %167 : vector<1x32xf32>
    %169 = math.exp %168 : vector<1x32xf32>
    %cst_55 = arith.constant 1.000000e+00 : f32
    %170 = vector.broadcast %cst_55 : f32 to vector<1x32xf32>
    %171 = arith.addf %170, %169 : vector<1x32xf32>
    %172 = arith.divf %170, %171 : vector<1x32xf32>
    %173 = vector.extract_strided_slice %141 {offsets = [0, 32], sizes = [1, 32], strides = [1, 1]} : vector<1x128xf32> to vector<1x32xf32>
    %174 = arith.negf %173 : vector<1x32xf32>
    %175 = math.exp %174 : vector<1x32xf32>
    %cst_56 = arith.constant 1.000000e+00 : f32
    %176 = vector.broadcast %cst_56 : f32 to vector<1x32xf32>
    %177 = arith.addf %176, %175 : vector<1x32xf32>
    %178 = arith.divf %176, %177 : vector<1x32xf32>
    %179 = vector.extract_strided_slice %141 {offsets = [0, 64], sizes = [1, 32], strides = [1, 1]} : vector<1x128xf32> to vector<1x32xf32>
    %180 = math.tanh %179 : vector<1x32xf32>
    %181 = vector.extract_strided_slice %141 {offsets = [0, 96], sizes = [1, 32], strides = [1, 1]} : vector<1x128xf32> to vector<1x32xf32>
    %182 = arith.negf %181 : vector<1x32xf32>
    %183 = math.exp %182 : vector<1x32xf32>
    %cst_57 = arith.constant 1.000000e+00 : f32
    %184 = vector.broadcast %cst_57 : f32 to vector<1x32xf32>
    %185 = arith.addf %184, %183 : vector<1x32xf32>
    %186 = arith.divf %184, %185 : vector<1x32xf32>
    %187 = arith.mulf %178, %133 : vector<1x32xf32>
    %188 = arith.mulf %172, %180 : vector<1x32xf32>
    %189 = arith.addf %187, %188 : vector<1x32xf32>
    %190 = math.tanh %189 : vector<1x32xf32>
    %191 = arith.mulf %186, %190 : vector<1x32xf32>
    %192 = vector.extract_strided_slice %19 {offsets = [3, 0], sizes = [1, 128], strides = [1, 1]} : vector<8x256xf32> to vector<1x128xf32>
    %cst_58 = arith.constant dense<0.000000e+00> : vector<1x128xf32>
    %193 = tpu.matmul %166, %14, %cst_58 {dimension_numbers = #tpu.dot_dimension_numbers<[1], [0], [0], [1], [0, 0, 1, 1], [], []>} : vector<1x32xf32>, vector<32x128xf32>, vector<1x128xf32> -> vector<1x128xf32>
    %194 = arith.addf %192, %193 : vector<1x128xf32>
    %195 = vector.extract_strided_slice %19 {offsets = [4, 128], sizes = [1, 128], strides = [1, 1]} : vector<8x256xf32> to vector<1x128xf32>
    %cst_59 = arith.constant dense<0.000000e+00> : vector<1x128xf32>
    %196 = tpu.matmul %191, %16, %cst_59 {dimension_numbers = #tpu.dot_dimension_numbers<[1], [0], [0], [1], [0, 0, 1, 1], [], []>} : vector<1x32xf32>, vector<32x128xf32>, vector<1x128xf32> -> vector<1x128xf32>
    %197 = arith.addf %195, %196 : vector<1x128xf32>
    %198 = vector.extract_strided_slice %194 {offsets = [0, 0], sizes = [1, 32], strides = [1, 1]} : vector<1x128xf32> to vector<1x32xf32>
    %199 = arith.negf %198 : vector<1x32xf32>
    %200 = math.exp %199 : vector<1x32xf32>
    %cst_60 = arith.constant 1.000000e+00 : f32
    %201 = vector.broadcast %cst_60 : f32 to vector<1x32xf32>
    %202 = arith.addf %201, %200 : vector<1x32xf32>
    %203 = arith.divf %201, %202 : vector<1x32xf32>
    %204 = vector.extract_strided_slice %194 {offsets = [0, 32], sizes = [1, 32], strides = [1, 1]} : vector<1x128xf32> to vector<1x32xf32>
    %205 = arith.negf %204 : vector<1x32xf32>
    %206 = math.exp %205 : vector<1x32xf32>
    %cst_61 = arith.constant 1.000000e+00 : f32
    %207 = vector.broadcast %cst_61 : f32 to vector<1x32xf32>
    %208 = arith.addf %207, %206 : vector<1x32xf32>
    %209 = arith.divf %207, %208 : vector<1x32xf32>
    %210 = vector.extract_strided_slice %194 {offsets = [0, 64], sizes = [1, 32], strides = [1, 1]} : vector<1x128xf32> to vector<1x32xf32>
    %211 = math.tanh %210 : vector<1x32xf32>
    %212 = vector.extract_strided_slice %194 {offsets = [0, 96], sizes = [1, 32], strides = [1, 1]} : vector<1x128xf32> to vector<1x32xf32>
    %213 = arith.negf %212 : vector<1x32xf32>
    %214 = math.exp %213 : vector<1x32xf32>
    %cst_62 = arith.constant 1.000000e+00 : f32
    %215 = vector.broadcast %cst_62 : f32 to vector<1x32xf32>
    %216 = arith.addf %215, %214 : vector<1x32xf32>
    %217 = arith.divf %215, %216 : vector<1x32xf32>
    %218 = arith.mulf %209, %164 : vector<1x32xf32>
    %219 = arith.mulf %203, %211 : vector<1x32xf32>
    %220 = arith.addf %218, %219 : vector<1x32xf32>
    %221 = math.tanh %220 : vector<1x32xf32>
    %222 = arith.mulf %217, %221 : vector<1x32xf32>
    %223 = vector.extract_strided_slice %197 {offsets = [0, 0], sizes = [1, 32], strides = [1, 1]} : vector<1x128xf32> to vector<1x32xf32>
    %224 = arith.negf %223 : vector<1x32xf32>
    %225 = math.exp %224 : vector<1x32xf32>
    %cst_63 = arith.constant 1.000000e+00 : f32
    %226 = vector.broadcast %cst_63 : f32 to vector<1x32xf32>
    %227 = arith.addf %226, %225 : vector<1x32xf32>
    %228 = arith.divf %226, %227 : vector<1x32xf32>
    %229 = vector.extract_strided_slice %197 {offsets = [0, 32], sizes = [1, 32], strides = [1, 1]} : vector<1x128xf32> to vector<1x32xf32>
    %230 = arith.negf %229 : vector<1x32xf32>
    %231 = math.exp %230 : vector<1x32xf32>
    %cst_64 = arith.constant 1.000000e+00 : f32
    %232 = vector.broadcast %cst_64 : f32 to vector<1x32xf32>
    %233 = arith.addf %232, %231 : vector<1x32xf32>
    %234 = arith.divf %232, %233 : vector<1x32xf32>
    %235 = vector.extract_strided_slice %197 {offsets = [0, 64], sizes = [1, 32], strides = [1, 1]} : vector<1x128xf32> to vector<1x32xf32>
    %236 = math.tanh %235 : vector<1x32xf32>
    %237 = vector.extract_strided_slice %197 {offsets = [0, 96], sizes = [1, 32], strides = [1, 1]} : vector<1x128xf32> to vector<1x32xf32>
    %238 = arith.negf %237 : vector<1x32xf32>
    %239 = math.exp %238 : vector<1x32xf32>
    %cst_65 = arith.constant 1.000000e+00 : f32
    %240 = vector.broadcast %cst_65 : f32 to vector<1x32xf32>
    %241 = arith.addf %240, %239 : vector<1x32xf32>
    %242 = arith.divf %240, %241 : vector<1x32xf32>
    %243 = arith.mulf %234, %189 : vector<1x32xf32>
    %244 = arith.mulf %228, %236 : vector<1x32xf32>
    %245 = arith.addf %243, %244 : vector<1x32xf32>
    %246 = math.tanh %245 : vector<1x32xf32>
    %247 = arith.mulf %242, %246 : vector<1x32xf32>
    %248 = vector.extract_strided_slice %19 {offsets = [4, 0], sizes = [1, 128], strides = [1, 1]} : vector<8x256xf32> to vector<1x128xf32>
    %cst_66 = arith.constant dense<0.000000e+00> : vector<1x128xf32>
    %249 = tpu.matmul %222, %14, %cst_66 {dimension_numbers = #tpu.dot_dimension_numbers<[1], [0], [0], [1], [0, 0, 1, 1], [], []>} : vector<1x32xf32>, vector<32x128xf32>, vector<1x128xf32> -> vector<1x128xf32>
    %250 = arith.addf %248, %249 : vector<1x128xf32>
    %251 = vector.extract_strided_slice %19 {offsets = [3, 128], sizes = [1, 128], strides = [1, 1]} : vector<8x256xf32> to vector<1x128xf32>
    %cst_67 = arith.constant dense<0.000000e+00> : vector<1x128xf32>
    %252 = tpu.matmul %247, %16, %cst_67 {dimension_numbers = #tpu.dot_dimension_numbers<[1], [0], [0], [1], [0, 0, 1, 1], [], []>} : vector<1x32xf32>, vector<32x128xf32>, vector<1x128xf32> -> vector<1x128xf32>
    %253 = arith.addf %251, %252 : vector<1x128xf32>
    %254 = vector.extract_strided_slice %250 {offsets = [0, 0], sizes = [1, 32], strides = [1, 1]} : vector<1x128xf32> to vector<1x32xf32>
    %255 = arith.negf %254 : vector<1x32xf32>
    %256 = math.exp %255 : vector<1x32xf32>
    %cst_68 = arith.constant 1.000000e+00 : f32
    %257 = vector.broadcast %cst_68 : f32 to vector<1x32xf32>
    %258 = arith.addf %257, %256 : vector<1x32xf32>
    %259 = arith.divf %257, %258 : vector<1x32xf32>
    %260 = vector.extract_strided_slice %250 {offsets = [0, 32], sizes = [1, 32], strides = [1, 1]} : vector<1x128xf32> to vector<1x32xf32>
    %261 = arith.negf %260 : vector<1x32xf32>
    %262 = math.exp %261 : vector<1x32xf32>
    %cst_69 = arith.constant 1.000000e+00 : f32
    %263 = vector.broadcast %cst_69 : f32 to vector<1x32xf32>
    %264 = arith.addf %263, %262 : vector<1x32xf32>
    %265 = arith.divf %263, %264 : vector<1x32xf32>
    %266 = vector.extract_strided_slice %250 {offsets = [0, 64], sizes = [1, 32], strides = [1, 1]} : vector<1x128xf32> to vector<1x32xf32>
    %267 = math.tanh %266 : vector<1x32xf32>
    %268 = vector.extract_strided_slice %250 {offsets = [0, 96], sizes = [1, 32], strides = [1, 1]} : vector<1x128xf32> to vector<1x32xf32>
    %269 = arith.negf %268 : vector<1x32xf32>
    %270 = math.exp %269 : vector<1x32xf32>
    %cst_70 = arith.constant 1.000000e+00 : f32
    %271 = vector.broadcast %cst_70 : f32 to vector<1x32xf32>
    %272 = arith.addf %271, %270 : vector<1x32xf32>
    %273 = arith.divf %271, %272 : vector<1x32xf32>
    %274 = arith.mulf %265, %220 : vector<1x32xf32>
    %275 = arith.mulf %259, %267 : vector<1x32xf32>
    %276 = arith.addf %274, %275 : vector<1x32xf32>
    %277 = math.tanh %276 : vector<1x32xf32>
    %278 = arith.mulf %273, %277 : vector<1x32xf32>
    %279 = vector.extract_strided_slice %253 {offsets = [0, 0], sizes = [1, 32], strides = [1, 1]} : vector<1x128xf32> to vector<1x32xf32>
    %280 = arith.negf %279 : vector<1x32xf32>
    %281 = math.exp %280 : vector<1x32xf32>
    %cst_71 = arith.constant 1.000000e+00 : f32
    %282 = vector.broadcast %cst_71 : f32 to vector<1x32xf32>
    %283 = arith.addf %282, %281 : vector<1x32xf32>
    %284 = arith.divf %282, %283 : vector<1x32xf32>
    %285 = vector.extract_strided_slice %253 {offsets = [0, 32], sizes = [1, 32], strides = [1, 1]} : vector<1x128xf32> to vector<1x32xf32>
    %286 = arith.negf %285 : vector<1x32xf32>
    %287 = math.exp %286 : vector<1x32xf32>
    %cst_72 = arith.constant 1.000000e+00 : f32
    %288 = vector.broadcast %cst_72 : f32 to vector<1x32xf32>
    %289 = arith.addf %288, %287 : vector<1x32xf32>
    %290 = arith.divf %288, %289 : vector<1x32xf32>
    %291 = vector.extract_strided_slice %253 {offsets = [0, 64], sizes = [1, 32], strides = [1, 1]} : vector<1x128xf32> to vector<1x32xf32>
    %292 = math.tanh %291 : vector<1x32xf32>
    %293 = vector.extract_strided_slice %253 {offsets = [0, 96], sizes = [1, 32], strides = [1, 1]} : vector<1x128xf32> to vector<1x32xf32>
    %294 = arith.negf %293 : vector<1x32xf32>
    %295 = math.exp %294 : vector<1x32xf32>
    %cst_73 = arith.constant 1.000000e+00 : f32
    %296 = vector.broadcast %cst_73 : f32 to vector<1x32xf32>
    %297 = arith.addf %296, %295 : vector<1x32xf32>
    %298 = arith.divf %296, %297 : vector<1x32xf32>
    %299 = arith.mulf %290, %245 : vector<1x32xf32>
    %300 = arith.mulf %284, %292 : vector<1x32xf32>
    %301 = arith.addf %299, %300 : vector<1x32xf32>
    %302 = math.tanh %301 : vector<1x32xf32>
    %303 = arith.mulf %298, %302 : vector<1x32xf32>
    %304 = vector.extract_strided_slice %19 {offsets = [5, 0], sizes = [1, 128], strides = [1, 1]} : vector<8x256xf32> to vector<1x128xf32>
    %cst_74 = arith.constant dense<0.000000e+00> : vector<1x128xf32>
    %305 = tpu.matmul %278, %14, %cst_74 {dimension_numbers = #tpu.dot_dimension_numbers<[1], [0], [0], [1], [0, 0, 1, 1], [], []>} : vector<1x32xf32>, vector<32x128xf32>, vector<1x128xf32> -> vector<1x128xf32>
    %306 = arith.addf %304, %305 : vector<1x128xf32>
    %307 = vector.extract_strided_slice %19 {offsets = [2, 128], sizes = [1, 128], strides = [1, 1]} : vector<8x256xf32> to vector<1x128xf32>
    %cst_75 = arith.constant dense<0.000000e+00> : vector<1x128xf32>
    %308 = tpu.matmul %303, %16, %cst_75 {dimension_numbers = #tpu.dot_dimension_numbers<[1], [0], [0], [1], [0, 0, 1, 1], [], []>} : vector<1x32xf32>, vector<32x128xf32>, vector<1x128xf32> -> vector<1x128xf32>
    %309 = arith.addf %307, %308 : vector<1x128xf32>
    %310 = vector.extract_strided_slice %306 {offsets = [0, 0], sizes = [1, 32], strides = [1, 1]} : vector<1x128xf32> to vector<1x32xf32>
    %311 = arith.negf %310 : vector<1x32xf32>
    %312 = math.exp %311 : vector<1x32xf32>
    %cst_76 = arith.constant 1.000000e+00 : f32
    %313 = vector.broadcast %cst_76 : f32 to vector<1x32xf32>
    %314 = arith.addf %313, %312 : vector<1x32xf32>
    %315 = arith.divf %313, %314 : vector<1x32xf32>
    %316 = vector.extract_strided_slice %306 {offsets = [0, 32], sizes = [1, 32], strides = [1, 1]} : vector<1x128xf32> to vector<1x32xf32>
    %317 = arith.negf %316 : vector<1x32xf32>
    %318 = math.exp %317 : vector<1x32xf32>
    %cst_77 = arith.constant 1.000000e+00 : f32
    %319 = vector.broadcast %cst_77 : f32 to vector<1x32xf32>
    %320 = arith.addf %319, %318 : vector<1x32xf32>
    %321 = arith.divf %319, %320 : vector<1x32xf32>
    %322 = vector.extract_strided_slice %306 {offsets = [0, 64], sizes = [1, 32], strides = [1, 1]} : vector<1x128xf32> to vector<1x32xf32>
    %323 = math.tanh %322 : vector<1x32xf32>
    %324 = vector.extract_strided_slice %306 {offsets = [0, 96], sizes = [1, 32], strides = [1, 1]} : vector<1x128xf32> to vector<1x32xf32>
    %325 = arith.negf %324 : vector<1x32xf32>
    %326 = math.exp %325 : vector<1x32xf32>
    %cst_78 = arith.constant 1.000000e+00 : f32
    %327 = vector.broadcast %cst_78 : f32 to vector<1x32xf32>
    %328 = arith.addf %327, %326 : vector<1x32xf32>
    %329 = arith.divf %327, %328 : vector<1x32xf32>
    %330 = arith.mulf %321, %276 : vector<1x32xf32>
    %331 = arith.mulf %315, %323 : vector<1x32xf32>
    %332 = arith.addf %330, %331 : vector<1x32xf32>
    %333 = math.tanh %332 : vector<1x32xf32>
    %334 = arith.mulf %329, %333 : vector<1x32xf32>
    %335 = vector.extract_strided_slice %309 {offsets = [0, 0], sizes = [1, 32], strides = [1, 1]} : vector<1x128xf32> to vector<1x32xf32>
    %336 = arith.negf %335 : vector<1x32xf32>
    %337 = math.exp %336 : vector<1x32xf32>
    %cst_79 = arith.constant 1.000000e+00 : f32
    %338 = vector.broadcast %cst_79 : f32 to vector<1x32xf32>
    %339 = arith.addf %338, %337 : vector<1x32xf32>
    %340 = arith.divf %338, %339 : vector<1x32xf32>
    %341 = vector.extract_strided_slice %309 {offsets = [0, 32], sizes = [1, 32], strides = [1, 1]} : vector<1x128xf32> to vector<1x32xf32>
    %342 = arith.negf %341 : vector<1x32xf32>
    %343 = math.exp %342 : vector<1x32xf32>
    %cst_80 = arith.constant 1.000000e+00 : f32
    %344 = vector.broadcast %cst_80 : f32 to vector<1x32xf32>
    %345 = arith.addf %344, %343 : vector<1x32xf32>
    %346 = arith.divf %344, %345 : vector<1x32xf32>
    %347 = vector.extract_strided_slice %309 {offsets = [0, 64], sizes = [1, 32], strides = [1, 1]} : vector<1x128xf32> to vector<1x32xf32>
    %348 = math.tanh %347 : vector<1x32xf32>
    %349 = vector.extract_strided_slice %309 {offsets = [0, 96], sizes = [1, 32], strides = [1, 1]} : vector<1x128xf32> to vector<1x32xf32>
    %350 = arith.negf %349 : vector<1x32xf32>
    %351 = math.exp %350 : vector<1x32xf32>
    %cst_81 = arith.constant 1.000000e+00 : f32
    %352 = vector.broadcast %cst_81 : f32 to vector<1x32xf32>
    %353 = arith.addf %352, %351 : vector<1x32xf32>
    %354 = arith.divf %352, %353 : vector<1x32xf32>
    %355 = arith.mulf %346, %301 : vector<1x32xf32>
    %356 = arith.mulf %340, %348 : vector<1x32xf32>
    %357 = arith.addf %355, %356 : vector<1x32xf32>
    %358 = math.tanh %357 : vector<1x32xf32>
    %359 = arith.mulf %354, %358 : vector<1x32xf32>
    %360 = vector.extract_strided_slice %19 {offsets = [6, 0], sizes = [1, 128], strides = [1, 1]} : vector<8x256xf32> to vector<1x128xf32>
    %cst_82 = arith.constant dense<0.000000e+00> : vector<1x128xf32>
    %361 = tpu.matmul %334, %14, %cst_82 {dimension_numbers = #tpu.dot_dimension_numbers<[1], [0], [0], [1], [0, 0, 1, 1], [], []>} : vector<1x32xf32>, vector<32x128xf32>, vector<1x128xf32> -> vector<1x128xf32>
    %362 = arith.addf %360, %361 : vector<1x128xf32>
    %363 = vector.extract_strided_slice %19 {offsets = [1, 128], sizes = [1, 128], strides = [1, 1]} : vector<8x256xf32> to vector<1x128xf32>
    %cst_83 = arith.constant dense<0.000000e+00> : vector<1x128xf32>
    %364 = tpu.matmul %359, %16, %cst_83 {dimension_numbers = #tpu.dot_dimension_numbers<[1], [0], [0], [1], [0, 0, 1, 1], [], []>} : vector<1x32xf32>, vector<32x128xf32>, vector<1x128xf32> -> vector<1x128xf32>
    %365 = arith.addf %363, %364 : vector<1x128xf32>
    %366 = vector.extract_strided_slice %362 {offsets = [0, 0], sizes = [1, 32], strides = [1, 1]} : vector<1x128xf32> to vector<1x32xf32>
    %367 = arith.negf %366 : vector<1x32xf32>
    %368 = math.exp %367 : vector<1x32xf32>
    %cst_84 = arith.constant 1.000000e+00 : f32
    %369 = vector.broadcast %cst_84 : f32 to vector<1x32xf32>
    %370 = arith.addf %369, %368 : vector<1x32xf32>
    %371 = arith.divf %369, %370 : vector<1x32xf32>
    %372 = vector.extract_strided_slice %362 {offsets = [0, 32], sizes = [1, 32], strides = [1, 1]} : vector<1x128xf32> to vector<1x32xf32>
    %373 = arith.negf %372 : vector<1x32xf32>
    %374 = math.exp %373 : vector<1x32xf32>
    %cst_85 = arith.constant 1.000000e+00 : f32
    %375 = vector.broadcast %cst_85 : f32 to vector<1x32xf32>
    %376 = arith.addf %375, %374 : vector<1x32xf32>
    %377 = arith.divf %375, %376 : vector<1x32xf32>
    %378 = vector.extract_strided_slice %362 {offsets = [0, 64], sizes = [1, 32], strides = [1, 1]} : vector<1x128xf32> to vector<1x32xf32>
    %379 = math.tanh %378 : vector<1x32xf32>
    %380 = vector.extract_strided_slice %362 {offsets = [0, 96], sizes = [1, 32], strides = [1, 1]} : vector<1x128xf32> to vector<1x32xf32>
    %381 = arith.negf %380 : vector<1x32xf32>
    %382 = math.exp %381 : vector<1x32xf32>
    %cst_86 = arith.constant 1.000000e+00 : f32
    %383 = vector.broadcast %cst_86 : f32 to vector<1x32xf32>
    %384 = arith.addf %383, %382 : vector<1x32xf32>
    %385 = arith.divf %383, %384 : vector<1x32xf32>
    %386 = arith.mulf %377, %332 : vector<1x32xf32>
    %387 = arith.mulf %371, %379 : vector<1x32xf32>
    %388 = arith.addf %386, %387 : vector<1x32xf32>
    %389 = math.tanh %388 : vector<1x32xf32>
    %390 = arith.mulf %385, %389 : vector<1x32xf32>
    %391 = vector.extract_strided_slice %365 {offsets = [0, 0], sizes = [1, 32], strides = [1, 1]} : vector<1x128xf32> to vector<1x32xf32>
    %392 = arith.negf %391 : vector<1x32xf32>
    %393 = math.exp %392 : vector<1x32xf32>
    %cst_87 = arith.constant 1.000000e+00 : f32
    %394 = vector.broadcast %cst_87 : f32 to vector<1x32xf32>
    %395 = arith.addf %394, %393 : vector<1x32xf32>
    %396 = arith.divf %394, %395 : vector<1x32xf32>
    %397 = vector.extract_strided_slice %365 {offsets = [0, 32], sizes = [1, 32], strides = [1, 1]} : vector<1x128xf32> to vector<1x32xf32>
    %398 = arith.negf %397 : vector<1x32xf32>
    %399 = math.exp %398 : vector<1x32xf32>
    %cst_88 = arith.constant 1.000000e+00 : f32
    %400 = vector.broadcast %cst_88 : f32 to vector<1x32xf32>
    %401 = arith.addf %400, %399 : vector<1x32xf32>
    %402 = arith.divf %400, %401 : vector<1x32xf32>
    %403 = vector.extract_strided_slice %365 {offsets = [0, 64], sizes = [1, 32], strides = [1, 1]} : vector<1x128xf32> to vector<1x32xf32>
    %404 = math.tanh %403 : vector<1x32xf32>
    %405 = vector.extract_strided_slice %365 {offsets = [0, 96], sizes = [1, 32], strides = [1, 1]} : vector<1x128xf32> to vector<1x32xf32>
    %406 = arith.negf %405 : vector<1x32xf32>
    %407 = math.exp %406 : vector<1x32xf32>
    %cst_89 = arith.constant 1.000000e+00 : f32
    %408 = vector.broadcast %cst_89 : f32 to vector<1x32xf32>
    %409 = arith.addf %408, %407 : vector<1x32xf32>
    %410 = arith.divf %408, %409 : vector<1x32xf32>
    %411 = arith.mulf %402, %357 : vector<1x32xf32>
    %412 = arith.mulf %396, %404 : vector<1x32xf32>
    %413 = arith.addf %411, %412 : vector<1x32xf32>
    %414 = math.tanh %413 : vector<1x32xf32>
    %415 = arith.mulf %410, %414 : vector<1x32xf32>
    %416 = vector.extract_strided_slice %19 {offsets = [7, 0], sizes = [1, 128], strides = [1, 1]} : vector<8x256xf32> to vector<1x128xf32>
    %cst_90 = arith.constant dense<0.000000e+00> : vector<1x128xf32>
    %417 = tpu.matmul %390, %14, %cst_90 {dimension_numbers = #tpu.dot_dimension_numbers<[1], [0], [0], [1], [0, 0, 1, 1], [], []>} : vector<1x32xf32>, vector<32x128xf32>, vector<1x128xf32> -> vector<1x128xf32>
    %418 = arith.addf %416, %417 : vector<1x128xf32>
    %419 = vector.extract_strided_slice %19 {offsets = [0, 128], sizes = [1, 128], strides = [1, 1]} : vector<8x256xf32> to vector<1x128xf32>
    %cst_91 = arith.constant dense<0.000000e+00> : vector<1x128xf32>
    %420 = tpu.matmul %415, %16, %cst_91 {dimension_numbers = #tpu.dot_dimension_numbers<[1], [0], [0], [1], [0, 0, 1, 1], [], []>} : vector<1x32xf32>, vector<32x128xf32>, vector<1x128xf32> -> vector<1x128xf32>
    %421 = arith.addf %419, %420 : vector<1x128xf32>
    %422 = vector.extract_strided_slice %418 {offsets = [0, 0], sizes = [1, 32], strides = [1, 1]} : vector<1x128xf32> to vector<1x32xf32>
    %423 = arith.negf %422 : vector<1x32xf32>
    %424 = math.exp %423 : vector<1x32xf32>
    %cst_92 = arith.constant 1.000000e+00 : f32
    %425 = vector.broadcast %cst_92 : f32 to vector<1x32xf32>
    %426 = arith.addf %425, %424 : vector<1x32xf32>
    %427 = arith.divf %425, %426 : vector<1x32xf32>
    %428 = vector.extract_strided_slice %418 {offsets = [0, 32], sizes = [1, 32], strides = [1, 1]} : vector<1x128xf32> to vector<1x32xf32>
    %429 = arith.negf %428 : vector<1x32xf32>
    %430 = math.exp %429 : vector<1x32xf32>
    %cst_93 = arith.constant 1.000000e+00 : f32
    %431 = vector.broadcast %cst_93 : f32 to vector<1x32xf32>
    %432 = arith.addf %431, %430 : vector<1x32xf32>
    %433 = arith.divf %431, %432 : vector<1x32xf32>
    %434 = vector.extract_strided_slice %418 {offsets = [0, 64], sizes = [1, 32], strides = [1, 1]} : vector<1x128xf32> to vector<1x32xf32>
    %435 = math.tanh %434 : vector<1x32xf32>
    %436 = vector.extract_strided_slice %418 {offsets = [0, 96], sizes = [1, 32], strides = [1, 1]} : vector<1x128xf32> to vector<1x32xf32>
    %437 = arith.negf %436 : vector<1x32xf32>
    %438 = math.exp %437 : vector<1x32xf32>
    %cst_94 = arith.constant 1.000000e+00 : f32
    %439 = vector.broadcast %cst_94 : f32 to vector<1x32xf32>
    %440 = arith.addf %439, %438 : vector<1x32xf32>
    %441 = arith.divf %439, %440 : vector<1x32xf32>
    %442 = arith.mulf %433, %388 : vector<1x32xf32>
    %443 = arith.mulf %427, %435 : vector<1x32xf32>
    %444 = arith.addf %442, %443 : vector<1x32xf32>
    %445 = math.tanh %444 : vector<1x32xf32>
    %446 = arith.mulf %441, %445 : vector<1x32xf32>
    %447 = vector.extract_strided_slice %421 {offsets = [0, 0], sizes = [1, 32], strides = [1, 1]} : vector<1x128xf32> to vector<1x32xf32>
    %448 = arith.negf %447 : vector<1x32xf32>
    %449 = math.exp %448 : vector<1x32xf32>
    %cst_95 = arith.constant 1.000000e+00 : f32
    %450 = vector.broadcast %cst_95 : f32 to vector<1x32xf32>
    %451 = arith.addf %450, %449 : vector<1x32xf32>
    %452 = arith.divf %450, %451 : vector<1x32xf32>
    %453 = vector.extract_strided_slice %421 {offsets = [0, 32], sizes = [1, 32], strides = [1, 1]} : vector<1x128xf32> to vector<1x32xf32>
    %454 = arith.negf %453 : vector<1x32xf32>
    %455 = math.exp %454 : vector<1x32xf32>
    %cst_96 = arith.constant 1.000000e+00 : f32
    %456 = vector.broadcast %cst_96 : f32 to vector<1x32xf32>
    %457 = arith.addf %456, %455 : vector<1x32xf32>
    %458 = arith.divf %456, %457 : vector<1x32xf32>
    %459 = vector.extract_strided_slice %421 {offsets = [0, 64], sizes = [1, 32], strides = [1, 1]} : vector<1x128xf32> to vector<1x32xf32>
    %460 = math.tanh %459 : vector<1x32xf32>
    %461 = vector.extract_strided_slice %421 {offsets = [0, 96], sizes = [1, 32], strides = [1, 1]} : vector<1x128xf32> to vector<1x32xf32>
    %462 = arith.negf %461 : vector<1x32xf32>
    %463 = math.exp %462 : vector<1x32xf32>
    %cst_97 = arith.constant 1.000000e+00 : f32
    %464 = vector.broadcast %cst_97 : f32 to vector<1x32xf32>
    %465 = arith.addf %464, %463 : vector<1x32xf32>
    %466 = arith.divf %464, %465 : vector<1x32xf32>
    %467 = arith.mulf %458, %413 : vector<1x32xf32>
    %468 = arith.mulf %452, %460 : vector<1x32xf32>
    %469 = arith.addf %467, %468 : vector<1x32xf32>
    %470 = math.tanh %469 : vector<1x32xf32>
    %471 = arith.mulf %466, %470 : vector<1x32xf32>
    %472 = tpu.concatenate %54, %110, %166, %222, %278, %334, %390, %446 in 0 : vector<1x32xf32>, vector<1x32xf32>, vector<1x32xf32>, vector<1x32xf32>, vector<1x32xf32>, vector<1x32xf32>, vector<1x32xf32>, vector<1x32xf32> -> vector<8x32xf32>
    %473 = tpu.concatenate %471, %415, %359, %303, %247, %191, %135, %79 in 0 : vector<1x32xf32>, vector<1x32xf32>, vector<1x32xf32>, vector<1x32xf32>, vector<1x32xf32>, vector<1x32xf32>, vector<1x32xf32>, vector<1x32xf32> -> vector<8x32xf32>
    %474 = tpu.concatenate %472, %473 in 1 : vector<8x32xf32>, vector<8x32xf32> -> vector<8x64xf32>
    %c0_98 = arith.constant 0 : index
    %c0_99 = arith.constant 0 : index
    %475 = vector.load %arg6[%c0_98, %c0_99] : memref<64x256xf32, #tpu.memory_space<vmem>>, vector<64x256xf32>
    %c0_100 = arith.constant 0 : index
    %c0_101 = arith.constant 0 : index
    %476 = vector.load %arg7[%c0_100, %c0_101] : memref<1x256xf32, #tpu.memory_space<vmem>>, vector<1x256xf32>
    %c0_102 = arith.constant 0 : index
    %c0_103 = arith.constant 0 : index
    %c0_104 = arith.constant 0 : index
    %477 = vector.load %arg8[%c0_102, %c0_103, %c0_104] : memref<2x32x128xf32, #tpu.memory_space<vmem>>, vector<1x32x128xf32>
    %478 = vector.shape_cast %477 : vector<1x32x128xf32> to vector<32x128xf32>
    %c1_105 = arith.constant 1 : index
    %c0_106 = arith.constant 0 : index
    %c0_107 = arith.constant 0 : index
    %479 = vector.load %arg8[%c1_105, %c0_106, %c0_107] : memref<2x32x128xf32, #tpu.memory_space<vmem>>, vector<1x32x128xf32>
    %480 = vector.shape_cast %479 : vector<1x32x128xf32> to vector<32x128xf32>
    %cst_108 = arith.constant dense<0.000000e+00> : vector<8x256xf32>
    %481 = tpu.matmul %474, %475, %cst_108 {dimension_numbers = #tpu.dot_dimension_numbers<[1], [0], [0], [1], [0, 0, 1, 1], [], []>} : vector<8x64xf32>, vector<64x256xf32>, vector<8x256xf32> -> vector<8x256xf32>
    %482 = vector.broadcast %476 : vector<1x256xf32> to vector<8x256xf32>
    %483 = arith.addf %481, %482 : vector<8x256xf32>
    %cst_109 = arith.constant 0.000000e+00 : f32
    %484 = vector.broadcast %cst_109 : f32 to vector<1x32xf32>
    %cst_110 = arith.constant 0.000000e+00 : f32
    %485 = vector.broadcast %cst_110 : f32 to vector<1x32xf32>
    %cst_111 = arith.constant 0.000000e+00 : f32
    %486 = vector.broadcast %cst_111 : f32 to vector<1x32xf32>
    %cst_112 = arith.constant 0.000000e+00 : f32
    %487 = vector.broadcast %cst_112 : f32 to vector<1x32xf32>
    %488 = vector.extract_strided_slice %483 {offsets = [0, 0], sizes = [1, 128], strides = [1, 1]} : vector<8x256xf32> to vector<1x128xf32>
    %cst_113 = arith.constant dense<0.000000e+00> : vector<1x128xf32>
    %489 = tpu.matmul %484, %478, %cst_113 {dimension_numbers = #tpu.dot_dimension_numbers<[1], [0], [0], [1], [0, 0, 1, 1], [], []>} : vector<1x32xf32>, vector<32x128xf32>, vector<1x128xf32> -> vector<1x128xf32>
    %490 = arith.addf %488, %489 : vector<1x128xf32>
    %491 = vector.extract_strided_slice %483 {offsets = [7, 128], sizes = [1, 128], strides = [1, 1]} : vector<8x256xf32> to vector<1x128xf32>
    %cst_114 = arith.constant dense<0.000000e+00> : vector<1x128xf32>
    %492 = tpu.matmul %486, %480, %cst_114 {dimension_numbers = #tpu.dot_dimension_numbers<[1], [0], [0], [1], [0, 0, 1, 1], [], []>} : vector<1x32xf32>, vector<32x128xf32>, vector<1x128xf32> -> vector<1x128xf32>
    %493 = arith.addf %491, %492 : vector<1x128xf32>
    %494 = vector.extract_strided_slice %490 {offsets = [0, 0], sizes = [1, 32], strides = [1, 1]} : vector<1x128xf32> to vector<1x32xf32>
    %495 = arith.negf %494 : vector<1x32xf32>
    %496 = math.exp %495 : vector<1x32xf32>
    %cst_115 = arith.constant 1.000000e+00 : f32
    %497 = vector.broadcast %cst_115 : f32 to vector<1x32xf32>
    %498 = arith.addf %497, %496 : vector<1x32xf32>
    %499 = arith.divf %497, %498 : vector<1x32xf32>
    %500 = vector.extract_strided_slice %490 {offsets = [0, 32], sizes = [1, 32], strides = [1, 1]} : vector<1x128xf32> to vector<1x32xf32>
    %501 = arith.negf %500 : vector<1x32xf32>
    %502 = math.exp %501 : vector<1x32xf32>
    %cst_116 = arith.constant 1.000000e+00 : f32
    %503 = vector.broadcast %cst_116 : f32 to vector<1x32xf32>
    %504 = arith.addf %503, %502 : vector<1x32xf32>
    %505 = arith.divf %503, %504 : vector<1x32xf32>
    %506 = vector.extract_strided_slice %490 {offsets = [0, 64], sizes = [1, 32], strides = [1, 1]} : vector<1x128xf32> to vector<1x32xf32>
    %507 = math.tanh %506 : vector<1x32xf32>
    %508 = vector.extract_strided_slice %490 {offsets = [0, 96], sizes = [1, 32], strides = [1, 1]} : vector<1x128xf32> to vector<1x32xf32>
    %509 = arith.negf %508 : vector<1x32xf32>
    %510 = math.exp %509 : vector<1x32xf32>
    %cst_117 = arith.constant 1.000000e+00 : f32
    %511 = vector.broadcast %cst_117 : f32 to vector<1x32xf32>
    %512 = arith.addf %511, %510 : vector<1x32xf32>
    %513 = arith.divf %511, %512 : vector<1x32xf32>
    %514 = arith.mulf %505, %485 : vector<1x32xf32>
    %515 = arith.mulf %499, %507 : vector<1x32xf32>
    %516 = arith.addf %514, %515 : vector<1x32xf32>
    %517 = math.tanh %516 : vector<1x32xf32>
    %518 = arith.mulf %513, %517 : vector<1x32xf32>
    %519 = vector.extract_strided_slice %493 {offsets = [0, 0], sizes = [1, 32], strides = [1, 1]} : vector<1x128xf32> to vector<1x32xf32>
    %520 = arith.negf %519 : vector<1x32xf32>
    %521 = math.exp %520 : vector<1x32xf32>
    %cst_118 = arith.constant 1.000000e+00 : f32
    %522 = vector.broadcast %cst_118 : f32 to vector<1x32xf32>
    %523 = arith.addf %522, %521 : vector<1x32xf32>
    %524 = arith.divf %522, %523 : vector<1x32xf32>
    %525 = vector.extract_strided_slice %493 {offsets = [0, 32], sizes = [1, 32], strides = [1, 1]} : vector<1x128xf32> to vector<1x32xf32>
    %526 = arith.negf %525 : vector<1x32xf32>
    %527 = math.exp %526 : vector<1x32xf32>
    %cst_119 = arith.constant 1.000000e+00 : f32
    %528 = vector.broadcast %cst_119 : f32 to vector<1x32xf32>
    %529 = arith.addf %528, %527 : vector<1x32xf32>
    %530 = arith.divf %528, %529 : vector<1x32xf32>
    %531 = vector.extract_strided_slice %493 {offsets = [0, 64], sizes = [1, 32], strides = [1, 1]} : vector<1x128xf32> to vector<1x32xf32>
    %532 = math.tanh %531 : vector<1x32xf32>
    %533 = vector.extract_strided_slice %493 {offsets = [0, 96], sizes = [1, 32], strides = [1, 1]} : vector<1x128xf32> to vector<1x32xf32>
    %534 = arith.negf %533 : vector<1x32xf32>
    %535 = math.exp %534 : vector<1x32xf32>
    %cst_120 = arith.constant 1.000000e+00 : f32
    %536 = vector.broadcast %cst_120 : f32 to vector<1x32xf32>
    %537 = arith.addf %536, %535 : vector<1x32xf32>
    %538 = arith.divf %536, %537 : vector<1x32xf32>
    %539 = arith.mulf %530, %487 : vector<1x32xf32>
    %540 = arith.mulf %524, %532 : vector<1x32xf32>
    %541 = arith.addf %539, %540 : vector<1x32xf32>
    %542 = math.tanh %541 : vector<1x32xf32>
    %543 = arith.mulf %538, %542 : vector<1x32xf32>
    %544 = vector.extract_strided_slice %483 {offsets = [1, 0], sizes = [1, 128], strides = [1, 1]} : vector<8x256xf32> to vector<1x128xf32>
    %cst_121 = arith.constant dense<0.000000e+00> : vector<1x128xf32>
    %545 = tpu.matmul %518, %478, %cst_121 {dimension_numbers = #tpu.dot_dimension_numbers<[1], [0], [0], [1], [0, 0, 1, 1], [], []>} : vector<1x32xf32>, vector<32x128xf32>, vector<1x128xf32> -> vector<1x128xf32>
    %546 = arith.addf %544, %545 : vector<1x128xf32>
    %547 = vector.extract_strided_slice %483 {offsets = [6, 128], sizes = [1, 128], strides = [1, 1]} : vector<8x256xf32> to vector<1x128xf32>
    %cst_122 = arith.constant dense<0.000000e+00> : vector<1x128xf32>
    %548 = tpu.matmul %543, %480, %cst_122 {dimension_numbers = #tpu.dot_dimension_numbers<[1], [0], [0], [1], [0, 0, 1, 1], [], []>} : vector<1x32xf32>, vector<32x128xf32>, vector<1x128xf32> -> vector<1x128xf32>
    %549 = arith.addf %547, %548 : vector<1x128xf32>
    %550 = vector.extract_strided_slice %546 {offsets = [0, 0], sizes = [1, 32], strides = [1, 1]} : vector<1x128xf32> to vector<1x32xf32>
    %551 = arith.negf %550 : vector<1x32xf32>
    %552 = math.exp %551 : vector<1x32xf32>
    %cst_123 = arith.constant 1.000000e+00 : f32
    %553 = vector.broadcast %cst_123 : f32 to vector<1x32xf32>
    %554 = arith.addf %553, %552 : vector<1x32xf32>
    %555 = arith.divf %553, %554 : vector<1x32xf32>
    %556 = vector.extract_strided_slice %546 {offsets = [0, 32], sizes = [1, 32], strides = [1, 1]} : vector<1x128xf32> to vector<1x32xf32>
    %557 = arith.negf %556 : vector<1x32xf32>
    %558 = math.exp %557 : vector<1x32xf32>
    %cst_124 = arith.constant 1.000000e+00 : f32
    %559 = vector.broadcast %cst_124 : f32 to vector<1x32xf32>
    %560 = arith.addf %559, %558 : vector<1x32xf32>
    %561 = arith.divf %559, %560 : vector<1x32xf32>
    %562 = vector.extract_strided_slice %546 {offsets = [0, 64], sizes = [1, 32], strides = [1, 1]} : vector<1x128xf32> to vector<1x32xf32>
    %563 = math.tanh %562 : vector<1x32xf32>
    %564 = vector.extract_strided_slice %546 {offsets = [0, 96], sizes = [1, 32], strides = [1, 1]} : vector<1x128xf32> to vector<1x32xf32>
    %565 = arith.negf %564 : vector<1x32xf32>
    %566 = math.exp %565 : vector<1x32xf32>
    %cst_125 = arith.constant 1.000000e+00 : f32
    %567 = vector.broadcast %cst_125 : f32 to vector<1x32xf32>
    %568 = arith.addf %567, %566 : vector<1x32xf32>
    %569 = arith.divf %567, %568 : vector<1x32xf32>
    %570 = arith.mulf %561, %516 : vector<1x32xf32>
    %571 = arith.mulf %555, %563 : vector<1x32xf32>
    %572 = arith.addf %570, %571 : vector<1x32xf32>
    %573 = math.tanh %572 : vector<1x32xf32>
    %574 = arith.mulf %569, %573 : vector<1x32xf32>
    %575 = vector.extract_strided_slice %549 {offsets = [0, 0], sizes = [1, 32], strides = [1, 1]} : vector<1x128xf32> to vector<1x32xf32>
    %576 = arith.negf %575 : vector<1x32xf32>
    %577 = math.exp %576 : vector<1x32xf32>
    %cst_126 = arith.constant 1.000000e+00 : f32
    %578 = vector.broadcast %cst_126 : f32 to vector<1x32xf32>
    %579 = arith.addf %578, %577 : vector<1x32xf32>
    %580 = arith.divf %578, %579 : vector<1x32xf32>
    %581 = vector.extract_strided_slice %549 {offsets = [0, 32], sizes = [1, 32], strides = [1, 1]} : vector<1x128xf32> to vector<1x32xf32>
    %582 = arith.negf %581 : vector<1x32xf32>
    %583 = math.exp %582 : vector<1x32xf32>
    %cst_127 = arith.constant 1.000000e+00 : f32
    %584 = vector.broadcast %cst_127 : f32 to vector<1x32xf32>
    %585 = arith.addf %584, %583 : vector<1x32xf32>
    %586 = arith.divf %584, %585 : vector<1x32xf32>
    %587 = vector.extract_strided_slice %549 {offsets = [0, 64], sizes = [1, 32], strides = [1, 1]} : vector<1x128xf32> to vector<1x32xf32>
    %588 = math.tanh %587 : vector<1x32xf32>
    %589 = vector.extract_strided_slice %549 {offsets = [0, 96], sizes = [1, 32], strides = [1, 1]} : vector<1x128xf32> to vector<1x32xf32>
    %590 = arith.negf %589 : vector<1x32xf32>
    %591 = math.exp %590 : vector<1x32xf32>
    %cst_128 = arith.constant 1.000000e+00 : f32
    %592 = vector.broadcast %cst_128 : f32 to vector<1x32xf32>
    %593 = arith.addf %592, %591 : vector<1x32xf32>
    %594 = arith.divf %592, %593 : vector<1x32xf32>
    %595 = arith.mulf %586, %541 : vector<1x32xf32>
    %596 = arith.mulf %580, %588 : vector<1x32xf32>
    %597 = arith.addf %595, %596 : vector<1x32xf32>
    %598 = math.tanh %597 : vector<1x32xf32>
    %599 = arith.mulf %594, %598 : vector<1x32xf32>
    %600 = vector.extract_strided_slice %483 {offsets = [2, 0], sizes = [1, 128], strides = [1, 1]} : vector<8x256xf32> to vector<1x128xf32>
    %cst_129 = arith.constant dense<0.000000e+00> : vector<1x128xf32>
    %601 = tpu.matmul %574, %478, %cst_129 {dimension_numbers = #tpu.dot_dimension_numbers<[1], [0], [0], [1], [0, 0, 1, 1], [], []>} : vector<1x32xf32>, vector<32x128xf32>, vector<1x128xf32> -> vector<1x128xf32>
    %602 = arith.addf %600, %601 : vector<1x128xf32>
    %603 = vector.extract_strided_slice %483 {offsets = [5, 128], sizes = [1, 128], strides = [1, 1]} : vector<8x256xf32> to vector<1x128xf32>
    %cst_130 = arith.constant dense<0.000000e+00> : vector<1x128xf32>
    %604 = tpu.matmul %599, %480, %cst_130 {dimension_numbers = #tpu.dot_dimension_numbers<[1], [0], [0], [1], [0, 0, 1, 1], [], []>} : vector<1x32xf32>, vector<32x128xf32>, vector<1x128xf32> -> vector<1x128xf32>
    %605 = arith.addf %603, %604 : vector<1x128xf32>
    %606 = vector.extract_strided_slice %602 {offsets = [0, 0], sizes = [1, 32], strides = [1, 1]} : vector<1x128xf32> to vector<1x32xf32>
    %607 = arith.negf %606 : vector<1x32xf32>
    %608 = math.exp %607 : vector<1x32xf32>
    %cst_131 = arith.constant 1.000000e+00 : f32
    %609 = vector.broadcast %cst_131 : f32 to vector<1x32xf32>
    %610 = arith.addf %609, %608 : vector<1x32xf32>
    %611 = arith.divf %609, %610 : vector<1x32xf32>
    %612 = vector.extract_strided_slice %602 {offsets = [0, 32], sizes = [1, 32], strides = [1, 1]} : vector<1x128xf32> to vector<1x32xf32>
    %613 = arith.negf %612 : vector<1x32xf32>
    %614 = math.exp %613 : vector<1x32xf32>
    %cst_132 = arith.constant 1.000000e+00 : f32
    %615 = vector.broadcast %cst_132 : f32 to vector<1x32xf32>
    %616 = arith.addf %615, %614 : vector<1x32xf32>
    %617 = arith.divf %615, %616 : vector<1x32xf32>
    %618 = vector.extract_strided_slice %602 {offsets = [0, 64], sizes = [1, 32], strides = [1, 1]} : vector<1x128xf32> to vector<1x32xf32>
    %619 = math.tanh %618 : vector<1x32xf32>
    %620 = vector.extract_strided_slice %602 {offsets = [0, 96], sizes = [1, 32], strides = [1, 1]} : vector<1x128xf32> to vector<1x32xf32>
    %621 = arith.negf %620 : vector<1x32xf32>
    %622 = math.exp %621 : vector<1x32xf32>
    %cst_133 = arith.constant 1.000000e+00 : f32
    %623 = vector.broadcast %cst_133 : f32 to vector<1x32xf32>
    %624 = arith.addf %623, %622 : vector<1x32xf32>
    %625 = arith.divf %623, %624 : vector<1x32xf32>
    %626 = arith.mulf %617, %572 : vector<1x32xf32>
    %627 = arith.mulf %611, %619 : vector<1x32xf32>
    %628 = arith.addf %626, %627 : vector<1x32xf32>
    %629 = math.tanh %628 : vector<1x32xf32>
    %630 = arith.mulf %625, %629 : vector<1x32xf32>
    %631 = vector.extract_strided_slice %605 {offsets = [0, 0], sizes = [1, 32], strides = [1, 1]} : vector<1x128xf32> to vector<1x32xf32>
    %632 = arith.negf %631 : vector<1x32xf32>
    %633 = math.exp %632 : vector<1x32xf32>
    %cst_134 = arith.constant 1.000000e+00 : f32
    %634 = vector.broadcast %cst_134 : f32 to vector<1x32xf32>
    %635 = arith.addf %634, %633 : vector<1x32xf32>
    %636 = arith.divf %634, %635 : vector<1x32xf32>
    %637 = vector.extract_strided_slice %605 {offsets = [0, 32], sizes = [1, 32], strides = [1, 1]} : vector<1x128xf32> to vector<1x32xf32>
    %638 = arith.negf %637 : vector<1x32xf32>
    %639 = math.exp %638 : vector<1x32xf32>
    %cst_135 = arith.constant 1.000000e+00 : f32
    %640 = vector.broadcast %cst_135 : f32 to vector<1x32xf32>
    %641 = arith.addf %640, %639 : vector<1x32xf32>
    %642 = arith.divf %640, %641 : vector<1x32xf32>
    %643 = vector.extract_strided_slice %605 {offsets = [0, 64], sizes = [1, 32], strides = [1, 1]} : vector<1x128xf32> to vector<1x32xf32>
    %644 = math.tanh %643 : vector<1x32xf32>
    %645 = vector.extract_strided_slice %605 {offsets = [0, 96], sizes = [1, 32], strides = [1, 1]} : vector<1x128xf32> to vector<1x32xf32>
    %646 = arith.negf %645 : vector<1x32xf32>
    %647 = math.exp %646 : vector<1x32xf32>
    %cst_136 = arith.constant 1.000000e+00 : f32
    %648 = vector.broadcast %cst_136 : f32 to vector<1x32xf32>
    %649 = arith.addf %648, %647 : vector<1x32xf32>
    %650 = arith.divf %648, %649 : vector<1x32xf32>
    %651 = arith.mulf %642, %597 : vector<1x32xf32>
    %652 = arith.mulf %636, %644 : vector<1x32xf32>
    %653 = arith.addf %651, %652 : vector<1x32xf32>
    %654 = math.tanh %653 : vector<1x32xf32>
    %655 = arith.mulf %650, %654 : vector<1x32xf32>
    %656 = vector.extract_strided_slice %483 {offsets = [3, 0], sizes = [1, 128], strides = [1, 1]} : vector<8x256xf32> to vector<1x128xf32>
    %cst_137 = arith.constant dense<0.000000e+00> : vector<1x128xf32>
    %657 = tpu.matmul %630, %478, %cst_137 {dimension_numbers = #tpu.dot_dimension_numbers<[1], [0], [0], [1], [0, 0, 1, 1], [], []>} : vector<1x32xf32>, vector<32x128xf32>, vector<1x128xf32> -> vector<1x128xf32>
    %658 = arith.addf %656, %657 : vector<1x128xf32>
    %659 = vector.extract_strided_slice %483 {offsets = [4, 128], sizes = [1, 128], strides = [1, 1]} : vector<8x256xf32> to vector<1x128xf32>
    %cst_138 = arith.constant dense<0.000000e+00> : vector<1x128xf32>
    %660 = tpu.matmul %655, %480, %cst_138 {dimension_numbers = #tpu.dot_dimension_numbers<[1], [0], [0], [1], [0, 0, 1, 1], [], []>} : vector<1x32xf32>, vector<32x128xf32>, vector<1x128xf32> -> vector<1x128xf32>
    %661 = arith.addf %659, %660 : vector<1x128xf32>
    %662 = vector.extract_strided_slice %658 {offsets = [0, 0], sizes = [1, 32], strides = [1, 1]} : vector<1x128xf32> to vector<1x32xf32>
    %663 = arith.negf %662 : vector<1x32xf32>
    %664 = math.exp %663 : vector<1x32xf32>
    %cst_139 = arith.constant 1.000000e+00 : f32
    %665 = vector.broadcast %cst_139 : f32 to vector<1x32xf32>
    %666 = arith.addf %665, %664 : vector<1x32xf32>
    %667 = arith.divf %665, %666 : vector<1x32xf32>
    %668 = vector.extract_strided_slice %658 {offsets = [0, 32], sizes = [1, 32], strides = [1, 1]} : vector<1x128xf32> to vector<1x32xf32>
    %669 = arith.negf %668 : vector<1x32xf32>
    %670 = math.exp %669 : vector<1x32xf32>
    %cst_140 = arith.constant 1.000000e+00 : f32
    %671 = vector.broadcast %cst_140 : f32 to vector<1x32xf32>
    %672 = arith.addf %671, %670 : vector<1x32xf32>
    %673 = arith.divf %671, %672 : vector<1x32xf32>
    %674 = vector.extract_strided_slice %658 {offsets = [0, 64], sizes = [1, 32], strides = [1, 1]} : vector<1x128xf32> to vector<1x32xf32>
    %675 = math.tanh %674 : vector<1x32xf32>
    %676 = vector.extract_strided_slice %658 {offsets = [0, 96], sizes = [1, 32], strides = [1, 1]} : vector<1x128xf32> to vector<1x32xf32>
    %677 = arith.negf %676 : vector<1x32xf32>
    %678 = math.exp %677 : vector<1x32xf32>
    %cst_141 = arith.constant 1.000000e+00 : f32
    %679 = vector.broadcast %cst_141 : f32 to vector<1x32xf32>
    %680 = arith.addf %679, %678 : vector<1x32xf32>
    %681 = arith.divf %679, %680 : vector<1x32xf32>
    %682 = arith.mulf %673, %628 : vector<1x32xf32>
    %683 = arith.mulf %667, %675 : vector<1x32xf32>
    %684 = arith.addf %682, %683 : vector<1x32xf32>
    %685 = math.tanh %684 : vector<1x32xf32>
    %686 = arith.mulf %681, %685 : vector<1x32xf32>
    %687 = vector.extract_strided_slice %661 {offsets = [0, 0], sizes = [1, 32], strides = [1, 1]} : vector<1x128xf32> to vector<1x32xf32>
    %688 = arith.negf %687 : vector<1x32xf32>
    %689 = math.exp %688 : vector<1x32xf32>
    %cst_142 = arith.constant 1.000000e+00 : f32
    %690 = vector.broadcast %cst_142 : f32 to vector<1x32xf32>
    %691 = arith.addf %690, %689 : vector<1x32xf32>
    %692 = arith.divf %690, %691 : vector<1x32xf32>
    %693 = vector.extract_strided_slice %661 {offsets = [0, 32], sizes = [1, 32], strides = [1, 1]} : vector<1x128xf32> to vector<1x32xf32>
    %694 = arith.negf %693 : vector<1x32xf32>
    %695 = math.exp %694 : vector<1x32xf32>
    %cst_143 = arith.constant 1.000000e+00 : f32
    %696 = vector.broadcast %cst_143 : f32 to vector<1x32xf32>
    %697 = arith.addf %696, %695 : vector<1x32xf32>
    %698 = arith.divf %696, %697 : vector<1x32xf32>
    %699 = vector.extract_strided_slice %661 {offsets = [0, 64], sizes = [1, 32], strides = [1, 1]} : vector<1x128xf32> to vector<1x32xf32>
    %700 = math.tanh %699 : vector<1x32xf32>
    %701 = vector.extract_strided_slice %661 {offsets = [0, 96], sizes = [1, 32], strides = [1, 1]} : vector<1x128xf32> to vector<1x32xf32>
    %702 = arith.negf %701 : vector<1x32xf32>
    %703 = math.exp %702 : vector<1x32xf32>
    %cst_144 = arith.constant 1.000000e+00 : f32
    %704 = vector.broadcast %cst_144 : f32 to vector<1x32xf32>
    %705 = arith.addf %704, %703 : vector<1x32xf32>
    %706 = arith.divf %704, %705 : vector<1x32xf32>
    %707 = arith.mulf %698, %653 : vector<1x32xf32>
    %708 = arith.mulf %692, %700 : vector<1x32xf32>
    %709 = arith.addf %707, %708 : vector<1x32xf32>
    %710 = math.tanh %709 : vector<1x32xf32>
    %711 = arith.mulf %706, %710 : vector<1x32xf32>
    %712 = vector.extract_strided_slice %483 {offsets = [4, 0], sizes = [1, 128], strides = [1, 1]} : vector<8x256xf32> to vector<1x128xf32>
    %cst_145 = arith.constant dense<0.000000e+00> : vector<1x128xf32>
    %713 = tpu.matmul %686, %478, %cst_145 {dimension_numbers = #tpu.dot_dimension_numbers<[1], [0], [0], [1], [0, 0, 1, 1], [], []>} : vector<1x32xf32>, vector<32x128xf32>, vector<1x128xf32> -> vector<1x128xf32>
    %714 = arith.addf %712, %713 : vector<1x128xf32>
    %715 = vector.extract_strided_slice %483 {offsets = [3, 128], sizes = [1, 128], strides = [1, 1]} : vector<8x256xf32> to vector<1x128xf32>
    %cst_146 = arith.constant dense<0.000000e+00> : vector<1x128xf32>
    %716 = tpu.matmul %711, %480, %cst_146 {dimension_numbers = #tpu.dot_dimension_numbers<[1], [0], [0], [1], [0, 0, 1, 1], [], []>} : vector<1x32xf32>, vector<32x128xf32>, vector<1x128xf32> -> vector<1x128xf32>
    %717 = arith.addf %715, %716 : vector<1x128xf32>
    %718 = vector.extract_strided_slice %714 {offsets = [0, 0], sizes = [1, 32], strides = [1, 1]} : vector<1x128xf32> to vector<1x32xf32>
    %719 = arith.negf %718 : vector<1x32xf32>
    %720 = math.exp %719 : vector<1x32xf32>
    %cst_147 = arith.constant 1.000000e+00 : f32
    %721 = vector.broadcast %cst_147 : f32 to vector<1x32xf32>
    %722 = arith.addf %721, %720 : vector<1x32xf32>
    %723 = arith.divf %721, %722 : vector<1x32xf32>
    %724 = vector.extract_strided_slice %714 {offsets = [0, 32], sizes = [1, 32], strides = [1, 1]} : vector<1x128xf32> to vector<1x32xf32>
    %725 = arith.negf %724 : vector<1x32xf32>
    %726 = math.exp %725 : vector<1x32xf32>
    %cst_148 = arith.constant 1.000000e+00 : f32
    %727 = vector.broadcast %cst_148 : f32 to vector<1x32xf32>
    %728 = arith.addf %727, %726 : vector<1x32xf32>
    %729 = arith.divf %727, %728 : vector<1x32xf32>
    %730 = vector.extract_strided_slice %714 {offsets = [0, 64], sizes = [1, 32], strides = [1, 1]} : vector<1x128xf32> to vector<1x32xf32>
    %731 = math.tanh %730 : vector<1x32xf32>
    %732 = vector.extract_strided_slice %714 {offsets = [0, 96], sizes = [1, 32], strides = [1, 1]} : vector<1x128xf32> to vector<1x32xf32>
    %733 = arith.negf %732 : vector<1x32xf32>
    %734 = math.exp %733 : vector<1x32xf32>
    %cst_149 = arith.constant 1.000000e+00 : f32
    %735 = vector.broadcast %cst_149 : f32 to vector<1x32xf32>
    %736 = arith.addf %735, %734 : vector<1x32xf32>
    %737 = arith.divf %735, %736 : vector<1x32xf32>
    %738 = arith.mulf %729, %684 : vector<1x32xf32>
    %739 = arith.mulf %723, %731 : vector<1x32xf32>
    %740 = arith.addf %738, %739 : vector<1x32xf32>
    %741 = math.tanh %740 : vector<1x32xf32>
    %742 = arith.mulf %737, %741 : vector<1x32xf32>
    %743 = vector.extract_strided_slice %717 {offsets = [0, 0], sizes = [1, 32], strides = [1, 1]} : vector<1x128xf32> to vector<1x32xf32>
    %744 = arith.negf %743 : vector<1x32xf32>
    %745 = math.exp %744 : vector<1x32xf32>
    %cst_150 = arith.constant 1.000000e+00 : f32
    %746 = vector.broadcast %cst_150 : f32 to vector<1x32xf32>
    %747 = arith.addf %746, %745 : vector<1x32xf32>
    %748 = arith.divf %746, %747 : vector<1x32xf32>
    %749 = vector.extract_strided_slice %717 {offsets = [0, 32], sizes = [1, 32], strides = [1, 1]} : vector<1x128xf32> to vector<1x32xf32>
    %750 = arith.negf %749 : vector<1x32xf32>
    %751 = math.exp %750 : vector<1x32xf32>
    %cst_151 = arith.constant 1.000000e+00 : f32
    %752 = vector.broadcast %cst_151 : f32 to vector<1x32xf32>
    %753 = arith.addf %752, %751 : vector<1x32xf32>
    %754 = arith.divf %752, %753 : vector<1x32xf32>
    %755 = vector.extract_strided_slice %717 {offsets = [0, 64], sizes = [1, 32], strides = [1, 1]} : vector<1x128xf32> to vector<1x32xf32>
    %756 = math.tanh %755 : vector<1x32xf32>
    %757 = vector.extract_strided_slice %717 {offsets = [0, 96], sizes = [1, 32], strides = [1, 1]} : vector<1x128xf32> to vector<1x32xf32>
    %758 = arith.negf %757 : vector<1x32xf32>
    %759 = math.exp %758 : vector<1x32xf32>
    %cst_152 = arith.constant 1.000000e+00 : f32
    %760 = vector.broadcast %cst_152 : f32 to vector<1x32xf32>
    %761 = arith.addf %760, %759 : vector<1x32xf32>
    %762 = arith.divf %760, %761 : vector<1x32xf32>
    %763 = arith.mulf %754, %709 : vector<1x32xf32>
    %764 = arith.mulf %748, %756 : vector<1x32xf32>
    %765 = arith.addf %763, %764 : vector<1x32xf32>
    %766 = math.tanh %765 : vector<1x32xf32>
    %767 = arith.mulf %762, %766 : vector<1x32xf32>
    %768 = vector.extract_strided_slice %483 {offsets = [5, 0], sizes = [1, 128], strides = [1, 1]} : vector<8x256xf32> to vector<1x128xf32>
    %cst_153 = arith.constant dense<0.000000e+00> : vector<1x128xf32>
    %769 = tpu.matmul %742, %478, %cst_153 {dimension_numbers = #tpu.dot_dimension_numbers<[1], [0], [0], [1], [0, 0, 1, 1], [], []>} : vector<1x32xf32>, vector<32x128xf32>, vector<1x128xf32> -> vector<1x128xf32>
    %770 = arith.addf %768, %769 : vector<1x128xf32>
    %771 = vector.extract_strided_slice %483 {offsets = [2, 128], sizes = [1, 128], strides = [1, 1]} : vector<8x256xf32> to vector<1x128xf32>
    %cst_154 = arith.constant dense<0.000000e+00> : vector<1x128xf32>
    %772 = tpu.matmul %767, %480, %cst_154 {dimension_numbers = #tpu.dot_dimension_numbers<[1], [0], [0], [1], [0, 0, 1, 1], [], []>} : vector<1x32xf32>, vector<32x128xf32>, vector<1x128xf32> -> vector<1x128xf32>
    %773 = arith.addf %771, %772 : vector<1x128xf32>
    %774 = vector.extract_strided_slice %770 {offsets = [0, 0], sizes = [1, 32], strides = [1, 1]} : vector<1x128xf32> to vector<1x32xf32>
    %775 = arith.negf %774 : vector<1x32xf32>
    %776 = math.exp %775 : vector<1x32xf32>
    %cst_155 = arith.constant 1.000000e+00 : f32
    %777 = vector.broadcast %cst_155 : f32 to vector<1x32xf32>
    %778 = arith.addf %777, %776 : vector<1x32xf32>
    %779 = arith.divf %777, %778 : vector<1x32xf32>
    %780 = vector.extract_strided_slice %770 {offsets = [0, 32], sizes = [1, 32], strides = [1, 1]} : vector<1x128xf32> to vector<1x32xf32>
    %781 = arith.negf %780 : vector<1x32xf32>
    %782 = math.exp %781 : vector<1x32xf32>
    %cst_156 = arith.constant 1.000000e+00 : f32
    %783 = vector.broadcast %cst_156 : f32 to vector<1x32xf32>
    %784 = arith.addf %783, %782 : vector<1x32xf32>
    %785 = arith.divf %783, %784 : vector<1x32xf32>
    %786 = vector.extract_strided_slice %770 {offsets = [0, 64], sizes = [1, 32], strides = [1, 1]} : vector<1x128xf32> to vector<1x32xf32>
    %787 = math.tanh %786 : vector<1x32xf32>
    %788 = vector.extract_strided_slice %770 {offsets = [0, 96], sizes = [1, 32], strides = [1, 1]} : vector<1x128xf32> to vector<1x32xf32>
    %789 = arith.negf %788 : vector<1x32xf32>
    %790 = math.exp %789 : vector<1x32xf32>
    %cst_157 = arith.constant 1.000000e+00 : f32
    %791 = vector.broadcast %cst_157 : f32 to vector<1x32xf32>
    %792 = arith.addf %791, %790 : vector<1x32xf32>
    %793 = arith.divf %791, %792 : vector<1x32xf32>
    %794 = arith.mulf %785, %740 : vector<1x32xf32>
    %795 = arith.mulf %779, %787 : vector<1x32xf32>
    %796 = arith.addf %794, %795 : vector<1x32xf32>
    %797 = math.tanh %796 : vector<1x32xf32>
    %798 = arith.mulf %793, %797 : vector<1x32xf32>
    %799 = vector.extract_strided_slice %773 {offsets = [0, 0], sizes = [1, 32], strides = [1, 1]} : vector<1x128xf32> to vector<1x32xf32>
    %800 = arith.negf %799 : vector<1x32xf32>
    %801 = math.exp %800 : vector<1x32xf32>
    %cst_158 = arith.constant 1.000000e+00 : f32
    %802 = vector.broadcast %cst_158 : f32 to vector<1x32xf32>
    %803 = arith.addf %802, %801 : vector<1x32xf32>
    %804 = arith.divf %802, %803 : vector<1x32xf32>
    %805 = vector.extract_strided_slice %773 {offsets = [0, 32], sizes = [1, 32], strides = [1, 1]} : vector<1x128xf32> to vector<1x32xf32>
    %806 = arith.negf %805 : vector<1x32xf32>
    %807 = math.exp %806 : vector<1x32xf32>
    %cst_159 = arith.constant 1.000000e+00 : f32
    %808 = vector.broadcast %cst_159 : f32 to vector<1x32xf32>
    %809 = arith.addf %808, %807 : vector<1x32xf32>
    %810 = arith.divf %808, %809 : vector<1x32xf32>
    %811 = vector.extract_strided_slice %773 {offsets = [0, 64], sizes = [1, 32], strides = [1, 1]} : vector<1x128xf32> to vector<1x32xf32>
    %812 = math.tanh %811 : vector<1x32xf32>
    %813 = vector.extract_strided_slice %773 {offsets = [0, 96], sizes = [1, 32], strides = [1, 1]} : vector<1x128xf32> to vector<1x32xf32>
    %814 = arith.negf %813 : vector<1x32xf32>
    %815 = math.exp %814 : vector<1x32xf32>
    %cst_160 = arith.constant 1.000000e+00 : f32
    %816 = vector.broadcast %cst_160 : f32 to vector<1x32xf32>
    %817 = arith.addf %816, %815 : vector<1x32xf32>
    %818 = arith.divf %816, %817 : vector<1x32xf32>
    %819 = arith.mulf %810, %765 : vector<1x32xf32>
    %820 = arith.mulf %804, %812 : vector<1x32xf32>
    %821 = arith.addf %819, %820 : vector<1x32xf32>
    %822 = math.tanh %821 : vector<1x32xf32>
    %823 = arith.mulf %818, %822 : vector<1x32xf32>
    %824 = vector.extract_strided_slice %483 {offsets = [6, 0], sizes = [1, 128], strides = [1, 1]} : vector<8x256xf32> to vector<1x128xf32>
    %cst_161 = arith.constant dense<0.000000e+00> : vector<1x128xf32>
    %825 = tpu.matmul %798, %478, %cst_161 {dimension_numbers = #tpu.dot_dimension_numbers<[1], [0], [0], [1], [0, 0, 1, 1], [], []>} : vector<1x32xf32>, vector<32x128xf32>, vector<1x128xf32> -> vector<1x128xf32>
    %826 = arith.addf %824, %825 : vector<1x128xf32>
    %827 = vector.extract_strided_slice %483 {offsets = [1, 128], sizes = [1, 128], strides = [1, 1]} : vector<8x256xf32> to vector<1x128xf32>
    %cst_162 = arith.constant dense<0.000000e+00> : vector<1x128xf32>
    %828 = tpu.matmul %823, %480, %cst_162 {dimension_numbers = #tpu.dot_dimension_numbers<[1], [0], [0], [1], [0, 0, 1, 1], [], []>} : vector<1x32xf32>, vector<32x128xf32>, vector<1x128xf32> -> vector<1x128xf32>
    %829 = arith.addf %827, %828 : vector<1x128xf32>
    %830 = vector.extract_strided_slice %826 {offsets = [0, 0], sizes = [1, 32], strides = [1, 1]} : vector<1x128xf32> to vector<1x32xf32>
    %831 = arith.negf %830 : vector<1x32xf32>
    %832 = math.exp %831 : vector<1x32xf32>
    %cst_163 = arith.constant 1.000000e+00 : f32
    %833 = vector.broadcast %cst_163 : f32 to vector<1x32xf32>
    %834 = arith.addf %833, %832 : vector<1x32xf32>
    %835 = arith.divf %833, %834 : vector<1x32xf32>
    %836 = vector.extract_strided_slice %826 {offsets = [0, 32], sizes = [1, 32], strides = [1, 1]} : vector<1x128xf32> to vector<1x32xf32>
    %837 = arith.negf %836 : vector<1x32xf32>
    %838 = math.exp %837 : vector<1x32xf32>
    %cst_164 = arith.constant 1.000000e+00 : f32
    %839 = vector.broadcast %cst_164 : f32 to vector<1x32xf32>
    %840 = arith.addf %839, %838 : vector<1x32xf32>
    %841 = arith.divf %839, %840 : vector<1x32xf32>
    %842 = vector.extract_strided_slice %826 {offsets = [0, 64], sizes = [1, 32], strides = [1, 1]} : vector<1x128xf32> to vector<1x32xf32>
    %843 = math.tanh %842 : vector<1x32xf32>
    %844 = vector.extract_strided_slice %826 {offsets = [0, 96], sizes = [1, 32], strides = [1, 1]} : vector<1x128xf32> to vector<1x32xf32>
    %845 = arith.negf %844 : vector<1x32xf32>
    %846 = math.exp %845 : vector<1x32xf32>
    %cst_165 = arith.constant 1.000000e+00 : f32
    %847 = vector.broadcast %cst_165 : f32 to vector<1x32xf32>
    %848 = arith.addf %847, %846 : vector<1x32xf32>
    %849 = arith.divf %847, %848 : vector<1x32xf32>
    %850 = arith.mulf %841, %796 : vector<1x32xf32>
    %851 = arith.mulf %835, %843 : vector<1x32xf32>
    %852 = arith.addf %850, %851 : vector<1x32xf32>
    %853 = math.tanh %852 : vector<1x32xf32>
    %854 = arith.mulf %849, %853 : vector<1x32xf32>
    %855 = vector.extract_strided_slice %829 {offsets = [0, 0], sizes = [1, 32], strides = [1, 1]} : vector<1x128xf32> to vector<1x32xf32>
    %856 = arith.negf %855 : vector<1x32xf32>
    %857 = math.exp %856 : vector<1x32xf32>
    %cst_166 = arith.constant 1.000000e+00 : f32
    %858 = vector.broadcast %cst_166 : f32 to vector<1x32xf32>
    %859 = arith.addf %858, %857 : vector<1x32xf32>
    %860 = arith.divf %858, %859 : vector<1x32xf32>
    %861 = vector.extract_strided_slice %829 {offsets = [0, 32], sizes = [1, 32], strides = [1, 1]} : vector<1x128xf32> to vector<1x32xf32>
    %862 = arith.negf %861 : vector<1x32xf32>
    %863 = math.exp %862 : vector<1x32xf32>
    %cst_167 = arith.constant 1.000000e+00 : f32
    %864 = vector.broadcast %cst_167 : f32 to vector<1x32xf32>
    %865 = arith.addf %864, %863 : vector<1x32xf32>
    %866 = arith.divf %864, %865 : vector<1x32xf32>
    %867 = vector.extract_strided_slice %829 {offsets = [0, 64], sizes = [1, 32], strides = [1, 1]} : vector<1x128xf32> to vector<1x32xf32>
    %868 = math.tanh %867 : vector<1x32xf32>
    %869 = vector.extract_strided_slice %829 {offsets = [0, 96], sizes = [1, 32], strides = [1, 1]} : vector<1x128xf32> to vector<1x32xf32>
    %870 = arith.negf %869 : vector<1x32xf32>
    %871 = math.exp %870 : vector<1x32xf32>
    %cst_168 = arith.constant 1.000000e+00 : f32
    %872 = vector.broadcast %cst_168 : f32 to vector<1x32xf32>
    %873 = arith.addf %872, %871 : vector<1x32xf32>
    %874 = arith.divf %872, %873 : vector<1x32xf32>
    %875 = arith.mulf %866, %821 : vector<1x32xf32>
    %876 = arith.mulf %860, %868 : vector<1x32xf32>
    %877 = arith.addf %875, %876 : vector<1x32xf32>
    %878 = math.tanh %877 : vector<1x32xf32>
    %879 = arith.mulf %874, %878 : vector<1x32xf32>
    %880 = vector.extract_strided_slice %483 {offsets = [7, 0], sizes = [1, 128], strides = [1, 1]} : vector<8x256xf32> to vector<1x128xf32>
    %cst_169 = arith.constant dense<0.000000e+00> : vector<1x128xf32>
    %881 = tpu.matmul %854, %478, %cst_169 {dimension_numbers = #tpu.dot_dimension_numbers<[1], [0], [0], [1], [0, 0, 1, 1], [], []>} : vector<1x32xf32>, vector<32x128xf32>, vector<1x128xf32> -> vector<1x128xf32>
    %882 = arith.addf %880, %881 : vector<1x128xf32>
    %883 = vector.extract_strided_slice %483 {offsets = [0, 128], sizes = [1, 128], strides = [1, 1]} : vector<8x256xf32> to vector<1x128xf32>
    %cst_170 = arith.constant dense<0.000000e+00> : vector<1x128xf32>
    %884 = tpu.matmul %879, %480, %cst_170 {dimension_numbers = #tpu.dot_dimension_numbers<[1], [0], [0], [1], [0, 0, 1, 1], [], []>} : vector<1x32xf32>, vector<32x128xf32>, vector<1x128xf32> -> vector<1x128xf32>
    %885 = arith.addf %883, %884 : vector<1x128xf32>
    %886 = vector.extract_strided_slice %882 {offsets = [0, 0], sizes = [1, 32], strides = [1, 1]} : vector<1x128xf32> to vector<1x32xf32>
    %887 = arith.negf %886 : vector<1x32xf32>
    %888 = math.exp %887 : vector<1x32xf32>
    %cst_171 = arith.constant 1.000000e+00 : f32
    %889 = vector.broadcast %cst_171 : f32 to vector<1x32xf32>
    %890 = arith.addf %889, %888 : vector<1x32xf32>
    %891 = arith.divf %889, %890 : vector<1x32xf32>
    %892 = vector.extract_strided_slice %882 {offsets = [0, 32], sizes = [1, 32], strides = [1, 1]} : vector<1x128xf32> to vector<1x32xf32>
    %893 = arith.negf %892 : vector<1x32xf32>
    %894 = math.exp %893 : vector<1x32xf32>
    %cst_172 = arith.constant 1.000000e+00 : f32
    %895 = vector.broadcast %cst_172 : f32 to vector<1x32xf32>
    %896 = arith.addf %895, %894 : vector<1x32xf32>
    %897 = arith.divf %895, %896 : vector<1x32xf32>
    %898 = vector.extract_strided_slice %882 {offsets = [0, 64], sizes = [1, 32], strides = [1, 1]} : vector<1x128xf32> to vector<1x32xf32>
    %899 = math.tanh %898 : vector<1x32xf32>
    %900 = vector.extract_strided_slice %882 {offsets = [0, 96], sizes = [1, 32], strides = [1, 1]} : vector<1x128xf32> to vector<1x32xf32>
    %901 = arith.negf %900 : vector<1x32xf32>
    %902 = math.exp %901 : vector<1x32xf32>
    %cst_173 = arith.constant 1.000000e+00 : f32
    %903 = vector.broadcast %cst_173 : f32 to vector<1x32xf32>
    %904 = arith.addf %903, %902 : vector<1x32xf32>
    %905 = arith.divf %903, %904 : vector<1x32xf32>
    %906 = arith.mulf %897, %852 : vector<1x32xf32>
    %907 = arith.mulf %891, %899 : vector<1x32xf32>
    %908 = arith.addf %906, %907 : vector<1x32xf32>
    %909 = math.tanh %908 : vector<1x32xf32>
    %910 = arith.mulf %905, %909 : vector<1x32xf32>
    %911 = vector.extract_strided_slice %885 {offsets = [0, 0], sizes = [1, 32], strides = [1, 1]} : vector<1x128xf32> to vector<1x32xf32>
    %912 = arith.negf %911 : vector<1x32xf32>
    %913 = math.exp %912 : vector<1x32xf32>
    %cst_174 = arith.constant 1.000000e+00 : f32
    %914 = vector.broadcast %cst_174 : f32 to vector<1x32xf32>
    %915 = arith.addf %914, %913 : vector<1x32xf32>
    %916 = arith.divf %914, %915 : vector<1x32xf32>
    %917 = vector.extract_strided_slice %885 {offsets = [0, 32], sizes = [1, 32], strides = [1, 1]} : vector<1x128xf32> to vector<1x32xf32>
    %918 = arith.negf %917 : vector<1x32xf32>
    %919 = math.exp %918 : vector<1x32xf32>
    %cst_175 = arith.constant 1.000000e+00 : f32
    %920 = vector.broadcast %cst_175 : f32 to vector<1x32xf32>
    %921 = arith.addf %920, %919 : vector<1x32xf32>
    %922 = arith.divf %920, %921 : vector<1x32xf32>
    %923 = vector.extract_strided_slice %885 {offsets = [0, 64], sizes = [1, 32], strides = [1, 1]} : vector<1x128xf32> to vector<1x32xf32>
    %924 = math.tanh %923 : vector<1x32xf32>
    %925 = vector.extract_strided_slice %885 {offsets = [0, 96], sizes = [1, 32], strides = [1, 1]} : vector<1x128xf32> to vector<1x32xf32>
    %926 = arith.negf %925 : vector<1x32xf32>
    %927 = math.exp %926 : vector<1x32xf32>
    %cst_176 = arith.constant 1.000000e+00 : f32
    %928 = vector.broadcast %cst_176 : f32 to vector<1x32xf32>
    %929 = arith.addf %928, %927 : vector<1x32xf32>
    %930 = arith.divf %928, %929 : vector<1x32xf32>
    %931 = arith.mulf %922, %877 : vector<1x32xf32>
    %932 = arith.mulf %916, %924 : vector<1x32xf32>
    %933 = arith.addf %931, %932 : vector<1x32xf32>
    %934 = math.tanh %933 : vector<1x32xf32>
    %935 = arith.mulf %930, %934 : vector<1x32xf32>
    %936 = tpu.concatenate %518, %574, %630, %686, %742, %798, %854, %910 in 0 : vector<1x32xf32>, vector<1x32xf32>, vector<1x32xf32>, vector<1x32xf32>, vector<1x32xf32>, vector<1x32xf32>, vector<1x32xf32>, vector<1x32xf32> -> vector<8x32xf32>
    %937 = tpu.concatenate %935, %879, %823, %767, %711, %655, %599, %543 in 0 : vector<1x32xf32>, vector<1x32xf32>, vector<1x32xf32>, vector<1x32xf32>, vector<1x32xf32>, vector<1x32xf32>, vector<1x32xf32>, vector<1x32xf32> -> vector<8x32xf32>
    %938 = tpu.concatenate %936, %937 in 1 : vector<8x32xf32>, vector<8x32xf32> -> vector<8x64xf32>
    %cst_177 = arith.constant dense<0.000000e+00> : vector<8x64xf32>
    %939 = tpu.matmul %938, %0, %cst_177 {dimension_numbers = #tpu.dot_dimension_numbers<[1], [0], [0], [1], [0, 0, 1, 1], [], []>} : vector<8x64xf32>, vector<64x64xf32>, vector<8x64xf32> -> vector<8x64xf32>
    %940 = vector.broadcast %1 : vector<1x64xf32> to vector<8x64xf32>
    %941 = arith.addf %939, %940 : vector<8x64xf32>
    %cst_178 = arith.constant dense<0.000000e+00> : vector<8x64xf32>
    %942 = tpu.matmul %9, %2, %cst_178 {dimension_numbers = #tpu.dot_dimension_numbers<[1], [0], [0], [1], [0, 0, 1, 1], [], []>} : vector<8x64xf32>, vector<64x64xf32>, vector<8x64xf32> -> vector<8x64xf32>
    %943 = vector.broadcast %3 : vector<1x64xf32> to vector<8x64xf32>
    %944 = arith.addf %942, %943 : vector<8x64xf32>
    %cst_179 = arith.constant dense<0.000000e+00> : vector<8x64xf32>
    %945 = tpu.matmul %9, %4, %cst_179 {dimension_numbers = #tpu.dot_dimension_numbers<[1], [0], [0], [1], [0, 0, 1, 1], [], []>} : vector<8x64xf32>, vector<64x64xf32>, vector<8x64xf32> -> vector<8x64xf32>
    %946 = vector.broadcast %5 : vector<1x64xf32> to vector<8x64xf32>
    %947 = arith.addf %945, %946 : vector<8x64xf32>
    %948 = vector.extract_strided_slice %941 {offsets = [0, 0], sizes = [8, 16], strides = [1, 1]} : vector<8x64xf32> to vector<8x16xf32>
    %949 = vector.extract_strided_slice %944 {offsets = [0, 0], sizes = [8, 16], strides = [1, 1]} : vector<8x64xf32> to vector<8x16xf32>
    %cst_180 = arith.constant dense<0.000000e+00> : vector<8x8xf32>
    %950 = tpu.matmul %948, %949, %cst_180 {dimension_numbers = #tpu.dot_dimension_numbers<[1], [1], [0], [0], [0, 0, 1, 0], [], []>} : vector<8x16xf32>, vector<8x16xf32>, vector<8x8xf32> -> vector<8x8xf32>
    %cst_181 = arith.constant 2.500000e-01 : f32
    %951 = vector.broadcast %cst_181 : f32 to vector<8x8xf32>
    %952 = arith.mulf %950, %951 : vector<8x8xf32>
    %cst_182 = arith.constant dense<0xFF800000> : vector<8xf32>
    %953 = vector.multi_reduction <maximumf>, %952, %cst_182 [1] : vector<8x8xf32> to vector<8xf32>
    %954 = vector.shape_cast %953 : vector<8xf32> to vector<8x1xf32>
    %955 = vector.broadcast %954 : vector<8x1xf32> to vector<8x8xf32>
    %956 = arith.subf %952, %955 : vector<8x8xf32>
    %957 = math.exp %956 : vector<8x8xf32>
    %cst_183 = arith.constant dense<0.000000e+00> : vector<8xf32>
    %958 = vector.multi_reduction <add>, %957, %cst_183 [1] : vector<8x8xf32> to vector<8xf32>
    %959 = vector.shape_cast %958 : vector<8xf32> to vector<8x1xf32>
    %960 = tpu.reciprocal %959 {approx = true} : vector<8x1xf32> -> vector<8x1xf32>
    %961 = vector.broadcast %960 : vector<8x1xf32> to vector<8x8xf32>
    %962 = arith.mulf %957, %961 : vector<8x8xf32>
    %963 = vector.extract_strided_slice %947 {offsets = [0, 0], sizes = [8, 16], strides = [1, 1]} : vector<8x64xf32> to vector<8x16xf32>
    %cst_184 = arith.constant dense<0.000000e+00> : vector<8x16xf32>
    %964 = tpu.matmul %962, %963, %cst_184 {dimension_numbers = #tpu.dot_dimension_numbers<[1], [0], [0], [1], [0, 0, 1, 1], [], []>} : vector<8x8xf32>, vector<8x16xf32>, vector<8x16xf32> -> vector<8x16xf32>
    %965 = vector.extract_strided_slice %941 {offsets = [0, 16], sizes = [8, 16], strides = [1, 1]} : vector<8x64xf32> to vector<8x16xf32>
    %966 = vector.extract_strided_slice %944 {offsets = [0, 16], sizes = [8, 16], strides = [1, 1]} : vector<8x64xf32> to vector<8x16xf32>
    %cst_185 = arith.constant dense<0.000000e+00> : vector<8x8xf32>
    %967 = tpu.matmul %965, %966, %cst_185 {dimension_numbers = #tpu.dot_dimension_numbers<[1], [1], [0], [0], [0, 0, 1, 0], [], []>} : vector<8x16xf32>, vector<8x16xf32>, vector<8x8xf32> -> vector<8x8xf32>
    %cst_186 = arith.constant 2.500000e-01 : f32
    %968 = vector.broadcast %cst_186 : f32 to vector<8x8xf32>
    %969 = arith.mulf %967, %968 : vector<8x8xf32>
    %cst_187 = arith.constant dense<0xFF800000> : vector<8xf32>
    %970 = vector.multi_reduction <maximumf>, %969, %cst_187 [1] : vector<8x8xf32> to vector<8xf32>
    %971 = vector.shape_cast %970 : vector<8xf32> to vector<8x1xf32>
    %972 = vector.broadcast %971 : vector<8x1xf32> to vector<8x8xf32>
    %973 = arith.subf %969, %972 : vector<8x8xf32>
    %974 = math.exp %973 : vector<8x8xf32>
    %cst_188 = arith.constant dense<0.000000e+00> : vector<8xf32>
    %975 = vector.multi_reduction <add>, %974, %cst_188 [1] : vector<8x8xf32> to vector<8xf32>
    %976 = vector.shape_cast %975 : vector<8xf32> to vector<8x1xf32>
    %977 = tpu.reciprocal %976 {approx = true} : vector<8x1xf32> -> vector<8x1xf32>
    %978 = vector.broadcast %977 : vector<8x1xf32> to vector<8x8xf32>
    %979 = arith.mulf %974, %978 : vector<8x8xf32>
    %980 = vector.extract_strided_slice %947 {offsets = [0, 16], sizes = [8, 16], strides = [1, 1]} : vector<8x64xf32> to vector<8x16xf32>
    %cst_189 = arith.constant dense<0.000000e+00> : vector<8x16xf32>
    %981 = tpu.matmul %979, %980, %cst_189 {dimension_numbers = #tpu.dot_dimension_numbers<[1], [0], [0], [1], [0, 0, 1, 1], [], []>} : vector<8x8xf32>, vector<8x16xf32>, vector<8x16xf32> -> vector<8x16xf32>
    %982 = vector.extract_strided_slice %941 {offsets = [0, 32], sizes = [8, 16], strides = [1, 1]} : vector<8x64xf32> to vector<8x16xf32>
    %983 = vector.extract_strided_slice %944 {offsets = [0, 32], sizes = [8, 16], strides = [1, 1]} : vector<8x64xf32> to vector<8x16xf32>
    %cst_190 = arith.constant dense<0.000000e+00> : vector<8x8xf32>
    %984 = tpu.matmul %982, %983, %cst_190 {dimension_numbers = #tpu.dot_dimension_numbers<[1], [1], [0], [0], [0, 0, 1, 0], [], []>} : vector<8x16xf32>, vector<8x16xf32>, vector<8x8xf32> -> vector<8x8xf32>
    %cst_191 = arith.constant 2.500000e-01 : f32
    %985 = vector.broadcast %cst_191 : f32 to vector<8x8xf32>
    %986 = arith.mulf %984, %985 : vector<8x8xf32>
    %cst_192 = arith.constant dense<0xFF800000> : vector<8xf32>
    %987 = vector.multi_reduction <maximumf>, %986, %cst_192 [1] : vector<8x8xf32> to vector<8xf32>
    %988 = vector.shape_cast %987 : vector<8xf32> to vector<8x1xf32>
    %989 = vector.broadcast %988 : vector<8x1xf32> to vector<8x8xf32>
    %990 = arith.subf %986, %989 : vector<8x8xf32>
    %991 = math.exp %990 : vector<8x8xf32>
    %cst_193 = arith.constant dense<0.000000e+00> : vector<8xf32>
    %992 = vector.multi_reduction <add>, %991, %cst_193 [1] : vector<8x8xf32> to vector<8xf32>
    %993 = vector.shape_cast %992 : vector<8xf32> to vector<8x1xf32>
    %994 = tpu.reciprocal %993 {approx = true} : vector<8x1xf32> -> vector<8x1xf32>
    %995 = vector.broadcast %994 : vector<8x1xf32> to vector<8x8xf32>
    %996 = arith.mulf %991, %995 : vector<8x8xf32>
    %997 = vector.extract_strided_slice %947 {offsets = [0, 32], sizes = [8, 16], strides = [1, 1]} : vector<8x64xf32> to vector<8x16xf32>
    %cst_194 = arith.constant dense<0.000000e+00> : vector<8x16xf32>
    %998 = tpu.matmul %996, %997, %cst_194 {dimension_numbers = #tpu.dot_dimension_numbers<[1], [0], [0], [1], [0, 0, 1, 1], [], []>} : vector<8x8xf32>, vector<8x16xf32>, vector<8x16xf32> -> vector<8x16xf32>
    %999 = vector.extract_strided_slice %941 {offsets = [0, 48], sizes = [8, 16], strides = [1, 1]} : vector<8x64xf32> to vector<8x16xf32>
    %1000 = vector.extract_strided_slice %944 {offsets = [0, 48], sizes = [8, 16], strides = [1, 1]} : vector<8x64xf32> to vector<8x16xf32>
    %cst_195 = arith.constant dense<0.000000e+00> : vector<8x8xf32>
    %1001 = tpu.matmul %999, %1000, %cst_195 {dimension_numbers = #tpu.dot_dimension_numbers<[1], [1], [0], [0], [0, 0, 1, 0], [], []>} : vector<8x16xf32>, vector<8x16xf32>, vector<8x8xf32> -> vector<8x8xf32>
    %cst_196 = arith.constant 2.500000e-01 : f32
    %1002 = vector.broadcast %cst_196 : f32 to vector<8x8xf32>
    %1003 = arith.mulf %1001, %1002 : vector<8x8xf32>
    %cst_197 = arith.constant dense<0xFF800000> : vector<8xf32>
    %1004 = vector.multi_reduction <maximumf>, %1003, %cst_197 [1] : vector<8x8xf32> to vector<8xf32>
    %1005 = vector.shape_cast %1004 : vector<8xf32> to vector<8x1xf32>
    %1006 = vector.broadcast %1005 : vector<8x1xf32> to vector<8x8xf32>
    %1007 = arith.subf %1003, %1006 : vector<8x8xf32>
    %1008 = math.exp %1007 : vector<8x8xf32>
    %cst_198 = arith.constant dense<0.000000e+00> : vector<8xf32>
    %1009 = vector.multi_reduction <add>, %1008, %cst_198 [1] : vector<8x8xf32> to vector<8xf32>
    %1010 = vector.shape_cast %1009 : vector<8xf32> to vector<8x1xf32>
    %1011 = tpu.reciprocal %1010 {approx = true} : vector<8x1xf32> -> vector<8x1xf32>
    %1012 = vector.broadcast %1011 : vector<8x1xf32> to vector<8x8xf32>
    %1013 = arith.mulf %1008, %1012 : vector<8x8xf32>
    %1014 = vector.extract_strided_slice %947 {offsets = [0, 48], sizes = [8, 16], strides = [1, 1]} : vector<8x64xf32> to vector<8x16xf32>
    %cst_199 = arith.constant dense<0.000000e+00> : vector<8x16xf32>
    %1015 = tpu.matmul %1013, %1014, %cst_199 {dimension_numbers = #tpu.dot_dimension_numbers<[1], [0], [0], [1], [0, 0, 1, 1], [], []>} : vector<8x8xf32>, vector<8x16xf32>, vector<8x16xf32> -> vector<8x16xf32>
    %1016 = tpu.concatenate %964, %981, %998, %1015 in 1 : vector<8x16xf32>, vector<8x16xf32>, vector<8x16xf32>, vector<8x16xf32> -> vector<8x64xf32>
    %cst_200 = arith.constant dense<0.000000e+00> : vector<8x64xf32>
    %1017 = tpu.matmul %1016, %6, %cst_200 {dimension_numbers = #tpu.dot_dimension_numbers<[1], [0], [0], [1], [0, 0, 1, 1], [], []>} : vector<8x64xf32>, vector<64x64xf32>, vector<8x64xf32> -> vector<8x64xf32>
    %1018 = vector.broadcast %7 : vector<1x64xf32> to vector<8x64xf32>
    %1019 = arith.addf %1017, %1018 : vector<8x64xf32>
    %cst_201 = arith.constant dense<0.000000e+00> : vector<8x64xf32>
    %1020 = tpu.matmul %1019, %0, %cst_201 {dimension_numbers = #tpu.dot_dimension_numbers<[1], [0], [0], [1], [0, 0, 1, 1], [], []>} : vector<8x64xf32>, vector<64x64xf32>, vector<8x64xf32> -> vector<8x64xf32>
    %1021 = vector.broadcast %1 : vector<1x64xf32> to vector<8x64xf32>
    %1022 = arith.addf %1020, %1021 : vector<8x64xf32>
    %cst_202 = arith.constant dense<0.000000e+00> : vector<8x64xf32>
    %1023 = tpu.matmul %10, %2, %cst_202 {dimension_numbers = #tpu.dot_dimension_numbers<[1], [0], [0], [1], [0, 0, 1, 1], [], []>} : vector<8x64xf32>, vector<64x64xf32>, vector<8x64xf32> -> vector<8x64xf32>
    %1024 = vector.broadcast %3 : vector<1x64xf32> to vector<8x64xf32>
    %1025 = arith.addf %1023, %1024 : vector<8x64xf32>
    %cst_203 = arith.constant dense<0.000000e+00> : vector<8x64xf32>
    %1026 = tpu.matmul %10, %4, %cst_203 {dimension_numbers = #tpu.dot_dimension_numbers<[1], [0], [0], [1], [0, 0, 1, 1], [], []>} : vector<8x64xf32>, vector<64x64xf32>, vector<8x64xf32> -> vector<8x64xf32>
    %1027 = vector.broadcast %5 : vector<1x64xf32> to vector<8x64xf32>
    %1028 = arith.addf %1026, %1027 : vector<8x64xf32>
    %1029 = vector.extract_strided_slice %1022 {offsets = [0, 0], sizes = [8, 16], strides = [1, 1]} : vector<8x64xf32> to vector<8x16xf32>
    %1030 = vector.extract_strided_slice %1025 {offsets = [0, 0], sizes = [8, 16], strides = [1, 1]} : vector<8x64xf32> to vector<8x16xf32>
    %cst_204 = arith.constant dense<0.000000e+00> : vector<8x8xf32>
    %1031 = tpu.matmul %1029, %1030, %cst_204 {dimension_numbers = #tpu.dot_dimension_numbers<[1], [1], [0], [0], [0, 0, 1, 0], [], []>} : vector<8x16xf32>, vector<8x16xf32>, vector<8x8xf32> -> vector<8x8xf32>
    %cst_205 = arith.constant 2.500000e-01 : f32
    %1032 = vector.broadcast %cst_205 : f32 to vector<8x8xf32>
    %1033 = arith.mulf %1031, %1032 : vector<8x8xf32>
    %cst_206 = arith.constant dense<0xFF800000> : vector<8xf32>
    %1034 = vector.multi_reduction <maximumf>, %1033, %cst_206 [1] : vector<8x8xf32> to vector<8xf32>
    %1035 = vector.shape_cast %1034 : vector<8xf32> to vector<8x1xf32>
    %1036 = vector.broadcast %1035 : vector<8x1xf32> to vector<8x8xf32>
    %1037 = arith.subf %1033, %1036 : vector<8x8xf32>
    %1038 = math.exp %1037 : vector<8x8xf32>
    %cst_207 = arith.constant dense<0.000000e+00> : vector<8xf32>
    %1039 = vector.multi_reduction <add>, %1038, %cst_207 [1] : vector<8x8xf32> to vector<8xf32>
    %1040 = vector.shape_cast %1039 : vector<8xf32> to vector<8x1xf32>
    %1041 = tpu.reciprocal %1040 {approx = true} : vector<8x1xf32> -> vector<8x1xf32>
    %1042 = vector.broadcast %1041 : vector<8x1xf32> to vector<8x8xf32>
    %1043 = arith.mulf %1038, %1042 : vector<8x8xf32>
    %1044 = vector.extract_strided_slice %1028 {offsets = [0, 0], sizes = [8, 16], strides = [1, 1]} : vector<8x64xf32> to vector<8x16xf32>
    %cst_208 = arith.constant dense<0.000000e+00> : vector<8x16xf32>
    %1045 = tpu.matmul %1043, %1044, %cst_208 {dimension_numbers = #tpu.dot_dimension_numbers<[1], [0], [0], [1], [0, 0, 1, 1], [], []>} : vector<8x8xf32>, vector<8x16xf32>, vector<8x16xf32> -> vector<8x16xf32>
    %1046 = vector.extract_strided_slice %1022 {offsets = [0, 16], sizes = [8, 16], strides = [1, 1]} : vector<8x64xf32> to vector<8x16xf32>
    %1047 = vector.extract_strided_slice %1025 {offsets = [0, 16], sizes = [8, 16], strides = [1, 1]} : vector<8x64xf32> to vector<8x16xf32>
    %cst_209 = arith.constant dense<0.000000e+00> : vector<8x8xf32>
    %1048 = tpu.matmul %1046, %1047, %cst_209 {dimension_numbers = #tpu.dot_dimension_numbers<[1], [1], [0], [0], [0, 0, 1, 0], [], []>} : vector<8x16xf32>, vector<8x16xf32>, vector<8x8xf32> -> vector<8x8xf32>
    %cst_210 = arith.constant 2.500000e-01 : f32
    %1049 = vector.broadcast %cst_210 : f32 to vector<8x8xf32>
    %1050 = arith.mulf %1048, %1049 : vector<8x8xf32>
    %cst_211 = arith.constant dense<0xFF800000> : vector<8xf32>
    %1051 = vector.multi_reduction <maximumf>, %1050, %cst_211 [1] : vector<8x8xf32> to vector<8xf32>
    %1052 = vector.shape_cast %1051 : vector<8xf32> to vector<8x1xf32>
    %1053 = vector.broadcast %1052 : vector<8x1xf32> to vector<8x8xf32>
    %1054 = arith.subf %1050, %1053 : vector<8x8xf32>
    %1055 = math.exp %1054 : vector<8x8xf32>
    %cst_212 = arith.constant dense<0.000000e+00> : vector<8xf32>
    %1056 = vector.multi_reduction <add>, %1055, %cst_212 [1] : vector<8x8xf32> to vector<8xf32>
    %1057 = vector.shape_cast %1056 : vector<8xf32> to vector<8x1xf32>
    %1058 = tpu.reciprocal %1057 {approx = true} : vector<8x1xf32> -> vector<8x1xf32>
    %1059 = vector.broadcast %1058 : vector<8x1xf32> to vector<8x8xf32>
    %1060 = arith.mulf %1055, %1059 : vector<8x8xf32>
    %1061 = vector.extract_strided_slice %1028 {offsets = [0, 16], sizes = [8, 16], strides = [1, 1]} : vector<8x64xf32> to vector<8x16xf32>
    %cst_213 = arith.constant dense<0.000000e+00> : vector<8x16xf32>
    %1062 = tpu.matmul %1060, %1061, %cst_213 {dimension_numbers = #tpu.dot_dimension_numbers<[1], [0], [0], [1], [0, 0, 1, 1], [], []>} : vector<8x8xf32>, vector<8x16xf32>, vector<8x16xf32> -> vector<8x16xf32>
    %1063 = vector.extract_strided_slice %1022 {offsets = [0, 32], sizes = [8, 16], strides = [1, 1]} : vector<8x64xf32> to vector<8x16xf32>
    %1064 = vector.extract_strided_slice %1025 {offsets = [0, 32], sizes = [8, 16], strides = [1, 1]} : vector<8x64xf32> to vector<8x16xf32>
    %cst_214 = arith.constant dense<0.000000e+00> : vector<8x8xf32>
    %1065 = tpu.matmul %1063, %1064, %cst_214 {dimension_numbers = #tpu.dot_dimension_numbers<[1], [1], [0], [0], [0, 0, 1, 0], [], []>} : vector<8x16xf32>, vector<8x16xf32>, vector<8x8xf32> -> vector<8x8xf32>
    %cst_215 = arith.constant 2.500000e-01 : f32
    %1066 = vector.broadcast %cst_215 : f32 to vector<8x8xf32>
    %1067 = arith.mulf %1065, %1066 : vector<8x8xf32>
    %cst_216 = arith.constant dense<0xFF800000> : vector<8xf32>
    %1068 = vector.multi_reduction <maximumf>, %1067, %cst_216 [1] : vector<8x8xf32> to vector<8xf32>
    %1069 = vector.shape_cast %1068 : vector<8xf32> to vector<8x1xf32>
    %1070 = vector.broadcast %1069 : vector<8x1xf32> to vector<8x8xf32>
    %1071 = arith.subf %1067, %1070 : vector<8x8xf32>
    %1072 = math.exp %1071 : vector<8x8xf32>
    %cst_217 = arith.constant dense<0.000000e+00> : vector<8xf32>
    %1073 = vector.multi_reduction <add>, %1072, %cst_217 [1] : vector<8x8xf32> to vector<8xf32>
    %1074 = vector.shape_cast %1073 : vector<8xf32> to vector<8x1xf32>
    %1075 = tpu.reciprocal %1074 {approx = true} : vector<8x1xf32> -> vector<8x1xf32>
    %1076 = vector.broadcast %1075 : vector<8x1xf32> to vector<8x8xf32>
    %1077 = arith.mulf %1072, %1076 : vector<8x8xf32>
    %1078 = vector.extract_strided_slice %1028 {offsets = [0, 32], sizes = [8, 16], strides = [1, 1]} : vector<8x64xf32> to vector<8x16xf32>
    %cst_218 = arith.constant dense<0.000000e+00> : vector<8x16xf32>
    %1079 = tpu.matmul %1077, %1078, %cst_218 {dimension_numbers = #tpu.dot_dimension_numbers<[1], [0], [0], [1], [0, 0, 1, 1], [], []>} : vector<8x8xf32>, vector<8x16xf32>, vector<8x16xf32> -> vector<8x16xf32>
    %1080 = vector.extract_strided_slice %1022 {offsets = [0, 48], sizes = [8, 16], strides = [1, 1]} : vector<8x64xf32> to vector<8x16xf32>
    %1081 = vector.extract_strided_slice %1025 {offsets = [0, 48], sizes = [8, 16], strides = [1, 1]} : vector<8x64xf32> to vector<8x16xf32>
    %cst_219 = arith.constant dense<0.000000e+00> : vector<8x8xf32>
    %1082 = tpu.matmul %1080, %1081, %cst_219 {dimension_numbers = #tpu.dot_dimension_numbers<[1], [1], [0], [0], [0, 0, 1, 0], [], []>} : vector<8x16xf32>, vector<8x16xf32>, vector<8x8xf32> -> vector<8x8xf32>
    %cst_220 = arith.constant 2.500000e-01 : f32
    %1083 = vector.broadcast %cst_220 : f32 to vector<8x8xf32>
    %1084 = arith.mulf %1082, %1083 : vector<8x8xf32>
    %cst_221 = arith.constant dense<0xFF800000> : vector<8xf32>
    %1085 = vector.multi_reduction <maximumf>, %1084, %cst_221 [1] : vector<8x8xf32> to vector<8xf32>
    %1086 = vector.shape_cast %1085 : vector<8xf32> to vector<8x1xf32>
    %1087 = vector.broadcast %1086 : vector<8x1xf32> to vector<8x8xf32>
    %1088 = arith.subf %1084, %1087 : vector<8x8xf32>
    %1089 = math.exp %1088 : vector<8x8xf32>
    %cst_222 = arith.constant dense<0.000000e+00> : vector<8xf32>
    %1090 = vector.multi_reduction <add>, %1089, %cst_222 [1] : vector<8x8xf32> to vector<8xf32>
    %1091 = vector.shape_cast %1090 : vector<8xf32> to vector<8x1xf32>
    %1092 = tpu.reciprocal %1091 {approx = true} : vector<8x1xf32> -> vector<8x1xf32>
    %1093 = vector.broadcast %1092 : vector<8x1xf32> to vector<8x8xf32>
    %1094 = arith.mulf %1089, %1093 : vector<8x8xf32>
    %1095 = vector.extract_strided_slice %1028 {offsets = [0, 48], sizes = [8, 16], strides = [1, 1]} : vector<8x64xf32> to vector<8x16xf32>
    %cst_223 = arith.constant dense<0.000000e+00> : vector<8x16xf32>
    %1096 = tpu.matmul %1094, %1095, %cst_223 {dimension_numbers = #tpu.dot_dimension_numbers<[1], [0], [0], [1], [0, 0, 1, 1], [], []>} : vector<8x8xf32>, vector<8x16xf32>, vector<8x16xf32> -> vector<8x16xf32>
    %1097 = tpu.concatenate %1045, %1062, %1079, %1096 in 1 : vector<8x16xf32>, vector<8x16xf32>, vector<8x16xf32>, vector<8x16xf32> -> vector<8x64xf32>
    %cst_224 = arith.constant dense<0.000000e+00> : vector<8x64xf32>
    %1098 = tpu.matmul %1097, %6, %cst_224 {dimension_numbers = #tpu.dot_dimension_numbers<[1], [0], [0], [1], [0, 0, 1, 1], [], []>} : vector<8x64xf32>, vector<64x64xf32>, vector<8x64xf32> -> vector<8x64xf32>
    %1099 = vector.broadcast %7 : vector<1x64xf32> to vector<8x64xf32>
    %1100 = arith.addf %1098, %1099 : vector<8x64xf32>
    %cst_225 = arith.constant dense<0.000000e+00> : vector<8x8xf32>
    %1101 = tpu.matmul %1100, %8, %cst_225 {dimension_numbers = #tpu.dot_dimension_numbers<[1], [1], [0], [0], [0, 0, 1, 0], [], []>} : vector<8x64xf32>, vector<8x64xf32>, vector<8x8xf32> -> vector<8x8xf32>
    %cst_226 = arith.constant dense<0xFF800000> : vector<8xf32>
    %1102 = vector.multi_reduction <maximumf>, %1101, %cst_226 [1] : vector<8x8xf32> to vector<8xf32>
    %1103 = vector.shape_cast %1102 : vector<8xf32> to vector<8x1xf32>
    %1104 = vector.broadcast %1103 : vector<8x1xf32> to vector<8x8xf32>
    %1105 = arith.subf %1101, %1104 : vector<8x8xf32>
    %1106 = math.exp %1105 : vector<8x8xf32>
    %cst_227 = arith.constant dense<0.000000e+00> : vector<8xf32>
    %1107 = vector.multi_reduction <add>, %1106, %cst_227 [1] : vector<8x8xf32> to vector<8xf32>
    %1108 = vector.shape_cast %1107 : vector<8xf32> to vector<8x1xf32>
    %1109 = tpu.reciprocal %1108 {approx = true} : vector<8x1xf32> -> vector<8x1xf32>
    %1110 = vector.broadcast %1109 : vector<8x1xf32> to vector<8x8xf32>
    %1111 = arith.mulf %1106, %1110 : vector<8x8xf32>
    %cst_228 = arith.constant dense<0.000000e+00> : vector<8x64xf32>
    %1112 = tpu.matmul %1111, %8, %cst_228 {dimension_numbers = #tpu.dot_dimension_numbers<[1], [0], [0], [1], [0, 0, 1, 1], [], []>} : vector<8x8xf32>, vector<8x64xf32>, vector<8x64xf32> -> vector<8x64xf32>
    %1113 = tpu.concatenate %1112, %938, %1100 in 1 : vector<8x64xf32>, vector<8x64xf32>, vector<8x64xf32> -> vector<8x192xf32>
    %c0_229 = arith.constant 0 : index
    %c0_230 = arith.constant 0 : index
    %1114 = vector.load %arg17[%c0_229, %c0_230] : memref<192x64xf32, #tpu.memory_space<vmem>>, vector<192x64xf32>
    %cst_231 = arith.constant dense<0.000000e+00> : vector<8x64xf32>
    %1115 = tpu.matmul %1113, %1114, %cst_231 {dimension_numbers = #tpu.dot_dimension_numbers<[1], [0], [0], [1], [0, 0, 1, 1], [], []>} : vector<8x192xf32>, vector<192x64xf32>, vector<8x64xf32> -> vector<8x64xf32>
    %c0_232 = arith.constant 0 : index
    %c0_233 = arith.constant 0 : index
    %1116 = vector.load %arg18[%c0_232, %c0_233] : memref<1x64xf32, #tpu.memory_space<vmem>>, vector<1x64xf32>
    %1117 = vector.broadcast %1116 : vector<1x64xf32> to vector<8x64xf32>
    %1118 = arith.addf %1115, %1117 : vector<8x64xf32>
    %c0_234 = arith.constant 0 : index
    %c0_235 = arith.constant 0 : index
    %1119 = vector.load %arg19[%c0_234, %c0_235] : memref<8x64xf32, #tpu.memory_space<vmem>>, vector<8x64xf32>
    tpu.vector_store %arg19[%c0_234, %c0_235], %1118 {strides = array<i32>} : memref<8x64xf32, #tpu.memory_space<vmem>>, vector<8x64xf32>,
    return
  }
}

</mosaic_0001>

<llo_original>
// kernel: tpu_custom_call.1
$region0: #{tpu_custom_call.1}
  #allocation0 [shape = 'u32[]', space=smem, size = 0x4, offset = 0x4, fixed_abs, tag = 'smem constant byte address 0x4 - core index']
  #allocation1 [shape = 'u32[144,128]{1,0:T(1,128)}', space=vmem, size = 0x12000, scoped, tag = 'internal scratch']
  %s0 = inlined_call_operand.hbm [shape: f32[8,64], index: 0, kind: input, shape index: {}]
  %s1 = inlined_call_operand.hbm [shape: f32[8,64], index: 1, kind: input, shape index: {}]
  %s2 = inlined_call_operand.hbm [shape: f32[8,64], index: 2, kind: input, shape index: {}]
  %s3 = inlined_call_operand.vmem [shape: f32[64,256], index: 3, kind: input, shape index: {}]
  %s4 = inlined_call_operand.vmem [shape: f32[1,256], index: 4, kind: input, shape index: {}]
  %s5 = inlined_call_operand.vmem [shape: f32[2,32,128], index: 5, kind: input, shape index: {}]
  %s6 = inlined_call_operand.vmem [shape: f32[64,256], index: 6, kind: input, shape index: {}]
  %s7 = inlined_call_operand.vmem [shape: f32[1,256], index: 7, kind: input, shape index: {}]
  %s8 = inlined_call_operand.hbm [shape: f32[2,32,128], index: 8, kind: input, shape index: {}]
  %s9 = inlined_call_operand.hbm [shape: f32[64,64], index: 9, kind: input, shape index: {}]
  %s10 = inlined_call_operand.vmem [shape: f32[1,64], index: 10, kind: input, shape index: {}]
  %s11 = inlined_call_operand.hbm [shape: f32[64,64], index: 11, kind: input, shape index: {}]
  %s12 = inlined_call_operand.vmem [shape: f32[1,64], index: 12, kind: input, shape index: {}]
  %s13 = inlined_call_operand.hbm [shape: f32[64,64], index: 13, kind: input, shape index: {}]
  %s14 = inlined_call_operand.vmem [shape: f32[1,64], index: 14, kind: input, shape index: {}]
  %s15 = inlined_call_operand.hbm [shape: f32[64,64], index: 15, kind: input, shape index: {}]
  %s16 = inlined_call_operand.vmem [shape: f32[1,64], index: 16, kind: input, shape index: {}]
  %s17 = inlined_call_operand.vmem [shape: f32[192,64], index: 17, kind: input, shape index: {}]
  %s18 = inlined_call_operand.vmem [shape: f32[1,64], index: 18, kind: input, shape index: {}]
  %s19 = inlined_call_operand.hbm [shape: f32[8,64], index: 19, kind: output, shape index: {}]
  %s20 = sld [smem:[#allocation0]]
  $region118: #{tpu_custom_call.1} parent=0
    _
  %s22 = ssub.s32 1, %s20
  %s23 = scalar_select 0, %s22, %s20
  $region1: #{tpu_custom_call.1} parent=0
    #allocation2 [shape = 'u8[4096]{0}', space=vmem, size = 0x1000, scoped, tag = 'input window, operand 0, single buffered']
    #allocation3 [shape = 's32[1]{0}', space=sflag, size = 0x4, scoped, tag = 'scoped memory for tpu_custom_call.1']
    #allocation4 [shape = 's32[1]{0}', space=sflag, size = 0x4, scoped, tag = 'scoped memory for tpu_custom_call.1']
    #allocation5 [shape = 'u8[4096]{0}', space=vmem, size = 0x1000, scoped, tag = 'input window, operand 1, single buffered']
    #allocation6 [shape = 's32[1]{0}', space=sflag, size = 0x4, scoped, tag = 'scoped memory for tpu_custom_call.1']
    #allocation7 [shape = 'u8[4096]{0}', space=vmem, size = 0x1000, scoped, tag = 'input window, operand 2, single buffered']
    #allocation8 [shape = 'u8[32768]{0}', space=vmem, size = 0x8000, scoped, tag = 'input window, operand 8, single buffered']
    #allocation9 [shape = 's32[1]{0}', space=sflag, size = 0x4, scoped, tag = 'scoped memory for tpu_custom_call.1']
    #allocation10 [shape = 'u8[32768]{0}', space=vmem, size = 0x8000, scoped, tag = 'input window, operand 9, single buffered']
    #allocation11 [shape = 'u8[32768]{0}', space=vmem, size = 0x8000, scoped, tag = 'input window, operand 11, single buffered']
    #allocation12 [shape = 's32[1]{0}', space=sflag, size = 0x4, scoped, tag = 'scoped memory for tpu_custom_call.1']
    #allocation13 [shape = 'u8[32768]{0}', space=vmem, size = 0x8000, scoped, tag = 'input window, operand 13, single buffered']
    #allocation14 [shape = 'u8[32768]{0}', space=vmem, size = 0x8000, scoped, tag = 'input window, operand 15, single buffered']
    #allocation15 [shape = 's32[1]{0}', space=sflag, size = 0x4, scoped, tag = 'scoped memory for tpu_custom_call.1']
    #allocation16 [shape = 'u8[4096]{0}', space=vmem, size = 0x1000, scoped, tag = 'output window, operand 0, single buffered']
    %24 = vsyncpa [#allocation3], 0
    %25 = vsyncpa [#allocation6], 0
    %26 = vsyncpa [#allocation9], 0
    %27 = vsyncpa [#allocation12], 0
    %28 = vsyncpa [#allocation15], 0
    %29 = vsyncpa [#allocation4], 0
    // Predicated region
    $region2: #{tpu_custom_call.1} parent=1 // pred_check
      _
    $region3: #{tpu_custom_call.1} parent=1 // pred_check_branch
      %31 = sbr.rel (0) target = $region5
    $region4: #{tpu_custom_call.1} parent=1 // pred_region
      %s33 = ssub.s32 128, 128
      %34 = vsyncadd [#allocation3], %s33
      %s36 = sshll.u32 [#allocation2], 4
      %s37 = int_to_ptr.vmem [resolvable:$true] %s36
      %39 = dma.hbm_to_vmem [thread:$0]  %s0, 128, %s37, [#allocation3]
    $region5: #{tpu_custom_call.1} parent=1 // pred_fallthru
      _
    // Predicated region
    $region6: #{tpu_custom_call.1} parent=1 // pred_check
      _
    $region7: #{tpu_custom_call.1} parent=1 // pred_check_branch
      %41 = sbr.rel (0) target = $region9
    $region8: #{tpu_custom_call.1} parent=1 // pred_region
      %s43 = ssub.s32 128, 128
      %44 = vsyncadd [#allocation6], %s43
      %s46 = sshll.u32 [#allocation5], 4
      %s47 = int_to_ptr.vmem [resolvable:$true] %s46
      %49 = dma.hbm_to_vmem [thread:$0]  %s1, 128, %s47, [#allocation6]
    $region9: #{tpu_custom_call.1} parent=1 // pred_fallthru
      _
    // Predicated region
    $region10: #{tpu_custom_call.1} parent=1 // pred_check
      _
    $region11: #{tpu_custom_call.1} parent=1 // pred_check_branch
      %51 = sbr.rel (0) target = $region13
    $region12: #{tpu_custom_call.1} parent=1 // pred_region
      %s53 = ssub.s32 128, 128
      %54 = vsyncadd [#allocation6], %s53
      %s56 = sshll.u32 [#allocation7], 4
      %s57 = int_to_ptr.vmem [resolvable:$true] %s56
      %59 = dma.hbm_to_vmem [thread:$0]  %s2, 128, %s57, [#allocation6]
    $region13: #{tpu_custom_call.1} parent=1 // pred_fallthru
      _
    // Predicated region
    $region14: #{tpu_custom_call.1} parent=1 // pred_check
      _
    $region15: #{tpu_custom_call.1} parent=1 // pred_check_branch
      %61 = sbr.rel (0) target = $region17
    $region16: #{tpu_custom_call.1} parent=1 // pred_region
      _
    $region17: #{tpu_custom_call.1} parent=1 // pred_fallthru
      _
    // Predicated region
    $region18: #{tpu_custom_call.1} parent=1 // pred_check
      _
    $region19: #{tpu_custom_call.1} parent=1 // pred_check_branch
      %63 = sbr.rel (0) target = $region21
    $region20: #{tpu_custom_call.1} parent=1 // pred_region
      _
    $region21: #{tpu_custom_call.1} parent=1 // pred_fallthru
      _
    // Predicated region
    $region22: #{tpu_custom_call.1} parent=1 // pred_check
      _
    $region23: #{tpu_custom_call.1} parent=1 // pred_check_branch
      %65 = sbr.rel (0) target = $region25
    $region24: #{tpu_custom_call.1} parent=1 // pred_region
      _
    $region25: #{tpu_custom_call.1} parent=1 // pred_fallthru
      _
    // Predicated region
    $region26: #{tpu_custom_call.1} parent=1 // pred_check
      _
    $region27: #{tpu_custom_call.1} parent=1 // pred_check_branch
      %67 = sbr.rel (0) target = $region29
    $region28: #{tpu_custom_call.1} parent=1 // pred_region
      _
    $region29: #{tpu_custom_call.1} parent=1 // pred_fallthru
      _
    // Predicated region
    $region30: #{tpu_custom_call.1} parent=1 // pred_check
      _
    $region31: #{tpu_custom_call.1} parent=1 // pred_check_branch
      %69 = sbr.rel (0) target = $region33
    $region32: #{tpu_custom_call.1} parent=1 // pred_region
      _
    $region33: #{tpu_custom_call.1} parent=1 // pred_fallthru
      _
    // Predicated region
    $region34: #{tpu_custom_call.1} parent=1 // pred_check
      _
    $region35: #{tpu_custom_call.1} parent=1 // pred_check_branch
      %71 = sbr.rel (0) target = $region37
    $region36: #{tpu_custom_call.1} parent=1 // pred_region
      %s73 = ssub.s32 1024, 1024
      %74 = vsyncadd [#allocation9], %s73
      %s75 = sshll.u32 [#allocation8], 4
      %s76 = int_to_ptr.vmem [resolvable:$true] %s75
      %81 = dma.hbm_to_vmem [thread:$0]  %s8, 1024, %s76, [#allocation9], 128, 128, 8
    $region37: #{tpu_custom_call.1} parent=1 // pred_fallthru
      _
    // Predicated region
    $region38: #{tpu_custom_call.1} parent=1 // pred_check
      _
    $region39: #{tpu_custom_call.1} parent=1 // pred_check_branch
      %83 = sbr.rel (0) target = $region41
    $region40: #{tpu_custom_call.1} parent=1 // pred_region
      %s85 = ssub.s32 1024, 1024
      %86 = vsyncadd [#allocation9], %s85
      %s87 = sshll.u32 [#allocation10], 4
      %s88 = int_to_ptr.vmem [resolvable:$true] %s87
      %93 = dma.hbm_to_vmem [thread:$0]  %s9, 1024, %s88, [#allocation9], 128, 128, 8
    $region41: #{tpu_custom_call.1} parent=1 // pred_fallthru
      _
    // Predicated region
    $region42: #{tpu_custom_call.1} parent=1 // pred_check
      _
    $region43: #{tpu_custom_call.1} parent=1 // pred_check_branch
      %95 = sbr.rel (0) target = $region45
    $region44: #{tpu_custom_call.1} parent=1 // pred_region
      _
    $region45: #{tpu_custom_call.1} parent=1 // pred_fallthru
      _
    // Predicated region
    $region46: #{tpu_custom_call.1} parent=1 // pred_check
      _
    $region47: #{tpu_custom_call.1} parent=1 // pred_check_branch
      %97 = sbr.rel (0) target = $region49
    $region48: #{tpu_custom_call.1} parent=1 // pred_region
      %s99 = ssub.s32 1024, 1024
      %100 = vsyncadd [#allocation12], %s99
      %s101 = sshll.u32 [#allocation11], 4
      %s102 = int_to_ptr.vmem [resolvable:$true] %s101
      %107 = dma.hbm_to_vmem [thread:$0]  %s11, 1024, %s102, [#allocation12], 128, 128, 8
    $region49: #{tpu_custom_call.1} parent=1 // pred_fallthru
      _
    // Predicated region
    $region50: #{tpu_custom_call.1} parent=1 // pred_check
      _
    $region51: #{tpu_custom_call.1} parent=1 // pred_check_branch
      %109 = sbr.rel (0) target = $region53
    $region52: #{tpu_custom_call.1} parent=1 // pred_region
      _
    $region53: #{tpu_custom_call.1} parent=1 // pred_fallthru
      _
    // Predicated region
    $region54: #{tpu_custom_call.1} parent=1 // pred_check
      _
    $region55: #{tpu_custom_call.1} parent=1 // pred_check_branch
      %111 = sbr.rel (0) target = $region57
    $region56: #{tpu_custom_call.1} parent=1 // pred_region
      %s113 = ssub.s32 1024, 1024
      %114 = vsyncadd [#allocation12], %s113
      %s115 = sshll.u32 [#allocation13], 4
      %s116 = int_to_ptr.vmem [resolvable:$true] %s115
      %121 = dma.hbm_to_vmem [thread:$0]  %s13, 1024, %s116, [#allocation12], 128, 128, 8
    $region57: #{tpu_custom_call.1} parent=1 // pred_fallthru
      _
    // Predicated region
    $region58: #{tpu_custom_call.1} parent=1 // pred_check
      _
    $region59: #{tpu_custom_call.1} parent=1 // pred_check_branch
      %123 = sbr.rel (0) target = $region61
    $region60: #{tpu_custom_call.1} parent=1 // pred_region
      _
    $region61: #{tpu_custom_call.1} parent=1 // pred_fallthru
      _
    // Predicated region
    $region62: #{tpu_custom_call.1} parent=1 // pred_check
      _
    $region63: #{tpu_custom_call.1} parent=1 // pred_check_branch
      %125 = sbr.rel (0) target = $region65
    $region64: #{tpu_custom_call.1} parent=1 // pred_region
      %s127 = ssub.s32 1024, 1024
      %128 = vsyncadd [#allocation15], %s127
      %s129 = sshll.u32 [#allocation14], 4
      %s130 = int_to_ptr.vmem [resolvable:$true] %s129
      %135 = dma.hbm_to_vmem [thread:$0]  %s15, 1024, %s130, [#allocation15], 128, 128, 8
    $region65: #{tpu_custom_call.1} parent=1 // pred_fallthru
      _
    // Predicated region
    $region66: #{tpu_custom_call.1} parent=1 // pred_check
      _
    $region67: #{tpu_custom_call.1} parent=1 // pred_check_branch
      %137 = sbr.rel (0) target = $region69
    $region68: #{tpu_custom_call.1} parent=1 // pred_region
      _
    $region69: #{tpu_custom_call.1} parent=1 // pred_fallthru
      _
    // Predicated region
    $region70: #{tpu_custom_call.1} parent=1 // pred_check
      _
    $region71: #{tpu_custom_call.1} parent=1 // pred_check_branch
      %139 = sbr.rel (0) target = $region73
    $region72: #{tpu_custom_call.1} parent=1 // pred_region
      _
    $region73: #{tpu_custom_call.1} parent=1 // pred_fallthru
      _
    // Predicated region
    $region74: #{tpu_custom_call.1} parent=1 // pred_check
      _
    $region75: #{tpu_custom_call.1} parent=1 // pred_check_branch
      %141 = sbr.rel (0) target = $region77
    $region76: #{tpu_custom_call.1} parent=1 // pred_region
      _
    $region77: #{tpu_custom_call.1} parent=1 // pred_fallthru
      _
    // Predicated region
    $region78: #{tpu_custom_call.1} parent=1 // pred_check
      _
    $region79: #{tpu_custom_call.1} parent=1 // pred_check_branch
      %143 = sbr.rel (0) target = $region81
    $region80: #{tpu_custom_call.1} parent=1 // pred_region
      %144 = dma.done [#allocation3], 128
    $region81: #{tpu_custom_call.1} parent=1 // pred_fallthru
      _
    // Predicated region
    $region82: #{tpu_custom_call.1} parent=1 // pred_check
      _
    $region83: #{tpu_custom_call.1} parent=1 // pred_check_branch
      %146 = sbr.rel (0) target = $region85
    $region84: #{tpu_custom_call.1} parent=1 // pred_region
      %147 = dma.done [#allocation6], 128
    $region85: #{tpu_custom_call.1} parent=1 // pred_fallthru
      _
    // Predicated region
    $region86: #{tpu_custom_call.1} parent=1 // pred_check
      _
    $region87: #{tpu_custom_call.1} parent=1 // pred_check_branch
      %149 = sbr.rel (0) target = $region89
    $region88: #{tpu_custom_call.1} parent=1 // pred_region
      %150 = dma.done [#allocation6], 128
    $region89: #{tpu_custom_call.1} parent=1 // pred_fallthru
      _
    // Predicated region
    $region90: #{tpu_custom_call.1} parent=1 // pred_check
      _
    $region91: #{tpu_custom_call.1} parent=1 // pred_check_branch
      %152 = sbr.rel (0) target = $region93
    $region92: #{tpu_custom_call.1} parent=1 // pred_region
      %153 = dma.done [#allocation9], 1024
    $region93: #{tpu_custom_call.1} parent=1 // pred_fallthru
      _
    // Predicated region
    $region94: #{tpu_custom_call.1} parent=1 // pred_check
      _
    $region95: #{tpu_custom_call.1} parent=1 // pred_check_branch
      %155 = sbr.rel (0) target = $region97
    $region96: #{tpu_custom_call.1} parent=1 // pred_region
      %156 = dma.done [#allocation9], 1024
    $region97: #{tpu_custom_call.1} parent=1 // pred_fallthru
      _
    // Predicated region
    $region98: #{tpu_custom_call.1} parent=1 // pred_check
      _
    $region99: #{tpu_custom_call.1} parent=1 // pred_check_branch
      %158 = sbr.rel (0) target = $region101
    $region100: #{tpu_custom_call.1} parent=1 // pred_region
      %159 = dma.done [#allocation12], 1024
    $region101: #{tpu_custom_call.1} parent=1 // pred_fallthru
      _
    // Predicated region
    $region102: #{tpu_custom_call.1} parent=1 // pred_check
      _
    $region103: #{tpu_custom_call.1} parent=1 // pred_check_branch
      %161 = sbr.rel (0) target = $region105
    $region104: #{tpu_custom_call.1} parent=1 // pred_region
      %162 = dma.done [#allocation12], 1024
    $region105: #{tpu_custom_call.1} parent=1 // pred_fallthru
      _
    // Predicated region
    $region106: #{tpu_custom_call.1} parent=1 // pred_check
      _
    $region107: #{tpu_custom_call.1} parent=1 // pred_check_branch
      %164 = sbr.rel (0) target = $region109
    $region108: #{tpu_custom_call.1} parent=1 // pred_region
      %165 = dma.done [#allocation15], 1024
    $region109: #{tpu_custom_call.1} parent=1 // pred_fallthru
      _
    %v166 = vld [vmem:[#allocation10] sm:$0xff]
    %v167 = vld [vmem:[#allocation10 + $0x8] sm:$0xff]
    %v168 = vld [vmem:[#allocation10 + $0x10] sm:$0xff]
    %v169 = vld [vmem:[#allocation10 + $0x18] sm:$0xff]
    %v170 = vld [vmem:[#allocation10 + $0x20] sm:$0xff]
    %v171 = vld [vmem:[#allocation10 + $0x28] sm:$0xff]
    %v172 = vld [vmem:[#allocation10 + $0x30] sm:$0xff]
    %v173 = vld [vmem:[#allocation10 + $0x38] sm:$0xff]
    %v174 = vld [vmem:[%s10] sm:$0x1]
    %v175 = vld [vmem:[#allocation11] sm:$0xff]
    %v176 = vld [vmem:[#allocation11 + $0x8] sm:$0xff]
    %v177 = vld [vmem:[#allocation11 + $0x10] sm:$0xff]
    %v178 = vld [vmem:[#allocation11 + $0x18] sm:$0xff]
    %v179 = vld [vmem:[#allocation11 + $0x20] sm:$0xff]
    %v180 = vld [vmem:[#allocation11 + $0x28] sm:$0xff]
    %v181 = vld [vmem:[#allocation11 + $0x30] sm:$0xff]
    %v182 = vld [vmem:[#allocation11 + $0x38] sm:$0xff]
    %v183 = vld [vmem:[%s12] sm:$0x1]
    %v184 = vld [vmem:[#allocation13] sm:$0xff]
    %v185 = vld [vmem:[#allocation13 + $0x8] sm:$0xff]
    %v186 = vld [vmem:[#allocation13 + $0x10] sm:$0xff]
    %v187 = vld [vmem:[#allocation13 + $0x18] sm:$0xff]
    %v188 = vld [vmem:[#allocation13 + $0x20] sm:$0xff]
    %v189 = vld [vmem:[#allocation13 + $0x28] sm:$0xff]
    %v190 = vld [vmem:[#allocation13 + $0x30] sm:$0xff]
    %v191 = vld [vmem:[#allocation13 + $0x38] sm:$0xff]
    %v192 = vld [vmem:[%s14] sm:$0x1]
    %v193 = vld [vmem:[#allocation14] sm:$0xff]
    %v194 = vld [vmem:[#allocation14 + $0x8] sm:$0xff]
    %v195 = vld [vmem:[#allocation14 + $0x10] sm:$0xff]
    %v196 = vld [vmem:[#allocation14 + $0x18] sm:$0xff]
    %v197 = vld [vmem:[#allocation14 + $0x20] sm:$0xff]
    %v198 = vld [vmem:[#allocation14 + $0x28] sm:$0xff]
    %v199 = vld [vmem:[#allocation14 + $0x30] sm:$0xff]
    %v200 = vld [vmem:[#allocation14 + $0x38] sm:$0xff]
    %v201 = vld [vmem:[%s16] sm:$0x1]
    %v202 = vld [vmem:[#allocation2] sm:$0xff]
    %v203 = vld [vmem:[#allocation5] sm:$0xff]
    %v204 = vld [vmem:[#allocation7] sm:$0xff]
    %v205 = vld [vmem:[%s3] sm:$0xff]
    %v206 = vld [vmem:[%s3 + $0x8] sm:$0xff]
    %v207 = vld [vmem:[%s3 + $0x10] sm:$0xff]
    %v208 = vld [vmem:[%s3 + $0x18] sm:$0xff]
    %v209 = vld [vmem:[%s3 + $0x20] sm:$0xff]
    %v210 = vld [vmem:[%s3 + $0x28] sm:$0xff]
    %v211 = vld [vmem:[%s3 + $0x30] sm:$0xff]
    %v212 = vld [vmem:[%s3 + $0x38] sm:$0xff]
    %v213 = vld [vmem:[%s3 + $0x40] sm:$0xff]
    %v214 = vld [vmem:[%s3 + $0x48] sm:$0xff]
    %v215 = vld [vmem:[%s3 + $0x50] sm:$0xff]
    %v216 = vld [vmem:[%s3 + $0x58] sm:$0xff]
    %v217 = vld [vmem:[%s3 + $0x60] sm:$0xff]
    %v218 = vld [vmem:[%s3 + $0x68] sm:$0xff]
    %v219 = vld [vmem:[%s3 + $0x70] sm:$0xff]
    %v220 = vld [vmem:[%s3 + $0x78] sm:$0xff]
    %v221 = vld [vmem:[%s4] sm:$0x3]
    %v222 = vld [vmem:[%s5] sm:$0xff]
    %v223 = vld [vmem:[%s5 + $0x8] sm:$0xff]
    %v224 = vld [vmem:[%s5 + $0x10] sm:$0xff]
    %v225 = vld [vmem:[%s5 + $0x18] sm:$0xff]
    %s226 = scalar_lea.vmem %s5, 32
    %v227 = vld [vmem:[%s226] sm:$0xff]
    %v228 = vld [vmem:[%s226 + $0x8] sm:$0xff]
    %v229 = vld [vmem:[%s226 + $0x10] sm:$0xff]
    %v230 = vld [vmem:[%s226 + $0x18] sm:$0xff]
    %v232 = vlaneseq
    %v233 = vshrl.u32 %v232, 7
    %v234 = vsub.s32 0, %v233
    %v235 = vrot.slane %v221, %v234
    %v236 = vlaneseq
    %v237 = vshrl.u32 %v236, 7
    %v238 = vsub.s32 1, %v237
    %v239 = vrot.slane %v221, %v238
    %vm242 = vcmask 523264
    %v244 = vsel %vm242, %v202, 0
    %246 = vmatprep.subr.mxu0 0.0
    %247 = vmatpush1.msra.mxu0 0.0
    %248 = vmatprep.subr.mxu0 0.0
    %249 = vmatpush1.msra.mxu0 0.0
    %250 = vmatprep.subr.mxu0 0.0
    %251 = vmatpush1.msra.mxu0 0.0
    %252 = vmatprep.subr.mxu0 0.0
    %253 = vmatpush1.msra.mxu0 0.0
    %254 = vmatprep.subr.mxu0 0.0
    %255 = vmatpush1.msra.mxu0 0.0
    %256 = vmatprep.subr.mxu0 0.0
    %257 = vmatpush1.msra.mxu0 0.0
    %258 = vmatprep.subr.mxu0 0.0
    %259 = vmatpush1.msra.mxu0 0.0
    %260 = vmatprep.subr.mxu0 0.0
    %261 = vmatpush1.msra.mxu0 0.0
    %262 = vmatprep.subr.mxu0 %v220
    %263 = vmatpush1.msra.mxu0 %v219
    %264 = vmatprep.subr.mxu0 %v218
    %265 = vmatpush1.msra.mxu0 %v217
    %266 = vmatprep.subr.mxu0 %v216
    %267 = vmatpush1.msra.mxu0 %v215
    %268 = vmatprep.subr.mxu0 %v214
    %269 = vmatpush1.msra.mxu0 %v213
    %270 = vmatprep.subr.mxu0 %v212
    %271 = vmatpush1.msra.mxu0 %v211
    %272 = vmatprep.subr.mxu0 %v210
    %273 = vmatpush1.msra.mxu0 %v209
    %274 = vmatprep.subr.mxu0 %v208
    %275 = vmatpush1.msra.mxu0 %v207
    %276 = vmatprep.subr.mxu0 %v206
    %277 = vmatpush1.msra.mxu0 %v205
    %278 = vmatprep.subr.mxu0 0.0
    %279 = vmatpush2.msra.mxu0 0.0
    %280 = vmatprep.subr.mxu0 0.0
    %281 = vmatpush2.msra.mxu0 0.0
    %282 = vmatprep.subr.mxu0 0.0
    %283 = vmatpush2.msra.mxu0 0.0
    %284 = vmatprep.subr.mxu0 0.0
    %285 = vmatpush2.msra.mxu0 0.0
    %286 = vmatprep.subr.mxu0 0.0
    %287 = vmatpush2.msra.mxu0 0.0
    %288 = vmatprep.subr.mxu0 0.0
    %289 = vmatpush2.msra.mxu0 0.0
    %290 = vmatprep.subr.mxu0 0.0
    %291 = vmatpush2.msra.mxu0 0.0
    %292 = vmatprep.subr.mxu0 0.0
    %293 = vmatpush2.msra.mxu0 0.0
    %294 = vmatprep.subr.mxu0 0.0
    %295 = vmatpush2.msra.mxu0 0.0
    %296 = vmatprep.subr.mxu0 0.0
    %297 = vmatpush2.msra.mxu0 0.0
    %298 = vmatprep.subr.mxu0 0.0
    %299 = vmatpush2.msra.mxu0 0.0
    %300 = vmatprep.subr.mxu0 0.0
    %301 = vmatpush2.msra.mxu0 0.0
    %302 = vmatprep.subr.mxu0 0.0
    %303 = vmatpush2.msra.mxu0 0.0
    %304 = vmatprep.subr.mxu0 0.0
    %305 = vmatpush2.msra.mxu0 0.0
    %306 = vmatprep.subr.mxu0 0.0
    %307 = vmatpush2.msra.mxu0 0.0
    %308 = vmatprep.subr.mxu0 0.0
    %309 = vmatpush2.msra.mxu0 0.0
    %310 = vmatprep.mubr.f32.mxu0 0.0
    %311 = vmatmul.mubr.f32.gmra.mxu0 %v244
    %v312 = vpop.f32.mrf.mxu0
    %v313 = vadd.f32 %v235, %v312
    %v314 = vpop.f32.mrf.mxu0
    %v315 = vadd.f32 %v239, %v314
    %316 = vdwg.mxu0
    %vm317 = vcmask 261120
    %v319 = vsel %vm317, 0.0, 0
    %321 = vmatprep.subr.mxu0 0.0
    %322 = vmatpush1.msra.mxu0 0.0
    %323 = vmatprep.subr.mxu0 0.0
    %324 = vmatpush1.msra.mxu0 0.0
    %325 = vmatprep.subr.mxu0 0.0
    %326 = vmatpush1.msra.mxu0 0.0
    %327 = vmatprep.subr.mxu0 0.0
    %328 = vmatpush1.msra.mxu0 0.0
    %329 = vmatprep.subr.mxu0 0.0
    %330 = vmatpush1.msra.mxu0 0.0
    %331 = vmatprep.subr.mxu0 0.0
    %332 = vmatpush1.msra.mxu0 0.0
    %333 = vmatprep.subr.mxu0 0.0
    %334 = vmatpush1.msra.mxu0 0.0
    %335 = vmatprep.subr.mxu0 0.0
    %336 = vmatpush1.msra.mxu0 0.0
    %337 = vmatprep.subr.mxu0 0.0
    %338 = vmatpush1.msra.mxu0 0.0
    %339 = vmatprep.subr.mxu0 0.0
    %340 = vmatpush1.msra.mxu0 0.0
    %341 = vmatprep.subr.mxu0 0.0
    %342 = vmatpush1.msra.mxu0 0.0
    %343 = vmatprep.subr.mxu0 0.0
    %344 = vmatpush1.msra.mxu0 0.0
    %345 = vmatprep.subr.mxu0 0.0
    %346 = vmatpush1.msra.mxu0 %v225
    %347 = vmatprep.subr.mxu0 0.0
    %348 = vmatpush1.msra.mxu0 %v224
    %349 = vmatprep.subr.mxu0 0.0
    %350 = vmatpush1.msra.mxu0 %v223
    %351 = vmatprep.subr.mxu0 0.0
    %352 = vmatpush1.msra.mxu0 %v222
    %353 = vmatprep.subr.mxu0 0.0
    %354 = vmatpush2.msra.mxu0 0.0
    %355 = vmatprep.subr.mxu0 0.0
    %356 = vmatpush2.msra.mxu0 0.0
    %357 = vmatprep.subr.mxu0 0.0
    %358 = vmatpush2.msra.mxu0 0.0
    %359 = vmatprep.subr.mxu0 0.0
    %360 = vmatpush2.msra.mxu0 0.0
    %361 = vmatprep.subr.mxu0 0.0
    %362 = vmatpush2.msra.mxu0 0.0
    %363 = vmatprep.subr.mxu0 0.0
    %364 = vmatpush2.msra.mxu0 0.0
    %365 = vmatprep.subr.mxu0 0.0
    %366 = vmatpush2.msra.mxu0 0.0
    %367 = vmatprep.subr.mxu0 0.0
    %368 = vmatpush2.msra.mxu0 0.0
    %369 = vmatprep.subr.mxu0 0.0
    %370 = vmatpush2.msra.mxu0 0.0
    %371 = vmatprep.subr.mxu0 0.0
    %372 = vmatpush2.msra.mxu0 0.0
    %373 = vmatprep.subr.mxu0 0.0
    %374 = vmatpush2.msra.mxu0 0.0
    %375 = vmatprep.subr.mxu0 0.0
    %376 = vmatpush2.msra.mxu0 0.0
    %377 = vmatprep.subr.mxu0 0.0
    %378 = vmatpush2.msra.mxu0 0.0
    %379 = vmatprep.subr.mxu0 0.0
    %380 = vmatpush2.msra.mxu0 0.0
    %381 = vmatprep.subr.mxu0 0.0
    %382 = vmatpush2.msra.mxu0 0.0
    %383 = vmatprep.subr.mxu0 0.0
    %384 = vmatpush2.msra.mxu0 0.0
    %385 = vmatprep.mubr.f32.mxu0 0.0
    %386 = vmatmul.mubr.f32.gmra.mxu0 %v319
    %v387 = vpop.f32.mrf.mxu0
    %v388 = vadd.f32 0.0, %v387
    %v389 = vpop.f32.mrf.mxu0
    %390 = vdwg.mxu0
    %v391 = vadd.f32 %v313, %v388
    %392 = vmatprep.subr.mxu0 0.0
    %393 = vmatpush1.msra.mxu0 0.0
    %394 = vmatprep.subr.mxu0 0.0
    %395 = vmatpush1.msra.mxu0 0.0
    %396 = vmatprep.subr.mxu0 0.0
    %397 = vmatpush1.msra.mxu0 0.0
    %398 = vmatprep.subr.mxu0 0.0
    %399 = vmatpush1.msra.mxu0 0.0
    %400 = vmatprep.subr.mxu0 0.0
    %401 = vmatpush1.msra.mxu0 0.0
    %402 = vmatprep.subr.mxu0 0.0
    %403 = vmatpush1.msra.mxu0 0.0
    %404 = vmatprep.subr.mxu0 0.0
    %405 = vmatpush1.msra.mxu0 0.0
    %406 = vmatprep.subr.mxu0 0.0
    %407 = vmatpush1.msra.mxu0 0.0
    %408 = vmatprep.subr.mxu0 0.0
    %409 = vmatpush1.msra.mxu0 0.0
    %410 = vmatprep.subr.mxu0 0.0
    %411 = vmatpush1.msra.mxu0 0.0
    %412 = vmatprep.subr.mxu0 0.0
    %413 = vmatpush1.msra.mxu0 0.0
    %414 = vmatprep.subr.mxu0 0.0
    %415 = vmatpush1.msra.mxu0 0.0
    %416 = vmatprep.subr.mxu0 0.0
    %417 = vmatpush1.msra.mxu0 %v230
    %418 = vmatprep.subr.mxu0 0.0
    %419 = vmatpush1.msra.mxu0 %v229
    %420 = vmatprep.subr.mxu0 0.0
    %421 = vmatpush1.msra.mxu0 %v228
    %422 = vmatprep.subr.mxu0 0.0
    %423 = vmatpush1.msra.mxu0 %v227
    %424 = vmatprep.subr.mxu0 0.0
    %425 = vmatpush2.msra.mxu0 0.0
    %426 = vmatprep.subr.mxu0 0.0
    %427 = vmatpush2.msra.mxu0 0.0
    %428 = vmatprep.subr.mxu0 0.0
    %429 = vmatpush2.msra.mxu0 0.0
    %430 = vmatprep.subr.mxu0 0.0
    %431 = vmatpush2.msra.mxu0 0.0
    %432 = vmatprep.subr.mxu0 0.0
    %433 = vmatpush2.msra.mxu0 0.0
    %434 = vmatprep.subr.mxu0 0.0
    %435 = vmatpush2.msra.mxu0 0.0
    %436 = vmatprep.subr.mxu0 0.0
    %437 = vmatpush2.msra.mxu0 0.0
    %438 = vmatprep.subr.mxu0 0.0
    %439 = vmatpush2.msra.mxu0 0.0
    %440 = vmatprep.subr.mxu0 0.0
    %441 = vmatpush2.msra.mxu0 0.0
    %442 = vmatprep.subr.mxu0 0.0
    %443 = vmatpush2.msra.mxu0 0.0
    %444 = vmatprep.subr.mxu0 0.0
    %445 = vmatpush2.msra.mxu0 0.0
    %446 = vmatprep.subr.mxu0 0.0
    %447 = vmatpush2.msra.mxu0 0.0
    %448 = vmatprep.subr.mxu0 0.0
    %449 = vmatpush2.msra.mxu0 0.0
    %450 = vmatprep.subr.mxu0 0.0
    %451 = vmatpush2.msra.mxu0 0.0
    %452 = vmatprep.subr.mxu0 0.0
    %453 = vmatpush2.msra.mxu0 0.0
    %454 = vmatprep.subr.mxu0 0.0
    %455 = vmatpush2.msra.mxu0 0.0
    %456 = vmatprep.mubr.f32.mxu0 0.0
    %457 = vmatmul.mubr.f32.gmra.mxu0 %v319
    %v458 = vpop.f32.mrf.mxu0
    %v459 = vadd.f32 0.0, %v458
    %v460 = vpop.f32.mrf.mxu0
    %461 = vdwg.mxu0
    %v463 = vrot.slane %v459, 1
    %v465 = vadd.f32 %v315, %v463
    %v466 = vxor.u32 %v391, 2147483648
    %v467 = vmul.f32 %v466, 1.442695
    %v468 = vpow.pop %v467
    %v469 = vadd.f32 %v468, 1.0
    %v470 = vrcp.pop %v469
    %v471 = vmul.f32 1.0, %v470
    %v472 = vtanh.pop %v391
    %v473 = vmul.f32 %v471, 0.0
    %475 = vrot.lane.b32.xlu0 %v472, 64
    %v476 = vpop.permute.xlu0 %475
    %v478 = vmul.f32 %v471, %v476
    %480 = vrot.lane.b32.xlu0 %v478, 32
    %v481 = vpop.permute.xlu0 %480
    %v483 = vadd.f32 %v473, %v481
    %v484 = vtanh.pop %v483
    %486 = vrot.lane.b32.xlu0 %v484, 64
    %v487 = vpop.permute.xlu0 %486
    %v489 = vmul.f32 %v471, %v487
    %v490 = vxor.u32 %v465, 2147483648
    %v491 = vmul.f32 %v490, 1.442695
    %v492 = vpow.pop %v491
    %v493 = vadd.f32 %v492, 1.0
    %v494 = vrcp.pop %v493
    %v495 = vmul.f32 1.0, %v494
    %v496 = vtanh.pop %v465
    %v497 = vmul.f32 %v495, 0.0
    %499 = vrot.lane.b32.xlu0 %v496, 64
    %v500 = vpop.permute.xlu0 %499
    %v502 = vmul.f32 %v495, %v500
    %504 = vrot.lane.b32.xlu0 %v502, 32
    %v505 = vpop.permute.xlu0 %504
    %v507 = vadd.f32 %v497, %v505
    %v508 = vtanh.pop %v507
    %510 = vrot.lane.b32.xlu0 %v508, 64
    %v511 = vpop.permute.xlu0 %510
    %v513 = vmul.f32 %v495, %v511
    %515 = vrot.lane.b32.xlu0 %v489, 32
    %v516 = vpop.permute.xlu0 %515
    %v517 = vsel %vm317, %v516, 0
    %519 = vmatprep.subr.mxu0 0.0
    %520 = vmatpush1.msra.mxu0 0.0
    %521 = vmatprep.subr.mxu0 0.0
    %522 = vmatpush1.msra.mxu0 0.0
    %523 = vmatprep.subr.mxu0 0.0
    %524 = vmatpush1.msra.mxu0 0.0
    %525 = vmatprep.subr.mxu0 0.0
    %526 = vmatpush1.msra.mxu0 0.0
    %527 = vmatprep.subr.mxu0 0.0
    %528 = vmatpush1.msra.mxu0 0.0
    %529 = vmatprep.subr.mxu0 0.0
    %530 = vmatpush1.msra.mxu0 0.0
    %531 = vmatprep.subr.mxu0 0.0
    %532 = vmatpush1.msra.mxu0 0.0
    %533 = vmatprep.subr.mxu0 0.0
    %534 = vmatpush1.msra.mxu0 0.0
    %535 = vmatprep.subr.mxu0 0.0
    %536 = vmatpush1.msra.mxu0 0.0
    %537 = vmatprep.subr.mxu0 0.0
    %538 = vmatpush1.msra.mxu0 0.0
    %539 = vmatprep.subr.mxu0 0.0
    %540 = vmatpush1.msra.mxu0 0.0
    %541 = vmatprep.subr.mxu0 0.0
    %542 = vmatpush1.msra.mxu0 0.0
    %543 = vmatprep.subr.mxu0 0.0
    %544 = vmatpush1.msra.mxu0 %v225
    %545 = vmatprep.subr.mxu0 0.0
    %546 = vmatpush1.msra.mxu0 %v224
    %547 = vmatprep.subr.mxu0 0.0
    %548 = vmatpush1.msra.mxu0 %v223
    %549 = vmatprep.subr.mxu0 0.0
    %550 = vmatpush1.msra.mxu0 %v222
    %551 = vmatprep.subr.mxu0 0.0
    %552 = vmatpush2.msra.mxu0 0.0
    %553 = vmatprep.subr.mxu0 0.0
    %554 = vmatpush2.msra.mxu0 0.0
    %555 = vmatprep.subr.mxu0 0.0
    %556 = vmatpush2.msra.mxu0 0.0
    %557 = vmatprep.subr.mxu0 0.0
    %558 = vmatpush2.msra.mxu0 0.0
    %559 = vmatprep.subr.mxu0 0.0
    %560 = vmatpush2.msra.mxu0 0.0
    %561 = vmatprep.subr.mxu0 0.0
    %562 = vmatpush2.msra.mxu0 0.0
    %563 = vmatprep.subr.mxu0 0.0
    %564 = vmatpush2.msra.mxu0 0.0
    %565 = vmatprep.subr.mxu0 0.0
    %566 = vmatpush2.msra.mxu0 0.0
    %567 = vmatprep.subr.mxu0 0.0
    %568 = vmatpush2.msra.mxu0 0.0
    %569 = vmatprep.subr.mxu0 0.0
    %570 = vmatpush2.msra.mxu0 0.0
    %571 = vmatprep.subr.mxu0 0.0
    %572 = vmatpush2.msra.mxu0 0.0
    %573 = vmatprep.subr.mxu0 0.0
    %574 = vmatpush2.msra.mxu0 0.0
    %575 = vmatprep.subr.mxu0 0.0
    %576 = vmatpush2.msra.mxu0 0.0
    %577 = vmatprep.subr.mxu0 0.0
    %578 = vmatpush2.msra.mxu0 0.0
    %579 = vmatprep.subr.mxu0 0.0
    %580 = vmatpush2.msra.mxu0 0.0
    %581 = vmatprep.subr.mxu0 0.0
    %582 = vmatpush2.msra.mxu0 0.0
    %583 = vmatprep.mubr.f32.mxu0 0.0
    %584 = vmatmul.mubr.f32.gmra.mxu0 %v517
    %v585 = vpop.f32.mrf.mxu0
    %v586 = vadd.f32 0.0, %v585
    %v587 = vpop.f32.mrf.mxu0
    %588 = vdwg.mxu0
    %v590 = vrot.slane %v586, 7
    %v592 = vadd.f32 %v313, %v590
    %v594 = vrot.slane %v513, 7
    %595 = vrot.lane.b32.xlu0 %v594, 32
    %v596 = vpop.permute.xlu0 %595
    %v597 = vsel %vm317, %v596, 0
    %599 = vmatprep.subr.mxu0 0.0
    %600 = vmatpush1.msra.mxu0 0.0
    %601 = vmatprep.subr.mxu0 0.0
    %602 = vmatpush1.msra.mxu0 0.0
    %603 = vmatprep.subr.mxu0 0.0
    %604 = vmatpush1.msra.mxu0 0.0
    %605 = vmatprep.subr.mxu0 0.0
    %606 = vmatpush1.msra.mxu0 0.0
    %607 = vmatprep.subr.mxu0 0.0
    %608 = vmatpush1.msra.mxu0 0.0
    %609 = vmatprep.subr.mxu0 0.0
    %610 = vmatpush1.msra.mxu0 0.0
    %611 = vmatprep.subr.mxu0 0.0
    %612 = vmatpush1.msra.mxu0 0.0
    %613 = vmatprep.subr.mxu0 0.0
    %614 = vmatpush1.msra.mxu0 0.0
    %615 = vmatprep.subr.mxu0 0.0
    %616 = vmatpush1.msra.mxu0 0.0
    %617 = vmatprep.subr.mxu0 0.0
    %618 = vmatpush1.msra.mxu0 0.0
    %619 = vmatprep.subr.mxu0 0.0
    %620 = vmatpush1.msra.mxu0 0.0
    %621 = vmatprep.subr.mxu0 0.0
    %622 = vmatpush1.msra.mxu0 0.0
    %623 = vmatprep.subr.mxu0 0.0
    %624 = vmatpush1.msra.mxu0 %v230
    %625 = vmatprep.subr.mxu0 0.0
    %626 = vmatpush1.msra.mxu0 %v229
    %627 = vmatprep.subr.mxu0 0.0
    %628 = vmatpush1.msra.mxu0 %v228
    %629 = vmatprep.subr.mxu0 0.0
    %630 = vmatpush1.msra.mxu0 %v227
    %631 = vmatprep.subr.mxu0 0.0
    %632 = vmatpush2.msra.mxu0 0.0
    %633 = vmatprep.subr.mxu0 0.0
    %634 = vmatpush2.msra.mxu0 0.0
    %635 = vmatprep.subr.mxu0 0.0
    %636 = vmatpush2.msra.mxu0 0.0
    %637 = vmatprep.subr.mxu0 0.0
    %638 = vmatpush2.msra.mxu0 0.0
    %639 = vmatprep.subr.mxu0 0.0
    %640 = vmatpush2.msra.mxu0 0.0
    %641 = vmatprep.subr.mxu0 0.0
    %642 = vmatpush2.msra.mxu0 0.0
    %643 = vmatprep.subr.mxu0 0.0
    %644 = vmatpush2.msra.mxu0 0.0
    %645 = vmatprep.subr.mxu0 0.0
    %646 = vmatpush2.msra.mxu0 0.0
    %647 = vmatprep.subr.mxu0 0.0
    %648 = vmatpush2.msra.mxu0 0.0
    %649 = vmatprep.subr.mxu0 0.0
    %650 = vmatpush2.msra.mxu0 0.0
    %651 = vmatprep.subr.mxu0 0.0
    %652 = vmatpush2.msra.mxu0 0.0
    %653 = vmatprep.subr.mxu0 0.0
    %654 = vmatpush2.msra.mxu0 0.0
    %655 = vmatprep.subr.mxu0 0.0
    %656 = vmatpush2.msra.mxu0 0.0
    %657 = vmatprep.subr.mxu0 0.0
    %658 = vmatpush2.msra.mxu0 0.0
    %659 = vmatprep.subr.mxu0 0.0
    %660 = vmatpush2.msra.mxu0 0.0
    %661 = vmatprep.subr.mxu0 0.0
    %662 = vmatpush2.msra.mxu0 0.0
    %663 = vmatprep.mubr.f32.mxu0 0.0
    %664 = vmatmul.mubr.f32.gmra.mxu0 %v597
    %v665 = vpop.f32.mrf.mxu0
    %v666 = vadd.f32 0.0, %v665
    %v667 = vpop.f32.mrf.mxu0
    %668 = vdwg.mxu0
    %v670 = vrot.slane %v666, 2
    %v672 = vadd.f32 %v315, %v670
    %v673 = vxor.u32 %v592, 2147483648
    %v674 = vmul.f32 %v673, 1.442695
    %v675 = vpow.pop %v674
    %v676 = vadd.f32 %v675, 1.0
    %v677 = vrcp.pop %v676
    %v678 = vmul.f32 1.0, %v677
    %v679 = vtanh.pop %v592
    %v681 = vrot.slane %v483, 7
    %v683 = vmul.f32 %v678, %v681
    %685 = vrot.lane.b32.xlu0 %v679, 64
    %v686 = vpop.permute.xlu0 %685
    %v688 = vmul.f32 %v678, %v686
    %690 = vrot.lane.b32.xlu0 %v688, 32
    %v691 = vpop.permute.xlu0 %690
    %v693 = vadd.f32 %v683, %v691
    %v694 = vtanh.pop %v693
    %696 = vrot.lane.b32.xlu0 %v694, 64
    %v697 = vpop.permute.xlu0 %696
    %v699 = vmul.f32 %v678, %v697
    %v700 = vxor.u32 %v672, 2147483648
    %v701 = vmul.f32 %v700, 1.442695
    %v702 = vpow.pop %v701
    %v703 = vadd.f32 %v702, 1.0
    %v704 = vrcp.pop %v703
    %v705 = vmul.f32 1.0, %v704
    %v706 = vtanh.pop %v672
    %v708 = vrot.slane %v507, 1
    %v710 = vmul.f32 %v705, %v708
    %712 = vrot.lane.b32.xlu0 %v706, 64
    %v713 = vpop.permute.xlu0 %712
    %v715 = vmul.f32 %v705, %v713
    %717 = vrot.lane.b32.xlu0 %v715, 32
    %v718 = vpop.permute.xlu0 %717
    %v720 = vadd.f32 %v710, %v718
    %v721 = vtanh.pop %v720
    %723 = vrot.lane.b32.xlu0 %v721, 64
    %v724 = vpop.permute.xlu0 %723
    %v726 = vmul.f32 %v705, %v724
    %v728 = vrot.slane %v699, 1
    %729 = vrot.lane.b32.xlu0 %v728, 32
    %v730 = vpop.permute.xlu0 %729
    %v731 = vsel %vm317, %v730, 0
    %733 = vmatprep.subr.mxu0 0.0
    %734 = vmatpush1.msra.mxu0 0.0
    %735 = vmatprep.subr.mxu0 0.0
    %736 = vmatpush1.msra.mxu0 0.0
    %737 = vmatprep.subr.mxu0 0.0
    %738 = vmatpush1.msra.mxu0 0.0
    %739 = vmatprep.subr.mxu0 0.0
    %740 = vmatpush1.msra.mxu0 0.0
    %741 = vmatprep.subr.mxu0 0.0
    %742 = vmatpush1.msra.mxu0 0.0
    %743 = vmatprep.subr.mxu0 0.0
    %744 = vmatpush1.msra.mxu0 0.0
    %745 = vmatprep.subr.mxu0 0.0
    %746 = vmatpush1.msra.mxu0 0.0
    %747 = vmatprep.subr.mxu0 0.0
    %748 = vmatpush1.msra.mxu0 0.0
    %749 = vmatprep.subr.mxu0 0.0
    %750 = vmatpush1.msra.mxu0 0.0
    %751 = vmatprep.subr.mxu0 0.0
    %752 = vmatpush1.msra.mxu0 0.0
    %753 = vmatprep.subr.mxu0 0.0
    %754 = vmatpush1.msra.mxu0 0.0
    %755 = vmatprep.subr.mxu0 0.0
    %756 = vmatpush1.msra.mxu0 0.0
    %757 = vmatprep.subr.mxu0 0.0
    %758 = vmatpush1.msra.mxu0 %v225
    %759 = vmatprep.subr.mxu0 0.0
    %760 = vmatpush1.msra.mxu0 %v224
    %761 = vmatprep.subr.mxu0 0.0
    %762 = vmatpush1.msra.mxu0 %v223
    %763 = vmatprep.subr.mxu0 0.0
    %764 = vmatpush1.msra.mxu0 %v222
    %765 = vmatprep.subr.mxu0 0.0
    %766 = vmatpush2.msra.mxu0 0.0
    %767 = vmatprep.subr.mxu0 0.0
    %768 = vmatpush2.msra.mxu0 0.0
    %769 = vmatprep.subr.mxu0 0.0
    %770 = vmatpush2.msra.mxu0 0.0
    %771 = vmatprep.subr.mxu0 0.0
    %772 = vmatpush2.msra.mxu0 0.0
    %773 = vmatprep.subr.mxu0 0.0
    %774 = vmatpush2.msra.mxu0 0.0
    %775 = vmatprep.subr.mxu0 0.0
    %776 = vmatpush2.msra.mxu0 0.0
    %777 = vmatprep.subr.mxu0 0.0
    %778 = vmatpush2.msra.mxu0 0.0
    %779 = vmatprep.subr.mxu0 0.0
    %780 = vmatpush2.msra.mxu0 0.0
    %781 = vmatprep.subr.mxu0 0.0
    %782 = vmatpush2.msra.mxu0 0.0
    %783 = vmatprep.subr.mxu0 0.0
    %784 = vmatpush2.msra.mxu0 0.0
    %785 = vmatprep.subr.mxu0 0.0
    %786 = vmatpush2.msra.mxu0 0.0
    %787 = vmatprep.subr.mxu0 0.0
    %788 = vmatpush2.msra.mxu0 0.0
    %789 = vmatprep.subr.mxu0 0.0
    %790 = vmatpush2.msra.mxu0 0.0
    %791 = vmatprep.subr.mxu0 0.0
    %792 = vmatpush2.msra.mxu0 0.0
    %793 = vmatprep.subr.mxu0 0.0
    %794 = vmatpush2.msra.mxu0 0.0
    %795 = vmatprep.subr.mxu0 0.0
    %796 = vmatpush2.msra.mxu0 0.0
    %797 = vmatprep.mubr.f32.mxu0 0.0
    %798 = vmatmul.mubr.f32.gmra.mxu0 %v731
    %v799 = vpop.f32.mrf.mxu0
    %v800 = vadd.f32 0.0, %v799
    %v801 = vpop.f32.mrf.mxu0
    %802 = vdwg.mxu0
    %v804 = vrot.slane %v800, 6
    %v806 = vadd.f32 %v313, %v804
    %v808 = vrot.slane %v726, 6
    %809 = vrot.lane.b32.xlu0 %v808, 32
    %v810 = vpop.permute.xlu0 %809
    %v811 = vsel %vm317, %v810, 0
    %813 = vmatprep.subr.mxu0 0.0
    %814 = vmatpush1.msra.mxu0 0.0
    %815 = vmatprep.subr.mxu0 0.0
    %816 = vmatpush1.msra.mxu0 0.0
    %817 = vmatprep.subr.mxu0 0.0
    %818 = vmatpush1.msra.mxu0 0.0
    %819 = vmatprep.subr.mxu0 0.0
    %820 = vmatpush1.msra.mxu0 0.0
    %821 = vmatprep.subr.mxu0 0.0
    %822 = vmatpush1.msra.mxu0 0.0
    %823 = vmatprep.subr.mxu0 0.0
    %824 = vmatpush1.msra.mxu0 0.0
    %825 = vmatprep.subr.mxu0 0.0
    %826 = vmatpush1.msra.mxu0 0.0
    %827 = vmatprep.subr.mxu0 0.0
    %828 = vmatpush1.msra.mxu0 0.0
    %829 = vmatprep.subr.mxu0 0.0
    %830 = vmatpush1.msra.mxu0 0.0
    %831 = vmatprep.subr.mxu0 0.0
    %832 = vmatpush1.msra.mxu0 0.0
    %833 = vmatprep.subr.mxu0 0.0
    %834 = vmatpush1.msra.mxu0 0.0
    %835 = vmatprep.subr.mxu0 0.0
    %836 = vmatpush1.msra.mxu0 0.0
    %837 = vmatprep.subr.mxu0 0.0
    %838 = vmatpush1.msra.mxu0 %v230
    %839 = vmatprep.subr.mxu0 0.0
    %840 = vmatpush1.msra.mxu0 %v229
    %841 = vmatprep.subr.mxu0 0.0
    %842 = vmatpush1.msra.mxu0 %v228
    %843 = vmatprep.subr.mxu0 0.0
    %844 = vmatpush1.msra.mxu0 %v227
    %845 = vmatprep.subr.mxu0 0.0
    %846 = vmatpush2.msra.mxu0 0.0
    %847 = vmatprep.subr.mxu0 0.0
    %848 = vmatpush2.msra.mxu0 0.0
    %849 = vmatprep.subr.mxu0 0.0
    %850 = vmatpush2.msra.mxu0 0.0
    %851 = vmatprep.subr.mxu0 0.0
    %852 = vmatpush2.msra.mxu0 0.0
    %853 = vmatprep.subr.mxu0 0.0
    %854 = vmatpush2.msra.mxu0 0.0
    %855 = vmatprep.subr.mxu0 0.0
    %856 = vmatpush2.msra.mxu0 0.0
    %857 = vmatprep.subr.mxu0 0.0
    %858 = vmatpush2.msra.mxu0 0.0
    %859 = vmatprep.subr.mxu0 0.0
    %860 = vmatpush2.msra.mxu0 0.0
    %861 = vmatprep.subr.mxu0 0.0
    %862 = vmatpush2.msra.mxu0 0.0
    %863 = vmatprep.subr.mxu0 0.0
    %864 = vmatpush2.msra.mxu0 0.0
    %865 = vmatprep.subr.mxu0 0.0
    %866 = vmatpush2.msra.mxu0 0.0
    %867 = vmatprep.subr.mxu0 0.0
    %868 = vmatpush2.msra.mxu0 0.0
    %869 = vmatprep.subr.mxu0 0.0
    %870 = vmatpush2.msra.mxu0 0.0
    %871 = vmatprep.subr.mxu0 0.0
    %872 = vmatpush2.msra.mxu0 0.0
    %873 = vmatprep.subr.mxu0 0.0
    %874 = vmatpush2.msra.mxu0 0.0
    %875 = vmatprep.subr.mxu0 0.0
    %876 = vmatpush2.msra.mxu0 0.0
    %877 = vmatprep.mubr.f32.mxu0 0.0
    %878 = vmatmul.mubr.f32.gmra.mxu0 %v811
    %v879 = vpop.f32.mrf.mxu0
    %v880 = vadd.f32 0.0, %v879
    %v881 = vpop.f32.mrf.mxu0
    %882 = vdwg.mxu0
    %v884 = vrot.slane %v880, 3
    %v886 = vadd.f32 %v315, %v884
    %v887 = vxor.u32 %v806, 2147483648
    %v888 = vmul.f32 %v887, 1.442695
    %v889 = vpow.pop %v888
    %v890 = vadd.f32 %v889, 1.0
    %v891 = vrcp.pop %v890
    %v892 = vmul.f32 1.0, %v891
    %v893 = vtanh.pop %v806
    %v895 = vrot.slane %v693, 7
    %v897 = vmul.f32 %v892, %v895
    %899 = vrot.lane.b32.xlu0 %v893, 64
    %v900 = vpop.permute.xlu0 %899
    %v902 = vmul.f32 %v892, %v900
    %904 = vrot.lane.b32.xlu0 %v902, 32
    %v905 = vpop.permute.xlu0 %904
    %v907 = vadd.f32 %v897, %v905
    %v908 = vtanh.pop %v907
    %910 = vrot.lane.b32.xlu0 %v908, 64
    %v911 = vpop.permute.xlu0 %910
    %v913 = vmul.f32 %v892, %v911
    %v914 = vxor.u32 %v886, 2147483648
    %v915 = vmul.f32 %v914, 1.442695
    %v916 = vpow.pop %v915
    %v917 = vadd.f32 %v916, 1.0
    %v918 = vrcp.pop %v917
    %v919 = vmul.f32 1.0, %v918
    %v920 = vtanh.pop %v886
    %v922 = vrot.slane %v720, 1
    %v924 = vmul.f32 %v919, %v922
    %926 = vrot.lane.b32.xlu0 %v920, 64
    %v927 = vpop.permute.xlu0 %926
    %v929 = vmul.f32 %v919, %v927
    %931 = vrot.lane.b32.xlu0 %v929, 32
    %v932 = vpop.permute.xlu0 %931
    %v934 = vadd.f32 %v924, %v932
    %v935 = vtanh.pop %v934
    %937 = vrot.lane.b32.xlu0 %v935, 64
    %v938 = vpop.permute.xlu0 %937
    %v940 = vmul.f32 %v919, %v938
    %v942 = vrot.slane %v913, 2
    %943 = vrot.lane.b32.xlu0 %v942, 32
    %v944 = vpop.permute.xlu0 %943
    %v945 = vsel %vm317, %v944, 0
    %947 = vmatprep.subr.mxu0 0.0
    %948 = vmatpush1.msra.mxu0 0.0
    %949 = vmatprep.subr.mxu0 0.0
    %950 = vmatpush1.msra.mxu0 0.0
    %951 = vmatprep.subr.mxu0 0.0
    %952 = vmatpush1.msra.mxu0 0.0
    %953 = vmatprep.subr.mxu0 0.0
    %954 = vmatpush1.msra.mxu0 0.0
    %955 = vmatprep.subr.mxu0 0.0
    %956 = vmatpush1.msra.mxu0 0.0
    %957 = vmatprep.subr.mxu0 0.0
    %958 = vmatpush1.msra.mxu0 0.0
    %959 = vmatprep.subr.mxu0 0.0
    %960 = vmatpush1.msra.mxu0 0.0
    %961 = vmatprep.subr.mxu0 0.0
    %962 = vmatpush1.msra.mxu0 0.0
    %963 = vmatprep.subr.mxu0 0.0
    %964 = vmatpush1.msra.mxu0 0.0
    %965 = vmatprep.subr.mxu0 0.0
    %966 = vmatpush1.msra.mxu0 0.0
    %967 = vmatprep.subr.mxu0 0.0
    %968 = vmatpush1.msra.mxu0 0.0
    %969 = vmatprep.subr.mxu0 0.0
    %970 = vmatpush1.msra.mxu0 0.0
    %971 = vmatprep.subr.mxu0 0.0
    %972 = vmatpush1.msra.mxu0 %v225
    %973 = vmatprep.subr.mxu0 0.0
    %974 = vmatpush1.msra.mxu0 %v224
    %975 = vmatprep.subr.mxu0 0.0
    %976 = vmatpush1.msra.mxu0 %v223
    %977 = vmatprep.subr.mxu0 0.0
    %978 = vmatpush1.msra.mxu0 %v222
    %979 = vmatprep.subr.mxu0 0.0
    %980 = vmatpush2.msra.mxu0 0.0
    %981 = vmatprep.subr.mxu0 0.0
    %982 = vmatpush2.msra.mxu0 0.0
    %983 = vmatprep.subr.mxu0 0.0
    %984 = vmatpush2.msra.mxu0 0.0
    %985 = vmatprep.subr.mxu0 0.0
    %986 = vmatpush2.msra.mxu0 0.0
    %987 = vmatprep.subr.mxu0 0.0
    %988 = vmatpush2.msra.mxu0 0.0
    %989 = vmatprep.subr.mxu0 0.0
    %990 = vmatpush2.msra.mxu0 0.0
    %991 = vmatprep.subr.mxu0 0.0
    %992 = vmatpush2.msra.mxu0 0.0
    %993 = vmatprep.subr.mxu0 0.0
    %994 = vmatpush2.msra.mxu0 0.0
    %995 = vmatprep.subr.mxu0 0.0
    %996 = vmatpush2.msra.mxu0 0.0
    %997 = vmatprep.subr.mxu0 0.0
    %998 = vmatpush2.msra.mxu0 0.0
    %999 = vmatprep.subr.mxu0 0.0
    %1000 = vmatpush2.msra.mxu0 0.0
    %1001 = vmatprep.subr.mxu0 0.0
    %1002 = vmatpush2.msra.mxu0 0.0
    %1003 = vmatprep.subr.mxu0 0.0
    %1004 = vmatpush2.msra.mxu0 0.0
    %1005 = vmatprep.subr.mxu0 0.0
    %1006 = vmatpush2.msra.mxu0 0.0
    %1007 = vmatprep.subr.mxu0 0.0
    %1008 = vmatpush2.msra.mxu0 0.0
    %1009 = vmatprep.subr.mxu0 0.0
    %1010 = vmatpush2.msra.mxu0 0.0
    %1011 = vmatprep.mubr.f32.mxu0 0.0
    %1012 = vmatmul.mubr.f32.gmra.mxu0 %v945
    %v1013 = vpop.f32.mrf.mxu0
    %v1014 = vadd.f32 0.0, %v1013
    %v1015 = vpop.f32.mrf.mxu0
    %1016 = vdwg.mxu0
    %v1018 = vrot.slane %v1014, 5
    %v1020 = vadd.f32 %v313, %v1018
    %v1022 = vrot.slane %v940, 5
    %1023 = vrot.lane.b32.xlu0 %v1022, 32
    %v1024 = vpop.permute.xlu0 %1023
    %v1025 = vsel %vm317, %v1024, 0
    %1027 = vmatprep.subr.mxu0 0.0
    %1028 = vmatpush1.msra.mxu0 0.0
    %1029 = vmatprep.subr.mxu0 0.0
    %1030 = vmatpush1.msra.mxu0 0.0
    %1031 = vmatprep.subr.mxu0 0.0
    %1032 = vmatpush1.msra.mxu0 0.0
    %1033 = vmatprep.subr.mxu0 0.0
    %1034 = vmatpush1.msra.mxu0 0.0
    %1035 = vmatprep.subr.mxu0 0.0
    %1036 = vmatpush1.msra.mxu0 0.0
    %1037 = vmatprep.subr.mxu0 0.0
    %1038 = vmatpush1.msra.mxu0 0.0
    %1039 = vmatprep.subr.mxu0 0.0
    %1040 = vmatpush1.msra.mxu0 0.0
    %1041 = vmatprep.subr.mxu0 0.0
    %1042 = vmatpush1.msra.mxu0 0.0
    %1043 = vmatprep.subr.mxu0 0.0
    %1044 = vmatpush1.msra.mxu0 0.0
    %1045 = vmatprep.subr.mxu0 0.0
    %1046 = vmatpush1.msra.mxu0 0.0
    %1047 = vmatprep.subr.mxu0 0.0
    %1048 = vmatpush1.msra.mxu0 0.0
    %1049 = vmatprep.subr.mxu0 0.0
    %1050 = vmatpush1.msra.mxu0 0.0
    %1051 = vmatprep.subr.mxu0 0.0
    %1052 = vmatpush1.msra.mxu0 %v230
    %1053 = vmatprep.subr.mxu0 0.0
    %1054 = vmatpush1.msra.mxu0 %v229
    %1055 = vmatprep.subr.mxu0 0.0
    %1056 = vmatpush1.msra.mxu0 %v228
    %1057 = vmatprep.subr.mxu0 0.0
    %1058 = vmatpush1.msra.mxu0 %v227
    %1059 = vmatprep.subr.mxu0 0.0
    %1060 = vmatpush2.msra.mxu0 0.0
    %1061 = vmatprep.subr.mxu0 0.0
    %1062 = vmatpush2.msra.mxu0 0.0
    %1063 = vmatprep.subr.mxu0 0.0
    %1064 = vmatpush2.msra.mxu0 0.0
    %1065 = vmatprep.subr.mxu0 0.0
    %1066 = vmatpush2.msra.mxu0 0.0
    %1067 = vmatprep.subr.mxu0 0.0
    %1068 = vmatpush2.msra.mxu0 0.0
    %1069 = vmatprep.subr.mxu0 0.0
    %1070 = vmatpush2.msra.mxu0 0.0
    %1071 = vmatprep.subr.mxu0 0.0
    %1072 = vmatpush2.msra.mxu0 0.0
    %1073 = vmatprep.subr.mxu0 0.0
    %1074 = vmatpush2.msra.mxu0 0.0
    %1075 = vmatprep.subr.mxu0 0.0
    %1076 = vmatpush2.msra.mxu0 0.0
    %1077 = vmatprep.subr.mxu0 0.0
    %1078 = vmatpush2.msra.mxu0 0.0
    %1079 = vmatprep.subr.mxu0 0.0
    %1080 = vmatpush2.msra.mxu0 0.0
    %1081 = vmatprep.subr.mxu0 0.0
    %1082 = vmatpush2.msra.mxu0 0.0
    %1083 = vmatprep.subr.mxu0 0.0
    %1084 = vmatpush2.msra.mxu0 0.0
    %1085 = vmatprep.subr.mxu0 0.0
    %1086 = vmatpush2.msra.mxu0 0.0
    %1087 = vmatprep.subr.mxu0 0.0
    %1088 = vmatpush2.msra.mxu0 0.0
    %1089 = vmatprep.subr.mxu0 0.0
    %1090 = vmatpush2.msra.mxu0 0.0
    %1091 = vmatprep.mubr.f32.mxu0 0.0
    %1092 = vmatmul.mubr.f32.gmra.mxu0 %v1025
    %v1093 = vpop.f32.mrf.mxu0
    %v1094 = vadd.f32 0.0, %v1093
    %v1095 = vpop.f32.mrf.mxu0
    %1096 = vdwg.mxu0
    %v1098 = vrot.slane %v1094, 4
    %v1100 = vadd.f32 %v315, %v1098
    %v1101 = vxor.u32 %v1020, 2147483648
    %v1102 = vmul.f32 %v1101, 1.442695
    %v1103 = vpow.pop %v1102
    %v1104 = vadd.f32 %v1103, 1.0
    %v1105 = vrcp.pop %v1104
    %v1106 = vmul.f32 1.0, %v1105
    %v1107 = vtanh.pop %v1020
    %v1109 = vrot.slane %v907, 7
    %v1111 = vmul.f32 %v1106, %v1109
    %1113 = vrot.lane.b32.xlu0 %v1107, 64
    %v1114 = vpop.permute.xlu0 %1113
    %v1116 = vmul.f32 %v1106, %v1114
    %1118 = vrot.lane.b32.xlu0 %v1116, 32
    %v1119 = vpop.permute.xlu0 %1118
    %v1121 = vadd.f32 %v1111, %v1119
    %v1122 = vtanh.pop %v1121
    %1124 = vrot.lane.b32.xlu0 %v1122, 64
    %v1125 = vpop.permute.xlu0 %1124
    %v1127 = vmul.f32 %v1106, %v1125
    %v1128 = vxor.u32 %v1100, 2147483648
    %v1129 = vmul.f32 %v1128, 1.442695
    %v1130 = vpow.pop %v1129
    %v1131 = vadd.f32 %v1130, 1.0
    %v1132 = vrcp.pop %v1131
    %v1133 = vmul.f32 1.0, %v1132
    %v1134 = vtanh.pop %v1100
    %v1136 = vrot.slane %v934, 1
    %v1138 = vmul.f32 %v1133, %v1136
    %1140 = vrot.lane.b32.xlu0 %v1134, 64
    %v1141 = vpop.permute.xlu0 %1140
    %v1143 = vmul.f32 %v1133, %v1141
    %1145 = vrot.lane.b32.xlu0 %v1143, 32
    %v1146 = vpop.permute.xlu0 %1145
    %v1148 = vadd.f32 %v1138, %v1146
    %v1149 = vtanh.pop %v1148
    %1151 = vrot.lane.b32.xlu0 %v1149, 64
    %v1152 = vpop.permute.xlu0 %1151
    %v1154 = vmul.f32 %v1133, %v1152
    %v1156 = vrot.slane %v1127, 3
    %1157 = vrot.lane.b32.xlu0 %v1156, 32
    %v1158 = vpop.permute.xlu0 %1157
    %v1159 = vsel %vm317, %v1158, 0
    %1161 = vmatprep.subr.mxu0 0.0
    %1162 = vmatpush1.msra.mxu0 0.0
    %1163 = vmatprep.subr.mxu0 0.0
    %1164 = vmatpush1.msra.mxu0 0.0
    %1165 = vmatprep.subr.mxu0 0.0
    %1166 = vmatpush1.msra.mxu0 0.0
    %1167 = vmatprep.subr.mxu0 0.0
    %1168 = vmatpush1.msra.mxu0 0.0
    %1169 = vmatprep.subr.mxu0 0.0
    %1170 = vmatpush1.msra.mxu0 0.0
    %1171 = vmatprep.subr.mxu0 0.0
    %1172 = vmatpush1.msra.mxu0 0.0
    %1173 = vmatprep.subr.mxu0 0.0
    %1174 = vmatpush1.msra.mxu0 0.0
    %1175 = vmatprep.subr.mxu0 0.0
    %1176 = vmatpush1.msra.mxu0 0.0
    %1177 = vmatprep.subr.mxu0 0.0
    %1178 = vmatpush1.msra.mxu0 0.0
    %1179 = vmatprep.subr.mxu0 0.0
    %1180 = vmatpush1.msra.mxu0 0.0
    %1181 = vmatprep.subr.mxu0 0.0
    %1182 = vmatpush1.msra.mxu0 0.0
    %1183 = vmatprep.subr.mxu0 0.0
    %1184 = vmatpush1.msra.mxu0 0.0
    %1185 = vmatprep.subr.mxu0 0.0
    %1186 = vmatpush1.msra.mxu0 %v225
    %1187 = vmatprep.subr.mxu0 0.0
    %1188 = vmatpush1.msra.mxu0 %v224
    %1189 = vmatprep.subr.mxu0 0.0
    %1190 = vmatpush1.msra.mxu0 %v223
    %1191 = vmatprep.subr.mxu0 0.0
    %1192 = vmatpush1.msra.mxu0 %v222
    %1193 = vmatprep.subr.mxu0 0.0
    %1194 = vmatpush2.msra.mxu0 0.0
    %1195 = vmatprep.subr.mxu0 0.0
    %1196 = vmatpush2.msra.mxu0 0.0
    %1197 = vmatprep.subr.mxu0 0.0
    %1198 = vmatpush2.msra.mxu0 0.0
    %1199 = vmatprep.subr.mxu0 0.0
    %1200 = vmatpush2.msra.mxu0 0.0
    %1201 = vmatprep.subr.mxu0 0.0
    %1202 = vmatpush2.msra.mxu0 0.0
    %1203 = vmatprep.subr.mxu0 0.0
    %1204 = vmatpush2.msra.mxu0 0.0
    %1205 = vmatprep.subr.mxu0 0.0
    %1206 = vmatpush2.msra.mxu0 0.0
    %1207 = vmatprep.subr.mxu0 0.0
    %1208 = vmatpush2.msra.mxu0 0.0
    %1209 = vmatprep.subr.mxu0 0.0
    %1210 = vmatpush2.msra.mxu0 0.0
    %1211 = vmatprep.subr.mxu0 0.0
    %1212 = vmatpush2.msra.mxu0 0.0
    %1213 = vmatprep.subr.mxu0 0.0
    %1214 = vmatpush2.msra.mxu0 0.0
    %1215 = vmatprep.subr.mxu0 0.0
    %1216 = vmatpush2.msra.mxu0 0.0
    %1217 = vmatprep.subr.mxu0 0.0
    %1218 = vmatpush2.msra.mxu0 0.0
    %1219 = vmatprep.subr.mxu0 0.0
    %1220 = vmatpush2.msra.mxu0 0.0
    %1221 = vmatprep.subr.mxu0 0.0
    %1222 = vmatpush2.msra.mxu0 0.0
    %1223 = vmatprep.subr.mxu0 0.0
    %1224 = vmatpush2.msra.mxu0 0.0
    %1225 = vmatprep.mubr.f32.mxu0 0.0
    %1226 = vmatmul.mubr.f32.gmra.mxu0 %v1159
    %v1227 = vpop.f32.mrf.mxu0
    %v1228 = vadd.f32 0.0, %v1227
    %v1229 = vpop.f32.mrf.mxu0
    %1230 = vdwg.mxu0
    %v1232 = vrot.slane %v1228, 4
    %v1234 = vadd.f32 %v313, %v1232
    %v1236 = vrot.slane %v1154, 4
    %1237 = vrot.lane.b32.xlu0 %v1236, 32
    %v1238 = vpop.permute.xlu0 %1237
    %v1239 = vsel %vm317, %v1238, 0
    %1241 = vmatprep.subr.mxu0 0.0
    %1242 = vmatpush1.msra.mxu0 0.0
    %1243 = vmatprep.subr.mxu0 0.0
    %1244 = vmatpush1.msra.mxu0 0.0
    %1245 = vmatprep.subr.mxu0 0.0
    %1246 = vmatpush1.msra.mxu0 0.0
    %1247 = vmatprep.subr.mxu0 0.0
    %1248 = vmatpush1.msra.mxu0 0.0
    %1249 = vmatprep.subr.mxu0 0.0
    %1250 = vmatpush1.msra.mxu0 0.0
    %1251 = vmatprep.subr.mxu0 0.0
    %1252 = vmatpush1.msra.mxu0 0.0
    %1253 = vmatprep.subr.mxu0 0.0
    %1254 = vmatpush1.msra.mxu0 0.0
    %1255 = vmatprep.subr.mxu0 0.0
    %1256 = vmatpush1.msra.mxu0 0.0
    %1257 = vmatprep.subr.mxu0 0.0
    %1258 = vmatpush1.msra.mxu0 0.0
    %1259 = vmatprep.subr.mxu0 0.0
    %1260 = vmatpush1.msra.mxu0 0.0
    %1261 = vmatprep.subr.mxu0 0.0
    %1262 = vmatpush1.msra.mxu0 0.0
    %1263 = vmatprep.subr.mxu0 0.0
    %1264 = vmatpush1.msra.mxu0 0.0
    %1265 = vmatprep.subr.mxu0 0.0
    %1266 = vmatpush1.msra.mxu0 %v230
    %1267 = vmatprep.subr.mxu0 0.0
    %1268 = vmatpush1.msra.mxu0 %v229
    %1269 = vmatprep.subr.mxu0 0.0
    %1270 = vmatpush1.msra.mxu0 %v228
    %1271 = vmatprep.subr.mxu0 0.0
    %1272 = vmatpush1.msra.mxu0 %v227
    %1273 = vmatprep.subr.mxu0 0.0
    %1274 = vmatpush2.msra.mxu0 0.0
    %1275 = vmatprep.subr.mxu0 0.0
    %1276 = vmatpush2.msra.mxu0 0.0
    %1277 = vmatprep.subr.mxu0 0.0
    %1278 = vmatpush2.msra.mxu0 0.0
    %1279 = vmatprep.subr.mxu0 0.0
    %1280 = vmatpush2.msra.mxu0 0.0
    %1281 = vmatprep.subr.mxu0 0.0
    %1282 = vmatpush2.msra.mxu0 0.0
    %1283 = vmatprep.subr.mxu0 0.0
    %1284 = vmatpush2.msra.mxu0 0.0
    %1285 = vmatprep.subr.mxu0 0.0
    %1286 = vmatpush2.msra.mxu0 0.0
    %1287 = vmatprep.subr.mxu0 0.0
    %1288 = vmatpush2.msra.mxu0 0.0
    %1289 = vmatprep.subr.mxu0 0.0
    %1290 = vmatpush2.msra.mxu0 0.0
    %1291 = vmatprep.subr.mxu0 0.0
    %1292 = vmatpush2.msra.mxu0 0.0
    %1293 = vmatprep.subr.mxu0 0.0
    %1294 = vmatpush2.msra.mxu0 0.0
    %1295 = vmatprep.subr.mxu0 0.0
    %1296 = vmatpush2.msra.mxu0 0.0
    %1297 = vmatprep.subr.mxu0 0.0
    %1298 = vmatpush2.msra.mxu0 0.0
    %1299 = vmatprep.subr.mxu0 0.0
    %1300 = vmatpush2.msra.mxu0 0.0
    %1301 = vmatprep.subr.mxu0 0.0
    %1302 = vmatpush2.msra.mxu0 0.0
    %1303 = vmatprep.subr.mxu0 0.0
    %1304 = vmatpush2.msra.mxu0 0.0
    %1305 = vmatprep.mubr.f32.mxu0 0.0
    %1306 = vmatmul.mubr.f32.gmra.mxu0 %v1239
    %v1307 = vpop.f32.mrf.mxu0
    %v1308 = vadd.f32 0.0, %v1307
    %v1309 = vpop.f32.mrf.mxu0
    %1310 = vdwg.mxu0
    %v1312 = vrot.slane %v1308, 5
    %v1314 = vadd.f32 %v315, %v1312
    %v1315 = vxor.u32 %v1234, 2147483648
    %v1316 = vmul.f32 %v1315, 1.442695
    %v1317 = vpow.pop %v1316
    %v1318 = vadd.f32 %v1317, 1.0
    %v1319 = vrcp.pop %v1318
    %v1320 = vmul.f32 1.0, %v1319
    %v1321 = vtanh.pop %v1234
    %v1323 = vrot.slane %v1121, 7
    %v1325 = vmul.f32 %v1320, %v1323
    %1327 = vrot.lane.b32.xlu0 %v1321, 64
    %v1328 = vpop.permute.xlu0 %1327
    %v1330 = vmul.f32 %v1320, %v1328
    %1332 = vrot.lane.b32.xlu0 %v1330, 32
    %v1333 = vpop.permute.xlu0 %1332
    %v1335 = vadd.f32 %v1325, %v1333
    %v1336 = vtanh.pop %v1335
    %1338 = vrot.lane.b32.xlu0 %v1336, 64
    %v1339 = vpop.permute.xlu0 %1338
    %v1341 = vmul.f32 %v1320, %v1339
    %v1342 = vxor.u32 %v1314, 2147483648
    %v1343 = vmul.f32 %v1342, 1.442695
    %v1344 = vpow.pop %v1343
    %v1345 = vadd.f32 %v1344, 1.0
    %v1346 = vrcp.pop %v1345
    %v1347 = vmul.f32 1.0, %v1346
    %v1348 = vtanh.pop %v1314
    %v1350 = vrot.slane %v1148, 1
    %v1352 = vmul.f32 %v1347, %v1350
    %1354 = vrot.lane.b32.xlu0 %v1348, 64
    %v1355 = vpop.permute.xlu0 %1354
    %v1357 = vmul.f32 %v1347, %v1355
    %1359 = vrot.lane.b32.xlu0 %v1357, 32
    %v1360 = vpop.permute.xlu0 %1359
    %v1362 = vadd.f32 %v1352, %v1360
    %v1363 = vtanh.pop %v1362
    %1365 = vrot.lane.b32.xlu0 %v1363, 64
    %v1366 = vpop.permute.xlu0 %1365
    %v1368 = vmul.f32 %v1347, %v1366
    %v1370 = vrot.slane %v1341, 4
    %1371 = vrot.lane.b32.xlu0 %v1370, 32
    %v1372 = vpop.permute.xlu0 %1371
    %v1373 = vsel %vm317, %v1372, 0
    %1375 = vmatprep.subr.mxu0 0.0
    %1376 = vmatpush1.msra.mxu0 0.0
    %1377 = vmatprep.subr.mxu0 0.0
    %1378 = vmatpush1.msra.mxu0 0.0
    %1379 = vmatprep.subr.mxu0 0.0
    %1380 = vmatpush1.msra.mxu0 0.0
    %1381 = vmatprep.subr.mxu0 0.0
    %1382 = vmatpush1.msra.mxu0 0.0
    %1383 = vmatprep.subr.mxu0 0.0
    %1384 = vmatpush1.msra.mxu0 0.0
    %1385 = vmatprep.subr.mxu0 0.0
    %1386 = vmatpush1.msra.mxu0 0.0
    %1387 = vmatprep.subr.mxu0 0.0
    %1388 = vmatpush1.msra.mxu0 0.0
    %1389 = vmatprep.subr.mxu0 0.0
    %1390 = vmatpush1.msra.mxu0 0.0
    %1391 = vmatprep.subr.mxu0 0.0
    %1392 = vmatpush1.msra.mxu0 0.0
    %1393 = vmatprep.subr.mxu0 0.0
    %1394 = vmatpush1.msra.mxu0 0.0
    %1395 = vmatprep.subr.mxu0 0.0
    %1396 = vmatpush1.msra.mxu0 0.0
    %1397 = vmatprep.subr.mxu0 0.0
    %1398 = vmatpush1.msra.mxu0 0.0
    %1399 = vmatprep.subr.mxu0 0.0
    %1400 = vmatpush1.msra.mxu0 %v225
    %1401 = vmatprep.subr.mxu0 0.0
    %1402 = vmatpush1.msra.mxu0 %v224
    %1403 = vmatprep.subr.mxu0 0.0
    %1404 = vmatpush1.msra.mxu0 %v223
    %1405 = vmatprep.subr.mxu0 0.0
    %1406 = vmatpush1.msra.mxu0 %v222
    %1407 = vmatprep.subr.mxu0 0.0
    %1408 = vmatpush2.msra.mxu0 0.0
    %1409 = vmatprep.subr.mxu0 0.0
    %1410 = vmatpush2.msra.mxu0 0.0
    %1411 = vmatprep.subr.mxu0 0.0
    %1412 = vmatpush2.msra.mxu0 0.0
    %1413 = vmatprep.subr.mxu0 0.0
    %1414 = vmatpush2.msra.mxu0 0.0
    %1415 = vmatprep.subr.mxu0 0.0
    %1416 = vmatpush2.msra.mxu0 0.0
    %1417 = vmatprep.subr.mxu0 0.0
    %1418 = vmatpush2.msra.mxu0 0.0
    %1419 = vmatprep.subr.mxu0 0.0
    %1420 = vmatpush2.msra.mxu0 0.0
    %1421 = vmatprep.subr.mxu0 0.0
    %1422 = vmatpush2.msra.mxu0 0.0
    %1423 = vmatprep.subr.mxu0 0.0
    %1424 = vmatpush2.msra.mxu0 0.0
    %1425 = vmatprep.subr.mxu0 0.0
    %1426 = vmatpush2.msra.mxu0 0.0
    %1427 = vmatprep.subr.mxu0 0.0
    %1428 = vmatpush2.msra.mxu0 0.0
    %1429 = vmatprep.subr.mxu0 0.0
    %1430 = vmatpush2.msra.mxu0 0.0
    %1431 = vmatprep.subr.mxu0 0.0
    %1432 = vmatpush2.msra.mxu0 0.0
    %1433 = vmatprep.subr.mxu0 0.0
    %1434 = vmatpush2.msra.mxu0 0.0
    %1435 = vmatprep.subr.mxu0 0.0
    %1436 = vmatpush2.msra.mxu0 0.0
    %1437 = vmatprep.subr.mxu0 0.0
    %1438 = vmatpush2.msra.mxu0 0.0
    %1439 = vmatprep.mubr.f32.mxu0 0.0
    %1440 = vmatmul.mubr.f32.gmra.mxu0 %v1373
    %v1441 = vpop.f32.mrf.mxu0
    %v1442 = vadd.f32 0.0, %v1441
    %v1443 = vpop.f32.mrf.mxu0
    %1444 = vdwg.mxu0
    %v1446 = vrot.slane %v1442, 3
    %v1448 = vadd.f32 %v313, %v1446
    %v1450 = vrot.slane %v1368, 3
    %1451 = vrot.lane.b32.xlu0 %v1450, 32
    %v1452 = vpop.permute.xlu0 %1451
    %v1453 = vsel %vm317, %v1452, 0
    %1455 = vmatprep.subr.mxu0 0.0
    %1456 = vmatpush1.msra.mxu0 0.0
    %1457 = vmatprep.subr.mxu0 0.0
    %1458 = vmatpush1.msra.mxu0 0.0
    %1459 = vmatprep.subr.mxu0 0.0
    %1460 = vmatpush1.msra.mxu0 0.0
    %1461 = vmatprep.subr.mxu0 0.0
    %1462 = vmatpush1.msra.mxu0 0.0
    %1463 = vmatprep.subr.mxu0 0.0
    %1464 = vmatpush1.msra.mxu0 0.0
    %1465 = vmatprep.subr.mxu0 0.0
    %1466 = vmatpush1.msra.mxu0 0.0
    %1467 = vmatprep.subr.mxu0 0.0
    %1468 = vmatpush1.msra.mxu0 0.0
    %1469 = vmatprep.subr.mxu0 0.0
    %1470 = vmatpush1.msra.mxu0 0.0
    %1471 = vmatprep.subr.mxu0 0.0
    %1472 = vmatpush1.msra.mxu0 0.0
    %1473 = vmatprep.subr.mxu0 0.0
    %1474 = vmatpush1.msra.mxu0 0.0
    %1475 = vmatprep.subr.mxu0 0.0
    %1476 = vmatpush1.msra.mxu0 0.0
    %1477 = vmatprep.subr.mxu0 0.0
    %1478 = vmatpush1.msra.mxu0 0.0
    %1479 = vmatprep.subr.mxu0 0.0
    %1480 = vmatpush1.msra.mxu0 %v230
    %1481 = vmatprep.subr.mxu0 0.0
    %1482 = vmatpush1.msra.mxu0 %v229
    %1483 = vmatprep.subr.mxu0 0.0
    %1484 = vmatpush1.msra.mxu0 %v228
    %1485 = vmatprep.subr.mxu0 0.0
    %1486 = vmatpush1.msra.mxu0 %v227
    %1487 = vmatprep.subr.mxu0 0.0
    %1488 = vmatpush2.msra.mxu0 0.0
    %1489 = vmatprep.subr.mxu0 0.0
    %1490 = vmatpush2.msra.mxu0 0.0
    %1491 = vmatprep.subr.mxu0 0.0
    %1492 = vmatpush2.msra.mxu0 0.0
    %1493 = vmatprep.subr.mxu0 0.0
    %1494 = vmatpush2.msra.mxu0 0.0
    %1495 = vmatprep.subr.mxu0 0.0
    %1496 = vmatpush2.msra.mxu0 0.0
    %1497 = vmatprep.subr.mxu0 0.0
    %1498 = vmatpush2.msra.mxu0 0.0
    %1499 = vmatprep.subr.mxu0 0.0
    %1500 = vmatpush2.msra.mxu0 0.0
    %1501 = vmatprep.subr.mxu0 0.0
    %1502 = vmatpush2.msra.mxu0 0.0
    %1503 = vmatprep.subr.mxu0 0.0
    %1504 = vmatpush2.msra.mxu0 0.0
    %1505 = vmatprep.subr.mxu0 0.0
    %1506 = vmatpush2.msra.mxu0 0.0
    %1507 = vmatprep.subr.mxu0 0.0
    %1508 = vmatpush2.msra.mxu0 0.0
    %1509 = vmatprep.subr.mxu0 0.0
    %1510 = vmatpush2.msra.mxu0 0.0
    %1511 = vmatprep.subr.mxu0 0.0
    %1512 = vmatpush2.msra.mxu0 0.0
    %1513 = vmatprep.subr.mxu0 0.0
    %1514 = vmatpush2.msra.mxu0 0.0
    %1515 = vmatprep.subr.mxu0 0.0
    %1516 = vmatpush2.msra.mxu0 0.0
    %1517 = vmatprep.subr.mxu0 0.0
    %1518 = vmatpush2.msra.mxu0 0.0
    %1519 = vmatprep.mubr.f32.mxu0 0.0
    %1520 = vmatmul.mubr.f32.gmra.mxu0 %v1453
    %v1521 = vpop.f32.mrf.mxu0
    %v1522 = vadd.f32 0.0, %v1521
    %v1523 = vpop.f32.mrf.mxu0
    %1524 = vdwg.mxu0
    %v1526 = vrot.slane %v1522, 6
    %v1528 = vadd.f32 %v315, %v1526
    %v1529 = vxor.u32 %v1448, 2147483648
    %v1530 = vmul.f32 %v1529, 1.442695
    %v1531 = vpow.pop %v1530
    %v1532 = vadd.f32 %v1531, 1.0
    %v1533 = vrcp.pop %v1532
    %v1534 = vmul.f32 1.0, %v1533
    %v1535 = vtanh.pop %v1448
    %v1537 = vrot.slane %v1335, 7
    %v1539 = vmul.f32 %v1534, %v1537
    %1541 = vrot.lane.b32.xlu0 %v1535, 64
    %v1542 = vpop.permute.xlu0 %1541
    %v1544 = vmul.f32 %v1534, %v1542
    %1546 = vrot.lane.b32.xlu0 %v1544, 32
    %v1547 = vpop.permute.xlu0 %1546
    %v1549 = vadd.f32 %v1539, %v1547
    %v1550 = vtanh.pop %v1549
    %1552 = vrot.lane.b32.xlu0 %v1550, 64
    %v1553 = vpop.permute.xlu0 %1552
    %v1555 = vmul.f32 %v1534, %v1553
    %v1556 = vxor.u32 %v1528, 2147483648
    %v1557 = vmul.f32 %v1556, 1.442695
    %v1558 = vpow.pop %v1557
    %v1559 = vadd.f32 %v1558, 1.0
    %v1560 = vrcp.pop %v1559
    %v1561 = vmul.f32 1.0, %v1560
    %v1562 = vtanh.pop %v1528
    %v1564 = vrot.slane %v1362, 1
    %v1566 = vmul.f32 %v1561, %v1564
    %1568 = vrot.lane.b32.xlu0 %v1562, 64
    %v1569 = vpop.permute.xlu0 %1568
    %v1571 = vmul.f32 %v1561, %v1569
    %1573 = vrot.lane.b32.xlu0 %v1571, 32
    %v1574 = vpop.permute.xlu0 %1573
    %v1576 = vadd.f32 %v1566, %v1574
    %v1577 = vtanh.pop %v1576
    %1579 = vrot.lane.b32.xlu0 %v1577, 64
    %v1580 = vpop.permute.xlu0 %1579
    %v1582 = vmul.f32 %v1561, %v1580
    %v1584 = vrot.slane %v1555, 5
    %1585 = vrot.lane.b32.xlu0 %v1584, 32
    %v1586 = vpop.permute.xlu0 %1585
    %v1587 = vsel %vm317, %v1586, 0
    %1589 = vmatprep.subr.mxu0 0.0
    %1590 = vmatpush1.msra.mxu0 0.0
    %1591 = vmatprep.subr.mxu0 0.0
    %1592 = vmatpush1.msra.mxu0 0.0
    %1593 = vmatprep.subr.mxu0 0.0
    %1594 = vmatpush1.msra.mxu0 0.0
    %1595 = vmatprep.subr.mxu0 0.0
    %1596 = vmatpush1.msra.mxu0 0.0
    %1597 = vmatprep.subr.mxu0 0.0
    %1598 = vmatpush1.msra.mxu0 0.0
    %1599 = vmatprep.subr.mxu0 0.0
    %1600 = vmatpush1.msra.mxu0 0.0
    %1601 = vmatprep.subr.mxu0 0.0
    %1602 = vmatpush1.msra.mxu0 0.0
    %1603 = vmatprep.subr.mxu0 0.0
    %1604 = vmatpush1.msra.mxu0 0.0
    %1605 = vmatprep.subr.mxu0 0.0
    %1606 = vmatpush1.msra.mxu0 0.0
    %1607 = vmatprep.subr.mxu0 0.0
    %1608 = vmatpush1.msra.mxu0 0.0
    %1609 = vmatprep.subr.mxu0 0.0
    %1610 = vmatpush1.msra.mxu0 0.0
    %1611 = vmatprep.subr.mxu0 0.0
    %1612 = vmatpush1.msra.mxu0 0.0
    %1613 = vmatprep.subr.mxu0 0.0
    %1614 = vmatpush1.msra.mxu0 %v225
    %1615 = vmatprep.subr.mxu0 0.0
    %1616 = vmatpush1.msra.mxu0 %v224
    %1617 = vmatprep.subr.mxu0 0.0
    %1618 = vmatpush1.msra.mxu0 %v223
    %1619 = vmatprep.subr.mxu0 0.0
    %1620 = vmatpush1.msra.mxu0 %v222
    %1621 = vmatprep.subr.mxu0 0.0
    %1622 = vmatpush2.msra.mxu0 0.0
    %1623 = vmatprep.subr.mxu0 0.0
    %1624 = vmatpush2.msra.mxu0 0.0
    %1625 = vmatprep.subr.mxu0 0.0
    %1626 = vmatpush2.msra.mxu0 0.0
    %1627 = vmatprep.subr.mxu0 0.0
    %1628 = vmatpush2.msra.mxu0 0.0
    %1629 = vmatprep.subr.mxu0 0.0
    %1630 = vmatpush2.msra.mxu0 0.0
    %1631 = vmatprep.subr.mxu0 0.0
    %1632 = vmatpush2.msra.mxu0 0.0
    %1633 = vmatprep.subr.mxu0 0.0
    %1634 = vmatpush2.msra.mxu0 0.0
    %1635 = vmatprep.subr.mxu0 0.0
    %1636 = vmatpush2.msra.mxu0 0.0
    %1637 = vmatprep.subr.mxu0 0.0
    %1638 = vmatpush2.msra.mxu0 0.0
    %1639 = vmatprep.subr.mxu0 0.0
    %1640 = vmatpush2.msra.mxu0 0.0
    %1641 = vmatprep.subr.mxu0 0.0
    %1642 = vmatpush2.msra.mxu0 0.0
    %1643 = vmatprep.subr.mxu0 0.0
    %1644 = vmatpush2.msra.mxu0 0.0
    %1645 = vmatprep.subr.mxu0 0.0
    %1646 = vmatpush2.msra.mxu0 0.0
    %1647 = vmatprep.subr.mxu0 0.0
    %1648 = vmatpush2.msra.mxu0 0.0
    %1649 = vmatprep.subr.mxu0 0.0
    %1650 = vmatpush2.msra.mxu0 0.0
    %1651 = vmatprep.subr.mxu0 0.0
    %1652 = vmatpush2.msra.mxu0 0.0
    %1653 = vmatprep.mubr.f32.mxu0 0.0
    %1654 = vmatmul.mubr.f32.gmra.mxu0 %v1587
    %v1655 = vpop.f32.mrf.mxu0
    %v1656 = vadd.f32 0.0, %v1655
    %v1657 = vpop.f32.mrf.mxu0
    %1658 = vdwg.mxu0
    %v1660 = vrot.slane %v1656, 2
    %v1662 = vadd.f32 %v313, %v1660
    %v1664 = vrot.slane %v1582, 2
    %1665 = vrot.lane.b32.xlu0 %v1664, 32
    %v1666 = vpop.permute.xlu0 %1665
    %v1667 = vsel %vm317, %v1666, 0
    %1669 = vmatprep.subr.mxu0 0.0
    %1670 = vmatpush1.msra.mxu0 0.0
    %1671 = vmatprep.subr.mxu0 0.0
    %1672 = vmatpush1.msra.mxu0 0.0
    %1673 = vmatprep.subr.mxu0 0.0
    %1674 = vmatpush1.msra.mxu0 0.0
    %1675 = vmatprep.subr.mxu0 0.0
    %1676 = vmatpush1.msra.mxu0 0.0
    %1677 = vmatprep.subr.mxu0 0.0
    %1678 = vmatpush1.msra.mxu0 0.0
    %1679 = vmatprep.subr.mxu0 0.0
    %1680 = vmatpush1.msra.mxu0 0.0
    %1681 = vmatprep.subr.mxu0 0.0
    %1682 = vmatpush1.msra.mxu0 0.0
    %1683 = vmatprep.subr.mxu0 0.0
    %1684 = vmatpush1.msra.mxu0 0.0
    %1685 = vmatprep.subr.mxu0 0.0
    %1686 = vmatpush1.msra.mxu0 0.0
    %1687 = vmatprep.subr.mxu0 0.0
    %1688 = vmatpush1.msra.mxu0 0.0
    %1689 = vmatprep.subr.mxu0 0.0
    %1690 = vmatpush1.msra.mxu0 0.0
    %1691 = vmatprep.subr.mxu0 0.0
    %1692 = vmatpush1.msra.mxu0 0.0
    %1693 = vmatprep.subr.mxu0 0.0
    %1694 = vmatpush1.msra.mxu0 %v230
    %1695 = vmatprep.subr.mxu0 0.0
    %1696 = vmatpush1.msra.mxu0 %v229
    %1697 = vmatprep.subr.mxu0 0.0
    %1698 = vmatpush1.msra.mxu0 %v228
    %1699 = vmatprep.subr.mxu0 0.0
    %1700 = vmatpush1.msra.mxu0 %v227
    %1701 = vmatprep.subr.mxu0 0.0
    %1702 = vmatpush2.msra.mxu0 0.0
    %1703 = vmatprep.subr.mxu0 0.0
    %1704 = vmatpush2.msra.mxu0 0.0
    %1705 = vmatprep.subr.mxu0 0.0
    %1706 = vmatpush2.msra.mxu0 0.0
    %1707 = vmatprep.subr.mxu0 0.0
    %1708 = vmatpush2.msra.mxu0 0.0
    %1709 = vmatprep.subr.mxu0 0.0
    %1710 = vmatpush2.msra.mxu0 0.0
    %1711 = vmatprep.subr.mxu0 0.0
    %1712 = vmatpush2.msra.mxu0 0.0
    %1713 = vmatprep.subr.mxu0 0.0
    %1714 = vmatpush2.msra.mxu0 0.0
    %1715 = vmatprep.subr.mxu0 0.0
    %1716 = vmatpush2.msra.mxu0 0.0
    %1717 = vmatprep.subr.mxu0 0.0
    %1718 = vmatpush2.msra.mxu0 0.0
    %1719 = vmatprep.subr.mxu0 0.0
    %1720 = vmatpush2.msra.mxu0 0.0
    %1721 = vmatprep.subr.mxu0 0.0
    %1722 = vmatpush2.msra.mxu0 0.0
    %1723 = vmatprep.subr.mxu0 0.0
    %1724 = vmatpush2.msra.mxu0 0.0
    %1725 = vmatprep.subr.mxu0 0.0
    %1726 = vmatpush2.msra.mxu0 0.0
    %1727 = vmatprep.subr.mxu0 0.0
    %1728 = vmatpush2.msra.mxu0 0.0
    %1729 = vmatprep.subr.mxu0 0.0
    %1730 = vmatpush2.msra.mxu0 0.0
    %1731 = vmatprep.subr.mxu0 0.0
    %1732 = vmatpush2.msra.mxu0 0.0
    %1733 = vmatprep.mubr.f32.mxu0 0.0
    %1734 = vmatmul.mubr.f32.gmra.mxu0 %v1667
    %v1735 = vpop.f32.mrf.mxu0
    %v1736 = vadd.f32 0.0, %v1735
    %v1737 = vpop.f32.mrf.mxu0
    %1738 = vdwg.mxu0
    %v1740 = vrot.slane %v1736, 7
    %v1742 = vadd.f32 %v315, %v1740
    %v1743 = vxor.u32 %v1662, 2147483648
    %v1744 = vmul.f32 %v1743, 1.442695
    %v1745 = vpow.pop %v1744
    %v1746 = vadd.f32 %v1745, 1.0
    %v1747 = vrcp.pop %v1746
    %v1748 = vmul.f32 1.0, %v1747
    %v1749 = vtanh.pop %v1662
    %v1751 = vrot.slane %v1549, 7
    %v1753 = vmul.f32 %v1748, %v1751
    %1755 = vrot.lane.b32.xlu0 %v1749, 64
    %v1756 = vpop.permute.xlu0 %1755
    %v1758 = vmul.f32 %v1748, %v1756
    %1760 = vrot.lane.b32.xlu0 %v1758, 32
    %v1761 = vpop.permute.xlu0 %1760
    %v1763 = vadd.f32 %v1753, %v1761
    %v1764 = vtanh.pop %v1763
    %1766 = vrot.lane.b32.xlu0 %v1764, 64
    %v1767 = vpop.permute.xlu0 %1766
    %v1769 = vmul.f32 %v1748, %v1767
    %v1770 = vxor.u32 %v1742, 2147483648
    %v1771 = vmul.f32 %v1770, 1.442695
    %v1772 = vpow.pop %v1771
    %v1773 = vadd.f32 %v1772, 1.0
    %v1774 = vrcp.pop %v1773
    %v1775 = vmul.f32 1.0, %v1774
    %v1776 = vtanh.pop %v1742
    %v1778 = vrot.slane %v1576, 1
    %v1780 = vmul.f32 %v1775, %v1778
    %1782 = vrot.lane.b32.xlu0 %v1776, 64
    %v1783 = vpop.permute.xlu0 %1782
    %v1785 = vmul.f32 %v1775, %v1783
    %1787 = vrot.lane.b32.xlu0 %v1785, 32
    %v1788 = vpop.permute.xlu0 %1787
    %v1790 = vadd.f32 %v1780, %v1788
    %v1791 = vtanh.pop %v1790
    %1793 = vrot.lane.b32.xlu0 %v1791, 64
    %v1794 = vpop.permute.xlu0 %1793
    %v1796 = vmul.f32 %v1775, %v1794
    %v1798 = vrot.slane %v1769, 6
    %1799 = vrot.lane.b32.xlu0 %v1798, 32
    %v1800 = vpop.permute.xlu0 %1799
    %v1801 = vsel %vm317, %v1800, 0
    %1803 = vmatprep.subr.mxu0 0.0
    %1804 = vmatpush1.msra.mxu0 0.0
    %1805 = vmatprep.subr.mxu0 0.0
    %1806 = vmatpush1.msra.mxu0 0.0
    %1807 = vmatprep.subr.mxu0 0.0
    %1808 = vmatpush1.msra.mxu0 0.0
    %1809 = vmatprep.subr.mxu0 0.0
    %1810 = vmatpush1.msra.mxu0 0.0
    %1811 = vmatprep.subr.mxu0 0.0
    %1812 = vmatpush1.msra.mxu0 0.0
    %1813 = vmatprep.subr.mxu0 0.0
    %1814 = vmatpush1.msra.mxu0 0.0
    %1815 = vmatprep.subr.mxu0 0.0
    %1816 = vmatpush1.msra.mxu0 0.0
    %1817 = vmatprep.subr.mxu0 0.0
    %1818 = vmatpush1.msra.mxu0 0.0
    %1819 = vmatprep.subr.mxu0 0.0
    %1820 = vmatpush1.msra.mxu0 0.0
    %1821 = vmatprep.subr.mxu0 0.0
    %1822 = vmatpush1.msra.mxu0 0.0
    %1823 = vmatprep.subr.mxu0 0.0
    %1824 = vmatpush1.msra.mxu0 0.0
    %1825 = vmatprep.subr.mxu0 0.0
    %1826 = vmatpush1.msra.mxu0 0.0
    %1827 = vmatprep.subr.mxu0 0.0
    %1828 = vmatpush1.msra.mxu0 %v225
    %1829 = vmatprep.subr.mxu0 0.0
    %1830 = vmatpush1.msra.mxu0 %v224
    %1831 = vmatprep.subr.mxu0 0.0
    %1832 = vmatpush1.msra.mxu0 %v223
    %1833 = vmatprep.subr.mxu0 0.0
    %1834 = vmatpush1.msra.mxu0 %v222
    %1835 = vmatprep.subr.mxu0 0.0
    %1836 = vmatpush2.msra.mxu0 0.0
    %1837 = vmatprep.subr.mxu0 0.0
    %1838 = vmatpush2.msra.mxu0 0.0
    %1839 = vmatprep.subr.mxu0 0.0
    %1840 = vmatpush2.msra.mxu0 0.0
    %1841 = vmatprep.subr.mxu0 0.0
    %1842 = vmatpush2.msra.mxu0 0.0
    %1843 = vmatprep.subr.mxu0 0.0
    %1844 = vmatpush2.msra.mxu0 0.0
    %1845 = vmatprep.subr.mxu0 0.0
    %1846 = vmatpush2.msra.mxu0 0.0
    %1847 = vmatprep.subr.mxu0 0.0
    %1848 = vmatpush2.msra.mxu0 0.0
    %1849 = vmatprep.subr.mxu0 0.0
    %1850 = vmatpush2.msra.mxu0 0.0
    %1851 = vmatprep.subr.mxu0 0.0
    %1852 = vmatpush2.msra.mxu0 0.0
    %1853 = vmatprep.subr.mxu0 0.0
    %1854 = vmatpush2.msra.mxu0 0.0
    %1855 = vmatprep.subr.mxu0 0.0
    %1856 = vmatpush2.msra.mxu0 0.0
    %1857 = vmatprep.subr.mxu0 0.0
    %1858 = vmatpush2.msra.mxu0 0.0
    %1859 = vmatprep.subr.mxu0 0.0
    %1860 = vmatpush2.msra.mxu0 0.0
    %1861 = vmatprep.subr.mxu0 0.0
    %1862 = vmatpush2.msra.mxu0 0.0
    %1863 = vmatprep.subr.mxu0 0.0
    %1864 = vmatpush2.msra.mxu0 0.0
    %1865 = vmatprep.subr.mxu0 0.0
    %1866 = vmatpush2.msra.mxu0 0.0
    %1867 = vmatprep.mubr.f32.mxu0 0.0
    %1868 = vmatmul.mubr.f32.gmra.mxu0 %v1801
    %v1869 = vpop.f32.mrf.mxu0
    %v1870 = vadd.f32 0.0, %v1869
    %v1871 = vpop.f32.mrf.mxu0
    %1872 = vdwg.mxu0
    %v1874 = vrot.slane %v1870, 1
    %v1876 = vadd.f32 %v313, %v1874
    %v1878 = vrot.slane %v1796, 1
    %1879 = vrot.lane.b32.xlu0 %v1878, 32
    %v1880 = vpop.permute.xlu0 %1879
    %v1881 = vsel %vm317, %v1880, 0
    %1883 = vmatprep.subr.mxu0 0.0
    %1884 = vmatpush1.msra.mxu0 0.0
    %1885 = vmatprep.subr.mxu0 0.0
    %1886 = vmatpush1.msra.mxu0 0.0
    %1887 = vmatprep.subr.mxu0 0.0
    %1888 = vmatpush1.msra.mxu0 0.0
    %1889 = vmatprep.subr.mxu0 0.0
    %1890 = vmatpush1.msra.mxu0 0.0
    %1891 = vmatprep.subr.mxu0 0.0
    %1892 = vmatpush1.msra.mxu0 0.0
    %1893 = vmatprep.subr.mxu0 0.0
    %1894 = vmatpush1.msra.mxu0 0.0
    %1895 = vmatprep.subr.mxu0 0.0
    %1896 = vmatpush1.msra.mxu0 0.0
    %1897 = vmatprep.subr.mxu0 0.0
    %1898 = vmatpush1.msra.mxu0 0.0
    %1899 = vmatprep.subr.mxu0 0.0
    %1900 = vmatpush1.msra.mxu0 0.0
    %1901 = vmatprep.subr.mxu0 0.0
    %1902 = vmatpush1.msra.mxu0 0.0
    %1903 = vmatprep.subr.mxu0 0.0
    %1904 = vmatpush1.msra.mxu0 0.0
    %1905 = vmatprep.subr.mxu0 0.0
    %1906 = vmatpush1.msra.mxu0 0.0
    %1907 = vmatprep.subr.mxu0 0.0
    %1908 = vmatpush1.msra.mxu0 %v230
    %1909 = vmatprep.subr.mxu0 0.0
    %1910 = vmatpush1.msra.mxu0 %v229
    %1911 = vmatprep.subr.mxu0 0.0
    %1912 = vmatpush1.msra.mxu0 %v228
    %1913 = vmatprep.subr.mxu0 0.0
    %1914 = vmatpush1.msra.mxu0 %v227
    %1915 = vmatprep.subr.mxu0 0.0
    %1916 = vmatpush2.msra.mxu0 0.0
    %1917 = vmatprep.subr.mxu0 0.0
    %1918 = vmatpush2.msra.mxu0 0.0
    %1919 = vmatprep.subr.mxu0 0.0
    %1920 = vmatpush2.msra.mxu0 0.0
    %1921 = vmatprep.subr.mxu0 0.0
    %1922 = vmatpush2.msra.mxu0 0.0
    %1923 = vmatprep.subr.mxu0 0.0
    %1924 = vmatpush2.msra.mxu0 0.0
    %1925 = vmatprep.subr.mxu0 0.0
    %1926 = vmatpush2.msra.mxu0 0.0
    %1927 = vmatprep.subr.mxu0 0.0
    %1928 = vmatpush2.msra.mxu0 0.0
    %1929 = vmatprep.subr.mxu0 0.0
    %1930 = vmatpush2.msra.mxu0 0.0
    %1931 = vmatprep.subr.mxu0 0.0
    %1932 = vmatpush2.msra.mxu0 0.0
    %1933 = vmatprep.subr.mxu0 0.0
    %1934 = vmatpush2.msra.mxu0 0.0
    %1935 = vmatprep.subr.mxu0 0.0
    %1936 = vmatpush2.msra.mxu0 0.0
    %1937 = vmatprep.subr.mxu0 0.0
    %1938 = vmatpush2.msra.mxu0 0.0
    %1939 = vmatprep.subr.mxu0 0.0
    %1940 = vmatpush2.msra.mxu0 0.0
    %1941 = vmatprep.subr.mxu0 0.0
    %1942 = vmatpush2.msra.mxu0 0.0
    %1943 = vmatprep.subr.mxu0 0.0
    %1944 = vmatpush2.msra.mxu0 0.0
    %1945 = vmatprep.subr.mxu0 0.0
    %1946 = vmatpush2.msra.mxu0 0.0
    %1947 = vmatprep.mubr.f32.mxu0 0.0
    %1948 = vmatmul.mubr.f32.gmra.mxu0 %v1881
    %v1949 = vpop.f32.mrf.mxu0
    %v1950 = vadd.f32 0.0, %v1949
    %v1951 = vpop.f32.mrf.mxu0
    %1952 = vdwg.mxu0
    %v1953 = vadd.f32 %v315, %v1950
    %v1954 = vxor.u32 %v1876, 2147483648
    %v1955 = vmul.f32 %v1954, 1.442695
    %v1956 = vpow.pop %v1955
    %v1957 = vadd.f32 %v1956, 1.0
    %v1958 = vrcp.pop %v1957
    %v1959 = vmul.f32 1.0, %v1958
    %v1960 = vtanh.pop %v1876
    %v1962 = vrot.slane %v1763, 7
    %v1964 = vmul.f32 %v1959, %v1962
    %1966 = vrot.lane.b32.xlu0 %v1960, 64
    %v1967 = vpop.permute.xlu0 %1966
    %v1969 = vmul.f32 %v1959, %v1967
    %1971 = vrot.lane.b32.xlu0 %v1969, 32
    %v1972 = vpop.permute.xlu0 %1971
    %v1974 = vadd.f32 %v1964, %v1972
    %v1975 = vtanh.pop %v1974
    %1977 = vrot.lane.b32.xlu0 %v1975, 64
    %v1978 = vpop.permute.xlu0 %1977
    %v1980 = vmul.f32 %v1959, %v1978
    %v1981 = vxor.u32 %v1953, 2147483648
    %v1982 = vmul.f32 %v1981, 1.442695
    %v1983 = vpow.pop %v1982
    %v1984 = vadd.f32 %v1983, 1.0
    %v1985 = vrcp.pop %v1984
    %v1986 = vmul.f32 1.0, %v1985
    %v1987 = vtanh.pop %v1953
    %v1989 = vrot.slane %v1790, 1
    %v1991 = vmul.f32 %v1986, %v1989
    %1993 = vrot.lane.b32.xlu0 %v1987, 64
    %v1994 = vpop.permute.xlu0 %1993
    %v1996 = vmul.f32 %v1986, %v1994
    %1998 = vrot.lane.b32.xlu0 %v1996, 32
    %v1999 = vpop.permute.xlu0 %1998
    %v2001 = vadd.f32 %v1991, %v1999
    %v2002 = vtanh.pop %v2001
    %2004 = vrot.lane.b32.xlu0 %v2002, 64
    %v2005 = vpop.permute.xlu0 %2004
    %v2007 = vmul.f32 %v1986, %v2005
    %vm2008 = vcmask 1040384
    %v2009 = vsel %vm2008, %v489, %v699
    %vm2010 = vcmask 1041408
    %v2011 = vsel %vm2010, %v2009, %v913
    %vm2012 = vcmask 1042432
    %v2013 = vsel %vm2012, %v2011, %v1127
    %vm2014 = vcmask 1043456
    %v2015 = vsel %vm2014, %v2013, %v1341
    %vm2016 = vcmask 1044480
    %v2017 = vsel %vm2016, %v2015, %v1555
    %vm2018 = vcmask 1045504
    %v2019 = vsel %vm2018, %v2017, %v1769
    %vm2020 = vcmask 1046528
    %v2021 = vsel %vm2020, %v2019, %v1980
    %v2022 = vsel %vm2008, %v2007, %v1796
    %v2023 = vsel %vm2010, %v2022, %v1582
    %v2024 = vsel %vm2012, %v2023, %v1368
    %v2025 = vsel %vm2014, %v2024, %v1154
    %v2026 = vsel %vm2016, %v2025, %v940
    %v2027 = vsel %vm2018, %v2026, %v726
    %v2028 = vsel %vm2020, %v2027, %v513
    %2030 = vrot.lane.b32.xlu0 %v2021, 32
    %v2031 = vpop.permute.xlu0 %2030
    %2034 = vrot.lane.b32.xlu0 %v2028, 64
    %v2035 = vpop.permute.xlu0 %2034
    %v2037 = vsel %vm317, %v2031, %v2035
    %v2038 = vld [vmem:[%s6] sm:$0xff]
    %v2039 = vld [vmem:[%s6 + $0x8] sm:$0xff]
    %v2040 = vld [vmem:[%s6 + $0x10] sm:$0xff]
    %v2041 = vld [vmem:[%s6 + $0x18] sm:$0xff]
    %v2042 = vld [vmem:[%s6 + $0x20] sm:$0xff]
    %v2043 = vld [vmem:[%s6 + $0x28] sm:$0xff]
    %v2044 = vld [vmem:[%s6 + $0x30] sm:$0xff]
    %v2045 = vld [vmem:[%s6 + $0x38] sm:$0xff]
    %v2046 = vld [vmem:[%s6 + $0x40] sm:$0xff]
    %v2047 = vld [vmem:[%s6 + $0x48] sm:$0xff]
    %v2048 = vld [vmem:[%s6 + $0x50] sm:$0xff]
    %v2049 = vld [vmem:[%s6 + $0x58] sm:$0xff]
    %v2050 = vld [vmem:[%s6 + $0x60] sm:$0xff]
    %v2051 = vld [vmem:[%s6 + $0x68] sm:$0xff]
    %v2052 = vld [vmem:[%s6 + $0x70] sm:$0xff]
    %v2053 = vld [vmem:[%s6 + $0x78] sm:$0xff]
    %v2054 = vld [vmem:[%s7] sm:$0x3]
    %v2055 = vld [vmem:[#allocation8] sm:$0xff]
    %v2056 = vld [vmem:[#allocation8 + $0x8] sm:$0xff]
    %v2057 = vld [vmem:[#allocation8 + $0x10] sm:$0xff]
    %v2058 = vld [vmem:[#allocation8 + $0x18] sm:$0xff]
    %s2059 = scalar_lea.vmem [#allocation8], 32
    %v2060 = vld [vmem:[%s2059] sm:$0xff]
    %v2061 = vld [vmem:[%s2059 + $0x8] sm:$0xff]
    %v2062 = vld [vmem:[%s2059 + $0x10] sm:$0xff]
    %v2063 = vld [vmem:[%s2059 + $0x18] sm:$0xff]
    %v2065 = vlaneseq
    %v2066 = vshrl.u32 %v2065, 7
    %v2067 = vsub.s32 0, %v2066
    %v2068 = vrot.slane %v2054, %v2067
    %v2069 = vlaneseq
    %v2070 = vshrl.u32 %v2069, 7
    %v2071 = vsub.s32 1, %v2070
    %v2072 = vrot.slane %v2054, %v2071
    %v2076 = vsel %vm242, %v2037, 0
    %2078 = vmatprep.subr.mxu0 0.0
    %2079 = vmatpush1.msra.mxu0 0.0
    %2080 = vmatprep.subr.mxu0 0.0
    %2081 = vmatpush1.msra.mxu0 0.0
    %2082 = vmatprep.subr.mxu0 0.0
    %2083 = vmatpush1.msra.mxu0 0.0
    %2084 = vmatprep.subr.mxu0 0.0
    %2085 = vmatpush1.msra.mxu0 0.0
    %2086 = vmatprep.subr.mxu0 0.0
    %2087 = vmatpush1.msra.mxu0 0.0
    %2088 = vmatprep.subr.mxu0 0.0
    %2089 = vmatpush1.msra.mxu0 0.0
    %2090 = vmatprep.subr.mxu0 0.0
    %2091 = vmatpush1.msra.mxu0 0.0
    %2092 = vmatprep.subr.mxu0 0.0
    %2093 = vmatpush1.msra.mxu0 0.0
    %2094 = vmatprep.subr.mxu0 %v2053
    %2095 = vmatpush1.msra.mxu0 %v2052
    %2096 = vmatprep.subr.mxu0 %v2051
    %2097 = vmatpush1.msra.mxu0 %v2050
    %2098 = vmatprep.subr.mxu0 %v2049
    %2099 = vmatpush1.msra.mxu0 %v2048
    %2100 = vmatprep.subr.mxu0 %v2047
    %2101 = vmatpush1.msra.mxu0 %v2046
    %2102 = vmatprep.subr.mxu0 %v2045
    %2103 = vmatpush1.msra.mxu0 %v2044
    %2104 = vmatprep.subr.mxu0 %v2043
    %2105 = vmatpush1.msra.mxu0 %v2042
    %2106 = vmatprep.subr.mxu0 %v2041
    %2107 = vmatpush1.msra.mxu0 %v2040
    %2108 = vmatprep.subr.mxu0 %v2039
    %2109 = vmatpush1.msra.mxu0 %v2038
    %2110 = vmatprep.subr.mxu0 0.0
    %2111 = vmatpush2.msra.mxu0 0.0
    %2112 = vmatprep.subr.mxu0 0.0
    %2113 = vmatpush2.msra.mxu0 0.0
    %2114 = vmatprep.subr.mxu0 0.0
    %2115 = vmatpush2.msra.mxu0 0.0
    %2116 = vmatprep.subr.mxu0 0.0
    %2117 = vmatpush2.msra.mxu0 0.0
    %2118 = vmatprep.subr.mxu0 0.0
    %2119 = vmatpush2.msra.mxu0 0.0
    %2120 = vmatprep.subr.mxu0 0.0
    %2121 = vmatpush2.msra.mxu0 0.0
    %2122 = vmatprep.subr.mxu0 0.0
    %2123 = vmatpush2.msra.mxu0 0.0
    %2124 = vmatprep.subr.mxu0 0.0
    %2125 = vmatpush2.msra.mxu0 0.0
    %2126 = vmatprep.subr.mxu0 0.0
    %2127 = vmatpush2.msra.mxu0 0.0
    %2128 = vmatprep.subr.mxu0 0.0
    %2129 = vmatpush2.msra.mxu0 0.0
    %2130 = vmatprep.subr.mxu0 0.0
    %2131 = vmatpush2.msra.mxu0 0.0
    %2132 = vmatprep.subr.mxu0 0.0
    %2133 = vmatpush2.msra.mxu0 0.0
    %2134 = vmatprep.subr.mxu0 0.0
    %2135 = vmatpush2.msra.mxu0 0.0
    %2136 = vmatprep.subr.mxu0 0.0
    %2137 = vmatpush2.msra.mxu0 0.0
    %2138 = vmatprep.subr.mxu0 0.0
    %2139 = vmatpush2.msra.mxu0 0.0
    %2140 = vmatprep.subr.mxu0 0.0
    %2141 = vmatpush2.msra.mxu0 0.0
    %2142 = vmatprep.mubr.f32.mxu0 0.0
    %2143 = vmatmul.mubr.f32.gmra.mxu0 %v2076
    %v2144 = vpop.f32.mrf.mxu0
    %v2145 = vadd.f32 %v2068, %v2144
    %v2146 = vpop.f32.mrf.mxu0
    %v2147 = vadd.f32 %v2072, %v2146
    %2148 = vdwg.mxu0
    %2149 = vmatprep.subr.mxu0 0.0
    %2150 = vmatpush1.msra.mxu0 0.0
    %2151 = vmatprep.subr.mxu0 0.0
    %2152 = vmatpush1.msra.mxu0 0.0
    %2153 = vmatprep.subr.mxu0 0.0
    %2154 = vmatpush1.msra.mxu0 0.0
    %2155 = vmatprep.subr.mxu0 0.0
    %2156 = vmatpush1.msra.mxu0 0.0
    %2157 = vmatprep.subr.mxu0 0.0
    %2158 = vmatpush1.msra.mxu0 0.0
    %2159 = vmatprep.subr.mxu0 0.0
    %2160 = vmatpush1.msra.mxu0 0.0
    %2161 = vmatprep.subr.mxu0 0.0
    %2162 = vmatpush1.msra.mxu0 0.0
    %2163 = vmatprep.subr.mxu0 0.0
    %2164 = vmatpush1.msra.mxu0 0.0
    %2165 = vmatprep.subr.mxu0 0.0
    %2166 = vmatpush1.msra.mxu0 0.0
    %2167 = vmatprep.subr.mxu0 0.0
    %2168 = vmatpush1.msra.mxu0 0.0
    %2169 = vmatprep.subr.mxu0 0.0
    %2170 = vmatpush1.msra.mxu0 0.0
    %2171 = vmatprep.subr.mxu0 0.0
    %2172 = vmatpush1.msra.mxu0 0.0
    %2173 = vmatprep.subr.mxu0 0.0
    %2174 = vmatpush1.msra.mxu0 %v2058
    %2175 = vmatprep.subr.mxu0 0.0
    %2176 = vmatpush1.msra.mxu0 %v2057
    %2177 = vmatprep.subr.mxu0 0.0
    %2178 = vmatpush1.msra.mxu0 %v2056
    %2179 = vmatprep.subr.mxu0 0.0
    %2180 = vmatpush1.msra.mxu0 %v2055
    %2181 = vmatprep.subr.mxu0 0.0
    %2182 = vmatpush2.msra.mxu0 0.0
    %2183 = vmatprep.subr.mxu0 0.0
    %2184 = vmatpush2.msra.mxu0 0.0
    %2185 = vmatprep.subr.mxu0 0.0
    %2186 = vmatpush2.msra.mxu0 0.0
    %2187 = vmatprep.subr.mxu0 0.0
    %2188 = vmatpush2.msra.mxu0 0.0
    %2189 = vmatprep.subr.mxu0 0.0
    %2190 = vmatpush2.msra.mxu0 0.0
    %2191 = vmatprep.subr.mxu0 0.0
    %2192 = vmatpush2.msra.mxu0 0.0
    %2193 = vmatprep.subr.mxu0 0.0
    %2194 = vmatpush2.msra.mxu0 0.0
    %2195 = vmatprep.subr.mxu0 0.0
    %2196 = vmatpush2.msra.mxu0 0.0
    %2197 = vmatprep.subr.mxu0 0.0
    %2198 = vmatpush2.msra.mxu0 0.0
    %2199 = vmatprep.subr.mxu0 0.0
    %2200 = vmatpush2.msra.mxu0 0.0
    %2201 = vmatprep.subr.mxu0 0.0
    %2202 = vmatpush2.msra.mxu0 0.0
    %2203 = vmatprep.subr.mxu0 0.0
    %2204 = vmatpush2.msra.mxu0 0.0
    %2205 = vmatprep.subr.mxu0 0.0
    %2206 = vmatpush2.msra.mxu0 0.0
    %2207 = vmatprep.subr.mxu0 0.0
    %2208 = vmatpush2.msra.mxu0 0.0
    %2209 = vmatprep.subr.mxu0 0.0
    %2210 = vmatpush2.msra.mxu0 0.0
    %2211 = vmatprep.subr.mxu0 0.0
    %2212 = vmatpush2.msra.mxu0 0.0
    %2213 = vmatprep.mubr.f32.mxu0 0.0
    %2214 = vmatmul.mubr.f32.gmra.mxu0 %v319
    %v2215 = vpop.f32.mrf.mxu0
    %v2216 = vadd.f32 0.0, %v2215
    %v2217 = vpop.f32.mrf.mxu0
    %2218 = vdwg.mxu0
    %v2219 = vadd.f32 %v2145, %v2216
    %2220 = vmatprep.subr.mxu0 0.0
    %2221 = vmatpush1.msra.mxu0 0.0
    %2222 = vmatprep.subr.mxu0 0.0
    %2223 = vmatpush1.msra.mxu0 0.0
    %2224 = vmatprep.subr.mxu0 0.0
    %2225 = vmatpush1.msra.mxu0 0.0
    %2226 = vmatprep.subr.mxu0 0.0
    %2227 = vmatpush1.msra.mxu0 0.0
    %2228 = vmatprep.subr.mxu0 0.0
    %2229 = vmatpush1.msra.mxu0 0.0
    %2230 = vmatprep.subr.mxu0 0.0
    %2231 = vmatpush1.msra.mxu0 0.0
    %2232 = vmatprep.subr.mxu0 0.0
    %2233 = vmatpush1.msra.mxu0 0.0
    %2234 = vmatprep.subr.mxu0 0.0
    %2235 = vmatpush1.msra.mxu0 0.0
    %2236 = vmatprep.subr.mxu0 0.0
    %2237 = vmatpush1.msra.mxu0 0.0
    %2238 = vmatprep.subr.mxu0 0.0
    %2239 = vmatpush1.msra.mxu0 0.0
    %2240 = vmatprep.subr.mxu0 0.0
    %2241 = vmatpush1.msra.mxu0 0.0
    %2242 = vmatprep.subr.mxu0 0.0
    %2243 = vmatpush1.msra.mxu0 0.0
    %2244 = vmatprep.subr.mxu0 0.0
    %2245 = vmatpush1.msra.mxu0 %v2063
    %2246 = vmatprep.subr.mxu0 0.0
    %2247 = vmatpush1.msra.mxu0 %v2062
    %2248 = vmatprep.subr.mxu0 0.0
    %2249 = vmatpush1.msra.mxu0 %v2061
    %2250 = vmatprep.subr.mxu0 0.0
    %2251 = vmatpush1.msra.mxu0 %v2060
    %2252 = vmatprep.subr.mxu0 0.0
    %2253 = vmatpush2.msra.mxu0 0.0
    %2254 = vmatprep.subr.mxu0 0.0
    %2255 = vmatpush2.msra.mxu0 0.0
    %2256 = vmatprep.subr.mxu0 0.0
    %2257 = vmatpush2.msra.mxu0 0.0
    %2258 = vmatprep.subr.mxu0 0.0
    %2259 = vmatpush2.msra.mxu0 0.0
    %2260 = vmatprep.subr.mxu0 0.0
    %2261 = vmatpush2.msra.mxu0 0.0
    %2262 = vmatprep.subr.mxu0 0.0
    %2263 = vmatpush2.msra.mxu0 0.0
    %2264 = vmatprep.subr.mxu0 0.0
    %2265 = vmatpush2.msra.mxu0 0.0
    %2266 = vmatprep.subr.mxu0 0.0
    %2267 = vmatpush2.msra.mxu0 0.0
    %2268 = vmatprep.subr.mxu0 0.0
    %2269 = vmatpush2.msra.mxu0 0.0
    %2270 = vmatprep.subr.mxu0 0.0
    %2271 = vmatpush2.msra.mxu0 0.0
    %2272 = vmatprep.subr.mxu0 0.0
    %2273 = vmatpush2.msra.mxu0 0.0
    %2274 = vmatprep.subr.mxu0 0.0
    %2275 = vmatpush2.msra.mxu0 0.0
    %2276 = vmatprep.subr.mxu0 0.0
    %2277 = vmatpush2.msra.mxu0 0.0
    %2278 = vmatprep.subr.mxu0 0.0
    %2279 = vmatpush2.msra.mxu0 0.0
    %2280 = vmatprep.subr.mxu0 0.0
    %2281 = vmatpush2.msra.mxu0 0.0
    %2282 = vmatprep.subr.mxu0 0.0
    %2283 = vmatpush2.msra.mxu0 0.0
    %2284 = vmatprep.mubr.f32.mxu0 0.0
    %2285 = vmatmul.mubr.f32.gmra.mxu0 %v319
    %v2286 = vpop.f32.mrf.mxu0
    %v2287 = vadd.f32 0.0, %v2286
    %v2288 = vpop.f32.mrf.mxu0
    %2289 = vdwg.mxu0
    %v2291 = vrot.slane %v2287, 1
    %v2293 = vadd.f32 %v2147, %v2291
    %v2294 = vxor.u32 %v2219, 2147483648
    %v2295 = vmul.f32 %v2294, 1.442695
    %v2296 = vpow.pop %v2295
    %v2297 = vadd.f32 %v2296, 1.0
    %v2298 = vrcp.pop %v2297
    %v2299 = vmul.f32 1.0, %v2298
    %v2300 = vtanh.pop %v2219
    %v2301 = vmul.f32 %v2299, 0.0
    %2303 = vrot.lane.b32.xlu0 %v2300, 64
    %v2304 = vpop.permute.xlu0 %2303
    %v2306 = vmul.f32 %v2299, %v2304
    %2308 = vrot.lane.b32.xlu0 %v2306, 32
    %v2309 = vpop.permute.xlu0 %2308
    %v2311 = vadd.f32 %v2301, %v2309
    %v2312 = vtanh.pop %v2311
    %2314 = vrot.lane.b32.xlu0 %v2312, 64
    %v2315 = vpop.permute.xlu0 %2314
    %v2317 = vmul.f32 %v2299, %v2315
    %v2318 = vxor.u32 %v2293, 2147483648
    %v2319 = vmul.f32 %v2318, 1.442695
    %v2320 = vpow.pop %v2319
    %v2321 = vadd.f32 %v2320, 1.0
    %v2322 = vrcp.pop %v2321
    %v2323 = vmul.f32 1.0, %v2322
    %v2324 = vtanh.pop %v2293
    %v2325 = vmul.f32 %v2323, 0.0
    %2327 = vrot.lane.b32.xlu0 %v2324, 64
    %v2328 = vpop.permute.xlu0 %2327
    %v2330 = vmul.f32 %v2323, %v2328
    %2332 = vrot.lane.b32.xlu0 %v2330, 32
    %v2333 = vpop.permute.xlu0 %2332
    %v2335 = vadd.f32 %v2325, %v2333
    %v2336 = vtanh.pop %v2335
    %2338 = vrot.lane.b32.xlu0 %v2336, 64
    %v2339 = vpop.permute.xlu0 %2338
    %v2341 = vmul.f32 %v2323, %v2339
    %2343 = vrot.lane.b32.xlu0 %v2317, 32
    %v2344 = vpop.permute.xlu0 %2343
    %v2345 = vsel %vm317, %v2344, 0
    %2347 = vmatprep.subr.mxu0 0.0
    %2348 = vmatpush1.msra.mxu0 0.0
    %2349 = vmatprep.subr.mxu0 0.0
    %2350 = vmatpush1.msra.mxu0 0.0
    %2351 = vmatprep.subr.mxu0 0.0
    %2352 = vmatpush1.msra.mxu0 0.0
    %2353 = vmatprep.subr.mxu0 0.0
    %2354 = vmatpush1.msra.mxu0 0.0
    %2355 = vmatprep.subr.mxu0 0.0
    %2356 = vmatpush1.msra.mxu0 0.0
    %2357 = vmatprep.subr.mxu0 0.0
    %2358 = vmatpush1.msra.mxu0 0.0
    %2359 = vmatprep.subr.mxu0 0.0
    %2360 = vmatpush1.msra.mxu0 0.0
    %2361 = vmatprep.subr.mxu0 0.0
    %2362 = vmatpush1.msra.mxu0 0.0
    %2363 = vmatprep.subr.mxu0 0.0
    %2364 = vmatpush1.msra.mxu0 0.0
    %2365 = vmatprep.subr.mxu0 0.0
    %2366 = vmatpush1.msra.mxu0 0.0
    %2367 = vmatprep.subr.mxu0 0.0
    %2368 = vmatpush1.msra.mxu0 0.0
    %2369 = vmatprep.subr.mxu0 0.0
    %2370 = vmatpush1.msra.mxu0 0.0
    %2371 = vmatprep.subr.mxu0 0.0
    %2372 = vmatpush1.msra.mxu0 %v2058
    %2373 = vmatprep.subr.mxu0 0.0
    %2374 = vmatpush1.msra.mxu0 %v2057
    %2375 = vmatprep.subr.mxu0 0.0
    %2376 = vmatpush1.msra.mxu0 %v2056
    %2377 = vmatprep.subr.mxu0 0.0
    %2378 = vmatpush1.msra.mxu0 %v2055
    %2379 = vmatprep.subr.mxu0 0.0
    %2380 = vmatpush2.msra.mxu0 0.0
    %2381 = vmatprep.subr.mxu0 0.0
    %2382 = vmatpush2.msra.mxu0 0.0
    %2383 = vmatprep.subr.mxu0 0.0
    %2384 = vmatpush2.msra.mxu0 0.0
    %2385 = vmatprep.subr.mxu0 0.0
    %2386 = vmatpush2.msra.mxu0 0.0
    %2387 = vmatprep.subr.mxu0 0.0
    %2388 = vmatpush2.msra.mxu0 0.0
    %2389 = vmatprep.subr.mxu0 0.0
    %2390 = vmatpush2.msra.mxu0 0.0
    %2391 = vmatprep.subr.mxu0 0.0
    %2392 = vmatpush2.msra.mxu0 0.0
    %2393 = vmatprep.subr.mxu0 0.0
    %2394 = vmatpush2.msra.mxu0 0.0
    %2395 = vmatprep.subr.mxu0 0.0
    %2396 = vmatpush2.msra.mxu0 0.0
    %2397 = vmatprep.subr.mxu0 0.0
    %2398 = vmatpush2.msra.mxu0 0.0
    %2399 = vmatprep.subr.mxu0 0.0
    %2400 = vmatpush2.msra.mxu0 0.0
    %2401 = vmatprep.subr.mxu0 0.0
    %2402 = vmatpush2.msra.mxu0 0.0
    %2403 = vmatprep.subr.mxu0 0.0
    %2404 = vmatpush2.msra.mxu0 0.0
    %2405 = vmatprep.subr.mxu0 0.0
    %2406 = vmatpush2.msra.mxu0 0.0
    %2407 = vmatprep.subr.mxu0 0.0
    %2408 = vmatpush2.msra.mxu0 0.0
    %2409 = vmatprep.subr.mxu0 0.0
    %2410 = vmatpush2.msra.mxu0 0.0
    %2411 = vmatprep.mubr.f32.mxu0 0.0
    %2412 = vmatmul.mubr.f32.gmra.mxu0 %v2345
    %v2413 = vpop.f32.mrf.mxu0
    %v2414 = vadd.f32 0.0, %v2413
    %v2415 = vpop.f32.mrf.mxu0
    %2416 = vdwg.mxu0
    %v2418 = vrot.slane %v2414, 7
    %v2420 = vadd.f32 %v2145, %v2418
    %v2422 = vrot.slane %v2341, 7
    %2423 = vrot.lane.b32.xlu0 %v2422, 32
    %v2424 = vpop.permute.xlu0 %2423
    %v2425 = vsel %vm317, %v2424, 0
    %2427 = vmatprep.subr.mxu0 0.0
    %2428 = vmatpush1.msra.mxu0 0.0
    %2429 = vmatprep.subr.mxu0 0.0
    %2430 = vmatpush1.msra.mxu0 0.0
    %2431 = vmatprep.subr.mxu0 0.0
    %2432 = vmatpush1.msra.mxu0 0.0
    %2433 = vmatprep.subr.mxu0 0.0
    %2434 = vmatpush1.msra.mxu0 0.0
    %2435 = vmatprep.subr.mxu0 0.0
    %2436 = vmatpush1.msra.mxu0 0.0
    %2437 = vmatprep.subr.mxu0 0.0
    %2438 = vmatpush1.msra.mxu0 0.0
    %2439 = vmatprep.subr.mxu0 0.0
    %2440 = vmatpush1.msra.mxu0 0.0
    %2441 = vmatprep.subr.mxu0 0.0
    %2442 = vmatpush1.msra.mxu0 0.0
    %2443 = vmatprep.subr.mxu0 0.0
    %2444 = vmatpush1.msra.mxu0 0.0
    %2445 = vmatprep.subr.mxu0 0.0
    %2446 = vmatpush1.msra.mxu0 0.0
    %2447 = vmatprep.subr.mxu0 0.0
    %2448 = vmatpush1.msra.mxu0 0.0
    %2449 = vmatprep.subr.mxu0 0.0
    %2450 = vmatpush1.msra.mxu0 0.0
    %2451 = vmatprep.subr.mxu0 0.0
    %2452 = vmatpush1.msra.mxu0 %v2063
    %2453 = vmatprep.subr.mxu0 0.0
    %2454 = vmatpush1.msra.mxu0 %v2062
    %2455 = vmatprep.subr.mxu0 0.0
    %2456 = vmatpush1.msra.mxu0 %v2061
    %2457 = vmatprep.subr.mxu0 0.0
    %2458 = vmatpush1.msra.mxu0 %v2060
    %2459 = vmatprep.subr.mxu0 0.0
    %2460 = vmatpush2.msra.mxu0 0.0
    %2461 = vmatprep.subr.mxu0 0.0
    %2462 = vmatpush2.msra.mxu0 0.0
    %2463 = vmatprep.subr.mxu0 0.0
    %2464 = vmatpush2.msra.mxu0 0.0
    %2465 = vmatprep.subr.mxu0 0.0
    %2466 = vmatpush2.msra.mxu0 0.0
    %2467 = vmatprep.subr.mxu0 0.0
    %2468 = vmatpush2.msra.mxu0 0.0
    %2469 = vmatprep.subr.mxu0 0.0
    %2470 = vmatpush2.msra.mxu0 0.0
    %2471 = vmatprep.subr.mxu0 0.0
    %2472 = vmatpush2.msra.mxu0 0.0
    %2473 = vmatprep.subr.mxu0 0.0
    %2474 = vmatpush2.msra.mxu0 0.0
    %2475 = vmatprep.subr.mxu0 0.0
    %2476 = vmatpush2.msra.mxu0 0.0
    %2477 = vmatprep.subr.mxu0 0.0
    %2478 = vmatpush2.msra.mxu0 0.0
    %2479 = vmatprep.subr.mxu0 0.0
    %2480 = vmatpush2.msra.mxu0 0.0
    %2481 = vmatprep.subr.mxu0 0.0
    %2482 = vmatpush2.msra.mxu0 0.0
    %2483 = vmatprep.subr.mxu0 0.0
    %2484 = vmatpush2.msra.mxu0 0.0
    %2485 = vmatprep.subr.mxu0 0.0
    %2486 = vmatpush2.msra.mxu0 0.0
    %2487 = vmatprep.subr.mxu0 0.0
    %2488 = vmatpush2.msra.mxu0 0.0
    %2489 = vmatprep.subr.mxu0 0.0
    %2490 = vmatpush2.msra.mxu0 0.0
    %2491 = vmatprep.mubr.f32.mxu0 0.0
    %2492 = vmatmul.mubr.f32.gmra.mxu0 %v2425
    %v2493 = vpop.f32.mrf.mxu0
    %v2494 = vadd.f32 0.0, %v2493
    %v2495 = vpop.f32.mrf.mxu0
    %2496 = vdwg.mxu0
    %v2498 = vrot.slane %v2494, 2
    %v2500 = vadd.f32 %v2147, %v2498
    %v2501 = vxor.u32 %v2420, 2147483648
    %v2502 = vmul.f32 %v2501, 1.442695
    %v2503 = vpow.pop %v2502
    %v2504 = vadd.f32 %v2503, 1.0
    %v2505 = vrcp.pop %v2504
    %v2506 = vmul.f32 1.0, %v2505
    %v2507 = vtanh.pop %v2420
    %v2509 = vrot.slane %v2311, 7
    %v2511 = vmul.f32 %v2506, %v2509
    %2513 = vrot.lane.b32.xlu0 %v2507, 64
    %v2514 = vpop.permute.xlu0 %2513
    %v2516 = vmul.f32 %v2506, %v2514
    %2518 = vrot.lane.b32.xlu0 %v2516, 32
    %v2519 = vpop.permute.xlu0 %2518
    %v2521 = vadd.f32 %v2511, %v2519
    %v2522 = vtanh.pop %v2521
    %2524 = vrot.lane.b32.xlu0 %v2522, 64
    %v2525 = vpop.permute.xlu0 %2524
    %v2527 = vmul.f32 %v2506, %v2525
    %v2528 = vxor.u32 %v2500, 2147483648
    %v2529 = vmul.f32 %v2528, 1.442695
    %v2530 = vpow.pop %v2529
    %v2531 = vadd.f32 %v2530, 1.0
    %v2532 = vrcp.pop %v2531
    %v2533 = vmul.f32 1.0, %v2532
    %v2534 = vtanh.pop %v2500
    %v2536 = vrot.slane %v2335, 1
    %v2538 = vmul.f32 %v2533, %v2536
    %2540 = vrot.lane.b32.xlu0 %v2534, 64
    %v2541 = vpop.permute.xlu0 %2540
    %v2543 = vmul.f32 %v2533, %v2541
    %2545 = vrot.lane.b32.xlu0 %v2543, 32
    %v2546 = vpop.permute.xlu0 %2545
    %v2548 = vadd.f32 %v2538, %v2546
    %v2549 = vtanh.pop %v2548
    %2551 = vrot.lane.b32.xlu0 %v2549, 64
    %v2552 = vpop.permute.xlu0 %2551
    %v2554 = vmul.f32 %v2533, %v2552
    %v2556 = vrot.slane %v2527, 1
    %2557 = vrot.lane.b32.xlu0 %v2556, 32
    %v2558 = vpop.permute.xlu0 %2557
    %v2559 = vsel %vm317, %v2558, 0
    %2561 = vmatprep.subr.mxu0 0.0
    %2562 = vmatpush1.msra.mxu0 0.0
    %2563 = vmatprep.subr.mxu0 0.0
    %2564 = vmatpush1.msra.mxu0 0.0
    %2565 = vmatprep.subr.mxu0 0.0
    %2566 = vmatpush1.msra.mxu0 0.0
    %2567 = vmatprep.subr.mxu0 0.0
    %2568 = vmatpush1.msra.mxu0 0.0
    %2569 = vmatprep.subr.mxu0 0.0
    %2570 = vmatpush1.msra.mxu0 0.0
    %2571 = vmatprep.subr.mxu0 0.0
    %2572 = vmatpush1.msra.mxu0 0.0
    %2573 = vmatprep.subr.mxu0 0.0
    %2574 = vmatpush1.msra.mxu0 0.0
    %2575 = vmatprep.subr.mxu0 0.0
    %2576 = vmatpush1.msra.mxu0 0.0
    %2577 = vmatprep.subr.mxu0 0.0
    %2578 = vmatpush1.msra.mxu0 0.0
    %2579 = vmatprep.subr.mxu0 0.0
    %2580 = vmatpush1.msra.mxu0 0.0
    %2581 = vmatprep.subr.mxu0 0.0
    %2582 = vmatpush1.msra.mxu0 0.0
    %2583 = vmatprep.subr.mxu0 0.0
    %2584 = vmatpush1.msra.mxu0 0.0
    %2585 = vmatprep.subr.mxu0 0.0
    %2586 = vmatpush1.msra.mxu0 %v2058
    %2587 = vmatprep.subr.mxu0 0.0
    %2588 = vmatpush1.msra.mxu0 %v2057
    %2589 = vmatprep.subr.mxu0 0.0
    %2590 = vmatpush1.msra.mxu0 %v2056
    %2591 = vmatprep.subr.mxu0 0.0
    %2592 = vmatpush1.msra.mxu0 %v2055
    %2593 = vmatprep.subr.mxu0 0.0
    %2594 = vmatpush2.msra.mxu0 0.0
    %2595 = vmatprep.subr.mxu0 0.0
    %2596 = vmatpush2.msra.mxu0 0.0
    %2597 = vmatprep.subr.mxu0 0.0
    %2598 = vmatpush2.msra.mxu0 0.0
    %2599 = vmatprep.subr.mxu0 0.0
    %2600 = vmatpush2.msra.mxu0 0.0
    %2601 = vmatprep.subr.mxu0 0.0
    %2602 = vmatpush2.msra.mxu0 0.0
    %2603 = vmatprep.subr.mxu0 0.0
    %2604 = vmatpush2.msra.mxu0 0.0
    %2605 = vmatprep.subr.mxu0 0.0
    %2606 = vmatpush2.msra.mxu0 0.0
    %2607 = vmatprep.subr.mxu0 0.0
    %2608 = vmatpush2.msra.mxu0 0.0
    %2609 = vmatprep.subr.mxu0 0.0
    %2610 = vmatpush2.msra.mxu0 0.0
    %2611 = vmatprep.subr.mxu0 0.0
    %2612 = vmatpush2.msra.mxu0 0.0
    %2613 = vmatprep.subr.mxu0 0.0
    %2614 = vmatpush2.msra.mxu0 0.0
    %2615 = vmatprep.subr.mxu0 0.0
    %2616 = vmatpush2.msra.mxu0 0.0
    %2617 = vmatprep.subr.mxu0 0.0
    %2618 = vmatpush2.msra.mxu0 0.0
    %2619 = vmatprep.subr.mxu0 0.0
    %2620 = vmatpush2.msra.mxu0 0.0
    %2621 = vmatprep.subr.mxu0 0.0
    %2622 = vmatpush2.msra.mxu0 0.0
    %2623 = vmatprep.subr.mxu0 0.0
    %2624 = vmatpush2.msra.mxu0 0.0
    %2625 = vmatprep.mubr.f32.mxu0 0.0
    %2626 = vmatmul.mubr.f32.gmra.mxu0 %v2559
    %v2627 = vpop.f32.mrf.mxu0
    %v2628 = vadd.f32 0.0, %v2627
    %v2629 = vpop.f32.mrf.mxu0
    %2630 = vdwg.mxu0
    %v2632 = vrot.slane %v2628, 6
    %v2634 = vadd.f32 %v2145, %v2632
    %v2636 = vrot.slane %v2554, 6
    %2637 = vrot.lane.b32.xlu0 %v2636, 32
    %v2638 = vpop.permute.xlu0 %2637
    %v2639 = vsel %vm317, %v2638, 0
    %2641 = vmatprep.subr.mxu0 0.0
    %2642 = vmatpush1.msra.mxu0 0.0
    %2643 = vmatprep.subr.mxu0 0.0
    %2644 = vmatpush1.msra.mxu0 0.0
    %2645 = vmatprep.subr.mxu0 0.0
    %2646 = vmatpush1.msra.mxu0 0.0
    %2647 = vmatprep.subr.mxu0 0.0
    %2648 = vmatpush1.msra.mxu0 0.0
    %2649 = vmatprep.subr.mxu0 0.0
    %2650 = vmatpush1.msra.mxu0 0.0
    %2651 = vmatprep.subr.mxu0 0.0
    %2652 = vmatpush1.msra.mxu0 0.0
    %2653 = vmatprep.subr.mxu0 0.0
    %2654 = vmatpush1.msra.mxu0 0.0
    %2655 = vmatprep.subr.mxu0 0.0
    %2656 = vmatpush1.msra.mxu0 0.0
    %2657 = vmatprep.subr.mxu0 0.0
    %2658 = vmatpush1.msra.mxu0 0.0
    %2659 = vmatprep.subr.mxu0 0.0
    %2660 = vmatpush1.msra.mxu0 0.0
    %2661 = vmatprep.subr.mxu0 0.0
    %2662 = vmatpush1.msra.mxu0 0.0
    %2663 = vmatprep.subr.mxu0 0.0
    %2664 = vmatpush1.msra.mxu0 0.0
    %2665 = vmatprep.subr.mxu0 0.0
    %2666 = vmatpush1.msra.mxu0 %v2063
    %2667 = vmatprep.subr.mxu0 0.0
    %2668 = vmatpush1.msra.mxu0 %v2062
    %2669 = vmatprep.subr.mxu0 0.0
    %2670 = vmatpush1.msra.mxu0 %v2061
    %2671 = vmatprep.subr.mxu0 0.0
    %2672 = vmatpush1.msra.mxu0 %v2060
    %2673 = vmatprep.subr.mxu0 0.0
    %2674 = vmatpush2.msra.mxu0 0.0
    %2675 = vmatprep.subr.mxu0 0.0
    %2676 = vmatpush2.msra.mxu0 0.0
    %2677 = vmatprep.subr.mxu0 0.0
    %2678 = vmatpush2.msra.mxu0 0.0
    %2679 = vmatprep.subr.mxu0 0.0
    %2680 = vmatpush2.msra.mxu0 0.0
    %2681 = vmatprep.subr.mxu0 0.0
    %2682 = vmatpush2.msra.mxu0 0.0
    %2683 = vmatprep.subr.mxu0 0.0
    %2684 = vmatpush2.msra.mxu0 0.0
    %2685 = vmatprep.subr.mxu0 0.0
    %2686 = vmatpush2.msra.mxu0 0.0
    %2687 = vmatprep.subr.mxu0 0.0
    %2688 = vmatpush2.msra.mxu0 0.0
    %2689 = vmatprep.subr.mxu0 0.0
    %2690 = vmatpush2.msra.mxu0 0.0
    %2691 = vmatprep.subr.mxu0 0.0
    %2692 = vmatpush2.msra.mxu0 0.0
    %2693 = vmatprep.subr.mxu0 0.0
    %2694 = vmatpush2.msra.mxu0 0.0
    %2695 = vmatprep.subr.mxu0 0.0
    %2696 = vmatpush2.msra.mxu0 0.0
    %2697 = vmatprep.subr.mxu0 0.0
    %2698 = vmatpush2.msra.mxu0 0.0
    %2699 = vmatprep.subr.mxu0 0.0
    %2700 = vmatpush2.msra.mxu0 0.0
    %2701 = vmatprep.subr.mxu0 0.0
    %2702 = vmatpush2.msra.mxu0 0.0
    %2703 = vmatprep.subr.mxu0 0.0
    %2704 = vmatpush2.msra.mxu0 0.0
    %2705 = vmatprep.mubr.f32.mxu0 0.0
    %2706 = vmatmul.mubr.f32.gmra.mxu0 %v2639
    %v2707 = vpop.f32.mrf.mxu0
    %v2708 = vadd.f32 0.0, %v2707
    %v2709 = vpop.f32.mrf.mxu0
    %2710 = vdwg.mxu0
    %v2712 = vrot.slane %v2708, 3
    %v2714 = vadd.f32 %v2147, %v2712
    %v2715 = vxor.u32 %v2634, 2147483648
    %v2716 = vmul.f32 %v2715, 1.442695
    %v2717 = vpow.pop %v2716
    %v2718 = vadd.f32 %v2717, 1.0
    %v2719 = vrcp.pop %v2718
    %v2720 = vmul.f32 1.0, %v2719
    %v2721 = vtanh.pop %v2634
    %v2723 = vrot.slane %v2521, 7
    %v2725 = vmul.f32 %v2720, %v2723
    %2727 = vrot.lane.b32.xlu0 %v2721, 64
    %v2728 = vpop.permute.xlu0 %2727
    %v2730 = vmul.f32 %v2720, %v2728
    %2732 = vrot.lane.b32.xlu0 %v2730, 32
    %v2733 = vpop.permute.xlu0 %2732
    %v2735 = vadd.f32 %v2725, %v2733
    %v2736 = vtanh.pop %v2735
    %2738 = vrot.lane.b32.xlu0 %v2736, 64
    %v2739 = vpop.permute.xlu0 %2738
    %v2741 = vmul.f32 %v2720, %v2739
    %v2742 = vxor.u32 %v2714, 2147483648
    %v2743 = vmul.f32 %v2742, 1.442695
    %v2744 = vpow.pop %v2743
    %v2745 = vadd.f32 %v2744, 1.0
    %v2746 = vrcp.pop %v2745
    %v2747 = vmul.f32 1.0, %v2746
    %v2748 = vtanh.pop %v2714
    %v2750 = vrot.slane %v2548, 1
    %v2752 = vmul.f32 %v2747, %v2750
    %2754 = vrot.lane.b32.xlu0 %v2748, 64
    %v2755 = vpop.permute.xlu0 %2754
    %v2757 = vmul.f32 %v2747, %v2755
    %2759 = vrot.lane.b32.xlu0 %v2757, 32
    %v2760 = vpop.permute.xlu0 %2759
    %v2762 = vadd.f32 %v2752, %v2760
    %v2763 = vtanh.pop %v2762
    %2765 = vrot.lane.b32.xlu0 %v2763, 64
    %v2766 = vpop.permute.xlu0 %2765
    %v2768 = vmul.f32 %v2747, %v2766
    %v2770 = vrot.slane %v2741, 2
    %2771 = vrot.lane.b32.xlu0 %v2770, 32
    %v2772 = vpop.permute.xlu0 %2771
    %v2773 = vsel %vm317, %v2772, 0
    %2775 = vmatprep.subr.mxu0 0.0
    %2776 = vmatpush1.msra.mxu0 0.0
    %2777 = vmatprep.subr.mxu0 0.0
    %2778 = vmatpush1.msra.mxu0 0.0
    %2779 = vmatprep.subr.mxu0 0.0
    %2780 = vmatpush1.msra.mxu0 0.0
    %2781 = vmatprep.subr.mxu0 0.0
    %2782 = vmatpush1.msra.mxu0 0.0
    %2783 = vmatprep.subr.mxu0 0.0
    %2784 = vmatpush1.msra.mxu0 0.0
    %2785 = vmatprep.subr.mxu0 0.0
    %2786 = vmatpush1.msra.mxu0 0.0
    %2787 = vmatprep.subr.mxu0 0.0
    %2788 = vmatpush1.msra.mxu0 0.0
    %2789 = vmatprep.subr.mxu0 0.0
    %2790 = vmatpush1.msra.mxu0 0.0
    %2791 = vmatprep.subr.mxu0 0.0
    %2792 = vmatpush1.msra.mxu0 0.0
    %2793 = vmatprep.subr.mxu0 0.0
    %2794 = vmatpush1.msra.mxu0 0.0
    %2795 = vmatprep.subr.mxu0 0.0
    %2796 = vmatpush1.msra.mxu0 0.0
    %2797 = vmatprep.subr.mxu0 0.0
    %2798 = vmatpush1.msra.mxu0 0.0
    %2799 = vmatprep.subr.mxu0 0.0
    %2800 = vmatpush1.msra.mxu0 %v2058
    %2801 = vmatprep.subr.mxu0 0.0
    %2802 = vmatpush1.msra.mxu0 %v2057
    %2803 = vmatprep.subr.mxu0 0.0
    %2804 = vmatpush1.msra.mxu0 %v2056
    %2805 = vmatprep.subr.mxu0 0.0
    %2806 = vmatpush1.msra.mxu0 %v2055
    %2807 = vmatprep.subr.mxu0 0.0
    %2808 = vmatpush2.msra.mxu0 0.0
    %2809 = vmatprep.subr.mxu0 0.0
    %2810 = vmatpush2.msra.mxu0 0.0
    %2811 = vmatprep.subr.mxu0 0.0
    %2812 = vmatpush2.msra.mxu0 0.0
    %2813 = vmatprep.subr.mxu0 0.0
    %2814 = vmatpush2.msra.mxu0 0.0
    %2815 = vmatprep.subr.mxu0 0.0
    %2816 = vmatpush2.msra.mxu0 0.0
    %2817 = vmatprep.subr.mxu0 0.0
    %2818 = vmatpush2.msra.mxu0 0.0
    %2819 = vmatprep.subr.mxu0 0.0
    %2820 = vmatpush2.msra.mxu0 0.0
    %2821 = vmatprep.subr.mxu0 0.0
    %2822 = vmatpush2.msra.mxu0 0.0
    %2823 = vmatprep.subr.mxu0 0.0
    %2824 = vmatpush2.msra.mxu0 0.0
    %2825 = vmatprep.subr.mxu0 0.0
    %2826 = vmatpush2.msra.mxu0 0.0
    %2827 = vmatprep.subr.mxu0 0.0
    %2828 = vmatpush2.msra.mxu0 0.0
    %2829 = vmatprep.subr.mxu0 0.0
    %2830 = vmatpush2.msra.mxu0 0.0
    %2831 = vmatprep.subr.mxu0 0.0
    %2832 = vmatpush2.msra.mxu0 0.0
    %2833 = vmatprep.subr.mxu0 0.0
    %2834 = vmatpush2.msra.mxu0 0.0
    %2835 = vmatprep.subr.mxu0 0.0
    %2836 = vmatpush2.msra.mxu0 0.0
    %2837 = vmatprep.subr.mxu0 0.0
    %2838 = vmatpush2.msra.mxu0 0.0
    %2839 = vmatprep.mubr.f32.mxu0 0.0
    %2840 = vmatmul.mubr.f32.gmra.mxu0 %v2773
    %v2841 = vpop.f32.mrf.mxu0
    %v2842 = vadd.f32 0.0, %v2841
    %v2843 = vpop.f32.mrf.mxu0
    %2844 = vdwg.mxu0
    %v2846 = vrot.slane %v2842, 5
    %v2848 = vadd.f32 %v2145, %v2846
    %v2850 = vrot.slane %v2768, 5
    %2851 = vrot.lane.b32.xlu0 %v2850, 32
    %v2852 = vpop.permute.xlu0 %2851
    %v2853 = vsel %vm317, %v2852, 0
    %2855 = vmatprep.subr.mxu0 0.0
    %2856 = vmatpush1.msra.mxu0 0.0
    %2857 = vmatprep.subr.mxu0 0.0
    %2858 = vmatpush1.msra.mxu0 0.0
    %2859 = vmatprep.subr.mxu0 0.0
    %2860 = vmatpush1.msra.mxu0 0.0
    %2861 = vmatprep.subr.mxu0 0.0
    %2862 = vmatpush1.msra.mxu0 0.0
    %2863 = vmatprep.subr.mxu0 0.0
    %2864 = vmatpush1.msra.mxu0 0.0
    %2865 = vmatprep.subr.mxu0 0.0
    %2866 = vmatpush1.msra.mxu0 0.0
    %2867 = vmatprep.subr.mxu0 0.0
    %2868 = vmatpush1.msra.mxu0 0.0
    %2869 = vmatprep.subr.mxu0 0.0
    %2870 = vmatpush1.msra.mxu0 0.0
    %2871 = vmatprep.subr.mxu0 0.0
    %2872 = vmatpush1.msra.mxu0 0.0
    %2873 = vmatprep.subr.mxu0 0.0
    %2874 = vmatpush1.msra.mxu0 0.0
    %2875 = vmatprep.subr.mxu0 0.0
    %2876 = vmatpush1.msra.mxu0 0.0
    %2877 = vmatprep.subr.mxu0 0.0
    %2878 = vmatpush1.msra.mxu0 0.0
    %2879 = vmatprep.subr.mxu0 0.0
    %2880 = vmatpush1.msra.mxu0 %v2063
    %2881 = vmatprep.subr.mxu0 0.0
    %2882 = vmatpush1.msra.mxu0 %v2062
    %2883 = vmatprep.subr.mxu0 0.0
    %2884 = vmatpush1.msra.mxu0 %v2061
    %2885 = vmatprep.subr.mxu0 0.0
    %2886 = vmatpush1.msra.mxu0 %v2060
    %2887 = vmatprep.subr.mxu0 0.0
    %2888 = vmatpush2.msra.mxu0 0.0
    %2889 = vmatprep.subr.mxu0 0.0
    %2890 = vmatpush2.msra.mxu0 0.0
    %2891 = vmatprep.subr.mxu0 0.0
    %2892 = vmatpush2.msra.mxu0 0.0
    %2893 = vmatprep.subr.mxu0 0.0
    %2894 = vmatpush2.msra.mxu0 0.0
    %2895 = vmatprep.subr.mxu0 0.0
    %2896 = vmatpush2.msra.mxu0 0.0
    %2897 = vmatprep.subr.mxu0 0.0
    %2898 = vmatpush2.msra.mxu0 0.0
    %2899 = vmatprep.subr.mxu0 0.0
    %2900 = vmatpush2.msra.mxu0 0.0
    %2901 = vmatprep.subr.mxu0 0.0
    %2902 = vmatpush2.msra.mxu0 0.0
    %2903 = vmatprep.subr.mxu0 0.0
    %2904 = vmatpush2.msra.mxu0 0.0
    %2905 = vmatprep.subr.mxu0 0.0
    %2906 = vmatpush2.msra.mxu0 0.0
    %2907 = vmatprep.subr.mxu0 0.0
    %2908 = vmatpush2.msra.mxu0 0.0
    %2909 = vmatprep.subr.mxu0 0.0
    %2910 = vmatpush2.msra.mxu0 0.0
    %2911 = vmatprep.subr.mxu0 0.0
    %2912 = vmatpush2.msra.mxu0 0.0
    %2913 = vmatprep.subr.mxu0 0.0
    %2914 = vmatpush2.msra.mxu0 0.0
    %2915 = vmatprep.subr.mxu0 0.0
    %2916 = vmatpush2.msra.mxu0 0.0
    %2917 = vmatprep.subr.mxu0 0.0
    %2918 = vmatpush2.msra.mxu0 0.0
    %2919 = vmatprep.mubr.f32.mxu0 0.0
    %2920 = vmatmul.mubr.f32.gmra.mxu0 %v2853
    %v2921 = vpop.f32.mrf.mxu0
    %v2922 = vadd.f32 0.0, %v2921
    %v2923 = vpop.f32.mrf.mxu0
    %2924 = vdwg.mxu0
    %v2926 = vrot.slane %v2922, 4
    %v2928 = vadd.f32 %v2147, %v2926
    %v2929 = vxor.u32 %v2848, 2147483648
    %v2930 = vmul.f32 %v2929, 1.442695
    %v2931 = vpow.pop %v2930
    %v2932 = vadd.f32 %v2931, 1.0
    %v2933 = vrcp.pop %v2932
    %v2934 = vmul.f32 1.0, %v2933
    %v2935 = vtanh.pop %v2848
    %v2937 = vrot.slane %v2735, 7
    %v2939 = vmul.f32 %v2934, %v2937
    %2941 = vrot.lane.b32.xlu0 %v2935, 64
    %v2942 = vpop.permute.xlu0 %2941
    %v2944 = vmul.f32 %v2934, %v2942
    %2946 = vrot.lane.b32.xlu0 %v2944, 32
    %v2947 = vpop.permute.xlu0 %2946
    %v2949 = vadd.f32 %v2939, %v2947
    %v2950 = vtanh.pop %v2949
    %2952 = vrot.lane.b32.xlu0 %v2950, 64
    %v2953 = vpop.permute.xlu0 %2952
    %v2955 = vmul.f32 %v2934, %v2953
    %v2956 = vxor.u32 %v2928, 2147483648
    %v2957 = vmul.f32 %v2956, 1.442695
    %v2958 = vpow.pop %v2957
    %v2959 = vadd.f32 %v2958, 1.0
    %v2960 = vrcp.pop %v2959
    %v2961 = vmul.f32 1.0, %v2960
    %v2962 = vtanh.pop %v2928
    %v2964 = vrot.slane %v2762, 1
    %v2966 = vmul.f32 %v2961, %v2964
    %2968 = vrot.lane.b32.xlu0 %v2962, 64
    %v2969 = vpop.permute.xlu0 %2968
    %v2971 = vmul.f32 %v2961, %v2969
    %2973 = vrot.lane.b32.xlu0 %v2971, 32
    %v2974 = vpop.permute.xlu0 %2973
    %v2976 = vadd.f32 %v2966, %v2974
    %v2977 = vtanh.pop %v2976
    %2979 = vrot.lane.b32.xlu0 %v2977, 64
    %v2980 = vpop.permute.xlu0 %2979
    %v2982 = vmul.f32 %v2961, %v2980
    %v2984 = vrot.slane %v2955, 3
    %2985 = vrot.lane.b32.xlu0 %v2984, 32
    %v2986 = vpop.permute.xlu0 %2985
    %v2987 = vsel %vm317, %v2986, 0
    %2989 = vmatprep.subr.mxu0 0.0
    %2990 = vmatpush1.msra.mxu0 0.0
    %2991 = vmatprep.subr.mxu0 0.0
    %2992 = vmatpush1.msra.mxu0 0.0
    %2993 = vmatprep.subr.mxu0 0.0
    %2994 = vmatpush1.msra.mxu0 0.0
    %2995 = vmatprep.subr.mxu0 0.0
    %2996 = vmatpush1.msra.mxu0 0.0
    %2997 = vmatprep.subr.mxu0 0.0
    %2998 = vmatpush1.msra.mxu0 0.0
    %2999 = vmatprep.subr.mxu0 0.0
    %3000 = vmatpush1.msra.mxu0 0.0
    %3001 = vmatprep.subr.mxu0 0.0
    %3002 = vmatpush1.msra.mxu0 0.0
    %3003 = vmatprep.subr.mxu0 0.0
    %3004 = vmatpush1.msra.mxu0 0.0
    %3005 = vmatprep.subr.mxu0 0.0
    %3006 = vmatpush1.msra.mxu0 0.0
    %3007 = vmatprep.subr.mxu0 0.0
    %3008 = vmatpush1.msra.mxu0 0.0
    %3009 = vmatprep.subr.mxu0 0.0
    %3010 = vmatpush1.msra.mxu0 0.0
    %3011 = vmatprep.subr.mxu0 0.0
    %3012 = vmatpush1.msra.mxu0 0.0
    %3013 = vmatprep.subr.mxu0 0.0
    %3014 = vmatpush1.msra.mxu0 %v2058
    %3015 = vmatprep.subr.mxu0 0.0
    %3016 = vmatpush1.msra.mxu0 %v2057
    %3017 = vmatprep.subr.mxu0 0.0
    %3018 = vmatpush1.msra.mxu0 %v2056
    %3019 = vmatprep.subr.mxu0 0.0
    %3020 = vmatpush1.msra.mxu0 %v2055
    %3021 = vmatprep.subr.mxu0 0.0
    %3022 = vmatpush2.msra.mxu0 0.0
    %3023 = vmatprep.subr.mxu0 0.0
    %3024 = vmatpush2.msra.mxu0 0.0
    %3025 = vmatprep.subr.mxu0 0.0
    %3026 = vmatpush2.msra.mxu0 0.0
    %3027 = vmatprep.subr.mxu0 0.0
    %3028 = vmatpush2.msra.mxu0 0.0
    %3029 = vmatprep.subr.mxu0 0.0
    %3030 = vmatpush2.msra.mxu0 0.0
    %3031 = vmatprep.subr.mxu0 0.0
    %3032 = vmatpush2.msra.mxu0 0.0
    %3033 = vmatprep.subr.mxu0 0.0
    %3034 = vmatpush2.msra.mxu0 0.0
    %3035 = vmatprep.subr.mxu0 0.0
    %3036 = vmatpush2.msra.mxu0 0.0
    %3037 = vmatprep.subr.mxu0 0.0
    %3038 = vmatpush2.msra.mxu0 0.0
    %3039 = vmatprep.subr.mxu0 0.0
    %3040 = vmatpush2.msra.mxu0 0.0
    %3041 = vmatprep.subr.mxu0 0.0
    %3042 = vmatpush2.msra.mxu0 0.0
    %3043 = vmatprep.subr.mxu0 0.0
    %3044 = vmatpush2.msra.mxu0 0.0
    %3045 = vmatprep.subr.mxu0 0.0
    %3046 = vmatpush2.msra.mxu0 0.0
    %3047 = vmatprep.subr.mxu0 0.0
    %3048 = vmatpush2.msra.mxu0 0.0
    %3049 = vmatprep.subr.mxu0 0.0
    %3050 = vmatpush2.msra.mxu0 0.0
    %3051 = vmatprep.subr.mxu0 0.0
    %3052 = vmatpush2.msra.mxu0 0.0
    %3053 = vmatprep.mubr.f32.mxu0 0.0
    %3054 = vmatmul.mubr.f32.gmra.mxu0 %v2987
    %v3055 = vpop.f32.mrf.mxu0
    %v3056 = vadd.f32 0.0, %v3055
    %v3057 = vpop.f32.mrf.mxu0
    %3058 = vdwg.mxu0
    %v3060 = vrot.slane %v3056, 4
    %v3062 = vadd.f32 %v2145, %v3060
    %v3064 = vrot.slane %v2982, 4
    %3065 = vrot.lane.b32.xlu0 %v3064, 32
    %v3066 = vpop.permute.xlu0 %3065
    %v3067 = vsel %vm317, %v3066, 0
    %3069 = vmatprep.subr.mxu0 0.0
    %3070 = vmatpush1.msra.mxu0 0.0
    %3071 = vmatprep.subr.mxu0 0.0
    %3072 = vmatpush1.msra.mxu0 0.0
    %3073 = vmatprep.subr.mxu0 0.0
    %3074 = vmatpush1.msra.mxu0 0.0
    %3075 = vmatprep.subr.mxu0 0.0
    %3076 = vmatpush1.msra.mxu0 0.0
    %3077 = vmatprep.subr.mxu0 0.0
    %3078 = vmatpush1.msra.mxu0 0.0
    %3079 = vmatprep.subr.mxu0 0.0
    %3080 = vmatpush1.msra.mxu0 0.0
    %3081 = vmatprep.subr.mxu0 0.0
    %3082 = vmatpush1.msra.mxu0 0.0
    %3083 = vmatprep.subr.mxu0 0.0
    %3084 = vmatpush1.msra.mxu0 0.0
    %3085 = vmatprep.subr.mxu0 0.0
    %3086 = vmatpush1.msra.mxu0 0.0
    %3087 = vmatprep.subr.mxu0 0.0
    %3088 = vmatpush1.msra.mxu0 0.0
    %3089 = vmatprep.subr.mxu0 0.0
    %3090 = vmatpush1.msra.mxu0 0.0
    %3091 = vmatprep.subr.mxu0 0.0
    %3092 = vmatpush1.msra.mxu0 0.0
    %3093 = vmatprep.subr.mxu0 0.0
    %3094 = vmatpush1.msra.mxu0 %v2063
    %3095 = vmatprep.subr.mxu0 0.0
    %3096 = vmatpush1.msra.mxu0 %v2062
    %3097 = vmatprep.subr.mxu0 0.0
    %3098 = vmatpush1.msra.mxu0 %v2061
    %3099 = vmatprep.subr.mxu0 0.0
    %3100 = vmatpush1.msra.mxu0 %v2060
    %3101 = vmatprep.subr.mxu0 0.0
    %3102 = vmatpush2.msra.mxu0 0.0
    %3103 = vmatprep.subr.mxu0 0.0
    %3104 = vmatpush2.msra.mxu0 0.0
    %3105 = vmatprep.subr.mxu0 0.0
    %3106 = vmatpush2.msra.mxu0 0.0
    %3107 = vmatprep.subr.mxu0 0.0
    %3108 = vmatpush2.msra.mxu0 0.0
    %3109 = vmatprep.subr.mxu0 0.0
    %3110 = vmatpush2.msra.mxu0 0.0
    %3111 = vmatprep.subr.mxu0 0.0
    %3112 = vmatpush2.msra.mxu0 0.0
    %3113 = vmatprep.subr.mxu0 0.0
    %3114 = vmatpush2.msra.mxu0 0.0
    %3115 = vmatprep.subr.mxu0 0.0
    %3116 = vmatpush2.msra.mxu0 0.0
    %3117 = vmatprep.subr.mxu0 0.0
    %3118 = vmatpush2.msra.mxu0 0.0
    %3119 = vmatprep.subr.mxu0 0.0
    %3120 = vmatpush2.msra.mxu0 0.0
    %3121 = vmatprep.subr.mxu0 0.0
    %3122 = vmatpush2.msra.mxu0 0.0
    %3123 = vmatprep.subr.mxu0 0.0
    %3124 = vmatpush2.msra.mxu0 0.0
    %3125 = vmatprep.subr.mxu0 0.0
    %3126 = vmatpush2.msra.mxu0 0.0
    %3127 = vmatprep.subr.mxu0 0.0
    %3128 = vmatpush2.msra.mxu0 0.0
    %3129 = vmatprep.subr.mxu0 0.0
    %3130 = vmatpush2.msra.mxu0 0.0
    %3131 = vmatprep.subr.mxu0 0.0
    %3132 = vmatpush2.msra.mxu0 0.0
    %3133 = vmatprep.mubr.f32.mxu0 0.0
    %3134 = vmatmul.mubr.f32.gmra.mxu0 %v3067
    %v3135 = vpop.f32.mrf.mxu0
    %v3136 = vadd.f32 0.0, %v3135
    %v3137 = vpop.f32.mrf.mxu0
    %3138 = vdwg.mxu0
    %v3140 = vrot.slane %v3136, 5
    %v3142 = vadd.f32 %v2147, %v3140
    %v3143 = vxor.u32 %v3062, 2147483648
    %v3144 = vmul.f32 %v3143, 1.442695
    %v3145 = vpow.pop %v3144
    %v3146 = vadd.f32 %v3145, 1.0
    %v3147 = vrcp.pop %v3146
    %v3148 = vmul.f32 1.0, %v3147
    %v3149 = vtanh.pop %v3062
    %v3151 = vrot.slane %v2949, 7
    %v3153 = vmul.f32 %v3148, %v3151
    %3155 = vrot.lane.b32.xlu0 %v3149, 64
    %v3156 = vpop.permute.xlu0 %3155
    %v3158 = vmul.f32 %v3148, %v3156
    %3160 = vrot.lane.b32.xlu0 %v3158, 32
    %v3161 = vpop.permute.xlu0 %3160
    %v3163 = vadd.f32 %v3153, %v3161
    %v3164 = vtanh.pop %v3163
    %3166 = vrot.lane.b32.xlu0 %v3164, 64
    %v3167 = vpop.permute.xlu0 %3166
    %v3169 = vmul.f32 %v3148, %v3167
    %v3170 = vxor.u32 %v3142, 2147483648
    %v3171 = vmul.f32 %v3170, 1.442695
    %v3172 = vpow.pop %v3171
    %v3173 = vadd.f32 %v3172, 1.0
    %v3174 = vrcp.pop %v3173
    %v3175 = vmul.f32 1.0, %v3174
    %v3176 = vtanh.pop %v3142
    %v3178 = vrot.slane %v2976, 1
    %v3180 = vmul.f32 %v3175, %v3178
    %3182 = vrot.lane.b32.xlu0 %v3176, 64
    %v3183 = vpop.permute.xlu0 %3182
    %v3185 = vmul.f32 %v3175, %v3183
    %3187 = vrot.lane.b32.xlu0 %v3185, 32
    %v3188 = vpop.permute.xlu0 %3187
    %v3190 = vadd.f32 %v3180, %v3188
    %v3191 = vtanh.pop %v3190
    %3193 = vrot.lane.b32.xlu0 %v3191, 64
    %v3194 = vpop.permute.xlu0 %3193
    %v3196 = vmul.f32 %v3175, %v3194
    %v3198 = vrot.slane %v3169, 4
    %3199 = vrot.lane.b32.xlu0 %v3198, 32
    %v3200 = vpop.permute.xlu0 %3199
    %v3201 = vsel %vm317, %v3200, 0
    %3203 = vmatprep.subr.mxu0 0.0
    %3204 = vmatpush1.msra.mxu0 0.0
    %3205 = vmatprep.subr.mxu0 0.0
    %3206 = vmatpush1.msra.mxu0 0.0
    %3207 = vmatprep.subr.mxu0 0.0
    %3208 = vmatpush1.msra.mxu0 0.0
    %3209 = vmatprep.subr.mxu0 0.0
    %3210 = vmatpush1.msra.mxu0 0.0
    %3211 = vmatprep.subr.mxu0 0.0
    %3212 = vmatpush1.msra.mxu0 0.0
    %3213 = vmatprep.subr.mxu0 0.0
    %3214 = vmatpush1.msra.mxu0 0.0
    %3215 = vmatprep.subr.mxu0 0.0
    %3216 = vmatpush1.msra.mxu0 0.0
    %3217 = vmatprep.subr.mxu0 0.0
    %3218 = vmatpush1.msra.mxu0 0.0
    %3219 = vmatprep.subr.mxu0 0.0
    %3220 = vmatpush1.msra.mxu0 0.0
    %3221 = vmatprep.subr.mxu0 0.0
    %3222 = vmatpush1.msra.mxu0 0.0
    %3223 = vmatprep.subr.mxu0 0.0
    %3224 = vmatpush1.msra.mxu0 0.0
    %3225 = vmatprep.subr.mxu0 0.0
    %3226 = vmatpush1.msra.mxu0 0.0
    %3227 = vmatprep.subr.mxu0 0.0
    %3228 = vmatpush1.msra.mxu0 %v2058
    %3229 = vmatprep.subr.mxu0 0.0
    %3230 = vmatpush1.msra.mxu0 %v2057
    %3231 = vmatprep.subr.mxu0 0.0
    %3232 = vmatpush1.msra.mxu0 %v2056
    %3233 = vmatprep.subr.mxu0 0.0
    %3234 = vmatpush1.msra.mxu0 %v2055
    %3235 = vmatprep.subr.mxu0 0.0
    %3236 = vmatpush2.msra.mxu0 0.0
    %3237 = vmatprep.subr.mxu0 0.0
    %3238 = vmatpush2.msra.mxu0 0.0
    %3239 = vmatprep.subr.mxu0 0.0
    %3240 = vmatpush2.msra.mxu0 0.0
    %3241 = vmatprep.subr.mxu0 0.0
    %3242 = vmatpush2.msra.mxu0 0.0
    %3243 = vmatprep.subr.mxu0 0.0
    %3244 = vmatpush2.msra.mxu0 0.0
    %3245 = vmatprep.subr.mxu0 0.0
    %3246 = vmatpush2.msra.mxu0 0.0
    %3247 = vmatprep.subr.mxu0 0.0
    %3248 = vmatpush2.msra.mxu0 0.0
    %3249 = vmatprep.subr.mxu0 0.0
    %3250 = vmatpush2.msra.mxu0 0.0
    %3251 = vmatprep.subr.mxu0 0.0
    %3252 = vmatpush2.msra.mxu0 0.0
    %3253 = vmatprep.subr.mxu0 0.0
    %3254 = vmatpush2.msra.mxu0 0.0
    %3255 = vmatprep.subr.mxu0 0.0
    %3256 = vmatpush2.msra.mxu0 0.0
    %3257 = vmatprep.subr.mxu0 0.0
    %3258 = vmatpush2.msra.mxu0 0.0
    %3259 = vmatprep.subr.mxu0 0.0
    %3260 = vmatpush2.msra.mxu0 0.0
    %3261 = vmatprep.subr.mxu0 0.0
    %3262 = vmatpush2.msra.mxu0 0.0
    %3263 = vmatprep.subr.mxu0 0.0
    %3264 = vmatpush2.msra.mxu0 0.0
    %3265 = vmatprep.subr.mxu0 0.0
    %3266 = vmatpush2.msra.mxu0 0.0
    %3267 = vmatprep.mubr.f32.mxu0 0.0
    %3268 = vmatmul.mubr.f32.gmra.mxu0 %v3201
    %v3269 = vpop.f32.mrf.mxu0
    %v3270 = vadd.f32 0.0, %v3269
    %v3271 = vpop.f32.mrf.mxu0
    %3272 = vdwg.mxu0
    %v3274 = vrot.slane %v3270, 3
    %v3276 = vadd.f32 %v2145, %v3274
    %v3278 = vrot.slane %v3196, 3
    %3279 = vrot.lane.b32.xlu0 %v3278, 32
    %v3280 = vpop.permute.xlu0 %3279
    %v3281 = vsel %vm317, %v3280, 0
    %3283 = vmatprep.subr.mxu0 0.0
    %3284 = vmatpush1.msra.mxu0 0.0
    %3285 = vmatprep.subr.mxu0 0.0
    %3286 = vmatpush1.msra.mxu0 0.0
    %3287 = vmatprep.subr.mxu0 0.0
    %3288 = vmatpush1.msra.mxu0 0.0
    %3289 = vmatprep.subr.mxu0 0.0
    %3290 = vmatpush1.msra.mxu0 0.0
    %3291 = vmatprep.subr.mxu0 0.0
    %3292 = vmatpush1.msra.mxu0 0.0
    %3293 = vmatprep.subr.mxu0 0.0
    %3294 = vmatpush1.msra.mxu0 0.0
    %3295 = vmatprep.subr.mxu0 0.0
    %3296 = vmatpush1.msra.mxu0 0.0
    %3297 = vmatprep.subr.mxu0 0.0
    %3298 = vmatpush1.msra.mxu0 0.0
    %3299 = vmatprep.subr.mxu0 0.0
    %3300 = vmatpush1.msra.mxu0 0.0
    %3301 = vmatprep.subr.mxu0 0.0
    %3302 = vmatpush1.msra.mxu0 0.0
    %3303 = vmatprep.subr.mxu0 0.0
    %3304 = vmatpush1.msra.mxu0 0.0
    %3305 = vmatprep.subr.mxu0 0.0
    %3306 = vmatpush1.msra.mxu0 0.0
    %3307 = vmatprep.subr.mxu0 0.0
    %3308 = vmatpush1.msra.mxu0 %v2063
    %3309 = vmatprep.subr.mxu0 0.0
    %3310 = vmatpush1.msra.mxu0 %v2062
    %3311 = vmatprep.subr.mxu0 0.0
    %3312 = vmatpush1.msra.mxu0 %v2061
    %3313 = vmatprep.subr.mxu0 0.0
    %3314 = vmatpush1.msra.mxu0 %v2060
    %3315 = vmatprep.subr.mxu0 0.0
    %3316 = vmatpush2.msra.mxu0 0.0
    %3317 = vmatprep.subr.mxu0 0.0
    %3318 = vmatpush2.msra.mxu0 0.0
    %3319 = vmatprep.subr.mxu0 0.0
    %3320 = vmatpush2.msra.mxu0 0.0
    %3321 = vmatprep.subr.mxu0 0.0
    %3322 = vmatpush2.msra.mxu0 0.0
    %3323 = vmatprep.subr.mxu0 0.0
    %3324 = vmatpush2.msra.mxu0 0.0
    %3325 = vmatprep.subr.mxu0 0.0
    %3326 = vmatpush2.msra.mxu0 0.0
    %3327 = vmatprep.subr.mxu0 0.0
    %3328 = vmatpush2.msra.mxu0 0.0
    %3329 = vmatprep.subr.mxu0 0.0
    %3330 = vmatpush2.msra.mxu0 0.0
    %3331 = vmatprep.subr.mxu0 0.0
    %3332 = vmatpush2.msra.mxu0 0.0
    %3333 = vmatprep.subr.mxu0 0.0
    %3334 = vmatpush2.msra.mxu0 0.0
    %3335 = vmatprep.subr.mxu0 0.0
    %3336 = vmatpush2.msra.mxu0 0.0
    %3337 = vmatprep.subr.mxu0 0.0
    %3338 = vmatpush2.msra.mxu0 0.0
    %3339 = vmatprep.subr.mxu0 0.0
    %3340 = vmatpush2.msra.mxu0 0.0
    %3341 = vmatprep.subr.mxu0 0.0
    %3342 = vmatpush2.msra.mxu0 0.0
    %3343 = vmatprep.subr.mxu0 0.0
    %3344 = vmatpush2.msra.mxu0 0.0
    %3345 = vmatprep.subr.mxu0 0.0
    %3346 = vmatpush2.msra.mxu0 0.0
    %3347 = vmatprep.mubr.f32.mxu0 0.0
    %3348 = vmatmul.mubr.f32.gmra.mxu0 %v3281
    %v3349 = vpop.f32.mrf.mxu0
    %v3350 = vadd.f32 0.0, %v3349
    %v3351 = vpop.f32.mrf.mxu0
    %3352 = vdwg.mxu0
    %v3354 = vrot.slane %v3350, 6
    %v3356 = vadd.f32 %v2147, %v3354
    %v3357 = vxor.u32 %v3276, 2147483648
    %v3358 = vmul.f32 %v3357, 1.442695
    %v3359 = vpow.pop %v3358
    %v3360 = vadd.f32 %v3359, 1.0
    %v3361 = vrcp.pop %v3360
    %v3362 = vmul.f32 1.0, %v3361
    %v3363 = vtanh.pop %v3276
    %v3365 = vrot.slane %v3163, 7
    %v3367 = vmul.f32 %v3362, %v3365
    %3369 = vrot.lane.b32.xlu0 %v3363, 64
    %v3370 = vpop.permute.xlu0 %3369
    %v3372 = vmul.f32 %v3362, %v3370
    %3374 = vrot.lane.b32.xlu0 %v3372, 32
    %v3375 = vpop.permute.xlu0 %3374
    %v3377 = vadd.f32 %v3367, %v3375
    %v3378 = vtanh.pop %v3377
    %3380 = vrot.lane.b32.xlu0 %v3378, 64
    %v3381 = vpop.permute.xlu0 %3380
    %v3383 = vmul.f32 %v3362, %v3381
    %v3384 = vxor.u32 %v3356, 2147483648
    %v3385 = vmul.f32 %v3384, 1.442695
    %v3386 = vpow.pop %v3385
    %v3387 = vadd.f32 %v3386, 1.0
    %v3388 = vrcp.pop %v3387
    %v3389 = vmul.f32 1.0, %v3388
    %v3390 = vtanh.pop %v3356
    %v3392 = vrot.slane %v3190, 1
    %v3394 = vmul.f32 %v3389, %v3392
    %3396 = vrot.lane.b32.xlu0 %v3390, 64
    %v3397 = vpop.permute.xlu0 %3396
    %v3399 = vmul.f32 %v3389, %v3397
    %3401 = vrot.lane.b32.xlu0 %v3399, 32
    %v3402 = vpop.permute.xlu0 %3401
    %v3404 = vadd.f32 %v3394, %v3402
    %v3405 = vtanh.pop %v3404
    %3407 = vrot.lane.b32.xlu0 %v3405, 64
    %v3408 = vpop.permute.xlu0 %3407
    %v3410 = vmul.f32 %v3389, %v3408
    %v3412 = vrot.slane %v3383, 5
    %3413 = vrot.lane.b32.xlu0 %v3412, 32
    %v3414 = vpop.permute.xlu0 %3413
    %v3415 = vsel %vm317, %v3414, 0
    %3417 = vmatprep.subr.mxu0 0.0
    %3418 = vmatpush1.msra.mxu0 0.0
    %3419 = vmatprep.subr.mxu0 0.0
    %3420 = vmatpush1.msra.mxu0 0.0
    %3421 = vmatprep.subr.mxu0 0.0
    %3422 = vmatpush1.msra.mxu0 0.0
    %3423 = vmatprep.subr.mxu0 0.0
    %3424 = vmatpush1.msra.mxu0 0.0
    %3425 = vmatprep.subr.mxu0 0.0
    %3426 = vmatpush1.msra.mxu0 0.0
    %3427 = vmatprep.subr.mxu0 0.0
    %3428 = vmatpush1.msra.mxu0 0.0
    %3429 = vmatprep.subr.mxu0 0.0
    %3430 = vmatpush1.msra.mxu0 0.0
    %3431 = vmatprep.subr.mxu0 0.0
    %3432 = vmatpush1.msra.mxu0 0.0
    %3433 = vmatprep.subr.mxu0 0.0
    %3434 = vmatpush1.msra.mxu0 0.0
    %3435 = vmatprep.subr.mxu0 0.0
    %3436 = vmatpush1.msra.mxu0 0.0
    %3437 = vmatprep.subr.mxu0 0.0
    %3438 = vmatpush1.msra.mxu0 0.0
    %3439 = vmatprep.subr.mxu0 0.0
    %3440 = vmatpush1.msra.mxu0 0.0
    %3441 = vmatprep.subr.mxu0 0.0
    %3442 = vmatpush1.msra.mxu0 %v2058
    %3443 = vmatprep.subr.mxu0 0.0
    %3444 = vmatpush1.msra.mxu0 %v2057
    %3445 = vmatprep.subr.mxu0 0.0
    %3446 = vmatpush1.msra.mxu0 %v2056
    %3447 = vmatprep.subr.mxu0 0.0
    %3448 = vmatpush1.msra.mxu0 %v2055
    %3449 = vmatprep.subr.mxu0 0.0
    %3450 = vmatpush2.msra.mxu0 0.0
    %3451 = vmatprep.subr.mxu0 0.0
    %3452 = vmatpush2.msra.mxu0 0.0
    %3453 = vmatprep.subr.mxu0 0.0
    %3454 = vmatpush2.msra.mxu0 0.0
    %3455 = vmatprep.subr.mxu0 0.0
    %3456 = vmatpush2.msra.mxu0 0.0
    %3457 = vmatprep.subr.mxu0 0.0
    %3458 = vmatpush2.msra.mxu0 0.0
    %3459 = vmatprep.subr.mxu0 0.0
    %3460 = vmatpush2.msra.mxu0 0.0
    %3461 = vmatprep.subr.mxu0 0.0
    %3462 = vmatpush2.msra.mxu0 0.0
    %3463 = vmatprep.subr.mxu0 0.0
    %3464 = vmatpush2.msra.mxu0 0.0
    %3465 = vmatprep.subr.mxu0 0.0
    %3466 = vmatpush2.msra.mxu0 0.0
    %3467 = vmatprep.subr.mxu0 0.0
    %3468 = vmatpush2.msra.mxu0 0.0
    %3469 = vmatprep.subr.mxu0 0.0
    %3470 = vmatpush2.msra.mxu0 0.0
    %3471 = vmatprep.subr.mxu0 0.0
    %3472 = vmatpush2.msra.mxu0 0.0
    %3473 = vmatprep.subr.mxu0 0.0
    %3474 = vmatpush2.msra.mxu0 0.0
    %3475 = vmatprep.subr.mxu0 0.0
    %3476 = vmatpush2.msra.mxu0 0.0
    %3477 = vmatprep.subr.mxu0 0.0
    %3478 = vmatpush2.msra.mxu0 0.0
    %3479 = vmatprep.subr.mxu0 0.0
    %3480 = vmatpush2.msra.mxu0 0.0
    %3481 = vmatprep.mubr.f32.mxu0 0.0
    %3482 = vmatmul.mubr.f32.gmra.mxu0 %v3415
    %v3483 = vpop.f32.mrf.mxu0
    %v3484 = vadd.f32 0.0, %v3483
    %v3485 = vpop.f32.mrf.mxu0
    %3486 = vdwg.mxu0
    %v3488 = vrot.slane %v3484, 2
    %v3490 = vadd.f32 %v2145, %v3488
    %v3492 = vrot.slane %v3410, 2
    %3493 = vrot.lane.b32.xlu0 %v3492, 32
    %v3494 = vpop.permute.xlu0 %3493
    %v3495 = vsel %vm317, %v3494, 0
    %3497 = vmatprep.subr.mxu0 0.0
    %3498 = vmatpush1.msra.mxu0 0.0
    %3499 = vmatprep.subr.mxu0 0.0
    %3500 = vmatpush1.msra.mxu0 0.0
    %3501 = vmatprep.subr.mxu0 0.0
    %3502 = vmatpush1.msra.mxu0 0.0
    %3503 = vmatprep.subr.mxu0 0.0
    %3504 = vmatpush1.msra.mxu0 0.0
    %3505 = vmatprep.subr.mxu0 0.0
    %3506 = vmatpush1.msra.mxu0 0.0
    %3507 = vmatprep.subr.mxu0 0.0
    %3508 = vmatpush1.msra.mxu0 0.0
    %3509 = vmatprep.subr.mxu0 0.0
    %3510 = vmatpush1.msra.mxu0 0.0
    %3511 = vmatprep.subr.mxu0 0.0
    %3512 = vmatpush1.msra.mxu0 0.0
    %3513 = vmatprep.subr.mxu0 0.0
    %3514 = vmatpush1.msra.mxu0 0.0
    %3515 = vmatprep.subr.mxu0 0.0
    %3516 = vmatpush1.msra.mxu0 0.0
    %3517 = vmatprep.subr.mxu0 0.0
    %3518 = vmatpush1.msra.mxu0 0.0
    %3519 = vmatprep.subr.mxu0 0.0
    %3520 = vmatpush1.msra.mxu0 0.0
    %3521 = vmatprep.subr.mxu0 0.0
    %3522 = vmatpush1.msra.mxu0 %v2063
    %3523 = vmatprep.subr.mxu0 0.0
    %3524 = vmatpush1.msra.mxu0 %v2062
    %3525 = vmatprep.subr.mxu0 0.0
    %3526 = vmatpush1.msra.mxu0 %v2061
    %3527 = vmatprep.subr.mxu0 0.0
    %3528 = vmatpush1.msra.mxu0 %v2060
    %3529 = vmatprep.subr.mxu0 0.0
    %3530 = vmatpush2.msra.mxu0 0.0
    %3531 = vmatprep.subr.mxu0 0.0
    %3532 = vmatpush2.msra.mxu0 0.0
    %3533 = vmatprep.subr.mxu0 0.0
    %3534 = vmatpush2.msra.mxu0 0.0
    %3535 = vmatprep.subr.mxu0 0.0
    %3536 = vmatpush2.msra.mxu0 0.0
    %3537 = vmatprep.subr.mxu0 0.0
    %3538 = vmatpush2.msra.mxu0 0.0
    %3539 = vmatprep.subr.mxu0 0.0
    %3540 = vmatpush2.msra.mxu0 0.0
    %3541 = vmatprep.subr.mxu0 0.0
    %3542 = vmatpush2.msra.mxu0 0.0
    %3543 = vmatprep.subr.mxu0 0.0
    %3544 = vmatpush2.msra.mxu0 0.0
    %3545 = vmatprep.subr.mxu0 0.0
    %3546 = vmatpush2.msra.mxu0 0.0
    %3547 = vmatprep.subr.mxu0 0.0
    %3548 = vmatpush2.msra.mxu0 0.0
    %3549 = vmatprep.subr.mxu0 0.0
    %3550 = vmatpush2.msra.mxu0 0.0
    %3551 = vmatprep.subr.mxu0 0.0
    %3552 = vmatpush2.msra.mxu0 0.0
    %3553 = vmatprep.subr.mxu0 0.0
    %3554 = vmatpush2.msra.mxu0 0.0
    %3555 = vmatprep.subr.mxu0 0.0
    %3556 = vmatpush2.msra.mxu0 0.0
    %3557 = vmatprep.subr.mxu0 0.0
    %3558 = vmatpush2.msra.mxu0 0.0
    %3559 = vmatprep.subr.mxu0 0.0
    %3560 = vmatpush2.msra.mxu0 0.0
    %3561 = vmatprep.mubr.f32.mxu0 0.0
    %3562 = vmatmul.mubr.f32.gmra.mxu0 %v3495
    %v3563 = vpop.f32.mrf.mxu0
    %v3564 = vadd.f32 0.0, %v3563
    %v3565 = vpop.f32.mrf.mxu0
    %3566 = vdwg.mxu0
    %v3568 = vrot.slane %v3564, 7
    %v3570 = vadd.f32 %v2147, %v3568
    %v3571 = vxor.u32 %v3490, 2147483648
    %v3572 = vmul.f32 %v3571, 1.442695
    %v3573 = vpow.pop %v3572
    %v3574 = vadd.f32 %v3573, 1.0
    %v3575 = vrcp.pop %v3574
    %v3576 = vmul.f32 1.0, %v3575
    %v3577 = vtanh.pop %v3490
    %v3579 = vrot.slane %v3377, 7
    %v3581 = vmul.f32 %v3576, %v3579
    %3583 = vrot.lane.b32.xlu0 %v3577, 64
    %v3584 = vpop.permute.xlu0 %3583
    %v3586 = vmul.f32 %v3576, %v3584
    %3588 = vrot.lane.b32.xlu0 %v3586, 32
    %v3589 = vpop.permute.xlu0 %3588
    %v3591 = vadd.f32 %v3581, %v3589
    %v3592 = vtanh.pop %v3591
    %3594 = vrot.lane.b32.xlu0 %v3592, 64
    %v3595 = vpop.permute.xlu0 %3594
    %v3597 = vmul.f32 %v3576, %v3595
    %v3598 = vxor.u32 %v3570, 2147483648
    %v3599 = vmul.f32 %v3598, 1.442695
    %v3600 = vpow.pop %v3599
    %v3601 = vadd.f32 %v3600, 1.0
    %v3602 = vrcp.pop %v3601
    %v3603 = vmul.f32 1.0, %v3602
    %v3604 = vtanh.pop %v3570
    %v3606 = vrot.slane %v3404, 1
    %v3608 = vmul.f32 %v3603, %v3606
    %3610 = vrot.lane.b32.xlu0 %v3604, 64
    %v3611 = vpop.permute.xlu0 %3610
    %v3613 = vmul.f32 %v3603, %v3611
    %3615 = vrot.lane.b32.xlu0 %v3613, 32
    %v3616 = vpop.permute.xlu0 %3615
    %v3618 = vadd.f32 %v3608, %v3616
    %v3619 = vtanh.pop %v3618
    %3621 = vrot.lane.b32.xlu0 %v3619, 64
    %v3622 = vpop.permute.xlu0 %3621
    %v3624 = vmul.f32 %v3603, %v3622
    %v3626 = vrot.slane %v3597, 6
    %3627 = vrot.lane.b32.xlu0 %v3626, 32
    %v3628 = vpop.permute.xlu0 %3627
    %v3629 = vsel %vm317, %v3628, 0
    %3631 = vmatprep.subr.mxu0 0.0
    %3632 = vmatpush1.msra.mxu0 0.0
    %3633 = vmatprep.subr.mxu0 0.0
    %3634 = vmatpush1.msra.mxu0 0.0
    %3635 = vmatprep.subr.mxu0 0.0
    %3636 = vmatpush1.msra.mxu0 0.0
    %3637 = vmatprep.subr.mxu0 0.0
    %3638 = vmatpush1.msra.mxu0 0.0
    %3639 = vmatprep.subr.mxu0 0.0
    %3640 = vmatpush1.msra.mxu0 0.0
    %3641 = vmatprep.subr.mxu0 0.0
    %3642 = vmatpush1.msra.mxu0 0.0
    %3643 = vmatprep.subr.mxu0 0.0
    %3644 = vmatpush1.msra.mxu0 0.0
    %3645 = vmatprep.subr.mxu0 0.0
    %3646 = vmatpush1.msra.mxu0 0.0
    %3647 = vmatprep.subr.mxu0 0.0
    %3648 = vmatpush1.msra.mxu0 0.0
    %3649 = vmatprep.subr.mxu0 0.0
    %3650 = vmatpush1.msra.mxu0 0.0
    %3651 = vmatprep.subr.mxu0 0.0
    %3652 = vmatpush1.msra.mxu0 0.0
    %3653 = vmatprep.subr.mxu0 0.0
    %3654 = vmatpush1.msra.mxu0 0.0
    %3655 = vmatprep.subr.mxu0 0.0
    %3656 = vmatpush1.msra.mxu0 %v2058
    %3657 = vmatprep.subr.mxu0 0.0
    %3658 = vmatpush1.msra.mxu0 %v2057
    %3659 = vmatprep.subr.mxu0 0.0
    %3660 = vmatpush1.msra.mxu0 %v2056
    %3661 = vmatprep.subr.mxu0 0.0
    %3662 = vmatpush1.msra.mxu0 %v2055
    %3663 = vmatprep.subr.mxu0 0.0
    %3664 = vmatpush2.msra.mxu0 0.0
    %3665 = vmatprep.subr.mxu0 0.0
    %3666 = vmatpush2.msra.mxu0 0.0
    %3667 = vmatprep.subr.mxu0 0.0
    %3668 = vmatpush2.msra.mxu0 0.0
    %3669 = vmatprep.subr.mxu0 0.0
    %3670 = vmatpush2.msra.mxu0 0.0
    %3671 = vmatprep.subr.mxu0 0.0
    %3672 = vmatpush2.msra.mxu0 0.0
    %3673 = vmatprep.subr.mxu0 0.0
    %3674 = vmatpush2.msra.mxu0 0.0
    %3675 = vmatprep.subr.mxu0 0.0
    %3676 = vmatpush2.msra.mxu0 0.0
    %3677 = vmatprep.subr.mxu0 0.0
    %3678 = vmatpush2.msra.mxu0 0.0
    %3679 = vmatprep.subr.mxu0 0.0
    %3680 = vmatpush2.msra.mxu0 0.0
    %3681 = vmatprep.subr.mxu0 0.0
    %3682 = vmatpush2.msra.mxu0 0.0
    %3683 = vmatprep.subr.mxu0 0.0
    %3684 = vmatpush2.msra.mxu0 0.0
    %3685 = vmatprep.subr.mxu0 0.0
    %3686 = vmatpush2.msra.mxu0 0.0
    %3687 = vmatprep.subr.mxu0 0.0
    %3688 = vmatpush2.msra.mxu0 0.0
    %3689 = vmatprep.subr.mxu0 0.0
    %3690 = vmatpush2.msra.mxu0 0.0
    %3691 = vmatprep.subr.mxu0 0.0
    %3692 = vmatpush2.msra.mxu0 0.0
    %3693 = vmatprep.subr.mxu0 0.0
    %3694 = vmatpush2.msra.mxu0 0.0
    %3695 = vmatprep.mubr.f32.mxu0 0.0
    %3696 = vmatmul.mubr.f32.gmra.mxu0 %v3629
    %v3697 = vpop.f32.mrf.mxu0
    %v3698 = vadd.f32 0.0, %v3697
    %v3699 = vpop.f32.mrf.mxu0
    %3700 = vdwg.mxu0
    %v3702 = vrot.slane %v3698, 1
    %v3704 = vadd.f32 %v2145, %v3702
    %v3706 = vrot.slane %v3624, 1
    %3707 = vrot.lane.b32.xlu0 %v3706, 32
    %v3708 = vpop.permute.xlu0 %3707
    %v3709 = vsel %vm317, %v3708, 0
    %3711 = vmatprep.subr.mxu0 0.0
    %3712 = vmatpush1.msra.mxu0 0.0
    %3713 = vmatprep.subr.mxu0 0.0
    %3714 = vmatpush1.msra.mxu0 0.0
    %3715 = vmatprep.subr.mxu0 0.0
    %3716 = vmatpush1.msra.mxu0 0.0
    %3717 = vmatprep.subr.mxu0 0.0
    %3718 = vmatpush1.msra.mxu0 0.0
    %3719 = vmatprep.subr.mxu0 0.0
    %3720 = vmatpush1.msra.mxu0 0.0
    %3721 = vmatprep.subr.mxu0 0.0
    %3722 = vmatpush1.msra.mxu0 0.0
    %3723 = vmatprep.subr.mxu0 0.0
    %3724 = vmatpush1.msra.mxu0 0.0
    %3725 = vmatprep.subr.mxu0 0.0
    %3726 = vmatpush1.msra.mxu0 0.0
    %3727 = vmatprep.subr.mxu0 0.0
    %3728 = vmatpush1.msra.mxu0 0.0
    %3729 = vmatprep.subr.mxu0 0.0
    %3730 = vmatpush1.msra.mxu0 0.0
    %3731 = vmatprep.subr.mxu0 0.0
    %3732 = vmatpush1.msra.mxu0 0.0
    %3733 = vmatprep.subr.mxu0 0.0
    %3734 = vmatpush1.msra.mxu0 0.0
    %3735 = vmatprep.subr.mxu0 0.0
    %3736 = vmatpush1.msra.mxu0 %v2063
    %3737 = vmatprep.subr.mxu0 0.0
    %3738 = vmatpush1.msra.mxu0 %v2062
    %3739 = vmatprep.subr.mxu0 0.0
    %3740 = vmatpush1.msra.mxu0 %v2061
    %3741 = vmatprep.subr.mxu0 0.0
    %3742 = vmatpush1.msra.mxu0 %v2060
    %3743 = vmatprep.subr.mxu0 0.0
    %3744 = vmatpush2.msra.mxu0 0.0
    %3745 = vmatprep.subr.mxu0 0.0
    %3746 = vmatpush2.msra.mxu0 0.0
    %3747 = vmatprep.subr.mxu0 0.0
    %3748 = vmatpush2.msra.mxu0 0.0
    %3749 = vmatprep.subr.mxu0 0.0
    %3750 = vmatpush2.msra.mxu0 0.0
    %3751 = vmatprep.subr.mxu0 0.0
    %3752 = vmatpush2.msra.mxu0 0.0
    %3753 = vmatprep.subr.mxu0 0.0
    %3754 = vmatpush2.msra.mxu0 0.0
    %3755 = vmatprep.subr.mxu0 0.0
    %3756 = vmatpush2.msra.mxu0 0.0
    %3757 = vmatprep.subr.mxu0 0.0
    %3758 = vmatpush2.msra.mxu0 0.0
    %3759 = vmatprep.subr.mxu0 0.0
    %3760 = vmatpush2.msra.mxu0 0.0
    %3761 = vmatprep.subr.mxu0 0.0
    %3762 = vmatpush2.msra.mxu0 0.0
    %3763 = vmatprep.subr.mxu0 0.0
    %3764 = vmatpush2.msra.mxu0 0.0
    %3765 = vmatprep.subr.mxu0 0.0
    %3766 = vmatpush2.msra.mxu0 0.0
    %3767 = vmatprep.subr.mxu0 0.0
    %3768 = vmatpush2.msra.mxu0 0.0
    %3769 = vmatprep.subr.mxu0 0.0
    %3770 = vmatpush2.msra.mxu0 0.0
    %3771 = vmatprep.subr.mxu0 0.0
    %3772 = vmatpush2.msra.mxu0 0.0
    %3773 = vmatprep.subr.mxu0 0.0
    %3774 = vmatpush2.msra.mxu0 0.0
    %3775 = vmatprep.mubr.f32.mxu0 0.0
    %3776 = vmatmul.mubr.f32.gmra.mxu0 %v3709
    %v3777 = vpop.f32.mrf.mxu0
    %v3778 = vadd.f32 0.0, %v3777
    %v3779 = vpop.f32.mrf.mxu0
    %3780 = vdwg.mxu0
    %v3781 = vadd.f32 %v2147, %v3778
    %v3782 = vxor.u32 %v3704, 2147483648
    %v3783 = vmul.f32 %v3782, 1.442695
    %v3784 = vpow.pop %v3783
    %v3785 = vadd.f32 %v3784, 1.0
    %v3786 = vrcp.pop %v3785
    %v3787 = vmul.f32 1.0, %v3786
    %v3788 = vtanh.pop %v3704
    %v3790 = vrot.slane %v3591, 7
    %v3792 = vmul.f32 %v3787, %v3790
    %3794 = vrot.lane.b32.xlu0 %v3788, 64
    %v3795 = vpop.permute.xlu0 %3794
    %v3797 = vmul.f32 %v3787, %v3795
    %3799 = vrot.lane.b32.xlu0 %v3797, 32
    %v3800 = vpop.permute.xlu0 %3799
    %v3802 = vadd.f32 %v3792, %v3800
    %v3803 = vtanh.pop %v3802
    %3805 = vrot.lane.b32.xlu0 %v3803, 64
    %v3806 = vpop.permute.xlu0 %3805
    %v3808 = vmul.f32 %v3787, %v3806
    %v3809 = vxor.u32 %v3781, 2147483648
    %v3810 = vmul.f32 %v3809, 1.442695
    %v3811 = vpow.pop %v3810
    %v3812 = vadd.f32 %v3811, 1.0
    %v3813 = vrcp.pop %v3812
    %v3814 = vmul.f32 1.0, %v3813
    %v3815 = vtanh.pop %v3781
    %v3817 = vrot.slane %v3618, 1
    %v3819 = vmul.f32 %v3814, %v3817
    %3821 = vrot.lane.b32.xlu0 %v3815, 64
    %v3822 = vpop.permute.xlu0 %3821
    %v3824 = vmul.f32 %v3814, %v3822
    %3826 = vrot.lane.b32.xlu0 %v3824, 32
    %v3827 = vpop.permute.xlu0 %3826
    %v3829 = vadd.f32 %v3819, %v3827
    %v3830 = vtanh.pop %v3829
    %3832 = vrot.lane.b32.xlu0 %v3830, 64
    %v3833 = vpop.permute.xlu0 %3832
    %v3835 = vmul.f32 %v3814, %v3833
    %v3836 = vsel %vm2008, %v2317, %v2527
    %v3837 = vsel %vm2010, %v3836, %v2741
    %v3838 = vsel %vm2012, %v3837, %v2955
    %v3839 = vsel %vm2014, %v3838, %v3169
    %v3840 = vsel %vm2016, %v3839, %v3383
    %v3841 = vsel %vm2018, %v3840, %v3597
    %v3842 = vsel %vm2020, %v3841, %v3808
    %v3843 = vsel %vm2008, %v3835, %v3624
    %v3844 = vsel %vm2010, %v3843, %v3410
    %v3845 = vsel %vm2012, %v3844, %v3196
    %v3846 = vsel %vm2014, %v3845, %v2982
    %v3847 = vsel %vm2016, %v3846, %v2768
    %v3848 = vsel %vm2018, %v3847, %v2554
    %v3849 = vsel %vm2020, %v3848, %v2341
    %3851 = vrot.lane.b32.xlu0 %v3842, 32
    %v3852 = vpop.permute.xlu0 %3851
    %3855 = vrot.lane.b32.xlu0 %v3849, 64
    %v3856 = vpop.permute.xlu0 %3855
    %v3858 = vsel %vm317, %v3852, %v3856
    %v3860 = vlaneseq
    %v3861 = vshrl.u32 %v3860, 7
    %v3862 = vsub.s32 0, %v3861
    %v3863 = vrot.slane %v174, %v3862
    %v3866 = vsel %vm242, %v3858, 0
    %3868 = vmatprep.subr.mxu0 0.0
    %3869 = vmatpush1.msra.mxu0 0.0
    %3870 = vmatprep.subr.mxu0 0.0
    %3871 = vmatpush1.msra.mxu0 0.0
    %3872 = vmatprep.subr.mxu0 0.0
    %3873 = vmatpush1.msra.mxu0 0.0
    %3874 = vmatprep.subr.mxu0 0.0
    %3875 = vmatpush1.msra.mxu0 0.0
    %3876 = vmatprep.subr.mxu0 0.0
    %3877 = vmatpush1.msra.mxu0 0.0
    %3878 = vmatprep.subr.mxu0 0.0
    %3879 = vmatpush1.msra.mxu0 0.0
    %3880 = vmatprep.subr.mxu0 0.0
    %3881 = vmatpush1.msra.mxu0 0.0
    %3882 = vmatprep.subr.mxu0 0.0
    %3883 = vmatpush1.msra.mxu0 0.0
    %3884 = vmatprep.subr.mxu0 0.0
    %3885 = vmatpush1.msra.mxu0 %v173
    %3886 = vmatprep.subr.mxu0 0.0
    %3887 = vmatpush1.msra.mxu0 %v172
    %3888 = vmatprep.subr.mxu0 0.0
    %3889 = vmatpush1.msra.mxu0 %v171
    %3890 = vmatprep.subr.mxu0 0.0
    %3891 = vmatpush1.msra.mxu0 %v170
    %3892 = vmatprep.subr.mxu0 0.0
    %3893 = vmatpush1.msra.mxu0 %v169
    %3894 = vmatprep.subr.mxu0 0.0
    %3895 = vmatpush1.msra.mxu0 %v168
    %3896 = vmatprep.subr.mxu0 0.0
    %3897 = vmatpush1.msra.mxu0 %v167
    %3898 = vmatprep.subr.mxu0 0.0
    %3899 = vmatpush1.msra.mxu0 %v166
    %3900 = vmatprep.subr.mxu0 0.0
    %3901 = vmatpush2.msra.mxu0 0.0
    %3902 = vmatprep.subr.mxu0 0.0
    %3903 = vmatpush2.msra.mxu0 0.0
    %3904 = vmatprep.subr.mxu0 0.0
    %3905 = vmatpush2.msra.mxu0 0.0
    %3906 = vmatprep.subr.mxu0 0.0
    %3907 = vmatpush2.msra.mxu0 0.0
    %3908 = vmatprep.subr.mxu0 0.0
    %3909 = vmatpush2.msra.mxu0 0.0
    %3910 = vmatprep.subr.mxu0 0.0
    %3911 = vmatpush2.msra.mxu0 0.0
    %3912 = vmatprep.subr.mxu0 0.0
    %3913 = vmatpush2.msra.mxu0 0.0
    %3914 = vmatprep.subr.mxu0 0.0
    %3915 = vmatpush2.msra.mxu0 0.0
    %3916 = vmatprep.subr.mxu0 0.0
    %3917 = vmatpush2.msra.mxu0 0.0
    %3918 = vmatprep.subr.mxu0 0.0
    %3919 = vmatpush2.msra.mxu0 0.0
    %3920 = vmatprep.subr.mxu0 0.0
    %3921 = vmatpush2.msra.mxu0 0.0
    %3922 = vmatprep.subr.mxu0 0.0
    %3923 = vmatpush2.msra.mxu0 0.0
    %3924 = vmatprep.subr.mxu0 0.0
    %3925 = vmatpush2.msra.mxu0 0.0
    %3926 = vmatprep.subr.mxu0 0.0
    %3927 = vmatpush2.msra.mxu0 0.0
    %3928 = vmatprep.subr.mxu0 0.0
    %3929 = vmatpush2.msra.mxu0 0.0
    %3930 = vmatprep.subr.mxu0 0.0
    %3931 = vmatpush2.msra.mxu0 0.0
    %3932 = vmatprep.mubr.f32.mxu0 0.0
    %3933 = vmatmul.mubr.f32.gmra.mxu0 %v3866
    %v3934 = vpop.f32.mrf.mxu0
    %v3935 = vadd.f32 %v3863, %v3934
    %v3936 = vpop.f32.mrf.mxu0
    %3937 = vdwg.mxu0
    %v3939 = vlaneseq
    %v3940 = vshrl.u32 %v3939, 7
    %v3941 = vsub.s32 0, %v3940
    %v3942 = vrot.slane %v183, %v3941
    %v3945 = vsel %vm242, %v203, 0
    %3947 = vmatprep.subr.mxu0 0.0
    %3948 = vmatpush1.msra.mxu0 0.0
    %3949 = vmatprep.subr.mxu0 0.0
    %3950 = vmatpush1.msra.mxu0 0.0
    %3951 = vmatprep.subr.mxu0 0.0
    %3952 = vmatpush1.msra.mxu0 0.0
    %3953 = vmatprep.subr.mxu0 0.0
    %3954 = vmatpush1.msra.mxu0 0.0
    %3955 = vmatprep.subr.mxu0 0.0
    %3956 = vmatpush1.msra.mxu0 0.0
    %3957 = vmatprep.subr.mxu0 0.0
    %3958 = vmatpush1.msra.mxu0 0.0
    %3959 = vmatprep.subr.mxu0 0.0
    %3960 = vmatpush1.msra.mxu0 0.0
    %3961 = vmatprep.subr.mxu0 0.0
    %3962 = vmatpush1.msra.mxu0 0.0
    %3963 = vmatprep.subr.mxu0 0.0
    %3964 = vmatpush1.msra.mxu0 %v182
    %3965 = vmatprep.subr.mxu0 0.0
    %3966 = vmatpush1.msra.mxu0 %v181
    %3967 = vmatprep.subr.mxu0 0.0
    %3968 = vmatpush1.msra.mxu0 %v180
    %3969 = vmatprep.subr.mxu0 0.0
    %3970 = vmatpush1.msra.mxu0 %v179
    %3971 = vmatprep.subr.mxu0 0.0
    %3972 = vmatpush1.msra.mxu0 %v178
    %3973 = vmatprep.subr.mxu0 0.0
    %3974 = vmatpush1.msra.mxu0 %v177
    %3975 = vmatprep.subr.mxu0 0.0
    %3976 = vmatpush1.msra.mxu0 %v176
    %3977 = vmatprep.subr.mxu0 0.0
    %3978 = vmatpush1.msra.mxu0 %v175
    %3979 = vmatprep.subr.mxu0 0.0
    %3980 = vmatpush2.msra.mxu0 0.0
    %3981 = vmatprep.subr.mxu0 0.0
    %3982 = vmatpush2.msra.mxu0 0.0
    %3983 = vmatprep.subr.mxu0 0.0
    %3984 = vmatpush2.msra.mxu0 0.0
    %3985 = vmatprep.subr.mxu0 0.0
    %3986 = vmatpush2.msra.mxu0 0.0
    %3987 = vmatprep.subr.mxu0 0.0
    %3988 = vmatpush2.msra.mxu0 0.0
    %3989 = vmatprep.subr.mxu0 0.0
    %3990 = vmatpush2.msra.mxu0 0.0
    %3991 = vmatprep.subr.mxu0 0.0
    %3992 = vmatpush2.msra.mxu0 0.0
    %3993 = vmatprep.subr.mxu0 0.0
    %3994 = vmatpush2.msra.mxu0 0.0
    %3995 = vmatprep.subr.mxu0 0.0
    %3996 = vmatpush2.msra.mxu0 0.0
    %3997 = vmatprep.subr.mxu0 0.0
    %3998 = vmatpush2.msra.mxu0 0.0
    %3999 = vmatprep.subr.mxu0 0.0
    %4000 = vmatpush2.msra.mxu0 0.0
    %4001 = vmatprep.subr.mxu0 0.0
    %4002 = vmatpush2.msra.mxu0 0.0
    %4003 = vmatprep.subr.mxu0 0.0
    %4004 = vmatpush2.msra.mxu0 0.0
    %4005 = vmatprep.subr.mxu0 0.0
    %4006 = vmatpush2.msra.mxu0 0.0
    %4007 = vmatprep.subr.mxu0 0.0
    %4008 = vmatpush2.msra.mxu0 0.0
    %4009 = vmatprep.subr.mxu0 0.0
    %4010 = vmatpush2.msra.mxu0 0.0
    %4011 = vmatprep.mubr.f32.mxu0 0.0
    %4012 = vmatmul.mubr.f32.gmra.mxu0 %v3945
    %v4013 = vpop.f32.mrf.mxu0
    %v4014 = vadd.f32 %v3942, %v4013
    %v4015 = vpop.f32.mrf.mxu0
    %4016 = vdwg.mxu0
    %v4018 = vlaneseq
    %v4019 = vshrl.u32 %v4018, 7
    %v4020 = vsub.s32 0, %v4019
    %v4021 = vrot.slane %v192, %v4020
    %4023 = vmatprep.subr.mxu0 0.0
    %4024 = vmatpush1.msra.mxu0 0.0
    %4025 = vmatprep.subr.mxu0 0.0
    %4026 = vmatpush1.msra.mxu0 0.0
    %4027 = vmatprep.subr.mxu0 0.0
    %4028 = vmatpush1.msra.mxu0 0.0
    %4029 = vmatprep.subr.mxu0 0.0
    %4030 = vmatpush1.msra.mxu0 0.0
    %4031 = vmatprep.subr.mxu0 0.0
    %4032 = vmatpush1.msra.mxu0 0.0
    %4033 = vmatprep.subr.mxu0 0.0
    %4034 = vmatpush1.msra.mxu0 0.0
    %4035 = vmatprep.subr.mxu0 0.0
    %4036 = vmatpush1.msra.mxu0 0.0
    %4037 = vmatprep.subr.mxu0 0.0
    %4038 = vmatpush1.msra.mxu0 0.0
    %4039 = vmatprep.subr.mxu0 0.0
    %4040 = vmatpush1.msra.mxu0 %v191
    %4041 = vmatprep.subr.mxu0 0.0
    %4042 = vmatpush1.msra.mxu0 %v190
    %4043 = vmatprep.subr.mxu0 0.0
    %4044 = vmatpush1.msra.mxu0 %v189
    %4045 = vmatprep.subr.mxu0 0.0
    %4046 = vmatpush1.msra.mxu0 %v188
    %4047 = vmatprep.subr.mxu0 0.0
    %4048 = vmatpush1.msra.mxu0 %v187
    %4049 = vmatprep.subr.mxu0 0.0
    %4050 = vmatpush1.msra.mxu0 %v186
    %4051 = vmatprep.subr.mxu0 0.0
    %4052 = vmatpush1.msra.mxu0 %v185
    %4053 = vmatprep.subr.mxu0 0.0
    %4054 = vmatpush1.msra.mxu0 %v184
    %4055 = vmatprep.subr.mxu0 0.0
    %4056 = vmatpush2.msra.mxu0 0.0
    %4057 = vmatprep.subr.mxu0 0.0
    %4058 = vmatpush2.msra.mxu0 0.0
    %4059 = vmatprep.subr.mxu0 0.0
    %4060 = vmatpush2.msra.mxu0 0.0
    %4061 = vmatprep.subr.mxu0 0.0
    %4062 = vmatpush2.msra.mxu0 0.0
    %4063 = vmatprep.subr.mxu0 0.0
    %4064 = vmatpush2.msra.mxu0 0.0
    %4065 = vmatprep.subr.mxu0 0.0
    %4066 = vmatpush2.msra.mxu0 0.0
    %4067 = vmatprep.subr.mxu0 0.0
    %4068 = vmatpush2.msra.mxu0 0.0
    %4069 = vmatprep.subr.mxu0 0.0
    %4070 = vmatpush2.msra.mxu0 0.0
    %4071 = vmatprep.subr.mxu0 0.0
    %4072 = vmatpush2.msra.mxu0 0.0
    %4073 = vmatprep.subr.mxu0 0.0
    %4074 = vmatpush2.msra.mxu0 0.0
    %4075 = vmatprep.subr.mxu0 0.0
    %4076 = vmatpush2.msra.mxu0 0.0
    %4077 = vmatprep.subr.mxu0 0.0
    %4078 = vmatpush2.msra.mxu0 0.0
    %4079 = vmatprep.subr.mxu0 0.0
    %4080 = vmatpush2.msra.mxu0 0.0
    %4081 = vmatprep.subr.mxu0 0.0
    %4082 = vmatpush2.msra.mxu0 0.0
    %4083 = vmatprep.subr.mxu0 0.0
    %4084 = vmatpush2.msra.mxu0 0.0
    %4085 = vmatprep.subr.mxu0 0.0
    %4086 = vmatpush2.msra.mxu0 0.0
    %4087 = vmatprep.mubr.f32.mxu0 0.0
    %4088 = vmatmul.mubr.f32.gmra.mxu0 %v3945
    %v4089 = vpop.f32.mrf.mxu0
    %v4090 = vadd.f32 %v4021, %v4089
    %v4091 = vpop.f32.mrf.mxu0
    %4092 = vdwg.mxu0
    %vm4093 = vcmask 130048
    %v4095 = vsel %vm4093, %v3935, 0
    %v4098 = vsel %vm4093, %v4014, 0
    %4100 = vmatprep.subr.mxu0 0.0
    %4101 = vmatpush1.xpose.msra.mxu0 0.0
    %4102 = vmatprep.subr.mxu0 0.0
    %4103 = vmatpush1.xpose.msra.mxu0 0.0
    %4104 = vmatprep.subr.mxu0 0.0
    %4105 = vmatpush1.xpose.msra.mxu0 0.0
    %4106 = vmatprep.subr.mxu0 0.0
    %4107 = vmatpush1.xpose.msra.mxu0 0.0
    %4108 = vmatprep.subr.mxu0 0.0
    %4109 = vmatpush1.xpose.msra.mxu0 0.0
    %4110 = vmatprep.subr.mxu0 0.0
    %4111 = vmatpush1.xpose.msra.mxu0 0.0
    %4112 = vmatprep.subr.mxu0 0.0
    %4113 = vmatpush1.xpose.msra.mxu0 0.0
    %4114 = vmatprep.subr.mxu0 0.0
    %4115 = vmatpush1.xpose.msra.mxu0 0.0
    %4116 = vmatprep.subr.mxu0 0.0
    %4117 = vmatpush1.xpose.msra.mxu0 0.0
    %4118 = vmatprep.subr.mxu0 0.0
    %4119 = vmatpush1.xpose.msra.mxu0 0.0
    %4120 = vmatprep.subr.mxu0 0.0
    %4121 = vmatpush1.xpose.msra.mxu0 0.0
    %4122 = vmatprep.subr.mxu0 0.0
    %4123 = vmatpush1.xpose.msra.mxu0 0.0
    %4124 = vmatprep.subr.mxu0 0.0
    %4125 = vmatpush1.xpose.msra.mxu0 0.0
    %4126 = vmatprep.subr.mxu0 0.0
    %4127 = vmatpush1.xpose.msra.mxu0 0.0
    %4128 = vmatprep.subr.mxu0 0.0
    %4129 = vmatpush1.xpose.msra.mxu0 0.0
    %4130 = vmatprep.subr.mxu0 0.0
    %4131 = vmatpush1.xpose.msra.mxu0 %v4098
    %4132 = vmatprep.subr.mxu0 0.0
    %4133 = vmatpush2.xpose.msra.mxu0 0.0
    %4134 = vmatprep.subr.mxu0 0.0
    %4135 = vmatpush2.xpose.msra.mxu0 0.0
    %4136 = vmatprep.subr.mxu0 0.0
    %4137 = vmatpush2.xpose.msra.mxu0 0.0
    %4138 = vmatprep.subr.mxu0 0.0
    %4139 = vmatpush2.xpose.msra.mxu0 0.0
    %4140 = vmatprep.subr.mxu0 0.0
    %4141 = vmatpush2.xpose.msra.mxu0 0.0
    %4142 = vmatprep.subr.mxu0 0.0
    %4143 = vmatpush2.xpose.msra.mxu0 0.0
    %4144 = vmatprep.subr.mxu0 0.0
    %4145 = vmatpush2.xpose.msra.mxu0 0.0
    %4146 = vmatprep.subr.mxu0 0.0
    %4147 = vmatpush2.xpose.msra.mxu0 0.0
    %4148 = vmatprep.subr.mxu0 0.0
    %4149 = vmatpush2.xpose.msra.mxu0 0.0
    %4150 = vmatprep.subr.mxu0 0.0
    %4151 = vmatpush2.xpose.msra.mxu0 0.0
    %4152 = vmatprep.subr.mxu0 0.0
    %4153 = vmatpush2.xpose.msra.mxu0 0.0
    %4154 = vmatprep.subr.mxu0 0.0
    %4155 = vmatpush2.xpose.msra.mxu0 0.0
    %4156 = vmatprep.subr.mxu0 0.0
    %4157 = vmatpush2.xpose.msra.mxu0 0.0
    %4158 = vmatprep.subr.mxu0 0.0
    %4159 = vmatpush2.xpose.msra.mxu0 0.0
    %4160 = vmatprep.subr.mxu0 0.0
    %4161 = vmatpush2.xpose.msra.mxu0 0.0
    %4162 = vmatprep.subr.mxu0 0.0
    %4163 = vmatpush2.xpose.msra.mxu0 0.0
    %4164 = vmatprep.mubr.f32.mxu0 0.0
    %4165 = vmatmul.mubr.f32.gmra.mxu0 %v4095
    %v4166 = vpop.f32.mrf.mxu0
    %v4167 = vadd.f32 0.0, %v4166
    %v4168 = vpop.f32.mrf.mxu0
    %4169 = vdwg.mxu0
    %v4170 = vmul.f32 %v4167, 0.25
    %vm4171 = vcmask 64512
    %v4172 = vsel %vm4171, %v4170, -inf
    %4173 = vmax.xlane.f32.xlu0 %v4172
    %v4174 = vpop.xlane.xlu0 %4173
    %v4175 = vsub.f32 %v4170, %v4174
    %v4176 = vmul.f32 %v4175, 1.442695
    %v4177 = vpow.pop %v4176
    %v4178 = vsel %vm4171, %v4177, 0.0
    %4179 = vadd.xlane.f32.xlu0 %v4178
    %v4180 = vpop.xlane.xlu0 %4179
    %v4181 = vrcp.pop %v4180
    %v4182 = vmul.f32 %v4177, %v4181
    %v4184 = vsel %vm4171, %v4182, 0
    %4186 = vmatprep.subr.mxu0 0.0
    %4187 = vmatpush1.msra.mxu0 0.0
    %4188 = vmatprep.subr.mxu0 0.0
    %4189 = vmatpush1.msra.mxu0 0.0
    %4190 = vmatprep.subr.mxu0 0.0
    %4191 = vmatpush1.msra.mxu0 0.0
    %4192 = vmatprep.subr.mxu0 0.0
    %4193 = vmatpush1.msra.mxu0 0.0
    %4194 = vmatprep.subr.mxu0 0.0
    %4195 = vmatpush1.msra.mxu0 0.0
    %4196 = vmatprep.subr.mxu0 0.0
    %4197 = vmatpush1.msra.mxu0 0.0
    %4198 = vmatprep.subr.mxu0 0.0
    %4199 = vmatpush1.msra.mxu0 0.0
    %4200 = vmatprep.subr.mxu0 0.0
    %4201 = vmatpush1.msra.mxu0 0.0
    %4202 = vmatprep.subr.mxu0 0.0
    %4203 = vmatpush1.msra.mxu0 0.0
    %4204 = vmatprep.subr.mxu0 0.0
    %4205 = vmatpush1.msra.mxu0 0.0
    %4206 = vmatprep.subr.mxu0 0.0
    %4207 = vmatpush1.msra.mxu0 0.0
    %4208 = vmatprep.subr.mxu0 0.0
    %4209 = vmatpush1.msra.mxu0 0.0
    %4210 = vmatprep.subr.mxu0 0.0
    %4211 = vmatpush1.msra.mxu0 0.0
    %4212 = vmatprep.subr.mxu0 0.0
    %4213 = vmatpush1.msra.mxu0 0.0
    %4214 = vmatprep.subr.mxu0 0.0
    %4215 = vmatpush1.msra.mxu0 0.0
    %4216 = vmatprep.subr.mxu0 0.0
    %4217 = vmatpush1.msra.mxu0 %v4090
    %4218 = vmatprep.subr.mxu0 0.0
    %4219 = vmatpush2.msra.mxu0 0.0
    %4220 = vmatprep.subr.mxu0 0.0
    %4221 = vmatpush2.msra.mxu0 0.0
    %4222 = vmatprep.subr.mxu0 0.0
    %4223 = vmatpush2.msra.mxu0 0.0
    %4224 = vmatprep.subr.mxu0 0.0
    %4225 = vmatpush2.msra.mxu0 0.0
    %4226 = vmatprep.subr.mxu0 0.0
    %4227 = vmatpush2.msra.mxu0 0.0
    %4228 = vmatprep.subr.mxu0 0.0
    %4229 = vmatpush2.msra.mxu0 0.0
    %4230 = vmatprep.subr.mxu0 0.0
    %4231 = vmatpush2.msra.mxu0 0.0
    %4232 = vmatprep.subr.mxu0 0.0
    %4233 = vmatpush2.msra.mxu0 0.0
    %4234 = vmatprep.subr.mxu0 0.0
    %4235 = vmatpush2.msra.mxu0 0.0
    %4236 = vmatprep.subr.mxu0 0.0
    %4237 = vmatpush2.msra.mxu0 0.0
    %4238 = vmatprep.subr.mxu0 0.0
    %4239 = vmatpush2.msra.mxu0 0.0
    %4240 = vmatprep.subr.mxu0 0.0
    %4241 = vmatpush2.msra.mxu0 0.0
    %4242 = vmatprep.subr.mxu0 0.0
    %4243 = vmatpush2.msra.mxu0 0.0
    %4244 = vmatprep.subr.mxu0 0.0
    %4245 = vmatpush2.msra.mxu0 0.0
    %4246 = vmatprep.subr.mxu0 0.0
    %4247 = vmatpush2.msra.mxu0 0.0
    %4248 = vmatprep.subr.mxu0 0.0
    %4249 = vmatpush2.msra.mxu0 0.0
    %4250 = vmatprep.mubr.f32.mxu0 0.0
    %4251 = vmatmul.mubr.f32.gmra.mxu0 %v4184
    %v4252 = vpop.f32.mrf.mxu0
    %v4253 = vadd.f32 0.0, %v4252
    %v4254 = vpop.f32.mrf.mxu0
    %4255 = vdwg.mxu0
    %4256 = vrot.lane.b32.xlu0 %v3935, 112
    %v4257 = vpop.permute.xlu0 %4256
    %4258 = vrot.lane.b32.xlu0 %v4014, 112
    %v4259 = vpop.permute.xlu0 %4258
    %v4260 = vsel %vm4093, %v4257, 0
    %v4262 = vsel %vm4093, %v4259, 0
    %4264 = vmatprep.subr.mxu0 0.0
    %4265 = vmatpush1.xpose.msra.mxu0 0.0
    %4266 = vmatprep.subr.mxu0 0.0
    %4267 = vmatpush1.xpose.msra.mxu0 0.0
    %4268 = vmatprep.subr.mxu0 0.0
    %4269 = vmatpush1.xpose.msra.mxu0 0.0
    %4270 = vmatprep.subr.mxu0 0.0
    %4271 = vmatpush1.xpose.msra.mxu0 0.0
    %4272 = vmatprep.subr.mxu0 0.0
    %4273 = vmatpush1.xpose.msra.mxu0 0.0
    %4274 = vmatprep.subr.mxu0 0.0
    %4275 = vmatpush1.xpose.msra.mxu0 0.0
    %4276 = vmatprep.subr.mxu0 0.0
    %4277 = vmatpush1.xpose.msra.mxu0 0.0
    %4278 = vmatprep.subr.mxu0 0.0
    %4279 = vmatpush1.xpose.msra.mxu0 0.0
    %4280 = vmatprep.subr.mxu0 0.0
    %4281 = vmatpush1.xpose.msra.mxu0 0.0
    %4282 = vmatprep.subr.mxu0 0.0
    %4283 = vmatpush1.xpose.msra.mxu0 0.0
    %4284 = vmatprep.subr.mxu0 0.0
    %4285 = vmatpush1.xpose.msra.mxu0 0.0
    %4286 = vmatprep.subr.mxu0 0.0
    %4287 = vmatpush1.xpose.msra.mxu0 0.0
    %4288 = vmatprep.subr.mxu0 0.0
    %4289 = vmatpush1.xpose.msra.mxu0 0.0
    %4290 = vmatprep.subr.mxu0 0.0
    %4291 = vmatpush1.xpose.msra.mxu0 0.0
    %4292 = vmatprep.subr.mxu0 0.0
    %4293 = vmatpush1.xpose.msra.mxu0 0.0
    %4294 = vmatprep.subr.mxu0 0.0
    %4295 = vmatpush1.xpose.msra.mxu0 %v4262
    %4296 = vmatprep.subr.mxu0 0.0
    %4297 = vmatpush2.xpose.msra.mxu0 0.0
    %4298 = vmatprep.subr.mxu0 0.0
    %4299 = vmatpush2.xpose.msra.mxu0 0.0
    %4300 = vmatprep.subr.mxu0 0.0
    %4301 = vmatpush2.xpose.msra.mxu0 0.0
    %4302 = vmatprep.subr.mxu0 0.0
    %4303 = vmatpush2.xpose.msra.mxu0 0.0
    %4304 = vmatprep.subr.mxu0 0.0
    %4305 = vmatpush2.xpose.msra.mxu0 0.0
    %4306 = vmatprep.subr.mxu0 0.0
    %4307 = vmatpush2.xpose.msra.mxu0 0.0
    %4308 = vmatprep.subr.mxu0 0.0
    %4309 = vmatpush2.xpose.msra.mxu0 0.0
    %4310 = vmatprep.subr.mxu0 0.0
    %4311 = vmatpush2.xpose.msra.mxu0 0.0
    %4312 = vmatprep.subr.mxu0 0.0
    %4313 = vmatpush2.xpose.msra.mxu0 0.0
    %4314 = vmatprep.subr.mxu0 0.0
    %4315 = vmatpush2.xpose.msra.mxu0 0.0
    %4316 = vmatprep.subr.mxu0 0.0
    %4317 = vmatpush2.xpose.msra.mxu0 0.0
    %4318 = vmatprep.subr.mxu0 0.0
    %4319 = vmatpush2.xpose.msra.mxu0 0.0
    %4320 = vmatprep.subr.mxu0 0.0
    %4321 = vmatpush2.xpose.msra.mxu0 0.0
    %4322 = vmatprep.subr.mxu0 0.0
    %4323 = vmatpush2.xpose.msra.mxu0 0.0
    %4324 = vmatprep.subr.mxu0 0.0
    %4325 = vmatpush2.xpose.msra.mxu0 0.0
    %4326 = vmatprep.subr.mxu0 0.0
    %4327 = vmatpush2.xpose.msra.mxu0 0.0
    %4328 = vmatprep.mubr.f32.mxu0 0.0
    %4329 = vmatmul.mubr.f32.gmra.mxu0 %v4260
    %v4330 = vpop.f32.mrf.mxu0
    %v4331 = vadd.f32 0.0, %v4330
    %v4332 = vpop.f32.mrf.mxu0
    %4333 = vdwg.mxu0
    %v4334 = vmul.f32 %v4331, 0.25
    %v4335 = vsel %vm4171, %v4334, -inf
    %4336 = vmax.xlane.f32.xlu0 %v4335
    %v4337 = vpop.xlane.xlu0 %4336
    %v4338 = vsub.f32 %v4334, %v4337
    %v4339 = vmul.f32 %v4338, 1.442695
    %v4340 = vpow.pop %v4339
    %v4341 = vsel %vm4171, %v4340, 0.0
    %4342 = vadd.xlane.f32.xlu0 %v4341
    %v4343 = vpop.xlane.xlu0 %4342
    %v4344 = vrcp.pop %v4343
    %v4345 = vmul.f32 %v4340, %v4344
    %4347 = vrot.lane.b32.xlu0 %v4090, 112
    %v4348 = vpop.permute.xlu0 %4347
    %v4351 = vsel %vm4171, %v4345, 0
    %4353 = vmatprep.subr.mxu0 0.0
    %4354 = vmatpush1.msra.mxu0 0.0
    %4355 = vmatprep.subr.mxu0 0.0
    %4356 = vmatpush1.msra.mxu0 0.0
    %4357 = vmatprep.subr.mxu0 0.0
    %4358 = vmatpush1.msra.mxu0 0.0
    %4359 = vmatprep.subr.mxu0 0.0
    %4360 = vmatpush1.msra.mxu0 0.0
    %4361 = vmatprep.subr.mxu0 0.0
    %4362 = vmatpush1.msra.mxu0 0.0
    %4363 = vmatprep.subr.mxu0 0.0
    %4364 = vmatpush1.msra.mxu0 0.0
    %4365 = vmatprep.subr.mxu0 0.0
    %4366 = vmatpush1.msra.mxu0 0.0
    %4367 = vmatprep.subr.mxu0 0.0
    %4368 = vmatpush1.msra.mxu0 0.0
    %4369 = vmatprep.subr.mxu0 0.0
    %4370 = vmatpush1.msra.mxu0 0.0
    %4371 = vmatprep.subr.mxu0 0.0
    %4372 = vmatpush1.msra.mxu0 0.0
    %4373 = vmatprep.subr.mxu0 0.0
    %4374 = vmatpush1.msra.mxu0 0.0
    %4375 = vmatprep.subr.mxu0 0.0
    %4376 = vmatpush1.msra.mxu0 0.0
    %4377 = vmatprep.subr.mxu0 0.0
    %4378 = vmatpush1.msra.mxu0 0.0
    %4379 = vmatprep.subr.mxu0 0.0
    %4380 = vmatpush1.msra.mxu0 0.0
    %4381 = vmatprep.subr.mxu0 0.0
    %4382 = vmatpush1.msra.mxu0 0.0
    %4383 = vmatprep.subr.mxu0 0.0
    %4384 = vmatpush1.msra.mxu0 %v4348
    %4385 = vmatprep.subr.mxu0 0.0
    %4386 = vmatpush2.msra.mxu0 0.0
    %4387 = vmatprep.subr.mxu0 0.0
    %4388 = vmatpush2.msra.mxu0 0.0
    %4389 = vmatprep.subr.mxu0 0.0
    %4390 = vmatpush2.msra.mxu0 0.0
    %4391 = vmatprep.subr.mxu0 0.0
    %4392 = vmatpush2.msra.mxu0 0.0
    %4393 = vmatprep.subr.mxu0 0.0
    %4394 = vmatpush2.msra.mxu0 0.0
    %4395 = vmatprep.subr.mxu0 0.0
    %4396 = vmatpush2.msra.mxu0 0.0
    %4397 = vmatprep.subr.mxu0 0.0
    %4398 = vmatpush2.msra.mxu0 0.0
    %4399 = vmatprep.subr.mxu0 0.0
    %4400 = vmatpush2.msra.mxu0 0.0
    %4401 = vmatprep.subr.mxu0 0.0
    %4402 = vmatpush2.msra.mxu0 0.0
    %4403 = vmatprep.subr.mxu0 0.0
    %4404 = vmatpush2.msra.mxu0 0.0
    %4405 = vmatprep.subr.mxu0 0.0
    %4406 = vmatpush2.msra.mxu0 0.0
    %4407 = vmatprep.subr.mxu0 0.0
    %4408 = vmatpush2.msra.mxu0 0.0
    %4409 = vmatprep.subr.mxu0 0.0
    %4410 = vmatpush2.msra.mxu0 0.0
    %4411 = vmatprep.subr.mxu0 0.0
    %4412 = vmatpush2.msra.mxu0 0.0
    %4413 = vmatprep.subr.mxu0 0.0
    %4414 = vmatpush2.msra.mxu0 0.0
    %4415 = vmatprep.subr.mxu0 0.0
    %4416 = vmatpush2.msra.mxu0 0.0
    %4417 = vmatprep.mubr.f32.mxu0 0.0
    %4418 = vmatmul.mubr.f32.gmra.mxu0 %v4351
    %v4419 = vpop.f32.mrf.mxu0
    %v4420 = vadd.f32 0.0, %v4419
    %v4421 = vpop.f32.mrf.mxu0
    %4422 = vdwg.mxu0
    %4423 = vrot.lane.b32.xlu0 %v3935, 96
    %v4424 = vpop.permute.xlu0 %4423
    %4425 = vrot.lane.b32.xlu0 %v4014, 96
    %v4426 = vpop.permute.xlu0 %4425
    %v4427 = vsel %vm4093, %v4424, 0
    %v4429 = vsel %vm4093, %v4426, 0
    %4431 = vmatprep.subr.mxu0 0.0
    %4432 = vmatpush1.xpose.msra.mxu0 0.0
    %4433 = vmatprep.subr.mxu0 0.0
    %4434 = vmatpush1.xpose.msra.mxu0 0.0
    %4435 = vmatprep.subr.mxu0 0.0
    %4436 = vmatpush1.xpose.msra.mxu0 0.0
    %4437 = vmatprep.subr.mxu0 0.0
    %4438 = vmatpush1.xpose.msra.mxu0 0.0
    %4439 = vmatprep.subr.mxu0 0.0
    %4440 = vmatpush1.xpose.msra.mxu0 0.0
    %4441 = vmatprep.subr.mxu0 0.0
    %4442 = vmatpush1.xpose.msra.mxu0 0.0
    %4443 = vmatprep.subr.mxu0 0.0
    %4444 = vmatpush1.xpose.msra.mxu0 0.0
    %4445 = vmatprep.subr.mxu0 0.0
    %4446 = vmatpush1.xpose.msra.mxu0 0.0
    %4447 = vmatprep.subr.mxu0 0.0
    %4448 = vmatpush1.xpose.msra.mxu0 0.0
    %4449 = vmatprep.subr.mxu0 0.0
    %4450 = vmatpush1.xpose.msra.mxu0 0.0
    %4451 = vmatprep.subr.mxu0 0.0
    %4452 = vmatpush1.xpose.msra.mxu0 0.0
    %4453 = vmatprep.subr.mxu0 0.0
    %4454 = vmatpush1.xpose.msra.mxu0 0.0
    %4455 = vmatprep.subr.mxu0 0.0
    %4456 = vmatpush1.xpose.msra.mxu0 0.0
    %4457 = vmatprep.subr.mxu0 0.0
    %4458 = vmatpush1.xpose.msra.mxu0 0.0
    %4459 = vmatprep.subr.mxu0 0.0
    %4460 = vmatpush1.xpose.msra.mxu0 0.0
    %4461 = vmatprep.subr.mxu0 0.0
    %4462 = vmatpush1.xpose.msra.mxu0 %v4429
    %4463 = vmatprep.subr.mxu0 0.0
    %4464 = vmatpush2.xpose.msra.mxu0 0.0
    %4465 = vmatprep.subr.mxu0 0.0
    %4466 = vmatpush2.xpose.msra.mxu0 0.0
    %4467 = vmatprep.subr.mxu0 0.0
    %4468 = vmatpush2.xpose.msra.mxu0 0.0
    %4469 = vmatprep.subr.mxu0 0.0
    %4470 = vmatpush2.xpose.msra.mxu0 0.0
    %4471 = vmatprep.subr.mxu0 0.0
    %4472 = vmatpush2.xpose.msra.mxu0 0.0
    %4473 = vmatprep.subr.mxu0 0.0
    %4474 = vmatpush2.xpose.msra.mxu0 0.0
    %4475 = vmatprep.subr.mxu0 0.0
    %4476 = vmatpush2.xpose.msra.mxu0 0.0
    %4477 = vmatprep.subr.mxu0 0.0
    %4478 = vmatpush2.xpose.msra.mxu0 0.0
    %4479 = vmatprep.subr.mxu0 0.0
    %4480 = vmatpush2.xpose.msra.mxu0 0.0
    %4481 = vmatprep.subr.mxu0 0.0
    %4482 = vmatpush2.xpose.msra.mxu0 0.0
    %4483 = vmatprep.subr.mxu0 0.0
    %4484 = vmatpush2.xpose.msra.mxu0 0.0
    %4485 = vmatprep.subr.mxu0 0.0
    %4486 = vmatpush2.xpose.msra.mxu0 0.0
    %4487 = vmatprep.subr.mxu0 0.0
    %4488 = vmatpush2.xpose.msra.mxu0 0.0
    %4489 = vmatprep.subr.mxu0 0.0
    %4490 = vmatpush2.xpose.msra.mxu0 0.0
    %4491 = vmatprep.subr.mxu0 0.0
    %4492 = vmatpush2.xpose.msra.mxu0 0.0
    %4493 = vmatprep.subr.mxu0 0.0
    %4494 = vmatpush2.xpose.msra.mxu0 0.0
    %4495 = vmatprep.mubr.f32.mxu0 0.0
    %4496 = vmatmul.mubr.f32.gmra.mxu0 %v4427
    %v4497 = vpop.f32.mrf.mxu0
    %v4498 = vadd.f32 0.0, %v4497
    %v4499 = vpop.f32.mrf.mxu0
    %4500 = vdwg.mxu0
    %v4501 = vmul.f32 %v4498, 0.25
    %v4502 = vsel %vm4171, %v4501, -inf
    %4503 = vmax.xlane.f32.xlu0 %v4502
    %v4504 = vpop.xlane.xlu0 %4503
    %v4505 = vsub.f32 %v4501, %v4504
    %v4506 = vmul.f32 %v4505, 1.442695
    %v4507 = vpow.pop %v4506
    %v4508 = vsel %vm4171, %v4507, 0.0
    %4509 = vadd.xlane.f32.xlu0 %v4508
    %v4510 = vpop.xlane.xlu0 %4509
    %v4511 = vrcp.pop %v4510
    %v4512 = vmul.f32 %v4507, %v4511
    %4513 = vrot.lane.b32.xlu0 %v4090, 96
    %v4514 = vpop.permute.xlu0 %4513
    %v4517 = vsel %vm4171, %v4512, 0
    %4519 = vmatprep.subr.mxu0 0.0
    %4520 = vmatpush1.msra.mxu0 0.0
    %4521 = vmatprep.subr.mxu0 0.0
    %4522 = vmatpush1.msra.mxu0 0.0
    %4523 = vmatprep.subr.mxu0 0.0
    %4524 = vmatpush1.msra.mxu0 0.0
    %4525 = vmatprep.subr.mxu0 0.0
    %4526 = vmatpush1.msra.mxu0 0.0
    %4527 = vmatprep.subr.mxu0 0.0
    %4528 = vmatpush1.msra.mxu0 0.0
    %4529 = vmatprep.subr.mxu0 0.0
    %4530 = vmatpush1.msra.mxu0 0.0
    %4531 = vmatprep.subr.mxu0 0.0
    %4532 = vmatpush1.msra.mxu0 0.0
    %4533 = vmatprep.subr.mxu0 0.0
    %4534 = vmatpush1.msra.mxu0 0.0
    %4535 = vmatprep.subr.mxu0 0.0
    %4536 = vmatpush1.msra.mxu0 0.0
    %4537 = vmatprep.subr.mxu0 0.0
    %4538 = vmatpush1.msra.mxu0 0.0
    %4539 = vmatprep.subr.mxu0 0.0
    %4540 = vmatpush1.msra.mxu0 0.0
    %4541 = vmatprep.subr.mxu0 0.0
    %4542 = vmatpush1.msra.mxu0 0.0
    %4543 = vmatprep.subr.mxu0 0.0
    %4544 = vmatpush1.msra.mxu0 0.0
    %4545 = vmatprep.subr.mxu0 0.0
    %4546 = vmatpush1.msra.mxu0 0.0
    %4547 = vmatprep.subr.mxu0 0.0
    %4548 = vmatpush1.msra.mxu0 0.0
    %4549 = vmatprep.subr.mxu0 0.0
    %4550 = vmatpush1.msra.mxu0 %v4514
    %4551 = vmatprep.subr.mxu0 0.0
    %4552 = vmatpush2.msra.mxu0 0.0
    %4553 = vmatprep.subr.mxu0 0.0
    %4554 = vmatpush2.msra.mxu0 0.0
    %4555 = vmatprep.subr.mxu0 0.0
    %4556 = vmatpush2.msra.mxu0 0.0
    %4557 = vmatprep.subr.mxu0 0.0
    %4558 = vmatpush2.msra.mxu0 0.0
    %4559 = vmatprep.subr.mxu0 0.0
    %4560 = vmatpush2.msra.mxu0 0.0
    %4561 = vmatprep.subr.mxu0 0.0
    %4562 = vmatpush2.msra.mxu0 0.0
    %4563 = vmatprep.subr.mxu0 0.0
    %4564 = vmatpush2.msra.mxu0 0.0
    %4565 = vmatprep.subr.mxu0 0.0
    %4566 = vmatpush2.msra.mxu0 0.0
    %4567 = vmatprep.subr.mxu0 0.0
    %4568 = vmatpush2.msra.mxu0 0.0
    %4569 = vmatprep.subr.mxu0 0.0
    %4570 = vmatpush2.msra.mxu0 0.0
    %4571 = vmatprep.subr.mxu0 0.0
    %4572 = vmatpush2.msra.mxu0 0.0
    %4573 = vmatprep.subr.mxu0 0.0
    %4574 = vmatpush2.msra.mxu0 0.0
    %4575 = vmatprep.subr.mxu0 0.0
    %4576 = vmatpush2.msra.mxu0 0.0
    %4577 = vmatprep.subr.mxu0 0.0
    %4578 = vmatpush2.msra.mxu0 0.0
    %4579 = vmatprep.subr.mxu0 0.0
    %4580 = vmatpush2.msra.mxu0 0.0
    %4581 = vmatprep.subr.mxu0 0.0
    %4582 = vmatpush2.msra.mxu0 0.0
    %4583 = vmatprep.mubr.f32.mxu0 0.0
    %4584 = vmatmul.mubr.f32.gmra.mxu0 %v4517
    %v4585 = vpop.f32.mrf.mxu0
    %v4586 = vadd.f32 0.0, %v4585
    %v4587 = vpop.f32.mrf.mxu0
    %4588 = vdwg.mxu0
    %4589 = vrot.lane.b32.xlu0 %v3935, 80
    %v4590 = vpop.permute.xlu0 %4589
    %4591 = vrot.lane.b32.xlu0 %v4014, 80
    %v4592 = vpop.permute.xlu0 %4591
    %v4593 = vsel %vm4093, %v4590, 0
    %v4595 = vsel %vm4093, %v4592, 0
    %4597 = vmatprep.subr.mxu0 0.0
    %4598 = vmatpush1.xpose.msra.mxu0 0.0
    %4599 = vmatprep.subr.mxu0 0.0
    %4600 = vmatpush1.xpose.msra.mxu0 0.0
    %4601 = vmatprep.subr.mxu0 0.0
    %4602 = vmatpush1.xpose.msra.mxu0 0.0
    %4603 = vmatprep.subr.mxu0 0.0
    %4604 = vmatpush1.xpose.msra.mxu0 0.0
    %4605 = vmatprep.subr.mxu0 0.0
    %4606 = vmatpush1.xpose.msra.mxu0 0.0
    %4607 = vmatprep.subr.mxu0 0.0
    %4608 = vmatpush1.xpose.msra.mxu0 0.0
    %4609 = vmatprep.subr.mxu0 0.0
    %4610 = vmatpush1.xpose.msra.mxu0 0.0
    %4611 = vmatprep.subr.mxu0 0.0
    %4612 = vmatpush1.xpose.msra.mxu0 0.0
    %4613 = vmatprep.subr.mxu0 0.0
    %4614 = vmatpush1.xpose.msra.mxu0 0.0
    %4615 = vmatprep.subr.mxu0 0.0
    %4616 = vmatpush1.xpose.msra.mxu0 0.0
    %4617 = vmatprep.subr.mxu0 0.0
    %4618 = vmatpush1.xpose.msra.mxu0 0.0
    %4619 = vmatprep.subr.mxu0 0.0
    %4620 = vmatpush1.xpose.msra.mxu0 0.0
    %4621 = vmatprep.subr.mxu0 0.0
    %4622 = vmatpush1.xpose.msra.mxu0 0.0
    %4623 = vmatprep.subr.mxu0 0.0
    %4624 = vmatpush1.xpose.msra.mxu0 0.0
    %4625 = vmatprep.subr.mxu0 0.0
    %4626 = vmatpush1.xpose.msra.mxu0 0.0
    %4627 = vmatprep.subr.mxu0 0.0
    %4628 = vmatpush1.xpose.msra.mxu0 %v4595
    %4629 = vmatprep.subr.mxu0 0.0
    %4630 = vmatpush2.xpose.msra.mxu0 0.0
    %4631 = vmatprep.subr.mxu0 0.0
    %4632 = vmatpush2.xpose.msra.mxu0 0.0
    %4633 = vmatprep.subr.mxu0 0.0
    %4634 = vmatpush2.xpose.msra.mxu0 0.0
    %4635 = vmatprep.subr.mxu0 0.0
    %4636 = vmatpush2.xpose.msra.mxu0 0.0
    %4637 = vmatprep.subr.mxu0 0.0
    %4638 = vmatpush2.xpose.msra.mxu0 0.0
    %4639 = vmatprep.subr.mxu0 0.0
    %4640 = vmatpush2.xpose.msra.mxu0 0.0
    %4641 = vmatprep.subr.mxu0 0.0
    %4642 = vmatpush2.xpose.msra.mxu0 0.0
    %4643 = vmatprep.subr.mxu0 0.0
    %4644 = vmatpush2.xpose.msra.mxu0 0.0
    %4645 = vmatprep.subr.mxu0 0.0
    %4646 = vmatpush2.xpose.msra.mxu0 0.0
    %4647 = vmatprep.subr.mxu0 0.0
    %4648 = vmatpush2.xpose.msra.mxu0 0.0
    %4649 = vmatprep.subr.mxu0 0.0
    %4650 = vmatpush2.xpose.msra.mxu0 0.0
    %4651 = vmatprep.subr.mxu0 0.0
    %4652 = vmatpush2.xpose.msra.mxu0 0.0
    %4653 = vmatprep.subr.mxu0 0.0
    %4654 = vmatpush2.xpose.msra.mxu0 0.0
    %4655 = vmatprep.subr.mxu0 0.0
    %4656 = vmatpush2.xpose.msra.mxu0 0.0
    %4657 = vmatprep.subr.mxu0 0.0
    %4658 = vmatpush2.xpose.msra.mxu0 0.0
    %4659 = vmatprep.subr.mxu0 0.0
    %4660 = vmatpush2.xpose.msra.mxu0 0.0
    %4661 = vmatprep.mubr.f32.mxu0 0.0
    %4662 = vmatmul.mubr.f32.gmra.mxu0 %v4593
    %v4663 = vpop.f32.mrf.mxu0
    %v4664 = vadd.f32 0.0, %v4663
    %v4665 = vpop.f32.mrf.mxu0
    %4666 = vdwg.mxu0
    %v4667 = vmul.f32 %v4664, 0.25
    %v4668 = vsel %vm4171, %v4667, -inf
    %4669 = vmax.xlane.f32.xlu0 %v4668
    %v4670 = vpop.xlane.xlu0 %4669
    %v4671 = vsub.f32 %v4667, %v4670
    %v4672 = vmul.f32 %v4671, 1.442695
    %v4673 = vpow.pop %v4672
    %v4674 = vsel %vm4171, %v4673, 0.0
    %4675 = vadd.xlane.f32.xlu0 %v4674
    %v4676 = vpop.xlane.xlu0 %4675
    %v4677 = vrcp.pop %v4676
    %v4678 = vmul.f32 %v4673, %v4677
    %4679 = vrot.lane.b32.xlu0 %v4090, 80
    %v4680 = vpop.permute.xlu0 %4679
    %v4683 = vsel %vm4171, %v4678, 0
    %4685 = vmatprep.subr.mxu0 0.0
    %4686 = vmatpush1.msra.mxu0 0.0
    %4687 = vmatprep.subr.mxu0 0.0
    %4688 = vmatpush1.msra.mxu0 0.0
    %4689 = vmatprep.subr.mxu0 0.0
    %4690 = vmatpush1.msra.mxu0 0.0
    %4691 = vmatprep.subr.mxu0 0.0
    %4692 = vmatpush1.msra.mxu0 0.0
    %4693 = vmatprep.subr.mxu0 0.0
    %4694 = vmatpush1.msra.mxu0 0.0
    %4695 = vmatprep.subr.mxu0 0.0
    %4696 = vmatpush1.msra.mxu0 0.0
    %4697 = vmatprep.subr.mxu0 0.0
    %4698 = vmatpush1.msra.mxu0 0.0
    %4699 = vmatprep.subr.mxu0 0.0
    %4700 = vmatpush1.msra.mxu0 0.0
    %4701 = vmatprep.subr.mxu0 0.0
    %4702 = vmatpush1.msra.mxu0 0.0
    %4703 = vmatprep.subr.mxu0 0.0
    %4704 = vmatpush1.msra.mxu0 0.0
    %4705 = vmatprep.subr.mxu0 0.0
    %4706 = vmatpush1.msra.mxu0 0.0
    %4707 = vmatprep.subr.mxu0 0.0
    %4708 = vmatpush1.msra.mxu0 0.0
    %4709 = vmatprep.subr.mxu0 0.0
    %4710 = vmatpush1.msra.mxu0 0.0
    %4711 = vmatprep.subr.mxu0 0.0
    %4712 = vmatpush1.msra.mxu0 0.0
    %4713 = vmatprep.subr.mxu0 0.0
    %4714 = vmatpush1.msra.mxu0 0.0
    %4715 = vmatprep.subr.mxu0 0.0
    %4716 = vmatpush1.msra.mxu0 %v4680
    %4717 = vmatprep.subr.mxu0 0.0
    %4718 = vmatpush2.msra.mxu0 0.0
    %4719 = vmatprep.subr.mxu0 0.0
    %4720 = vmatpush2.msra.mxu0 0.0
    %4721 = vmatprep.subr.mxu0 0.0
    %4722 = vmatpush2.msra.mxu0 0.0
    %4723 = vmatprep.subr.mxu0 0.0
    %4724 = vmatpush2.msra.mxu0 0.0
    %4725 = vmatprep.subr.mxu0 0.0
    %4726 = vmatpush2.msra.mxu0 0.0
    %4727 = vmatprep.subr.mxu0 0.0
    %4728 = vmatpush2.msra.mxu0 0.0
    %4729 = vmatprep.subr.mxu0 0.0
    %4730 = vmatpush2.msra.mxu0 0.0
    %4731 = vmatprep.subr.mxu0 0.0
    %4732 = vmatpush2.msra.mxu0 0.0
    %4733 = vmatprep.subr.mxu0 0.0
    %4734 = vmatpush2.msra.mxu0 0.0
    %4735 = vmatprep.subr.mxu0 0.0
    %4736 = vmatpush2.msra.mxu0 0.0
    %4737 = vmatprep.subr.mxu0 0.0
    %4738 = vmatpush2.msra.mxu0 0.0
    %4739 = vmatprep.subr.mxu0 0.0
    %4740 = vmatpush2.msra.mxu0 0.0
    %4741 = vmatprep.subr.mxu0 0.0
    %4742 = vmatpush2.msra.mxu0 0.0
    %4743 = vmatprep.subr.mxu0 0.0
    %4744 = vmatpush2.msra.mxu0 0.0
    %4745 = vmatprep.subr.mxu0 0.0
    %4746 = vmatpush2.msra.mxu0 0.0
    %4747 = vmatprep.subr.mxu0 0.0
    %4748 = vmatpush2.msra.mxu0 0.0
    %4749 = vmatprep.mubr.f32.mxu0 0.0
    %4750 = vmatmul.mubr.f32.gmra.mxu0 %v4683
    %v4751 = vpop.f32.mrf.mxu0
    %v4752 = vadd.f32 0.0, %v4751
    %v4753 = vpop.f32.mrf.mxu0
    %4754 = vdwg.mxu0
    %4756 = vrot.lane.b32.xlu0 %v4420, 16
    %v4757 = vpop.permute.xlu0 %4756
    %4760 = vrot.lane.b32.xlu0 %v4586, 32
    %v4761 = vpop.permute.xlu0 %4760
    %4764 = vrot.lane.b32.xlu0 %v4752, 48
    %v4765 = vpop.permute.xlu0 %4764
    %v4767 = vsel %vm4093, %v4253, %v4757
    %v4768 = vsel %vm317, %v4767, %v4761
    %vm4769 = vcmask 392192
    %v4770 = vsel %vm4769, %v4768, %v4765
    %v4772 = vlaneseq
    %v4773 = vshrl.u32 %v4772, 7
    %v4774 = vsub.s32 0, %v4773
    %v4775 = vrot.slane %v201, %v4774
    %v4778 = vsel %vm242, %v4770, 0
    %4780 = vmatprep.subr.mxu0 0.0
    %4781 = vmatpush1.msra.mxu0 0.0
    %4782 = vmatprep.subr.mxu0 0.0
    %4783 = vmatpush1.msra.mxu0 0.0
    %4784 = vmatprep.subr.mxu0 0.0
    %4785 = vmatpush1.msra.mxu0 0.0
    %4786 = vmatprep.subr.mxu0 0.0
    %4787 = vmatpush1.msra.mxu0 0.0
    %4788 = vmatprep.subr.mxu0 0.0
    %4789 = vmatpush1.msra.mxu0 0.0
    %4790 = vmatprep.subr.mxu0 0.0
    %4791 = vmatpush1.msra.mxu0 0.0
    %4792 = vmatprep.subr.mxu0 0.0
    %4793 = vmatpush1.msra.mxu0 0.0
    %4794 = vmatprep.subr.mxu0 0.0
    %4795 = vmatpush1.msra.mxu0 0.0
    %4796 = vmatprep.subr.mxu0 0.0
    %4797 = vmatpush1.msra.mxu0 %v200
    %4798 = vmatprep.subr.mxu0 0.0
    %4799 = vmatpush1.msra.mxu0 %v199
    %4800 = vmatprep.subr.mxu0 0.0
    %4801 = vmatpush1.msra.mxu0 %v198
    %4802 = vmatprep.subr.mxu0 0.0
    %4803 = vmatpush1.msra.mxu0 %v197
    %4804 = vmatprep.subr.mxu0 0.0
    %4805 = vmatpush1.msra.mxu0 %v196
    %4806 = vmatprep.subr.mxu0 0.0
    %4807 = vmatpush1.msra.mxu0 %v195
    %4808 = vmatprep.subr.mxu0 0.0
    %4809 = vmatpush1.msra.mxu0 %v194
    %4810 = vmatprep.subr.mxu0 0.0
    %4811 = vmatpush1.msra.mxu0 %v193
    %4812 = vmatprep.subr.mxu0 0.0
    %4813 = vmatpush2.msra.mxu0 0.0
    %4814 = vmatprep.subr.mxu0 0.0
    %4815 = vmatpush2.msra.mxu0 0.0
    %4816 = vmatprep.subr.mxu0 0.0
    %4817 = vmatpush2.msra.mxu0 0.0
    %4818 = vmatprep.subr.mxu0 0.0
    %4819 = vmatpush2.msra.mxu0 0.0
    %4820 = vmatprep.subr.mxu0 0.0
    %4821 = vmatpush2.msra.mxu0 0.0
    %4822 = vmatprep.subr.mxu0 0.0
    %4823 = vmatpush2.msra.mxu0 0.0
    %4824 = vmatprep.subr.mxu0 0.0
    %4825 = vmatpush2.msra.mxu0 0.0
    %4826 = vmatprep.subr.mxu0 0.0
    %4827 = vmatpush2.msra.mxu0 0.0
    %4828 = vmatprep.subr.mxu0 0.0
    %4829 = vmatpush2.msra.mxu0 0.0
    %4830 = vmatprep.subr.mxu0 0.0
    %4831 = vmatpush2.msra.mxu0 0.0
    %4832 = vmatprep.subr.mxu0 0.0
    %4833 = vmatpush2.msra.mxu0 0.0
    %4834 = vmatprep.subr.mxu0 0.0
    %4835 = vmatpush2.msra.mxu0 0.0
    %4836 = vmatprep.subr.mxu0 0.0
    %4837 = vmatpush2.msra.mxu0 0.0
    %4838 = vmatprep.subr.mxu0 0.0
    %4839 = vmatpush2.msra.mxu0 0.0
    %4840 = vmatprep.subr.mxu0 0.0
    %4841 = vmatpush2.msra.mxu0 0.0
    %4842 = vmatprep.subr.mxu0 0.0
    %4843 = vmatpush2.msra.mxu0 0.0
    %4844 = vmatprep.mubr.f32.mxu0 0.0
    %4845 = vmatmul.mubr.f32.gmra.mxu0 %v4778
    %v4846 = vpop.f32.mrf.mxu0
    %v4847 = vadd.f32 %v4775, %v4846
    %v4848 = vpop.f32.mrf.mxu0
    %4849 = vdwg.mxu0
    %v4851 = vsel %vm242, %v4847, 0
    %4853 = vmatprep.subr.mxu0 0.0
    %4854 = vmatpush1.msra.mxu0 0.0
    %4855 = vmatprep.subr.mxu0 0.0
    %4856 = vmatpush1.msra.mxu0 0.0
    %4857 = vmatprep.subr.mxu0 0.0
    %4858 = vmatpush1.msra.mxu0 0.0
    %4859 = vmatprep.subr.mxu0 0.0
    %4860 = vmatpush1.msra.mxu0 0.0
    %4861 = vmatprep.subr.mxu0 0.0
    %4862 = vmatpush1.msra.mxu0 0.0
    %4863 = vmatprep.subr.mxu0 0.0
    %4864 = vmatpush1.msra.mxu0 0.0
    %4865 = vmatprep.subr.mxu0 0.0
    %4866 = vmatpush1.msra.mxu0 0.0
    %4867 = vmatprep.subr.mxu0 0.0
    %4868 = vmatpush1.msra.mxu0 0.0
    %4869 = vmatprep.subr.mxu0 0.0
    %4870 = vmatpush1.msra.mxu0 %v173
    %4871 = vmatprep.subr.mxu0 0.0
    %4872 = vmatpush1.msra.mxu0 %v172
    %4873 = vmatprep.subr.mxu0 0.0
    %4874 = vmatpush1.msra.mxu0 %v171
    %4875 = vmatprep.subr.mxu0 0.0
    %4876 = vmatpush1.msra.mxu0 %v170
    %4877 = vmatprep.subr.mxu0 0.0
    %4878 = vmatpush1.msra.mxu0 %v169
    %4879 = vmatprep.subr.mxu0 0.0
    %4880 = vmatpush1.msra.mxu0 %v168
    %4881 = vmatprep.subr.mxu0 0.0
    %4882 = vmatpush1.msra.mxu0 %v167
    %4883 = vmatprep.subr.mxu0 0.0
    %4884 = vmatpush1.msra.mxu0 %v166
    %4885 = vmatprep.subr.mxu0 0.0
    %4886 = vmatpush2.msra.mxu0 0.0
    %4887 = vmatprep.subr.mxu0 0.0
    %4888 = vmatpush2.msra.mxu0 0.0
    %4889 = vmatprep.subr.mxu0 0.0
    %4890 = vmatpush2.msra.mxu0 0.0
    %4891 = vmatprep.subr.mxu0 0.0
    %4892 = vmatpush2.msra.mxu0 0.0
    %4893 = vmatprep.subr.mxu0 0.0
    %4894 = vmatpush2.msra.mxu0 0.0
    %4895 = vmatprep.subr.mxu0 0.0
    %4896 = vmatpush2.msra.mxu0 0.0
    %4897 = vmatprep.subr.mxu0 0.0
    %4898 = vmatpush2.msra.mxu0 0.0
    %4899 = vmatprep.subr.mxu0 0.0
    %4900 = vmatpush2.msra.mxu0 0.0
    %4901 = vmatprep.subr.mxu0 0.0
    %4902 = vmatpush2.msra.mxu0 0.0
    %4903 = vmatprep.subr.mxu0 0.0
    %4904 = vmatpush2.msra.mxu0 0.0
    %4905 = vmatprep.subr.mxu0 0.0
    %4906 = vmatpush2.msra.mxu0 0.0
    %4907 = vmatprep.subr.mxu0 0.0
    %4908 = vmatpush2.msra.mxu0 0.0
    %4909 = vmatprep.subr.mxu0 0.0
    %4910 = vmatpush2.msra.mxu0 0.0
    %4911 = vmatprep.subr.mxu0 0.0
    %4912 = vmatpush2.msra.mxu0 0.0
    %4913 = vmatprep.subr.mxu0 0.0
    %4914 = vmatpush2.msra.mxu0 0.0
    %4915 = vmatprep.subr.mxu0 0.0
    %4916 = vmatpush2.msra.mxu0 0.0
    %4917 = vmatprep.mubr.f32.mxu0 0.0
    %4918 = vmatmul.mubr.f32.gmra.mxu0 %v4851
    %v4919 = vpop.f32.mrf.mxu0
    %v4920 = vadd.f32 %v3863, %v4919
    %v4921 = vpop.f32.mrf.mxu0
    %4922 = vdwg.mxu0
    %v4924 = vsel %vm242, %v204, 0
    %4926 = vmatprep.subr.mxu0 0.0
    %4927 = vmatpush1.msra.mxu0 0.0
    %4928 = vmatprep.subr.mxu0 0.0
    %4929 = vmatpush1.msra.mxu0 0.0
    %4930 = vmatprep.subr.mxu0 0.0
    %4931 = vmatpush1.msra.mxu0 0.0
    %4932 = vmatprep.subr.mxu0 0.0
    %4933 = vmatpush1.msra.mxu0 0.0
    %4934 = vmatprep.subr.mxu0 0.0
    %4935 = vmatpush1.msra.mxu0 0.0
    %4936 = vmatprep.subr.mxu0 0.0
    %4937 = vmatpush1.msra.mxu0 0.0
    %4938 = vmatprep.subr.mxu0 0.0
    %4939 = vmatpush1.msra.mxu0 0.0
    %4940 = vmatprep.subr.mxu0 0.0
    %4941 = vmatpush1.msra.mxu0 0.0
    %4942 = vmatprep.subr.mxu0 0.0
    %4943 = vmatpush1.msra.mxu0 %v182
    %4944 = vmatprep.subr.mxu0 0.0
    %4945 = vmatpush1.msra.mxu0 %v181
    %4946 = vmatprep.subr.mxu0 0.0
    %4947 = vmatpush1.msra.mxu0 %v180
    %4948 = vmatprep.subr.mxu0 0.0
    %4949 = vmatpush1.msra.mxu0 %v179
    %4950 = vmatprep.subr.mxu0 0.0
    %4951 = vmatpush1.msra.mxu0 %v178
    %4952 = vmatprep.subr.mxu0 0.0
    %4953 = vmatpush1.msra.mxu0 %v177
    %4954 = vmatprep.subr.mxu0 0.0
    %4955 = vmatpush1.msra.mxu0 %v176
    %4956 = vmatprep.subr.mxu0 0.0
    %4957 = vmatpush1.msra.mxu0 %v175
    %4958 = vmatprep.subr.mxu0 0.0
    %4959 = vmatpush2.msra.mxu0 0.0
    %4960 = vmatprep.subr.mxu0 0.0
    %4961 = vmatpush2.msra.mxu0 0.0
    %4962 = vmatprep.subr.mxu0 0.0
    %4963 = vmatpush2.msra.mxu0 0.0
    %4964 = vmatprep.subr.mxu0 0.0
    %4965 = vmatpush2.msra.mxu0 0.0
    %4966 = vmatprep.subr.mxu0 0.0
    %4967 = vmatpush2.msra.mxu0 0.0
    %4968 = vmatprep.subr.mxu0 0.0
    %4969 = vmatpush2.msra.mxu0 0.0
    %4970 = vmatprep.subr.mxu0 0.0
    %4971 = vmatpush2.msra.mxu0 0.0
    %4972 = vmatprep.subr.mxu0 0.0
    %4973 = vmatpush2.msra.mxu0 0.0
    %4974 = vmatprep.subr.mxu0 0.0
    %4975 = vmatpush2.msra.mxu0 0.0
    %4976 = vmatprep.subr.mxu0 0.0
    %4977 = vmatpush2.msra.mxu0 0.0
    %4978 = vmatprep.subr.mxu0 0.0
    %4979 = vmatpush2.msra.mxu0 0.0
    %4980 = vmatprep.subr.mxu0 0.0
    %4981 = vmatpush2.msra.mxu0 0.0
    %4982 = vmatprep.subr.mxu0 0.0
    %4983 = vmatpush2.msra.mxu0 0.0
    %4984 = vmatprep.subr.mxu0 0.0
    %4985 = vmatpush2.msra.mxu0 0.0
    %4986 = vmatprep.subr.mxu0 0.0
    %4987 = vmatpush2.msra.mxu0 0.0
    %4988 = vmatprep.subr.mxu0 0.0
    %4989 = vmatpush2.msra.mxu0 0.0
    %4990 = vmatprep.mubr.f32.mxu0 0.0
    %4991 = vmatmul.mubr.f32.gmra.mxu0 %v4924
    %v4992 = vpop.f32.mrf.mxu0
    %v4993 = vadd.f32 %v3942, %v4992
    %v4994 = vpop.f32.mrf.mxu0
    %4995 = vdwg.mxu0
    %4996 = vmatprep.subr.mxu0 0.0
    %4997 = vmatpush1.msra.mxu0 0.0
    %4998 = vmatprep.subr.mxu0 0.0
    %4999 = vmatpush1.msra.mxu0 0.0
    %5000 = vmatprep.subr.mxu0 0.0
    %5001 = vmatpush1.msra.mxu0 0.0
    %5002 = vmatprep.subr.mxu0 0.0
    %5003 = vmatpush1.msra.mxu0 0.0
    %5004 = vmatprep.subr.mxu0 0.0
    %5005 = vmatpush1.msra.mxu0 0.0
    %5006 = vmatprep.subr.mxu0 0.0
    %5007 = vmatpush1.msra.mxu0 0.0
    %5008 = vmatprep.subr.mxu0 0.0
    %5009 = vmatpush1.msra.mxu0 0.0
    %5010 = vmatprep.subr.mxu0 0.0
    %5011 = vmatpush1.msra.mxu0 0.0
    %5012 = vmatprep.subr.mxu0 0.0
    %5013 = vmatpush1.msra.mxu0 %v191
    %5014 = vmatprep.subr.mxu0 0.0
    %5015 = vmatpush1.msra.mxu0 %v190
    %5016 = vmatprep.subr.mxu0 0.0
    %5017 = vmatpush1.msra.mxu0 %v189
    %5018 = vmatprep.subr.mxu0 0.0
    %5019 = vmatpush1.msra.mxu0 %v188
    %5020 = vmatprep.subr.mxu0 0.0
    %5021 = vmatpush1.msra.mxu0 %v187
    %5022 = vmatprep.subr.mxu0 0.0
    %5023 = vmatpush1.msra.mxu0 %v186
    %5024 = vmatprep.subr.mxu0 0.0
    %5025 = vmatpush1.msra.mxu0 %v185
    %5026 = vmatprep.subr.mxu0 0.0
    %5027 = vmatpush1.msra.mxu0 %v184
    %5028 = vmatprep.subr.mxu0 0.0
    %5029 = vmatpush2.msra.mxu0 0.0
    %5030 = vmatprep.subr.mxu0 0.0
    %5031 = vmatpush2.msra.mxu0 0.0
    %5032 = vmatprep.subr.mxu0 0.0
    %5033 = vmatpush2.msra.mxu0 0.0
    %5034 = vmatprep.subr.mxu0 0.0
    %5035 = vmatpush2.msra.mxu0 0.0
    %5036 = vmatprep.subr.mxu0 0.0
    %5037 = vmatpush2.msra.mxu0 0.0
    %5038 = vmatprep.subr.mxu0 0.0
    %5039 = vmatpush2.msra.mxu0 0.0
    %5040 = vmatprep.subr.mxu0 0.0
    %5041 = vmatpush2.msra.mxu0 0.0
    %5042 = vmatprep.subr.mxu0 0.0
    %5043 = vmatpush2.msra.mxu0 0.0
    %5044 = vmatprep.subr.mxu0 0.0
    %5045 = vmatpush2.msra.mxu0 0.0
    %5046 = vmatprep.subr.mxu0 0.0
    %5047 = vmatpush2.msra.mxu0 0.0
    %5048 = vmatprep.subr.mxu0 0.0
    %5049 = vmatpush2.msra.mxu0 0.0
    %5050 = vmatprep.subr.mxu0 0.0
    %5051 = vmatpush2.msra.mxu0 0.0
    %5052 = vmatprep.subr.mxu0 0.0
    %5053 = vmatpush2.msra.mxu0 0.0
    %5054 = vmatprep.subr.mxu0 0.0
    %5055 = vmatpush2.msra.mxu0 0.0
    %5056 = vmatprep.subr.mxu0 0.0
    %5057 = vmatpush2.msra.mxu0 0.0
    %5058 = vmatprep.subr.mxu0 0.0
    %5059 = vmatpush2.msra.mxu0 0.0
    %5060 = vmatprep.mubr.f32.mxu0 0.0
    %5061 = vmatmul.mubr.f32.gmra.mxu0 %v4924
    %v5062 = vpop.f32.mrf.mxu0
    %v5063 = vadd.f32 %v4021, %v5062
    %v5064 = vpop.f32.mrf.mxu0
    %5065 = vdwg.mxu0
    %v5067 = vsel %vm4093, %v4920, 0
    %v5070 = vsel %vm4093, %v4993, 0
    %5072 = vmatprep.subr.mxu0 0.0
    %5073 = vmatpush1.xpose.msra.mxu0 0.0
    %5074 = vmatprep.subr.mxu0 0.0
    %5075 = vmatpush1.xpose.msra.mxu0 0.0
    %5076 = vmatprep.subr.mxu0 0.0
    %5077 = vmatpush1.xpose.msra.mxu0 0.0
    %5078 = vmatprep.subr.mxu0 0.0
    %5079 = vmatpush1.xpose.msra.mxu0 0.0
    %5080 = vmatprep.subr.mxu0 0.0
    %5081 = vmatpush1.xpose.msra.mxu0 0.0
    %5082 = vmatprep.subr.mxu0 0.0
    %5083 = vmatpush1.xpose.msra.mxu0 0.0
    %5084 = vmatprep.subr.mxu0 0.0
    %5085 = vmatpush1.xpose.msra.mxu0 0.0
    %5086 = vmatprep.subr.mxu0 0.0
    %5087 = vmatpush1.xpose.msra.mxu0 0.0
    %5088 = vmatprep.subr.mxu0 0.0
    %5089 = vmatpush1.xpose.msra.mxu0 0.0
    %5090 = vmatprep.subr.mxu0 0.0
    %5091 = vmatpush1.xpose.msra.mxu0 0.0
    %5092 = vmatprep.subr.mxu0 0.0
    %5093 = vmatpush1.xpose.msra.mxu0 0.0
    %5094 = vmatprep.subr.mxu0 0.0
    %5095 = vmatpush1.xpose.msra.mxu0 0.0
    %5096 = vmatprep.subr.mxu0 0.0
    %5097 = vmatpush1.xpose.msra.mxu0 0.0
    %5098 = vmatprep.subr.mxu0 0.0
    %5099 = vmatpush1.xpose.msra.mxu0 0.0
    %5100 = vmatprep.subr.mxu0 0.0
    %5101 = vmatpush1.xpose.msra.mxu0 0.0
    %5102 = vmatprep.subr.mxu0 0.0
    %5103 = vmatpush1.xpose.msra.mxu0 %v5070
    %5104 = vmatprep.subr.mxu0 0.0
    %5105 = vmatpush2.xpose.msra.mxu0 0.0
    %5106 = vmatprep.subr.mxu0 0.0
    %5107 = vmatpush2.xpose.msra.mxu0 0.0
    %5108 = vmatprep.subr.mxu0 0.0
    %5109 = vmatpush2.xpose.msra.mxu0 0.0
    %5110 = vmatprep.subr.mxu0 0.0
    %5111 = vmatpush2.xpose.msra.mxu0 0.0
    %5112 = vmatprep.subr.mxu0 0.0
    %5113 = vmatpush2.xpose.msra.mxu0 0.0
    %5114 = vmatprep.subr.mxu0 0.0
    %5115 = vmatpush2.xpose.msra.mxu0 0.0
    %5116 = vmatprep.subr.mxu0 0.0
    %5117 = vmatpush2.xpose.msra.mxu0 0.0
    %5118 = vmatprep.subr.mxu0 0.0
    %5119 = vmatpush2.xpose.msra.mxu0 0.0
    %5120 = vmatprep.subr.mxu0 0.0
    %5121 = vmatpush2.xpose.msra.mxu0 0.0
    %5122 = vmatprep.subr.mxu0 0.0
    %5123 = vmatpush2.xpose.msra.mxu0 0.0
    %5124 = vmatprep.subr.mxu0 0.0
    %5125 = vmatpush2.xpose.msra.mxu0 0.0
    %5126 = vmatprep.subr.mxu0 0.0
    %5127 = vmatpush2.xpose.msra.mxu0 0.0
    %5128 = vmatprep.subr.mxu0 0.0
    %5129 = vmatpush2.xpose.msra.mxu0 0.0
    %5130 = vmatprep.subr.mxu0 0.0
    %5131 = vmatpush2.xpose.msra.mxu0 0.0
    %5132 = vmatprep.subr.mxu0 0.0
    %5133 = vmatpush2.xpose.msra.mxu0 0.0
    %5134 = vmatprep.subr.mxu0 0.0
    %5135 = vmatpush2.xpose.msra.mxu0 0.0
    %5136 = vmatprep.mubr.f32.mxu0 0.0
    %5137 = vmatmul.mubr.f32.gmra.mxu0 %v5067
    %v5138 = vpop.f32.mrf.mxu0
    %v5139 = vadd.f32 0.0, %v5138
    %v5140 = vpop.f32.mrf.mxu0
    %5141 = vdwg.mxu0
    %v5142 = vmul.f32 %v5139, 0.25
    %v5143 = vsel %vm4171, %v5142, -inf
    %5144 = vmax.xlane.f32.xlu0 %v5143
    %v5145 = vpop.xlane.xlu0 %5144
    %v5146 = vsub.f32 %v5142, %v5145
    %v5147 = vmul.f32 %v5146, 1.442695
    %v5148 = vpow.pop %v5147
    %v5149 = vsel %vm4171, %v5148, 0.0
    %5150 = vadd.xlane.f32.xlu0 %v5149
    %v5151 = vpop.xlane.xlu0 %5150
    %v5152 = vrcp.pop %v5151
    %v5153 = vmul.f32 %v5148, %v5152
    %v5155 = vsel %vm4171, %v5153, 0
    %5157 = vmatprep.subr.mxu0 0.0
    %5158 = vmatpush1.msra.mxu0 0.0
    %5159 = vmatprep.subr.mxu0 0.0
    %5160 = vmatpush1.msra.mxu0 0.0
    %5161 = vmatprep.subr.mxu0 0.0
    %5162 = vmatpush1.msra.mxu0 0.0
    %5163 = vmatprep.subr.mxu0 0.0
    %5164 = vmatpush1.msra.mxu0 0.0
    %5165 = vmatprep.subr.mxu0 0.0
    %5166 = vmatpush1.msra.mxu0 0.0
    %5167 = vmatprep.subr.mxu0 0.0
    %5168 = vmatpush1.msra.mxu0 0.0
    %5169 = vmatprep.subr.mxu0 0.0
    %5170 = vmatpush1.msra.mxu0 0.0
    %5171 = vmatprep.subr.mxu0 0.0
    %5172 = vmatpush1.msra.mxu0 0.0
    %5173 = vmatprep.subr.mxu0 0.0
    %5174 = vmatpush1.msra.mxu0 0.0
    %5175 = vmatprep.subr.mxu0 0.0
    %5176 = vmatpush1.msra.mxu0 0.0
    %5177 = vmatprep.subr.mxu0 0.0
    %5178 = vmatpush1.msra.mxu0 0.0
    %5179 = vmatprep.subr.mxu0 0.0
    %5180 = vmatpush1.msra.mxu0 0.0
    %5181 = vmatprep.subr.mxu0 0.0
    %5182 = vmatpush1.msra.mxu0 0.0
    %5183 = vmatprep.subr.mxu0 0.0
    %5184 = vmatpush1.msra.mxu0 0.0
    %5185 = vmatprep.subr.mxu0 0.0
    %5186 = vmatpush1.msra.mxu0 0.0
    %5187 = vmatprep.subr.mxu0 0.0
    %5188 = vmatpush1.msra.mxu0 %v5063
    %5189 = vmatprep.subr.mxu0 0.0
    %5190 = vmatpush2.msra.mxu0 0.0
    %5191 = vmatprep.subr.mxu0 0.0
    %5192 = vmatpush2.msra.mxu0 0.0
    %5193 = vmatprep.subr.mxu0 0.0
    %5194 = vmatpush2.msra.mxu0 0.0
    %5195 = vmatprep.subr.mxu0 0.0
    %5196 = vmatpush2.msra.mxu0 0.0
    %5197 = vmatprep.subr.mxu0 0.0
    %5198 = vmatpush2.msra.mxu0 0.0
    %5199 = vmatprep.subr.mxu0 0.0
    %5200 = vmatpush2.msra.mxu0 0.0
    %5201 = vmatprep.subr.mxu0 0.0
    %5202 = vmatpush2.msra.mxu0 0.0
    %5203 = vmatprep.subr.mxu0 0.0
    %5204 = vmatpush2.msra.mxu0 0.0
    %5205 = vmatprep.subr.mxu0 0.0
    %5206 = vmatpush2.msra.mxu0 0.0
    %5207 = vmatprep.subr.mxu0 0.0
    %5208 = vmatpush2.msra.mxu0 0.0
    %5209 = vmatprep.subr.mxu0 0.0
    %5210 = vmatpush2.msra.mxu0 0.0
    %5211 = vmatprep.subr.mxu0 0.0
    %5212 = vmatpush2.msra.mxu0 0.0
    %5213 = vmatprep.subr.mxu0 0.0
    %5214 = vmatpush2.msra.mxu0 0.0
    %5215 = vmatprep.subr.mxu0 0.0
    %5216 = vmatpush2.msra.mxu0 0.0
    %5217 = vmatprep.subr.mxu0 0.0
    %5218 = vmatpush2.msra.mxu0 0.0
    %5219 = vmatprep.subr.mxu0 0.0
    %5220 = vmatpush2.msra.mxu0 0.0
    %5221 = vmatprep.mubr.f32.mxu0 0.0
    %5222 = vmatmul.mubr.f32.gmra.mxu0 %v5155
    %v5223 = vpop.f32.mrf.mxu0
    %v5224 = vadd.f32 0.0, %v5223
    %v5225 = vpop.f32.mrf.mxu0
    %5226 = vdwg.mxu0
    %5227 = vrot.lane.b32.xlu0 %v4920, 112
    %v5228 = vpop.permute.xlu0 %5227
    %5229 = vrot.lane.b32.xlu0 %v4993, 112
    %v5230 = vpop.permute.xlu0 %5229
    %v5231 = vsel %vm4093, %v5228, 0
    %v5233 = vsel %vm4093, %v5230, 0
    %5235 = vmatprep.subr.mxu0 0.0
    %5236 = vmatpush1.xpose.msra.mxu0 0.0
    %5237 = vmatprep.subr.mxu0 0.0
    %5238 = vmatpush1.xpose.msra.mxu0 0.0
    %5239 = vmatprep.subr.mxu0 0.0
    %5240 = vmatpush1.xpose.msra.mxu0 0.0
    %5241 = vmatprep.subr.mxu0 0.0
    %5242 = vmatpush1.xpose.msra.mxu0 0.0
    %5243 = vmatprep.subr.mxu0 0.0
    %5244 = vmatpush1.xpose.msra.mxu0 0.0
    %5245 = vmatprep.subr.mxu0 0.0
    %5246 = vmatpush1.xpose.msra.mxu0 0.0
    %5247 = vmatprep.subr.mxu0 0.0
    %5248 = vmatpush1.xpose.msra.mxu0 0.0
    %5249 = vmatprep.subr.mxu0 0.0
    %5250 = vmatpush1.xpose.msra.mxu0 0.0
    %5251 = vmatprep.subr.mxu0 0.0
    %5252 = vmatpush1.xpose.msra.mxu0 0.0
    %5253 = vmatprep.subr.mxu0 0.0
    %5254 = vmatpush1.xpose.msra.mxu0 0.0
    %5255 = vmatprep.subr.mxu0 0.0
    %5256 = vmatpush1.xpose.msra.mxu0 0.0
    %5257 = vmatprep.subr.mxu0 0.0
    %5258 = vmatpush1.xpose.msra.mxu0 0.0
    %5259 = vmatprep.subr.mxu0 0.0
    %5260 = vmatpush1.xpose.msra.mxu0 0.0
    %5261 = vmatprep.subr.mxu0 0.0
    %5262 = vmatpush1.xpose.msra.mxu0 0.0
    %5263 = vmatprep.subr.mxu0 0.0
    %5264 = vmatpush1.xpose.msra.mxu0 0.0
    %5265 = vmatprep.subr.mxu0 0.0
    %5266 = vmatpush1.xpose.msra.mxu0 %v5233
    %5267 = vmatprep.subr.mxu0 0.0
    %5268 = vmatpush2.xpose.msra.mxu0 0.0
    %5269 = vmatprep.subr.mxu0 0.0
    %5270 = vmatpush2.xpose.msra.mxu0 0.0
    %5271 = vmatprep.subr.mxu0 0.0
    %5272 = vmatpush2.xpose.msra.mxu0 0.0
    %5273 = vmatprep.subr.mxu0 0.0
    %5274 = vmatpush2.xpose.msra.mxu0 0.0
    %5275 = vmatprep.subr.mxu0 0.0
    %5276 = vmatpush2.xpose.msra.mxu0 0.0
    %5277 = vmatprep.subr.mxu0 0.0
    %5278 = vmatpush2.xpose.msra.mxu0 0.0
    %5279 = vmatprep.subr.mxu0 0.0
    %5280 = vmatpush2.xpose.msra.mxu0 0.0
    %5281 = vmatprep.subr.mxu0 0.0
    %5282 = vmatpush2.xpose.msra.mxu0 0.0
    %5283 = vmatprep.subr.mxu0 0.0
    %5284 = vmatpush2.xpose.msra.mxu0 0.0
    %5285 = vmatprep.subr.mxu0 0.0
    %5286 = vmatpush2.xpose.msra.mxu0 0.0
    %5287 = vmatprep.subr.mxu0 0.0
    %5288 = vmatpush2.xpose.msra.mxu0 0.0
    %5289 = vmatprep.subr.mxu0 0.0
    %5290 = vmatpush2.xpose.msra.mxu0 0.0
    %5291 = vmatprep.subr.mxu0 0.0
    %5292 = vmatpush2.xpose.msra.mxu0 0.0
    %5293 = vmatprep.subr.mxu0 0.0
    %5294 = vmatpush2.xpose.msra.mxu0 0.0
    %5295 = vmatprep.subr.mxu0 0.0
    %5296 = vmatpush2.xpose.msra.mxu0 0.0
    %5297 = vmatprep.subr.mxu0 0.0
    %5298 = vmatpush2.xpose.msra.mxu0 0.0
    %5299 = vmatprep.mubr.f32.mxu0 0.0
    %5300 = vmatmul.mubr.f32.gmra.mxu0 %v5231
    %v5301 = vpop.f32.mrf.mxu0
    %v5302 = vadd.f32 0.0, %v5301
    %v5303 = vpop.f32.mrf.mxu0
    %5304 = vdwg.mxu0
    %v5305 = vmul.f32 %v5302, 0.25
    %v5306 = vsel %vm4171, %v5305, -inf
    %5307 = vmax.xlane.f32.xlu0 %v5306
    %v5308 = vpop.xlane.xlu0 %5307
    %v5309 = vsub.f32 %v5305, %v5308
    %v5310 = vmul.f32 %v5309, 1.442695
    %v5311 = vpow.pop %v5310
    %v5312 = vsel %vm4171, %v5311, 0.0
    %5313 = vadd.xlane.f32.xlu0 %v5312
    %v5314 = vpop.xlane.xlu0 %5313
    %v5315 = vrcp.pop %v5314
    %v5316 = vmul.f32 %v5311, %v5315
    %5318 = vrot.lane.b32.xlu0 %v5063, 112
    %v5319 = vpop.permute.xlu0 %5318
    %v5322 = vsel %vm4171, %v5316, 0
    %5324 = vmatprep.subr.mxu0 0.0
    %5325 = vmatpush1.msra.mxu0 0.0
    %5326 = vmatprep.subr.mxu0 0.0
    %5327 = vmatpush1.msra.mxu0 0.0
    %5328 = vmatprep.subr.mxu0 0.0
    %5329 = vmatpush1.msra.mxu0 0.0
    %5330 = vmatprep.subr.mxu0 0.0
    %5331 = vmatpush1.msra.mxu0 0.0
    %5332 = vmatprep.subr.mxu0 0.0
    %5333 = vmatpush1.msra.mxu0 0.0
    %5334 = vmatprep.subr.mxu0 0.0
    %5335 = vmatpush1.msra.mxu0 0.0
    %5336 = vmatprep.subr.mxu0 0.0
    %5337 = vmatpush1.msra.mxu0 0.0
    %5338 = vmatprep.subr.mxu0 0.0
    %5339 = vmatpush1.msra.mxu0 0.0
    %5340 = vmatprep.subr.mxu0 0.0
    %5341 = vmatpush1.msra.mxu0 0.0
    %5342 = vmatprep.subr.mxu0 0.0
    %5343 = vmatpush1.msra.mxu0 0.0
    %5344 = vmatprep.subr.mxu0 0.0
    %5345 = vmatpush1.msra.mxu0 0.0
    %5346 = vmatprep.subr.mxu0 0.0
    %5347 = vmatpush1.msra.mxu0 0.0
    %5348 = vmatprep.subr.mxu0 0.0
    %5349 = vmatpush1.msra.mxu0 0.0
    %5350 = vmatprep.subr.mxu0 0.0
    %5351 = vmatpush1.msra.mxu0 0.0
    %5352 = vmatprep.subr.mxu0 0.0
    %5353 = vmatpush1.msra.mxu0 0.0
    %5354 = vmatprep.subr.mxu0 0.0
    %5355 = vmatpush1.msra.mxu0 %v5319
    %5356 = vmatprep.subr.mxu0 0.0
    %5357 = vmatpush2.msra.mxu0 0.0
    %5358 = vmatprep.subr.mxu0 0.0
    %5359 = vmatpush2.msra.mxu0 0.0
    %5360 = vmatprep.subr.mxu0 0.0
    %5361 = vmatpush2.msra.mxu0 0.0
    %5362 = vmatprep.subr.mxu0 0.0
    %5363 = vmatpush2.msra.mxu0 0.0
    %5364 = vmatprep.subr.mxu0 0.0
    %5365 = vmatpush2.msra.mxu0 0.0
    %5366 = vmatprep.subr.mxu0 0.0
    %5367 = vmatpush2.msra.mxu0 0.0
    %5368 = vmatprep.subr.mxu0 0.0
    %5369 = vmatpush2.msra.mxu0 0.0
    %5370 = vmatprep.subr.mxu0 0.0
    %5371 = vmatpush2.msra.mxu0 0.0
    %5372 = vmatprep.subr.mxu0 0.0
    %5373 = vmatpush2.msra.mxu0 0.0
    %5374 = vmatprep.subr.mxu0 0.0
    %5375 = vmatpush2.msra.mxu0 0.0
    %5376 = vmatprep.subr.mxu0 0.0
    %5377 = vmatpush2.msra.mxu0 0.0
    %5378 = vmatprep.subr.mxu0 0.0
    %5379 = vmatpush2.msra.mxu0 0.0
    %5380 = vmatprep.subr.mxu0 0.0
    %5381 = vmatpush2.msra.mxu0 0.0
    %5382 = vmatprep.subr.mxu0 0.0
    %5383 = vmatpush2.msra.mxu0 0.0
    %5384 = vmatprep.subr.mxu0 0.0
    %5385 = vmatpush2.msra.mxu0 0.0
    %5386 = vmatprep.subr.mxu0 0.0
    %5387 = vmatpush2.msra.mxu0 0.0
    %5388 = vmatprep.mubr.f32.mxu0 0.0
    %5389 = vmatmul.mubr.f32.gmra.mxu0 %v5322
    %v5390 = vpop.f32.mrf.mxu0
    %v5391 = vadd.f32 0.0, %v5390
    %v5392 = vpop.f32.mrf.mxu0
    %5393 = vdwg.mxu0
    %5394 = vrot.lane.b32.xlu0 %v4920, 96
    %v5395 = vpop.permute.xlu0 %5394
    %5396 = vrot.lane.b32.xlu0 %v4993, 96
    %v5397 = vpop.permute.xlu0 %5396
    %v5398 = vsel %vm4093, %v5395, 0
    %v5400 = vsel %vm4093, %v5397, 0
    %5402 = vmatprep.subr.mxu0 0.0
    %5403 = vmatpush1.xpose.msra.mxu0 0.0
    %5404 = vmatprep.subr.mxu0 0.0
    %5405 = vmatpush1.xpose.msra.mxu0 0.0
    %5406 = vmatprep.subr.mxu0 0.0
    %5407 = vmatpush1.xpose.msra.mxu0 0.0
    %5408 = vmatprep.subr.mxu0 0.0
    %5409 = vmatpush1.xpose.msra.mxu0 0.0
    %5410 = vmatprep.subr.mxu0 0.0
    %5411 = vmatpush1.xpose.msra.mxu0 0.0
    %5412 = vmatprep.subr.mxu0 0.0
    %5413 = vmatpush1.xpose.msra.mxu0 0.0
    %5414 = vmatprep.subr.mxu0 0.0
    %5415 = vmatpush1.xpose.msra.mxu0 0.0
    %5416 = vmatprep.subr.mxu0 0.0
    %5417 = vmatpush1.xpose.msra.mxu0 0.0
    %5418 = vmatprep.subr.mxu0 0.0
    %5419 = vmatpush1.xpose.msra.mxu0 0.0
    %5420 = vmatprep.subr.mxu0 0.0
    %5421 = vmatpush1.xpose.msra.mxu0 0.0
    %5422 = vmatprep.subr.mxu0 0.0
    %5423 = vmatpush1.xpose.msra.mxu0 0.0
    %5424 = vmatprep.subr.mxu0 0.0
    %5425 = vmatpush1.xpose.msra.mxu0 0.0
    %5426 = vmatprep.subr.mxu0 0.0
    %5427 = vmatpush1.xpose.msra.mxu0 0.0
    %5428 = vmatprep.subr.mxu0 0.0
    %5429 = vmatpush1.xpose.msra.mxu0 0.0
    %5430 = vmatprep.subr.mxu0 0.0
    %5431 = vmatpush1.xpose.msra.mxu0 0.0
    %5432 = vmatprep.subr.mxu0 0.0
    %5433 = vmatpush1.xpose.msra.mxu0 %v5400
    %5434 = vmatprep.subr.mxu0 0.0
    %5435 = vmatpush2.xpose.msra.mxu0 0.0
    %5436 = vmatprep.subr.mxu0 0.0
    %5437 = vmatpush2.xpose.msra.mxu0 0.0
    %5438 = vmatprep.subr.mxu0 0.0
    %5439 = vmatpush2.xpose.msra.mxu0 0.0
    %5440 = vmatprep.subr.mxu0 0.0
    %5441 = vmatpush2.xpose.msra.mxu0 0.0
    %5442 = vmatprep.subr.mxu0 0.0
    %5443 = vmatpush2.xpose.msra.mxu0 0.0
    %5444 = vmatprep.subr.mxu0 0.0
    %5445 = vmatpush2.xpose.msra.mxu0 0.0
    %5446 = vmatprep.subr.mxu0 0.0
    %5447 = vmatpush2.xpose.msra.mxu0 0.0
    %5448 = vmatprep.subr.mxu0 0.0
    %5449 = vmatpush2.xpose.msra.mxu0 0.0
    %5450 = vmatprep.subr.mxu0 0.0
    %5451 = vmatpush2.xpose.msra.mxu0 0.0
    %5452 = vmatprep.subr.mxu0 0.0
    %5453 = vmatpush2.xpose.msra.mxu0 0.0
    %5454 = vmatprep.subr.mxu0 0.0
    %5455 = vmatpush2.xpose.msra.mxu0 0.0
    %5456 = vmatprep.subr.mxu0 0.0
    %5457 = vmatpush2.xpose.msra.mxu0 0.0
    %5458 = vmatprep.subr.mxu0 0.0
    %5459 = vmatpush2.xpose.msra.mxu0 0.0
    %5460 = vmatprep.subr.mxu0 0.0
    %5461 = vmatpush2.xpose.msra.mxu0 0.0
    %5462 = vmatprep.subr.mxu0 0.0
    %5463 = vmatpush2.xpose.msra.mxu0 0.0
    %5464 = vmatprep.subr.mxu0 0.0
    %5465 = vmatpush2.xpose.msra.mxu0 0.0
    %5466 = vmatprep.mubr.f32.mxu0 0.0
    %5467 = vmatmul.mubr.f32.gmra.mxu0 %v5398
    %v5468 = vpop.f32.mrf.mxu0
    %v5469 = vadd.f32 0.0, %v5468
    %v5470 = vpop.f32.mrf.mxu0
    %5471 = vdwg.mxu0
    %v5472 = vmul.f32 %v5469, 0.25
    %v5473 = vsel %vm4171, %v5472, -inf
    %5474 = vmax.xlane.f32.xlu0 %v5473
    %v5475 = vpop.xlane.xlu0 %5474
    %v5476 = vsub.f32 %v5472, %v5475
    %v5477 = vmul.f32 %v5476, 1.442695
    %v5478 = vpow.pop %v5477
    %v5479 = vsel %vm4171, %v5478, 0.0
    %5480 = vadd.xlane.f32.xlu0 %v5479
    %v5481 = vpop.xlane.xlu0 %5480
    %v5482 = vrcp.pop %v5481
    %v5483 = vmul.f32 %v5478, %v5482
    %5484 = vrot.lane.b32.xlu0 %v5063, 96
    %v5485 = vpop.permute.xlu0 %5484
    %v5488 = vsel %vm4171, %v5483, 0
    %5490 = vmatprep.subr.mxu0 0.0
    %5491 = vmatpush1.msra.mxu0 0.0
    %5492 = vmatprep.subr.mxu0 0.0
    %5493 = vmatpush1.msra.mxu0 0.0
    %5494 = vmatprep.subr.mxu0 0.0
    %5495 = vmatpush1.msra.mxu0 0.0
    %5496 = vmatprep.subr.mxu0 0.0
    %5497 = vmatpush1.msra.mxu0 0.0
    %5498 = vmatprep.subr.mxu0 0.0
    %5499 = vmatpush1.msra.mxu0 0.0
    %5500 = vmatprep.subr.mxu0 0.0
    %5501 = vmatpush1.msra.mxu0 0.0
    %5502 = vmatprep.subr.mxu0 0.0
    %5503 = vmatpush1.msra.mxu0 0.0
    %5504 = vmatprep.subr.mxu0 0.0
    %5505 = vmatpush1.msra.mxu0 0.0
    %5506 = vmatprep.subr.mxu0 0.0
    %5507 = vmatpush1.msra.mxu0 0.0
    %5508 = vmatprep.subr.mxu0 0.0
    %5509 = vmatpush1.msra.mxu0 0.0
    %5510 = vmatprep.subr.mxu0 0.0
    %5511 = vmatpush1.msra.mxu0 0.0
    %5512 = vmatprep.subr.mxu0 0.0
    %5513 = vmatpush1.msra.mxu0 0.0
    %5514 = vmatprep.subr.mxu0 0.0
    %5515 = vmatpush1.msra.mxu0 0.0
    %5516 = vmatprep.subr.mxu0 0.0
    %5517 = vmatpush1.msra.mxu0 0.0
    %5518 = vmatprep.subr.mxu0 0.0
    %5519 = vmatpush1.msra.mxu0 0.0
    %5520 = vmatprep.subr.mxu0 0.0
    %5521 = vmatpush1.msra.mxu0 %v5485
    %5522 = vmatprep.subr.mxu0 0.0
    %5523 = vmatpush2.msra.mxu0 0.0
    %5524 = vmatprep.subr.mxu0 0.0
    %5525 = vmatpush2.msra.mxu0 0.0
    %5526 = vmatprep.subr.mxu0 0.0
    %5527 = vmatpush2.msra.mxu0 0.0
    %5528 = vmatprep.subr.mxu0 0.0
    %5529 = vmatpush2.msra.mxu0 0.0
    %5530 = vmatprep.subr.mxu0 0.0
    %5531 = vmatpush2.msra.mxu0 0.0
    %5532 = vmatprep.subr.mxu0 0.0
    %5533 = vmatpush2.msra.mxu0 0.0
    %5534 = vmatprep.subr.mxu0 0.0
    %5535 = vmatpush2.msra.mxu0 0.0
    %5536 = vmatprep.subr.mxu0 0.0
    %5537 = vmatpush2.msra.mxu0 0.0
    %5538 = vmatprep.subr.mxu0 0.0
    %5539 = vmatpush2.msra.mxu0 0.0
    %5540 = vmatprep.subr.mxu0 0.0
    %5541 = vmatpush2.msra.mxu0 0.0
    %5542 = vmatprep.subr.mxu0 0.0
    %5543 = vmatpush2.msra.mxu0 0.0
    %5544 = vmatprep.subr.mxu0 0.0
    %5545 = vmatpush2.msra.mxu0 0.0
    %5546 = vmatprep.subr.mxu0 0.0
    %5547 = vmatpush2.msra.mxu0 0.0
    %5548 = vmatprep.subr.mxu0 0.0
    %5549 = vmatpush2.msra.mxu0 0.0
    %5550 = vmatprep.subr.mxu0 0.0
    %5551 = vmatpush2.msra.mxu0 0.0
    %5552 = vmatprep.subr.mxu0 0.0
    %5553 = vmatpush2.msra.mxu0 0.0
    %5554 = vmatprep.mubr.f32.mxu0 0.0
    %5555 = vmatmul.mubr.f32.gmra.mxu0 %v5488
    %v5556 = vpop.f32.mrf.mxu0
    %v5557 = vadd.f32 0.0, %v5556
    %v5558 = vpop.f32.mrf.mxu0
    %5559 = vdwg.mxu0
    %5560 = vrot.lane.b32.xlu0 %v4920, 80
    %v5561 = vpop.permute.xlu0 %5560
    %5562 = vrot.lane.b32.xlu0 %v4993, 80
    %v5563 = vpop.permute.xlu0 %5562
    %v5564 = vsel %vm4093, %v5561, 0
    %v5566 = vsel %vm4093, %v5563, 0
    %5568 = vmatprep.subr.mxu0 0.0
    %5569 = vmatpush1.xpose.msra.mxu0 0.0
    %5570 = vmatprep.subr.mxu0 0.0
    %5571 = vmatpush1.xpose.msra.mxu0 0.0
    %5572 = vmatprep.subr.mxu0 0.0
    %5573 = vmatpush1.xpose.msra.mxu0 0.0
    %5574 = vmatprep.subr.mxu0 0.0
    %5575 = vmatpush1.xpose.msra.mxu0 0.0
    %5576 = vmatprep.subr.mxu0 0.0
    %5577 = vmatpush1.xpose.msra.mxu0 0.0
    %5578 = vmatprep.subr.mxu0 0.0
    %5579 = vmatpush1.xpose.msra.mxu0 0.0
    %5580 = vmatprep.subr.mxu0 0.0
    %5581 = vmatpush1.xpose.msra.mxu0 0.0
    %5582 = vmatprep.subr.mxu0 0.0
    %5583 = vmatpush1.xpose.msra.mxu0 0.0
    %5584 = vmatprep.subr.mxu0 0.0
    %5585 = vmatpush1.xpose.msra.mxu0 0.0
    %5586 = vmatprep.subr.mxu0 0.0
    %5587 = vmatpush1.xpose.msra.mxu0 0.0
    %5588 = vmatprep.subr.mxu0 0.0
    %5589 = vmatpush1.xpose.msra.mxu0 0.0
    %5590 = vmatprep.subr.mxu0 0.0
    %5591 = vmatpush1.xpose.msra.mxu0 0.0
    %5592 = vmatprep.subr.mxu0 0.0
    %5593 = vmatpush1.xpose.msra.mxu0 0.0
    %5594 = vmatprep.subr.mxu0 0.0
    %5595 = vmatpush1.xpose.msra.mxu0 0.0
    %5596 = vmatprep.subr.mxu0 0.0
    %5597 = vmatpush1.xpose.msra.mxu0 0.0
    %5598 = vmatprep.subr.mxu0 0.0
    %5599 = vmatpush1.xpose.msra.mxu0 %v5566
    %5600 = vmatprep.subr.mxu0 0.0
    %5601 = vmatpush2.xpose.msra.mxu0 0.0
    %5602 = vmatprep.subr.mxu0 0.0
    %5603 = vmatpush2.xpose.msra.mxu0 0.0
    %5604 = vmatprep.subr.mxu0 0.0
    %5605 = vmatpush2.xpose.msra.mxu0 0.0
    %5606 = vmatprep.subr.mxu0 0.0
    %5607 = vmatpush2.xpose.msra.mxu0 0.0
    %5608 = vmatprep.subr.mxu0 0.0
    %5609 = vmatpush2.xpose.msra.mxu0 0.0
    %5610 = vmatprep.subr.mxu0 0.0
    %5611 = vmatpush2.xpose.msra.mxu0 0.0
    %5612 = vmatprep.subr.mxu0 0.0
    %5613 = vmatpush2.xpose.msra.mxu0 0.0
    %5614 = vmatprep.subr.mxu0 0.0
    %5615 = vmatpush2.xpose.msra.mxu0 0.0
    %5616 = vmatprep.subr.mxu0 0.0
    %5617 = vmatpush2.xpose.msra.mxu0 0.0
    %5618 = vmatprep.subr.mxu0 0.0
    %5619 = vmatpush2.xpose.msra.mxu0 0.0
    %5620 = vmatprep.subr.mxu0 0.0
    %5621 = vmatpush2.xpose.msra.mxu0 0.0
    %5622 = vmatprep.subr.mxu0 0.0
    %5623 = vmatpush2.xpose.msra.mxu0 0.0
    %5624 = vmatprep.subr.mxu0 0.0
    %5625 = vmatpush2.xpose.msra.mxu0 0.0
    %5626 = vmatprep.subr.mxu0 0.0
    %5627 = vmatpush2.xpose.msra.mxu0 0.0
    %5628 = vmatprep.subr.mxu0 0.0
    %5629 = vmatpush2.xpose.msra.mxu0 0.0
    %5630 = vmatprep.subr.mxu0 0.0
    %5631 = vmatpush2.xpose.msra.mxu0 0.0
    %5632 = vmatprep.mubr.f32.mxu0 0.0
    %5633 = vmatmul.mubr.f32.gmra.mxu0 %v5564
    %v5634 = vpop.f32.mrf.mxu0
    %v5635 = vadd.f32 0.0, %v5634
    %v5636 = vpop.f32.mrf.mxu0
    %5637 = vdwg.mxu0
    %v5638 = vmul.f32 %v5635, 0.25
    %v5639 = vsel %vm4171, %v5638, -inf
    %5640 = vmax.xlane.f32.xlu0 %v5639
    %v5641 = vpop.xlane.xlu0 %5640
    %v5642 = vsub.f32 %v5638, %v5641
    %v5643 = vmul.f32 %v5642, 1.442695
    %v5644 = vpow.pop %v5643
    %v5645 = vsel %vm4171, %v5644, 0.0
    %5646 = vadd.xlane.f32.xlu0 %v5645
    %v5647 = vpop.xlane.xlu0 %5646
    %v5648 = vrcp.pop %v5647
    %v5649 = vmul.f32 %v5644, %v5648
    %5650 = vrot.lane.b32.xlu0 %v5063, 80
    %v5651 = vpop.permute.xlu0 %5650
    %v5654 = vsel %vm4171, %v5649, 0
    %5656 = vmatprep.subr.mxu0 0.0
    %5657 = vmatpush1.msra.mxu0 0.0
    %5658 = vmatprep.subr.mxu0 0.0
    %5659 = vmatpush1.msra.mxu0 0.0
    %5660 = vmatprep.subr.mxu0 0.0
    %5661 = vmatpush1.msra.mxu0 0.0
    %5662 = vmatprep.subr.mxu0 0.0
    %5663 = vmatpush1.msra.mxu0 0.0
    %5664 = vmatprep.subr.mxu0 0.0
    %5665 = vmatpush1.msra.mxu0 0.0
    %5666 = vmatprep.subr.mxu0 0.0
    %5667 = vmatpush1.msra.mxu0 0.0
    %5668 = vmatprep.subr.mxu0 0.0
    %5669 = vmatpush1.msra.mxu0 0.0
    %5670 = vmatprep.subr.mxu0 0.0
    %5671 = vmatpush1.msra.mxu0 0.0
    %5672 = vmatprep.subr.mxu0 0.0
    %5673 = vmatpush1.msra.mxu0 0.0
    %5674 = vmatprep.subr.mxu0 0.0
    %5675 = vmatpush1.msra.mxu0 0.0
    %5676 = vmatprep.subr.mxu0 0.0
    %5677 = vmatpush1.msra.mxu0 0.0
    %5678 = vmatprep.subr.mxu0 0.0
    %5679 = vmatpush1.msra.mxu0 0.0
    %5680 = vmatprep.subr.mxu0 0.0
    %5681 = vmatpush1.msra.mxu0 0.0
    %5682 = vmatprep.subr.mxu0 0.0
    %5683 = vmatpush1.msra.mxu0 0.0
    %5684 = vmatprep.subr.mxu0 0.0
    %5685 = vmatpush1.msra.mxu0 0.0
    %5686 = vmatprep.subr.mxu0 0.0
    %5687 = vmatpush1.msra.mxu0 %v5651
    %5688 = vmatprep.subr.mxu0 0.0
    %5689 = vmatpush2.msra.mxu0 0.0
    %5690 = vmatprep.subr.mxu0 0.0
    %5691 = vmatpush2.msra.mxu0 0.0
    %5692 = vmatprep.subr.mxu0 0.0
    %5693 = vmatpush2.msra.mxu0 0.0
    %5694 = vmatprep.subr.mxu0 0.0
    %5695 = vmatpush2.msra.mxu0 0.0
    %5696 = vmatprep.subr.mxu0 0.0
    %5697 = vmatpush2.msra.mxu0 0.0
    %5698 = vmatprep.subr.mxu0 0.0
    %5699 = vmatpush2.msra.mxu0 0.0
    %5700 = vmatprep.subr.mxu0 0.0
    %5701 = vmatpush2.msra.mxu0 0.0
    %5702 = vmatprep.subr.mxu0 0.0
    %5703 = vmatpush2.msra.mxu0 0.0
    %5704 = vmatprep.subr.mxu0 0.0
    %5705 = vmatpush2.msra.mxu0 0.0
    %5706 = vmatprep.subr.mxu0 0.0
    %5707 = vmatpush2.msra.mxu0 0.0
    %5708 = vmatprep.subr.mxu0 0.0
    %5709 = vmatpush2.msra.mxu0 0.0
    %5710 = vmatprep.subr.mxu0 0.0
    %5711 = vmatpush2.msra.mxu0 0.0
    %5712 = vmatprep.subr.mxu0 0.0
    %5713 = vmatpush2.msra.mxu0 0.0
    %5714 = vmatprep.subr.mxu0 0.0
    %5715 = vmatpush2.msra.mxu0 0.0
    %5716 = vmatprep.subr.mxu0 0.0
    %5717 = vmatpush2.msra.mxu0 0.0
    %5718 = vmatprep.subr.mxu0 0.0
    %5719 = vmatpush2.msra.mxu0 0.0
    %5720 = vmatprep.mubr.f32.mxu0 0.0
    %5721 = vmatmul.mubr.f32.gmra.mxu0 %v5654
    %v5722 = vpop.f32.mrf.mxu0
    %v5723 = vadd.f32 0.0, %v5722
    %v5724 = vpop.f32.mrf.mxu0
    %5725 = vdwg.mxu0
    %5727 = vrot.lane.b32.xlu0 %v5391, 16
    %v5728 = vpop.permute.xlu0 %5727
    %5731 = vrot.lane.b32.xlu0 %v5557, 32
    %v5732 = vpop.permute.xlu0 %5731
    %5735 = vrot.lane.b32.xlu0 %v5723, 48
    %v5736 = vpop.permute.xlu0 %5735
    %v5738 = vsel %vm4093, %v5224, %v5728
    %v5739 = vsel %vm317, %v5738, %v5732
    %v5740 = vsel %vm4769, %v5739, %v5736
    %v5742 = vsel %vm242, %v5740, 0
    %5744 = vmatprep.subr.mxu0 0.0
    %5745 = vmatpush1.msra.mxu0 0.0
    %5746 = vmatprep.subr.mxu0 0.0
    %5747 = vmatpush1.msra.mxu0 0.0
    %5748 = vmatprep.subr.mxu0 0.0
    %5749 = vmatpush1.msra.mxu0 0.0
    %5750 = vmatprep.subr.mxu0 0.0
    %5751 = vmatpush1.msra.mxu0 0.0
    %5752 = vmatprep.subr.mxu0 0.0
    %5753 = vmatpush1.msra.mxu0 0.0
    %5754 = vmatprep.subr.mxu0 0.0
    %5755 = vmatpush1.msra.mxu0 0.0
    %5756 = vmatprep.subr.mxu0 0.0
    %5757 = vmatpush1.msra.mxu0 0.0
    %5758 = vmatprep.subr.mxu0 0.0
    %5759 = vmatpush1.msra.mxu0 0.0
    %5760 = vmatprep.subr.mxu0 0.0
    %5761 = vmatpush1.msra.mxu0 %v200
    %5762 = vmatprep.subr.mxu0 0.0
    %5763 = vmatpush1.msra.mxu0 %v199
    %5764 = vmatprep.subr.mxu0 0.0
    %5765 = vmatpush1.msra.mxu0 %v198
    %5766 = vmatprep.subr.mxu0 0.0
    %5767 = vmatpush1.msra.mxu0 %v197
    %5768 = vmatprep.subr.mxu0 0.0
    %5769 = vmatpush1.msra.mxu0 %v196
    %5770 = vmatprep.subr.mxu0 0.0
    %5771 = vmatpush1.msra.mxu0 %v195
    %5772 = vmatprep.subr.mxu0 0.0
    %5773 = vmatpush1.msra.mxu0 %v194
    %5774 = vmatprep.subr.mxu0 0.0
    %5775 = vmatpush1.msra.mxu0 %v193
    %5776 = vmatprep.subr.mxu0 0.0
    %5777 = vmatpush2.msra.mxu0 0.0
    %5778 = vmatprep.subr.mxu0 0.0
    %5779 = vmatpush2.msra.mxu0 0.0
    %5780 = vmatprep.subr.mxu0 0.0
    %5781 = vmatpush2.msra.mxu0 0.0
    %5782 = vmatprep.subr.mxu0 0.0
    %5783 = vmatpush2.msra.mxu0 0.0
    %5784 = vmatprep.subr.mxu0 0.0
    %5785 = vmatpush2.msra.mxu0 0.0
    %5786 = vmatprep.subr.mxu0 0.0
    %5787 = vmatpush2.msra.mxu0 0.0
    %5788 = vmatprep.subr.mxu0 0.0
    %5789 = vmatpush2.msra.mxu0 0.0
    %5790 = vmatprep.subr.mxu0 0.0
    %5791 = vmatpush2.msra.mxu0 0.0
    %5792 = vmatprep.subr.mxu0 0.0
    %5793 = vmatpush2.msra.mxu0 0.0
    %5794 = vmatprep.subr.mxu0 0.0
    %5795 = vmatpush2.msra.mxu0 0.0
    %5796 = vmatprep.subr.mxu0 0.0
    %5797 = vmatpush2.msra.mxu0 0.0
    %5798 = vmatprep.subr.mxu0 0.0
    %5799 = vmatpush2.msra.mxu0 0.0
    %5800 = vmatprep.subr.mxu0 0.0
    %5801 = vmatpush2.msra.mxu0 0.0
    %5802 = vmatprep.subr.mxu0 0.0
    %5803 = vmatpush2.msra.mxu0 0.0
    %5804 = vmatprep.subr.mxu0 0.0
    %5805 = vmatpush2.msra.mxu0 0.0
    %5806 = vmatprep.subr.mxu0 0.0
    %5807 = vmatpush2.msra.mxu0 0.0
    %5808 = vmatprep.mubr.f32.mxu0 0.0
    %5809 = vmatmul.mubr.f32.gmra.mxu0 %v5742
    %v5810 = vpop.f32.mrf.mxu0
    %v5811 = vadd.f32 %v4775, %v5810
    %v5812 = vpop.f32.mrf.mxu0
    %5813 = vdwg.mxu0
    %v5815 = vsel %vm242, %v5811, 0
    %5817 = vmatprep.subr.mxu0 0.0
    %5818 = vmatpush1.xpose.msra.mxu0 0.0
    %5819 = vmatprep.subr.mxu0 0.0
    %5820 = vmatpush1.xpose.msra.mxu0 0.0
    %5821 = vmatprep.subr.mxu0 0.0
    %5822 = vmatpush1.xpose.msra.mxu0 0.0
    %5823 = vmatprep.subr.mxu0 0.0
    %5824 = vmatpush1.xpose.msra.mxu0 0.0
    %5825 = vmatprep.subr.mxu0 0.0
    %5826 = vmatpush1.xpose.msra.mxu0 0.0
    %5827 = vmatprep.subr.mxu0 0.0
    %5828 = vmatpush1.xpose.msra.mxu0 0.0
    %5829 = vmatprep.subr.mxu0 0.0
    %5830 = vmatpush1.xpose.msra.mxu0 0.0
    %5831 = vmatprep.subr.mxu0 0.0
    %5832 = vmatpush1.xpose.msra.mxu0 0.0
    %5833 = vmatprep.subr.mxu0 0.0
    %5834 = vmatpush1.xpose.msra.mxu0 0.0
    %5835 = vmatprep.subr.mxu0 0.0
    %5836 = vmatpush1.xpose.msra.mxu0 0.0
    %5837 = vmatprep.subr.mxu0 0.0
    %5838 = vmatpush1.xpose.msra.mxu0 0.0
    %5839 = vmatprep.subr.mxu0 0.0
    %5840 = vmatpush1.xpose.msra.mxu0 0.0
    %5841 = vmatprep.subr.mxu0 0.0
    %5842 = vmatpush1.xpose.msra.mxu0 0.0
    %5843 = vmatprep.subr.mxu0 0.0
    %5844 = vmatpush1.xpose.msra.mxu0 0.0
    %5845 = vmatprep.subr.mxu0 0.0
    %5846 = vmatpush1.xpose.msra.mxu0 0.0
    %5847 = vmatprep.subr.mxu0 0.0
    %5848 = vmatpush1.xpose.msra.mxu0 %v244
    %5849 = vmatprep.subr.mxu0 0.0
    %5850 = vmatpush2.xpose.msra.mxu0 0.0
    %5851 = vmatprep.subr.mxu0 0.0
    %5852 = vmatpush2.xpose.msra.mxu0 0.0
    %5853 = vmatprep.subr.mxu0 0.0
    %5854 = vmatpush2.xpose.msra.mxu0 0.0
    %5855 = vmatprep.subr.mxu0 0.0
    %5856 = vmatpush2.xpose.msra.mxu0 0.0
    %5857 = vmatprep.subr.mxu0 0.0
    %5858 = vmatpush2.xpose.msra.mxu0 0.0
    %5859 = vmatprep.subr.mxu0 0.0
    %5860 = vmatpush2.xpose.msra.mxu0 0.0
    %5861 = vmatprep.subr.mxu0 0.0
    %5862 = vmatpush2.xpose.msra.mxu0 0.0
    %5863 = vmatprep.subr.mxu0 0.0
    %5864 = vmatpush2.xpose.msra.mxu0 0.0
    %5865 = vmatprep.subr.mxu0 0.0
    %5866 = vmatpush2.xpose.msra.mxu0 0.0
    %5867 = vmatprep.subr.mxu0 0.0
    %5868 = vmatpush2.xpose.msra.mxu0 0.0
    %5869 = vmatprep.subr.mxu0 0.0
    %5870 = vmatpush2.xpose.msra.mxu0 0.0
    %5871 = vmatprep.subr.mxu0 0.0
    %5872 = vmatpush2.xpose.msra.mxu0 0.0
    %5873 = vmatprep.subr.mxu0 0.0
    %5874 = vmatpush2.xpose.msra.mxu0 0.0
    %5875 = vmatprep.subr.mxu0 0.0
    %5876 = vmatpush2.xpose.msra.mxu0 0.0
    %5877 = vmatprep.subr.mxu0 0.0
    %5878 = vmatpush2.xpose.msra.mxu0 0.0
    %5879 = vmatprep.subr.mxu0 0.0
    %5880 = vmatpush2.xpose.msra.mxu0 0.0
    %5881 = vmatprep.mubr.f32.mxu0 0.0
    %5882 = vmatmul.mubr.f32.gmra.mxu0 %v5815
    %v5883 = vpop.f32.mrf.mxu0
    %v5884 = vadd.f32 0.0, %v5883
    %v5885 = vpop.f32.mrf.mxu0
    %5886 = vdwg.mxu0
    %v5887 = vsel %vm4171, %v5884, -inf
    %5888 = vmax.xlane.f32.xlu0 %v5887
    %v5889 = vpop.xlane.xlu0 %5888
    %v5890 = vsub.f32 %v5884, %v5889
    %v5891 = vmul.f32 %v5890, 1.442695
    %v5892 = vpow.pop %v5891
    %v5893 = vsel %vm4171, %v5892, 0.0
    %5894 = vadd.xlane.f32.xlu0 %v5893
    %v5895 = vpop.xlane.xlu0 %5894
    %v5896 = vrcp.pop %v5895
    %v5897 = vmul.f32 %v5892, %v5896
    %v5899 = vsel %vm4171, %v5897, 0
    %5901 = vmatprep.subr.mxu0 0.0
    %5902 = vmatpush1.msra.mxu0 0.0
    %5903 = vmatprep.subr.mxu0 0.0
    %5904 = vmatpush1.msra.mxu0 0.0
    %5905 = vmatprep.subr.mxu0 0.0
    %5906 = vmatpush1.msra.mxu0 0.0
    %5907 = vmatprep.subr.mxu0 0.0
    %5908 = vmatpush1.msra.mxu0 0.0
    %5909 = vmatprep.subr.mxu0 0.0
    %5910 = vmatpush1.msra.mxu0 0.0
    %5911 = vmatprep.subr.mxu0 0.0
    %5912 = vmatpush1.msra.mxu0 0.0
    %5913 = vmatprep.subr.mxu0 0.0
    %5914 = vmatpush1.msra.mxu0 0.0
    %5915 = vmatprep.subr.mxu0 0.0
    %5916 = vmatpush1.msra.mxu0 0.0
    %5917 = vmatprep.subr.mxu0 0.0
    %5918 = vmatpush1.msra.mxu0 0.0
    %5919 = vmatprep.subr.mxu0 0.0
    %5920 = vmatpush1.msra.mxu0 0.0
    %5921 = vmatprep.subr.mxu0 0.0
    %5922 = vmatpush1.msra.mxu0 0.0
    %5923 = vmatprep.subr.mxu0 0.0
    %5924 = vmatpush1.msra.mxu0 0.0
    %5925 = vmatprep.subr.mxu0 0.0
    %5926 = vmatpush1.msra.mxu0 0.0
    %5927 = vmatprep.subr.mxu0 0.0
    %5928 = vmatpush1.msra.mxu0 0.0
    %5929 = vmatprep.subr.mxu0 0.0
    %5930 = vmatpush1.msra.mxu0 0.0
    %5931 = vmatprep.subr.mxu0 0.0
    %5932 = vmatpush1.msra.mxu0 %v202
    %5933 = vmatprep.subr.mxu0 0.0
    %5934 = vmatpush2.msra.mxu0 0.0
    %5935 = vmatprep.subr.mxu0 0.0
    %5936 = vmatpush2.msra.mxu0 0.0
    %5937 = vmatprep.subr.mxu0 0.0
    %5938 = vmatpush2.msra.mxu0 0.0
    %5939 = vmatprep.subr.mxu0 0.0
    %5940 = vmatpush2.msra.mxu0 0.0
    %5941 = vmatprep.subr.mxu0 0.0
    %5942 = vmatpush2.msra.mxu0 0.0
    %5943 = vmatprep.subr.mxu0 0.0
    %5944 = vmatpush2.msra.mxu0 0.0
    %5945 = vmatprep.subr.mxu0 0.0
    %5946 = vmatpush2.msra.mxu0 0.0
    %5947 = vmatprep.subr.mxu0 0.0
    %5948 = vmatpush2.msra.mxu0 0.0
    %5949 = vmatprep.subr.mxu0 0.0
    %5950 = vmatpush2.msra.mxu0 0.0
    %5951 = vmatprep.subr.mxu0 0.0
    %5952 = vmatpush2.msra.mxu0 0.0
    %5953 = vmatprep.subr.mxu0 0.0
    %5954 = vmatpush2.msra.mxu0 0.0
    %5955 = vmatprep.subr.mxu0 0.0
    %5956 = vmatpush2.msra.mxu0 0.0
    %5957 = vmatprep.subr.mxu0 0.0
    %5958 = vmatpush2.msra.mxu0 0.0
    %5959 = vmatprep.subr.mxu0 0.0
    %5960 = vmatpush2.msra.mxu0 0.0
    %5961 = vmatprep.subr.mxu0 0.0
    %5962 = vmatpush2.msra.mxu0 0.0
    %5963 = vmatprep.subr.mxu0 0.0
    %5964 = vmatpush2.msra.mxu0 0.0
    %5965 = vmatprep.mubr.f32.mxu0 0.0
    %5966 = vmatmul.mubr.f32.gmra.mxu0 %v5899
    %v5967 = vpop.f32.mrf.mxu0
    %v5968 = vadd.f32 0.0, %v5967
    %v5969 = vpop.f32.mrf.mxu0
    %5970 = vdwg.mxu0
    %5971 = vrot.lane.b32.xlu0 %v3858, 64
    %v5972 = vpop.permute.xlu0 %5971
    %v5974 = vsel %vm242, %v5968, %v5972
    %v5975 = vld [vmem:[%s17] sm:$0xff]
    %v5976 = vld [vmem:[%s17 + $0x8] sm:$0xff]
    %v5977 = vld [vmem:[%s17 + $0x10] sm:$0xff]
    %v5978 = vld [vmem:[%s17 + $0x18] sm:$0xff]
    %v5979 = vld [vmem:[%s17 + $0x20] sm:$0xff]
    %v5980 = vld [vmem:[%s17 + $0x28] sm:$0xff]
    %v5981 = vld [vmem:[%s17 + $0x30] sm:$0xff]
    %v5982 = vld [vmem:[%s17 + $0x38] sm:$0xff]
    %v5983 = vld [vmem:[%s17 + $0x40] sm:$0xff]
    %v5984 = vld [vmem:[%s17 + $0x48] sm:$0xff]
    %v5985 = vld [vmem:[%s17 + $0x50] sm:$0xff]
    %v5986 = vld [vmem:[%s17 + $0x58] sm:$0xff]
    %v5987 = vld [vmem:[%s17 + $0x60] sm:$0xff]
    %v5988 = vld [vmem:[%s17 + $0x68] sm:$0xff]
    %v5989 = vld [vmem:[%s17 + $0x70] sm:$0xff]
    %v5990 = vld [vmem:[%s17 + $0x78] sm:$0xff]
    %v5991 = vld [vmem:[%s17 + $0x80] sm:$0xff]
    %v5992 = vld [vmem:[%s17 + $0x88] sm:$0xff]
    %v5993 = vld [vmem:[%s17 + $0x90] sm:$0xff]
    %v5994 = vld [vmem:[%s17 + $0x98] sm:$0xff]
    %v5995 = vld [vmem:[%s17 + $0xa0] sm:$0xff]
    %v5996 = vld [vmem:[%s17 + $0xa8] sm:$0xff]
    %v5997 = vld [vmem:[%s17 + $0xb0] sm:$0xff]
    %v5998 = vld [vmem:[%s17 + $0xb8] sm:$0xff]
    %v5999 = vld [vmem:[%s18] sm:$0x1]
    %v6001 = vlaneseq
    %v6002 = vshrl.u32 %v6001, 7
    %v6003 = vsub.s32 0, %v6002
    %v6004 = vrot.slane %v5999, %v6003
    %6006 = vmatprep.subr.mxu0 0.0
    %6007 = vmatpush1.msra.mxu0 %v5990
    %6008 = vmatprep.subr.mxu0 0.0
    %6009 = vmatpush1.msra.mxu0 %v5989
    %6010 = vmatprep.subr.mxu0 0.0
    %6011 = vmatpush1.msra.mxu0 %v5988
    %6012 = vmatprep.subr.mxu0 0.0
    %6013 = vmatpush1.msra.mxu0 %v5987
    %6014 = vmatprep.subr.mxu0 0.0
    %6015 = vmatpush1.msra.mxu0 %v5986
    %6016 = vmatprep.subr.mxu0 0.0
    %6017 = vmatpush1.msra.mxu0 %v5985
    %6018 = vmatprep.subr.mxu0 0.0
    %6019 = vmatpush1.msra.mxu0 %v5984
    %6020 = vmatprep.subr.mxu0 0.0
    %6021 = vmatpush1.msra.mxu0 %v5983
    %6022 = vmatprep.subr.mxu0 0.0
    %6023 = vmatpush1.msra.mxu0 %v5982
    %6024 = vmatprep.subr.mxu0 0.0
    %6025 = vmatpush1.msra.mxu0 %v5981
    %6026 = vmatprep.subr.mxu0 0.0
    %6027 = vmatpush1.msra.mxu0 %v5980
    %6028 = vmatprep.subr.mxu0 0.0
    %6029 = vmatpush1.msra.mxu0 %v5979
    %6030 = vmatprep.subr.mxu0 0.0
    %6031 = vmatpush1.msra.mxu0 %v5978
    %6032 = vmatprep.subr.mxu0 0.0
    %6033 = vmatpush1.msra.mxu0 %v5977
    %6034 = vmatprep.subr.mxu0 0.0
    %6035 = vmatpush1.msra.mxu0 %v5976
    %6036 = vmatprep.subr.mxu0 0.0
    %6037 = vmatpush1.msra.mxu0 %v5975
    %6038 = vmatprep.subr.mxu0 0.0
    %6039 = vmatpush2.msra.mxu0 0.0
    %6040 = vmatprep.subr.mxu0 0.0
    %6041 = vmatpush2.msra.mxu0 0.0
    %6042 = vmatprep.subr.mxu0 0.0
    %6043 = vmatpush2.msra.mxu0 0.0
    %6044 = vmatprep.subr.mxu0 0.0
    %6045 = vmatpush2.msra.mxu0 0.0
    %6046 = vmatprep.subr.mxu0 0.0
    %6047 = vmatpush2.msra.mxu0 0.0
    %6048 = vmatprep.subr.mxu0 0.0
    %6049 = vmatpush2.msra.mxu0 0.0
    %6050 = vmatprep.subr.mxu0 0.0
    %6051 = vmatpush2.msra.mxu0 0.0
    %6052 = vmatprep.subr.mxu0 0.0
    %6053 = vmatpush2.msra.mxu0 0.0
    %6054 = vmatprep.subr.mxu0 0.0
    %6055 = vmatpush2.msra.mxu0 %v5998
    %6056 = vmatprep.subr.mxu0 0.0
    %6057 = vmatpush2.msra.mxu0 %v5997
    %6058 = vmatprep.subr.mxu0 0.0
    %6059 = vmatpush2.msra.mxu0 %v5996
    %6060 = vmatprep.subr.mxu0 0.0
    %6061 = vmatpush2.msra.mxu0 %v5995
    %6062 = vmatprep.subr.mxu0 0.0
    %6063 = vmatpush2.msra.mxu0 %v5994
    %6064 = vmatprep.subr.mxu0 0.0
    %6065 = vmatpush2.msra.mxu0 %v5993
    %6066 = vmatprep.subr.mxu0 0.0
    %6067 = vmatpush2.msra.mxu0 %v5992
    %6068 = vmatprep.subr.mxu0 0.0
    %6069 = vmatpush2.msra.mxu0 %v5991
    %6070 = vmatprep.mubr.f32.mxu0 %v5815
    %6071 = vmatmul.mubr.f32.gmra.mxu0 %v5974
    %v6072 = vpop.f32.mrf.mxu0
    %v6073 = vadd.f32 %v6004, %v6072
    %v6074 = vpop.f32.mrf.mxu0
    %6075 = vdwg.mxu0
    %6076 = vst.msk [vmem:[#allocation16] sm:$0xff] %vm242, %v6073
    // Predicated region
    $region110: #{tpu_custom_call.1} parent=1 // pred_check
      _
    $region111: #{tpu_custom_call.1} parent=1 // pred_check_branch
      %6078 = sbr.rel (0) target = $region113
    $region112: #{tpu_custom_call.1} parent=1 // pred_region
      %s6080 = ssub.s32 128, 128
      %6081 = vsyncadd [#allocation4], %s6080
      %s6083 = sshll.u32 [#allocation16], 4
      %s6084 = int_to_ptr.vmem [resolvable:$true] %s6083
      %6086 = dma.vmem_to_hbm [thread:$0]  %s6084, 128, %s19, [#allocation4]
    $region113: #{tpu_custom_call.1} parent=1 // pred_fallthru
      _
    // Predicated region
    $region114: #{tpu_custom_call.1} parent=1 // pred_check
      _
    $region115: #{tpu_custom_call.1} parent=1 // pred_check_branch
      %6088 = sbr.rel (0) target = $region117
    $region116: #{tpu_custom_call.1} parent=1 // pred_region
      %6089 = dma.done [#allocation4], 128
    $region117: #{tpu_custom_call.1} parent=1 // pred_fallthru
      _
    %6090 = vsyncpa [#allocation3], 1
    %6091 = vsyncpa [#allocation6], 1
    %6092 = vsyncpa [#allocation9], 1
    %6093 = vsyncpa [#allocation12], 1
    %6094 = vsyncpa [#allocation15], 1
    %6095 = vsyncpa [#allocation4], 1

</llo_original>
